<compile_context>
chip_gen: v7x
topology: tpu7x:2x2x1
jax: 0.10.0
libtpu: 0.0.40
codegen_flags: <defaults>
</compile_context>

<pallas_src>
import functools

import jax
import jax.numpy as jnp
from jax.experimental import pallas as pl
from jax.experimental.pallas import tpu as pltpu

NEG_SLOPE = 0.2
_VMEM_LIMIT = 48 * 1024 * 1024   # <= v7x 64 MiB physical; fine on v5e/v6e too


def _round_up(x, m):
    return (x + m - 1) // m * m


def _resident_spec(block_shape, index_map):
    """Constant-index (VMEM-resident) block: single-buffered to save VMEM."""
    try:
        return pl.BlockSpec(block_shape, index_map, pipeline_mode=pl.Buffered(1))
    except (TypeError, AttributeError):
        return pl.BlockSpec(block_shape, index_map)


# ---------------------------------------------------------------------------
# Kernel 1 (layer 1): fused matmul + bias + LeakyReLU on im2col patches.
#   x_ref: (TM, K) bf16   w_ref: (K, Cout) bf16   b_ref: (1, Cout) f32
# ---------------------------------------------------------------------------
def _matmul_bias_act_kernel(x_ref, w_ref, b_ref, o_ref, *, apply_act):
    acc = jnp.dot(x_ref[...], w_ref[...], preferred_element_type=jnp.float32)
    acc = acc + b_ref[...]
    if apply_act:
        acc = jnp.where(acc >= 0.0, acc, NEG_SLOPE * acc)
    o_ref[...] = acc.astype(o_ref.dtype)


# ---------------------------------------------------------------------------
# Kernel 2 (layers 2-4): fused stride-1 "slab" conv + bias + LeakyReLU.
#   x_ref: (1, Lpad, Cin)  flattened (H*W) image rows, Cin on the lane axis
#   w_ref: (keff*keff, Cin, Cout)   b_ref: (1, Cout) f32
#   o_ref: (1, L, Cout) with L = Ho * w_row; columns [Wo, w_row) are junk
#          (wrap-around rows) and are sliced off outside the kernel.
# ---------------------------------------------------------------------------
def _slab_conv_kernel(x_ref, w_ref, b_ref, o_ref, *, keff, w_row, apply_act):
    L = o_ref.shape[1]
    cout = o_ref.shape[2]
    acc = jnp.zeros((L, cout), jnp.float32)
    for ta in range(keff):
        for tb in range(keff):
            s = ta * w_row + tb                       # static slab offset
            xt = x_ref[0, s:s + L, :]                 # (L, Cin) contiguous slice
            acc = acc + jnp.dot(xt, w_ref[ta * keff + tb],
                                preferred_element_type=jnp.float32)
    acc = acc + b_ref[...]
    if apply_act:
        acc = jnp.where(acc >= 0.0, acc, NEG_SLOPE * acc)
    o_ref[0] = acc.astype(o_ref.dtype)


# ---------------------------------------------------------------------------
# Generic stride-1 VALID conv via the slab kernel (fused, no patch matrix).
# ---------------------------------------------------------------------------
def _slab_conv(xs, w_taps, bias, *, keff, cout_real, apply_act, out_dtype):
    N, Hin, Win, C = xs.shape
    Ho, Wo = Hin - keff + 1, Win - keff + 1
    L = Ho * Win
    Lpad = Hin * Win + (keff - 1)          # tail rows keep the last tap in-bounds
    Cout_p = w_taps.shape[-1]

    x_flat = xs.reshape(N, Hin * Win, C)
    x_flat = jnp.pad(x_flat, ((0, 0), (0, Lpad - Hin * Win), (0, 0)))

    b_row = jnp.zeros((1, Cout_p), jnp.float32).at[0, :cout_real].set(
        bias.astype(jnp.float32))

    out = pl.pallas_call(
        functools.partial(_slab_conv_kernel, keff=keff, w_row=Win,
                          apply_act=apply_act),
        out_shape=jax.ShapeDtypeStruct((N, L, Cout_p), out_dtype),
        grid=(N,),                                     # one image per grid step
        in_specs=[
            pl.BlockSpec((1, Lpad, C), lambda n: (n, 0, 0)),
            _resident_spec((keff * keff, C, Cout_p), lambda n: (0, 0, 0)),
            _resident_spec((1, Cout_p), lambda n: (0, 0)),
        ],
        out_specs=pl.BlockSpec((1, L, Cout_p), lambda n: (n, 0, 0)),
        compiler_params=pltpu.CompilerParams(
            dimension_semantics=("parallel",),
            vmem_limit_bytes=_VMEM_LIMIT),
    )(x_flat, w_taps, b_row)

    out = out.reshape(N, Ho, Win, Cout_p)
    # Lazy slice of the junk columns / padded channels; fuses into the next
    # layer's pad + space-to-depth copy pass.
    return out[:, :, :Wo, :cout_real]


# ---------------------------------------------------------------------------
# Layers 2-3: 4x4 / stride-2 / pad-1 conv = pad + 2x2 space-to-depth (pure
# reshapes) + fused 2x2 stride-1 slab conv kernel.
# ---------------------------------------------------------------------------
def _conv_s2d_slab(x_nhwc, w, bias, *, apply_act, out_dtype):
    N, H, W, Cin = x_nhwc.shape
    Cout = w.shape[0]
    xp = jnp.pad(x_nhwc, ((0, 0), (1, 1), (1, 1), (0, 0)))
    H2, W2 = (H + 2) // 2, (W + 2) // 2
    xs = xp.reshape(N, H2, 2, W2, 2, Cin).transpose(0, 1, 3, 2, 4, 5)
    xs = xs.reshape(N, H2, W2, 4 * Cin)
    # (Cout, Cin, 4, 4) -> (tap=(a,b), chan=(di,dj,c), Cout):  W[co, c, 2a+di, 2b+dj]
    w_taps = w.reshape(Cout, Cin, 2, 2, 2, 2).transpose(2, 4, 3, 5, 1, 0)
    w_taps = w_taps.reshape(4, 4 * Cin, Cout).astype(jnp.bfloat16)
    return _slab_conv(xs, w_taps, bias, keff=2, cout_real=Cout,
                      apply_act=apply_act, out_dtype=out_dtype)


# ---------------------------------------------------------------------------
# Layer 1: im2col (K = 4*4*3 = 48, kept un-padded) + matmul kernel, M-tiled.
# ---------------------------------------------------------------------------
def _conv_im2col(x_nhwc, w, bias, *, stride, pad, apply_act, out_dtype):
    N, H, W, Cin = x_nhwc.shape
    Cout, _, k, _ = w.shape
    xp = jnp.pad(x_nhwc, ((0, 0), (pad, pad), (pad, pad), (0, 0)))
    Ho = (H + 2 * pad - k) // stride + 1
    Wo = (W + 2 * pad - k) // stride + 1
    cols = [xp[:, i:i + stride * Ho:stride, j:j + stride * Wo:stride, :]
            for i in range(k) for j in range(k)]
    patches = jnp.concatenate(cols, axis=-1).reshape(N * Ho * Wo, k * k * Cin)

    w_mat = w.transpose(2, 3, 1, 0).reshape(k * k * Cin, Cout).astype(jnp.bfloat16)
    b_row = bias.astype(jnp.float32).reshape(1, Cout)

    M, K = patches.shape
    # Big M tiles for DMA efficiency, but keep >= 2 grid steps (v7x megacore).
    if M >= 2048:
        TM = 1024
    elif M >= 16:
        TM = _round_up(pl.cdiv(M, 2), 8)
    else:
        TM = _round_up(max(M, 1), 8)
    Mp = _round_up(M, TM)
    if Mp != M:                                        # gate no-op pads
        patches = jnp.pad(patches, ((0, Mp - M), (0, 0)))

    out = pl.pallas_call(
        functools.partial(_matmul_bias_act_kernel, apply_act=apply_act),
        out_shape=jax.ShapeDtypeStruct((Mp, Cout), out_dtype),
        grid=(Mp // TM,),
        in_specs=[
            pl.BlockSpec((TM, K), lambda i: (i, 0)),   # full-dim K block (no pad)
            _resident_spec((K, Cout), lambda i: (0, 0)),
            _resident_spec((1, Cout), lambda i: (0, 0)),
        ],
        out_specs=pl.BlockSpec((TM, Cout), lambda i: (i, 0)),
        compiler_params=pltpu.CompilerParams(
            dimension_semantics=("parallel",),
            vmem_limit_bytes=_VMEM_LIMIT),
    )(patches, w_mat, b_row)
    if Mp != M:
        out = out[:M]
    return out.reshape(N, Ho, Wo, Cout)


# ---------------------------------------------------------------------------
# PatchDiscriminator parameters / forward
# ---------------------------------------------------------------------------
_LAYER_SHAPES = [(64, 3, 4), (128, 64, 4), (256, 128, 4), (1, 256, 4)]


def init_params(key):
    params = []
    for cout, cin, k in _LAYER_SHAPES:
        key, wk, bk = jax.random.split(key, 3)
        w = jax.random.normal(wk, (cout, cin, k, k), jnp.float32) * 0.02
        b = jax.random.normal(bk, (cout,), jnp.float32) * 0.02
        params.append((w, b))
    return params


@jax.jit
def patch_discriminator(x, params):
    # NCHW -> NHWC once; cast to bf16 once (all inter-layer glue stays bf16).
    h = jnp.transpose(x, (0, 2, 3, 1)).astype(jnp.bfloat16)

    # Layer 1: Conv2d(3, 64, 4, 2, 1) + LeakyReLU  (im2col path, K=48).
    w1, b1 = params[0]
    h = _conv_im2col(h, w1, b1, stride=2, pad=1, apply_act=True,
                     out_dtype=jnp.bfloat16)

    # Layers 2-3: Conv2d(*, *, 4, 2, 1) + LeakyReLU (fused s2d slab kernel).
    for (w, b) in params[1:3]:
        h = _conv_s2d_slab(h, w, b, apply_act=True, out_dtype=jnp.bfloat16)

    # Layer 4: Conv2d(256, 1, 4, 1, 0) — 16-tap slab kernel, Cout padded to 128
    # lanes for dense stores (tiny tensor), f32 output.
    w4, b4 = params[3]
    cout4, cin4 = w4.shape[0], w4.shape[1]
    wt4 = w4.transpose(2, 3, 1, 0).reshape(16, cin4, cout4).astype(jnp.bfloat16)
    wt4 = jnp.zeros((16, cin4, 128), jnp.bfloat16).at[:, :, :cout4].set(wt4)
    h = _slab_conv(h, wt4, b4, keff=4, cout_real=cout4,
                   apply_act=False, out_dtype=jnp.float32)

    return jnp.transpose(h, (0, 3, 1, 2))              # NHWC -> NCHW


# Pure-JAX f32 reference (lax conv) for correctness checking.
def _ref_forward(x, params):
    cfgs = [(2, 1, True), (2, 1, True), (2, 1, True), (1, 0, False)]
    for (w, b), (stride, pad, act) in zip(params, cfgs):
        x = jax.lax.conv_general_dilated(
            x, w, (stride, stride), [(pad, pad), (pad, pad)],
            dimension_numbers=("NCHW", "OIHW", "NCHW"))
        x = x + b[None, :, None, None]
        if act:
            x = jnp.where(x >= 0, x, NEG_SLOPE * x)
    return x


if __name__ == "__main__":
    key = jax.random.PRNGKey(0)
    k_x, k_p = jax.random.split(key)
    # N=2, C=3, H=W=32 -> output (2, 1, 1, 1): smallest spatial size surviving
    # three stride-2 convs followed by the final valid 4x4 conv.
    x = jax.random.normal(k_x, (2, 3, 32, 32), jnp.float32)
    params = init_params(k_p)

    out = patch_discriminator(x, params)
    out = jax.block_until_ready(out)

    ref = _ref_forward(x, params)
    assert out.shape == ref.shape == (2, 1, 1, 1), (out.shape, ref.shape)
    # bf16 MXU operands + bf16 intermediate activations (intentional trade-off
    # for HBM bandwidth): tolerance is looser than pure-f32 parity.
    assert jnp.allclose(out, ref, rtol=5e-2, atol=5e-3), (out, ref)

    print("KERNEL_OK")
</pallas_src>

<mosaic_0001>
module attributes {stable_mosaic.version = 11 : i64} {
  func.func @_matmul_bias_act_kernel(%arg0: i32, %arg1: memref<256x48xbf16, #tpu.memory_space<vmem>>, %arg2: memref<48x64xbf16, #tpu.memory_space<vmem>>, %arg3: memref<1x64xf32, #tpu.memory_space<vmem>>, %arg4: memref<256x64xbf16, #tpu.memory_space<vmem>>) attributes {dimension_semantics = [#tpu.dimension_semantics<parallel>], iteration_bounds = array<i64: 2>, scalar_prefetch = 0 : i64, scratch_operands = 0 : i64, tpu.core_type = #tpu.core_type<tc>, window_params = [{transform_indices = @transform_0, window_bounds = array<i64: 256, 48>}, {pipeline_mode = #tpu.pipeline_mode<synchronous>, transform_indices = @transform_1, window_bounds = array<i64: 48, 64>}, {pipeline_mode = #tpu.pipeline_mode<synchronous>, transform_indices = @transform_2, window_bounds = array<i64: 1, 64>}, {transform_indices = @transform_3, window_bounds = array<i64: 256, 64>}]} {
    %c0 = arith.constant 0 : index
    %c0_0 = arith.constant 0 : index
    %0 = vector.load %arg1[%c0, %c0_0] : memref<256x48xbf16, #tpu.memory_space<vmem>>, vector<256x48xbf16>
    %c0_1 = arith.constant 0 : index
    %c0_2 = arith.constant 0 : index
    %1 = vector.load %arg2[%c0_1, %c0_2] : memref<48x64xbf16, #tpu.memory_space<vmem>>, vector<48x64xbf16>
    %cst = arith.constant dense<0.000000e+00> : vector<256x64xf32>
    %2 = tpu.matmul %0, %1, %cst {dimension_numbers = #tpu.dot_dimension_numbers<[1], [0], [0], [1], [0, 0, 1, 1], [], []>} : vector<256x48xbf16>, vector<48x64xbf16>, vector<256x64xf32> -> vector<256x64xf32>
    %c0_3 = arith.constant 0 : index
    %c0_4 = arith.constant 0 : index
    %3 = vector.load %arg3[%c0_3, %c0_4] : memref<1x64xf32, #tpu.memory_space<vmem>>, vector<1x64xf32>
    %4 = vector.broadcast %3 : vector<1x64xf32> to vector<256x64xf32>
    %5 = arith.addf %2, %4 : vector<256x64xf32>
    %cst_5 = arith.constant 0.000000e+00 : f32
    %6 = vector.broadcast %cst_5 : f32 to vector<256x64xf32>
    %7 = arith.cmpf oge, %5, %6 : vector<256x64xf32>
    %cst_6 = arith.constant 2.000000e-01 : f32
    %8 = vector.broadcast %cst_6 : f32 to vector<256x64xf32>
    %9 = arith.mulf %8, %5 : vector<256x64xf32>
    %10 = arith.select %7, %5, %9 : vector<256x64xi1>, vector<256x64xf32>
    %11 = arith.truncf %10 : vector<256x64xf32> to vector<256x64xbf16>
    %c0_7 = arith.constant 0 : index
    %c0_8 = arith.constant 0 : index
    %12 = vector.load %arg4[%c0_7, %c0_8] : memref<256x64xbf16, #tpu.memory_space<vmem>>, vector<256x64xbf16>
    tpu.vector_store %arg4[%c0_7, %c0_8], %11 {strides = array<i32>} : memref<256x64xbf16, #tpu.memory_space<vmem>>, vector<256x64xbf16>,
    return
  }
  func.func @transform_0(%arg0: i32) -> (i32, i32) {
    %c0_i32 = arith.constant 0 : i32
    %c0_i32_0 = arith.constant 0 : i32
    return %arg0, %c0_i32 : i32, i32
  }
  func.func @transform_1(%arg0: i32) -> (i32, i32) {
    %c0_i32 = arith.constant 0 : i32
    %c0_i32_0 = arith.constant 0 : i32
    %c0_i32_1 = arith.constant 0 : i32
    return %c0_i32, %c0_i32_0 : i32, i32
  }
  func.func @transform_2(%arg0: i32) -> (i32, i32) {
    %c0_i32 = arith.constant 0 : i32
    %c0_i32_0 = arith.constant 0 : i32
    %c0_i32_1 = arith.constant 0 : i32
    return %c0_i32, %c0_i32_0 : i32, i32
  }
  func.func @transform_3(%arg0: i32) -> (i32, i32) {
    %c0_i32 = arith.constant 0 : i32
    %c0_i32_0 = arith.constant 0 : i32
    return %arg0, %c0_i32 : i32, i32
  }
}

module attributes {stable_mosaic.version = 11 : i64} {
  func.func @_slab_conv_kernel(%arg0: i32, %arg1: memref<1x82x256xbf16, #tpu.memory_space<vmem>>, %arg2: memref<4x256x128xbf16, #tpu.memory_space<vmem>>, %arg3: memref<1x128xf32, #tpu.memory_space<vmem>>, %arg4: memref<1x72x128xbf16, #tpu.memory_space<vmem>>) attributes {dimension_semantics = [#tpu.dimension_semantics<parallel>], iteration_bounds = array<i64: 2>, scalar_prefetch = 0 : i64, scratch_operands = 0 : i64, tpu.core_type = #tpu.core_type<tc>, window_params = [{transform_indices = @transform_0, window_bounds = array<i64: 1, 82, 256>}, {pipeline_mode = #tpu.pipeline_mode<synchronous>, transform_indices = @transform_1, window_bounds = array<i64: 4, 256, 128>}, {pipeline_mode = #tpu.pipeline_mode<synchronous>, transform_indices = @transform_2, window_bounds = array<i64: 1, 128>}, {transform_indices = @transform_3, window_bounds = array<i64: 1, 72, 128>}]} {
    %cst = arith.constant 0.000000e+00 : f32
    %0 = vector.broadcast %cst : f32 to vector<72x128xf32>
    %c0 = arith.constant 0 : index
    %c0_0 = arith.constant 0 : index
    %c0_1 = arith.constant 0 : index
    %1 = vector.load %arg1[%c0, %c0_0, %c0_1] : memref<1x82x256xbf16, #tpu.memory_space<vmem>>, vector<1x72x256xbf16>
    %2 = vector.shape_cast %1 : vector<1x72x256xbf16> to vector<72x256xbf16>
    %c0_2 = arith.constant 0 : index
    %c0_3 = arith.constant 0 : index
    %c0_4 = arith.constant 0 : index
    %3 = vector.load %arg2[%c0_2, %c0_3, %c0_4] : memref<4x256x128xbf16, #tpu.memory_space<vmem>>, vector<1x256x128xbf16>
    %4 = vector.shape_cast %3 : vector<1x256x128xbf16> to vector<256x128xbf16>
    %cst_5 = arith.constant dense<0.000000e+00> : vector<72x128xf32>
    %5 = tpu.matmul %2, %4, %cst_5 {dimension_numbers = #tpu.dot_dimension_numbers<[1], [0], [0], [1], [0, 0, 1, 1], [], []>} : vector<72x256xbf16>, vector<256x128xbf16>, vector<72x128xf32> -> vector<72x128xf32>
    %6 = arith.addf %0, %5 : vector<72x128xf32>
    %c0_6 = arith.constant 0 : index
    %c1 = arith.constant 1 : index
    %c0_7 = arith.constant 0 : index
    %7 = vector.load %arg1[%c0_6, %c1, %c0_7] : memref<1x82x256xbf16, #tpu.memory_space<vmem>>, vector<1x72x256xbf16>
    %8 = vector.shape_cast %7 : vector<1x72x256xbf16> to vector<72x256xbf16>
    %c1_8 = arith.constant 1 : index
    %c0_9 = arith.constant 0 : index
    %c0_10 = arith.constant 0 : index
    %9 = vector.load %arg2[%c1_8, %c0_9, %c0_10] : memref<4x256x128xbf16, #tpu.memory_space<vmem>>, vector<1x256x128xbf16>
    %10 = vector.shape_cast %9 : vector<1x256x128xbf16> to vector<256x128xbf16>
    %cst_11 = arith.constant dense<0.000000e+00> : vector<72x128xf32>
    %11 = tpu.matmul %8, %10, %cst_11 {dimension_numbers = #tpu.dot_dimension_numbers<[1], [0], [0], [1], [0, 0, 1, 1], [], []>} : vector<72x256xbf16>, vector<256x128xbf16>, vector<72x128xf32> -> vector<72x128xf32>
    %12 = arith.addf %6, %11 : vector<72x128xf32>
    %c0_12 = arith.constant 0 : index
    %c9 = arith.constant 9 : index
    %c0_13 = arith.constant 0 : index
    %13 = vector.load %arg1[%c0_12, %c9, %c0_13] : memref<1x82x256xbf16, #tpu.memory_space<vmem>>, vector<1x72x256xbf16>
    %14 = vector.shape_cast %13 : vector<1x72x256xbf16> to vector<72x256xbf16>
    %c2 = arith.constant 2 : index
    %c0_14 = arith.constant 0 : index
    %c0_15 = arith.constant 0 : index
    %15 = vector.load %arg2[%c2, %c0_14, %c0_15] : memref<4x256x128xbf16, #tpu.memory_space<vmem>>, vector<1x256x128xbf16>
    %16 = vector.shape_cast %15 : vector<1x256x128xbf16> to vector<256x128xbf16>
    %cst_16 = arith.constant dense<0.000000e+00> : vector<72x128xf32>
    %17 = tpu.matmul %14, %16, %cst_16 {dimension_numbers = #tpu.dot_dimension_numbers<[1], [0], [0], [1], [0, 0, 1, 1], [], []>} : vector<72x256xbf16>, vector<256x128xbf16>, vector<72x128xf32> -> vector<72x128xf32>
    %18 = arith.addf %12, %17 : vector<72x128xf32>
    %c0_17 = arith.constant 0 : index
    %c10 = arith.constant 10 : index
    %c0_18 = arith.constant 0 : index
    %19 = vector.load %arg1[%c0_17, %c10, %c0_18] : memref<1x82x256xbf16, #tpu.memory_space<vmem>>, vector<1x72x256xbf16>
    %20 = vector.shape_cast %19 : vector<1x72x256xbf16> to vector<72x256xbf16>
    %c3 = arith.constant 3 : index
    %c0_19 = arith.constant 0 : index
    %c0_20 = arith.constant 0 : index
    %21 = vector.load %arg2[%c3, %c0_19, %c0_20] : memref<4x256x128xbf16, #tpu.memory_space<vmem>>, vector<1x256x128xbf16>
    %22 = vector.shape_cast %21 : vector<1x256x128xbf16> to vector<256x128xbf16>
    %cst_21 = arith.constant dense<0.000000e+00> : vector<72x128xf32>
    %23 = tpu.matmul %20, %22, %cst_21 {dimension_numbers = #tpu.dot_dimension_numbers<[1], [0], [0], [1], [0, 0, 1, 1], [], []>} : vector<72x256xbf16>, vector<256x128xbf16>, vector<72x128xf32> -> vector<72x128xf32>
    %24 = arith.addf %18, %23 : vector<72x128xf32>
    %c0_22 = arith.constant 0 : index
    %c0_23 = arith.constant 0 : index
    %25 = vector.load %arg3[%c0_22, %c0_23] : memref<1x128xf32, #tpu.memory_space<vmem>>, vector<1x128xf32>
    %26 = vector.broadcast %25 : vector<1x128xf32> to vector<72x128xf32>
    %27 = arith.addf %24, %26 : vector<72x128xf32>
    %cst_24 = arith.constant 0.000000e+00 : f32
    %28 = vector.broadcast %cst_24 : f32 to vector<72x128xf32>
    %29 = arith.cmpf oge, %27, %28 : vector<72x128xf32>
    %cst_25 = arith.constant 2.000000e-01 : f32
    %30 = vector.broadcast %cst_25 : f32 to vector<72x128xf32>
    %31 = arith.mulf %30, %27 : vector<72x128xf32>
    %32 = arith.select %29, %27, %31 : vector<72x128xi1>, vector<72x128xf32>
    %33 = arith.truncf %32 : vector<72x128xf32> to vector<72x128xbf16>
    %c0_26 = arith.constant 0 : index
    %c0_27 = arith.constant 0 : index
    %c0_28 = arith.constant 0 : index
    %34 = vector.load %arg4[%c0_26, %c0_27, %c0_28] : memref<1x72x128xbf16, #tpu.memory_space<vmem>>, vector<1x72x128xbf16>
    %35 = vector.shape_cast %34 : vector<1x72x128xbf16> to vector<72x128xbf16>
    %36 = vector.shape_cast %33 : vector<72x128xbf16> to vector<1x72x128xbf16>
    tpu.vector_store %arg4[%c0_26, %c0_27, %c0_28], %36 {strides = array<i32>} : memref<1x72x128xbf16, #tpu.memory_space<vmem>>, vector<1x72x128xbf16>,
    return
  }
  func.func @transform_0(%arg0: i32) -> (i32, i32, i32) {
    %c0_i32 = arith.constant 0 : i32
    %c0_i32_0 = arith.constant 0 : i32
    %c0_i32_1 = arith.constant 0 : i32
    return %arg0, %c0_i32, %c0_i32_0 : i32, i32, i32
  }
  func.func @transform_1(%arg0: i32) -> (i32, i32, i32) {
    %c0_i32 = arith.constant 0 : i32
    %c0_i32_0 = arith.constant 0 : i32
    %c0_i32_1 = arith.constant 0 : i32
    %c0_i32_2 = arith.constant 0 : i32
    return %c0_i32, %c0_i32_0, %c0_i32_1 : i32, i32, i32
  }
  func.func @transform_2(%arg0: i32) -> (i32, i32) {
    %c0_i32 = arith.constant 0 : i32
    %c0_i32_0 = arith.constant 0 : i32
    %c0_i32_1 = arith.constant 0 : i32
    return %c0_i32, %c0_i32_0 : i32, i32
  }
  func.func @transform_3(%arg0: i32) -> (i32, i32, i32) {
    %c0_i32 = arith.constant 0 : i32
    %c0_i32_0 = arith.constant 0 : i32
    %c0_i32_1 = arith.constant 0 : i32
    return %arg0, %c0_i32, %c0_i32_0 : i32, i32, i32
  }
}

module attributes {stable_mosaic.version = 11 : i64} {
  func.func @_slab_conv_kernel(%arg0: i32, %arg1: memref<1x26x512xbf16, #tpu.memory_space<vmem>>, %arg2: memref<4x512x256xbf16, #tpu.memory_space<vmem>>, %arg3: memref<1x256xf32, #tpu.memory_space<vmem>>, %arg4: memref<1x20x256xbf16, #tpu.memory_space<vmem>>) attributes {dimension_semantics = [#tpu.dimension_semantics<parallel>], iteration_bounds = array<i64: 2>, scalar_prefetch = 0 : i64, scratch_operands = 0 : i64, tpu.core_type = #tpu.core_type<tc>, window_params = [{transform_indices = @transform_0, window_bounds = array<i64: 1, 26, 512>}, {pipeline_mode = #tpu.pipeline_mode<synchronous>, transform_indices = @transform_1, window_bounds = array<i64: 4, 512, 256>}, {pipeline_mode = #tpu.pipeline_mode<synchronous>, transform_indices = @transform_2, window_bounds = array<i64: 1, 256>}, {transform_indices = @transform_3, window_bounds = array<i64: 1, 20, 256>}]} {
    %cst = arith.constant 0.000000e+00 : f32
    %0 = vector.broadcast %cst : f32 to vector<20x256xf32>
    %c0 = arith.constant 0 : index
    %c0_0 = arith.constant 0 : index
    %c0_1 = arith.constant 0 : index
    %1 = vector.load %arg1[%c0, %c0_0, %c0_1] : memref<1x26x512xbf16, #tpu.memory_space<vmem>>, vector<1x20x512xbf16>
    %2 = vector.shape_cast %1 : vector<1x20x512xbf16> to vector<20x512xbf16>
    %c0_2 = arith.constant 0 : index
    %c0_3 = arith.constant 0 : index
    %c0_4 = arith.constant 0 : index
    %3 = vector.load %arg2[%c0_2, %c0_3, %c0_4] : memref<4x512x256xbf16, #tpu.memory_space<vmem>>, vector<1x512x256xbf16>
    %4 = vector.shape_cast %3 : vector<1x512x256xbf16> to vector<512x256xbf16>
    %cst_5 = arith.constant dense<0.000000e+00> : vector<20x256xf32>
    %5 = tpu.matmul %2, %4, %cst_5 {dimension_numbers = #tpu.dot_dimension_numbers<[1], [0], [0], [1], [0, 0, 1, 1], [], []>} : vector<20x512xbf16>, vector<512x256xbf16>, vector<20x256xf32> -> vector<20x256xf32>
    %6 = arith.addf %0, %5 : vector<20x256xf32>
    %c0_6 = arith.constant 0 : index
    %c1 = arith.constant 1 : index
    %c0_7 = arith.constant 0 : index
    %7 = vector.load %arg1[%c0_6, %c1, %c0_7] : memref<1x26x512xbf16, #tpu.memory_space<vmem>>, vector<1x20x512xbf16>
    %8 = vector.shape_cast %7 : vector<1x20x512xbf16> to vector<20x512xbf16>
    %c1_8 = arith.constant 1 : index
    %c0_9 = arith.constant 0 : index
    %c0_10 = arith.constant 0 : index
    %9 = vector.load %arg2[%c1_8, %c0_9, %c0_10] : memref<4x512x256xbf16, #tpu.memory_space<vmem>>, vector<1x512x256xbf16>
    %10 = vector.shape_cast %9 : vector<1x512x256xbf16> to vector<512x256xbf16>
    %cst_11 = arith.constant dense<0.000000e+00> : vector<20x256xf32>
    %11 = tpu.matmul %8, %10, %cst_11 {dimension_numbers = #tpu.dot_dimension_numbers<[1], [0], [0], [1], [0, 0, 1, 1], [], []>} : vector<20x512xbf16>, vector<512x256xbf16>, vector<20x256xf32> -> vector<20x256xf32>
    %12 = arith.addf %6, %11 : vector<20x256xf32>
    %c0_12 = arith.constant 0 : index
    %c5 = arith.constant 5 : index
    %c0_13 = arith.constant 0 : index
    %13 = vector.load %arg1[%c0_12, %c5, %c0_13] : memref<1x26x512xbf16, #tpu.memory_space<vmem>>, vector<1x20x512xbf16>
    %14 = vector.shape_cast %13 : vector<1x20x512xbf16> to vector<20x512xbf16>
    %c2 = arith.constant 2 : index
    %c0_14 = arith.constant 0 : index
    %c0_15 = arith.constant 0 : index
    %15 = vector.load %arg2[%c2, %c0_14, %c0_15] : memref<4x512x256xbf16, #tpu.memory_space<vmem>>, vector<1x512x256xbf16>
    %16 = vector.shape_cast %15 : vector<1x512x256xbf16> to vector<512x256xbf16>
    %cst_16 = arith.constant dense<0.000000e+00> : vector<20x256xf32>
    %17 = tpu.matmul %14, %16, %cst_16 {dimension_numbers = #tpu.dot_dimension_numbers<[1], [0], [0], [1], [0, 0, 1, 1], [], []>} : vector<20x512xbf16>, vector<512x256xbf16>, vector<20x256xf32> -> vector<20x256xf32>
    %18 = arith.addf %12, %17 : vector<20x256xf32>
    %c0_17 = arith.constant 0 : index
    %c6 = arith.constant 6 : index
    %c0_18 = arith.constant 0 : index
    %19 = vector.load %arg1[%c0_17, %c6, %c0_18] : memref<1x26x512xbf16, #tpu.memory_space<vmem>>, vector<1x20x512xbf16>
    %20 = vector.shape_cast %19 : vector<1x20x512xbf16> to vector<20x512xbf16>
    %c3 = arith.constant 3 : index
    %c0_19 = arith.constant 0 : index
    %c0_20 = arith.constant 0 : index
    %21 = vector.load %arg2[%c3, %c0_19, %c0_20] : memref<4x512x256xbf16, #tpu.memory_space<vmem>>, vector<1x512x256xbf16>
    %22 = vector.shape_cast %21 : vector<1x512x256xbf16> to vector<512x256xbf16>
    %cst_21 = arith.constant dense<0.000000e+00> : vector<20x256xf32>
    %23 = tpu.matmul %20, %22, %cst_21 {dimension_numbers = #tpu.dot_dimension_numbers<[1], [0], [0], [1], [0, 0, 1, 1], [], []>} : vector<20x512xbf16>, vector<512x256xbf16>, vector<20x256xf32> -> vector<20x256xf32>
    %24 = arith.addf %18, %23 : vector<20x256xf32>
    %c0_22 = arith.constant 0 : index
    %c0_23 = arith.constant 0 : index
    %25 = vector.load %arg3[%c0_22, %c0_23] : memref<1x256xf32, #tpu.memory_space<vmem>>, vector<1x256xf32>
    %26 = vector.broadcast %25 : vector<1x256xf32> to vector<20x256xf32>
    %27 = arith.addf %24, %26 : vector<20x256xf32>
    %cst_24 = arith.constant 0.000000e+00 : f32
    %28 = vector.broadcast %cst_24 : f32 to vector<20x256xf32>
    %29 = arith.cmpf oge, %27, %28 : vector<20x256xf32>
    %cst_25 = arith.constant 2.000000e-01 : f32
    %30 = vector.broadcast %cst_25 : f32 to vector<20x256xf32>
    %31 = arith.mulf %30, %27 : vector<20x256xf32>
    %32 = arith.select %29, %27, %31 : vector<20x256xi1>, vector<20x256xf32>
    %33 = arith.truncf %32 : vector<20x256xf32> to vector<20x256xbf16>
    %c0_26 = arith.constant 0 : index
    %c0_27 = arith.constant 0 : index
    %c0_28 = arith.constant 0 : index
    %34 = vector.load %arg4[%c0_26, %c0_27, %c0_28] : memref<1x20x256xbf16, #tpu.memory_space<vmem>>, vector<1x20x256xbf16>
    %35 = vector.shape_cast %34 : vector<1x20x256xbf16> to vector<20x256xbf16>
    %36 = vector.shape_cast %33 : vector<20x256xbf16> to vector<1x20x256xbf16>
    tpu.vector_store %arg4[%c0_26, %c0_27, %c0_28], %36 {strides = array<i32>} : memref<1x20x256xbf16, #tpu.memory_space<vmem>>, vector<1x20x256xbf16>,
    return
  }
  func.func @transform_0(%arg0: i32) -> (i32, i32, i32) {
    %c0_i32 = arith.constant 0 : i32
    %c0_i32_0 = arith.constant 0 : i32
    %c0_i32_1 = arith.constant 0 : i32
    return %arg0, %c0_i32, %c0_i32_0 : i32, i32, i32
  }
  func.func @transform_1(%arg0: i32) -> (i32, i32, i32) {
    %c0_i32 = arith.constant 0 : i32
    %c0_i32_0 = arith.constant 0 : i32
    %c0_i32_1 = arith.constant 0 : i32
    %c0_i32_2 = arith.constant 0 : i32
    return %c0_i32, %c0_i32_0, %c0_i32_1 : i32, i32, i32
  }
  func.func @transform_2(%arg0: i32) -> (i32, i32) {
    %c0_i32 = arith.constant 0 : i32
    %c0_i32_0 = arith.constant 0 : i32
    %c0_i32_1 = arith.constant 0 : i32
    return %c0_i32, %c0_i32_0 : i32, i32
  }
  func.func @transform_3(%arg0: i32) -> (i32, i32, i32) {
    %c0_i32 = arith.constant 0 : i32
    %c0_i32_0 = arith.constant 0 : i32
    %c0_i32_1 = arith.constant 0 : i32
    return %arg0, %c0_i32, %c0_i32_0 : i32, i32, i32
  }
}

module attributes {stable_mosaic.version = 11 : i64} {
  func.func @_slab_conv_kernel(%arg0: i32, %arg1: memref<1x19x256xbf16, #tpu.memory_space<vmem>>, %arg2: memref<16x256x128xbf16, #tpu.memory_space<vmem>>, %arg3: memref<1x128xf32, #tpu.memory_space<vmem>>, %arg4: memref<1x4x128xf32, #tpu.memory_space<vmem>>) attributes {dimension_semantics = [#tpu.dimension_semantics<parallel>], iteration_bounds = array<i64: 2>, scalar_prefetch = 0 : i64, scratch_operands = 0 : i64, tpu.core_type = #tpu.core_type<tc>, window_params = [{transform_indices = @transform_0, window_bounds = array<i64: 1, 19, 256>}, {pipeline_mode = #tpu.pipeline_mode<synchronous>, transform_indices = @transform_1, window_bounds = array<i64: 16, 256, 128>}, {pipeline_mode = #tpu.pipeline_mode<synchronous>, transform_indices = @transform_2, window_bounds = array<i64: 1, 128>}, {transform_indices = @transform_3, window_bounds = array<i64: 1, 4, 128>}]} {
    %cst = arith.constant 0.000000e+00 : f32
    %0 = vector.broadcast %cst : f32 to vector<4x128xf32>
    %c0 = arith.constant 0 : index
    %c0_0 = arith.constant 0 : index
    %c0_1 = arith.constant 0 : index
    %1 = vector.load %arg1[%c0, %c0_0, %c0_1] : memref<1x19x256xbf16, #tpu.memory_space<vmem>>, vector<1x4x256xbf16>
    %2 = vector.shape_cast %1 : vector<1x4x256xbf16> to vector<4x256xbf16>
    %c0_2 = arith.constant 0 : index
    %c0_3 = arith.constant 0 : index
    %c0_4 = arith.constant 0 : index
    %3 = vector.load %arg2[%c0_2, %c0_3, %c0_4] : memref<16x256x128xbf16, #tpu.memory_space<vmem>>, vector<1x256x128xbf16>
    %4 = vector.shape_cast %3 : vector<1x256x128xbf16> to vector<256x128xbf16>
    %cst_5 = arith.constant dense<0.000000e+00> : vector<4x128xf32>
    %5 = tpu.matmul %2, %4, %cst_5 {dimension_numbers = #tpu.dot_dimension_numbers<[1], [0], [0], [1], [0, 0, 1, 1], [], []>} : vector<4x256xbf16>, vector<256x128xbf16>, vector<4x128xf32> -> vector<4x128xf32>
    %6 = arith.addf %0, %5 : vector<4x128xf32>
    %c0_6 = arith.constant 0 : index
    %c1 = arith.constant 1 : index
    %c0_7 = arith.constant 0 : index
    %7 = vector.load %arg1[%c0_6, %c1, %c0_7] : memref<1x19x256xbf16, #tpu.memory_space<vmem>>, vector<1x4x256xbf16>
    %8 = vector.shape_cast %7 : vector<1x4x256xbf16> to vector<4x256xbf16>
    %c1_8 = arith.constant 1 : index
    %c0_9 = arith.constant 0 : index
    %c0_10 = arith.constant 0 : index
    %9 = vector.load %arg2[%c1_8, %c0_9, %c0_10] : memref<16x256x128xbf16, #tpu.memory_space<vmem>>, vector<1x256x128xbf16>
    %10 = vector.shape_cast %9 : vector<1x256x128xbf16> to vector<256x128xbf16>
    %cst_11 = arith.constant dense<0.000000e+00> : vector<4x128xf32>
    %11 = tpu.matmul %8, %10, %cst_11 {dimension_numbers = #tpu.dot_dimension_numbers<[1], [0], [0], [1], [0, 0, 1, 1], [], []>} : vector<4x256xbf16>, vector<256x128xbf16>, vector<4x128xf32> -> vector<4x128xf32>
    %12 = arith.addf %6, %11 : vector<4x128xf32>
    %c0_12 = arith.constant 0 : index
    %c2 = arith.constant 2 : index
    %c0_13 = arith.constant 0 : index
    %13 = vector.load %arg1[%c0_12, %c2, %c0_13] : memref<1x19x256xbf16, #tpu.memory_space<vmem>>, vector<1x4x256xbf16>
    %14 = vector.shape_cast %13 : vector<1x4x256xbf16> to vector<4x256xbf16>
    %c2_14 = arith.constant 2 : index
    %c0_15 = arith.constant 0 : index
    %c0_16 = arith.constant 0 : index
    %15 = vector.load %arg2[%c2_14, %c0_15, %c0_16] : memref<16x256x128xbf16, #tpu.memory_space<vmem>>, vector<1x256x128xbf16>
    %16 = vector.shape_cast %15 : vector<1x256x128xbf16> to vector<256x128xbf16>
    %cst_17 = arith.constant dense<0.000000e+00> : vector<4x128xf32>
    %17 = tpu.matmul %14, %16, %cst_17 {dimension_numbers = #tpu.dot_dimension_numbers<[1], [0], [0], [1], [0, 0, 1, 1], [], []>} : vector<4x256xbf16>, vector<256x128xbf16>, vector<4x128xf32> -> vector<4x128xf32>
    %18 = arith.addf %12, %17 : vector<4x128xf32>
    %c0_18 = arith.constant 0 : index
    %c3 = arith.constant 3 : index
    %c0_19 = arith.constant 0 : index
    %19 = vector.load %arg1[%c0_18, %c3, %c0_19] : memref<1x19x256xbf16, #tpu.memory_space<vmem>>, vector<1x4x256xbf16>
    %20 = vector.shape_cast %19 : vector<1x4x256xbf16> to vector<4x256xbf16>
    %c3_20 = arith.constant 3 : index
    %c0_21 = arith.constant 0 : index
    %c0_22 = arith.constant 0 : index
    %21 = vector.load %arg2[%c3_20, %c0_21, %c0_22] : memref<16x256x128xbf16, #tpu.memory_space<vmem>>, vector<1x256x128xbf16>
    %22 = vector.shape_cast %21 : vector<1x256x128xbf16> to vector<256x128xbf16>
    %cst_23 = arith.constant dense<0.000000e+00> : vector<4x128xf32>
    %23 = tpu.matmul %20, %22, %cst_23 {dimension_numbers = #tpu.dot_dimension_numbers<[1], [0], [0], [1], [0, 0, 1, 1], [], []>} : vector<4x256xbf16>, vector<256x128xbf16>, vector<4x128xf32> -> vector<4x128xf32>
    %24 = arith.addf %18, %23 : vector<4x128xf32>
    %c0_24 = arith.constant 0 : index
    %c4 = arith.constant 4 : index
    %c0_25 = arith.constant 0 : index
    %25 = vector.load %arg1[%c0_24, %c4, %c0_25] : memref<1x19x256xbf16, #tpu.memory_space<vmem>>, vector<1x4x256xbf16>
    %26 = vector.shape_cast %25 : vector<1x4x256xbf16> to vector<4x256xbf16>
    %c4_26 = arith.constant 4 : index
    %c0_27 = arith.constant 0 : index
    %c0_28 = arith.constant 0 : index
    %27 = vector.load %arg2[%c4_26, %c0_27, %c0_28] : memref<16x256x128xbf16, #tpu.memory_space<vmem>>, vector<1x256x128xbf16>
    %28 = vector.shape_cast %27 : vector<1x256x128xbf16> to vector<256x128xbf16>
    %cst_29 = arith.constant dense<0.000000e+00> : vector<4x128xf32>
    %29 = tpu.matmul %26, %28, %cst_29 {dimension_numbers = #tpu.dot_dimension_numbers<[1], [0], [0], [1], [0, 0, 1, 1], [], []>} : vector<4x256xbf16>, vector<256x128xbf16>, vector<4x128xf32> -> vector<4x128xf32>
    %30 = arith.addf %24, %29 : vector<4x128xf32>
    %c0_30 = arith.constant 0 : index
    %c5 = arith.constant 5 : index
    %c0_31 = arith.constant 0 : index
    %31 = vector.load %arg1[%c0_30, %c5, %c0_31] : memref<1x19x256xbf16, #tpu.memory_space<vmem>>, vector<1x4x256xbf16>
    %32 = vector.shape_cast %31 : vector<1x4x256xbf16> to vector<4x256xbf16>
    %c5_32 = arith.constant 5 : index
    %c0_33 = arith.constant 0 : index
    %c0_34 = arith.constant 0 : index
    %33 = vector.load %arg2[%c5_32, %c0_33, %c0_34] : memref<16x256x128xbf16, #tpu.memory_space<vmem>>, vector<1x256x128xbf16>
    %34 = vector.shape_cast %33 : vector<1x256x128xbf16> to vector<256x128xbf16>
    %cst_35 = arith.constant dense<0.000000e+00> : vector<4x128xf32>
    %35 = tpu.matmul %32, %34, %cst_35 {dimension_numbers = #tpu.dot_dimension_numbers<[1], [0], [0], [1], [0, 0, 1, 1], [], []>} : vector<4x256xbf16>, vector<256x128xbf16>, vector<4x128xf32> -> vector<4x128xf32>
    %36 = arith.addf %30, %35 : vector<4x128xf32>
    %c0_36 = arith.constant 0 : index
    %c6 = arith.constant 6 : index
    %c0_37 = arith.constant 0 : index
    %37 = vector.load %arg1[%c0_36, %c6, %c0_37] : memref<1x19x256xbf16, #tpu.memory_space<vmem>>, vector<1x4x256xbf16>
    %38 = vector.shape_cast %37 : vector<1x4x256xbf16> to vector<4x256xbf16>
    %c6_38 = arith.constant 6 : index
    %c0_39 = arith.constant 0 : index
    %c0_40 = arith.constant 0 : index
    %39 = vector.load %arg2[%c6_38, %c0_39, %c0_40] : memref<16x256x128xbf16, #tpu.memory_space<vmem>>, vector<1x256x128xbf16>
    %40 = vector.shape_cast %39 : vector<1x256x128xbf16> to vector<256x128xbf16>
    %cst_41 = arith.constant dense<0.000000e+00> : vector<4x128xf32>
    %41 = tpu.matmul %38, %40, %cst_41 {dimension_numbers = #tpu.dot_dimension_numbers<[1], [0], [0], [1], [0, 0, 1, 1], [], []>} : vector<4x256xbf16>, vector<256x128xbf16>, vector<4x128xf32> -> vector<4x128xf32>
    %42 = arith.addf %36, %41 : vector<4x128xf32>
    %c0_42 = arith.constant 0 : index
    %c7 = arith.constant 7 : index
    %c0_43 = arith.constant 0 : index
    %43 = vector.load %arg1[%c0_42, %c7, %c0_43] : memref<1x19x256xbf16, #tpu.memory_space<vmem>>, vector<1x4x256xbf16>
    %44 = vector.shape_cast %43 : vector<1x4x256xbf16> to vector<4x256xbf16>
    %c7_44 = arith.constant 7 : index
    %c0_45 = arith.constant 0 : index
    %c0_46 = arith.constant 0 : index
    %45 = vector.load %arg2[%c7_44, %c0_45, %c0_46] : memref<16x256x128xbf16, #tpu.memory_space<vmem>>, vector<1x256x128xbf16>
    %46 = vector.shape_cast %45 : vector<1x256x128xbf16> to vector<256x128xbf16>
    %cst_47 = arith.constant dense<0.000000e+00> : vector<4x128xf32>
    %47 = tpu.matmul %44, %46, %cst_47 {dimension_numbers = #tpu.dot_dimension_numbers<[1], [0], [0], [1], [0, 0, 1, 1], [], []>} : vector<4x256xbf16>, vector<256x128xbf16>, vector<4x128xf32> -> vector<4x128xf32>
    %48 = arith.addf %42, %47 : vector<4x128xf32>
    %c0_48 = arith.constant 0 : index
    %c8 = arith.constant 8 : index
    %c0_49 = arith.constant 0 : index
    %49 = vector.load %arg1[%c0_48, %c8, %c0_49] : memref<1x19x256xbf16, #tpu.memory_space<vmem>>, vector<1x4x256xbf16>
    %50 = vector.shape_cast %49 : vector<1x4x256xbf16> to vector<4x256xbf16>
    %c8_50 = arith.constant 8 : index
    %c0_51 = arith.constant 0 : index
    %c0_52 = arith.constant 0 : index
    %51 = vector.load %arg2[%c8_50, %c0_51, %c0_52] : memref<16x256x128xbf16, #tpu.memory_space<vmem>>, vector<1x256x128xbf16>
    %52 = vector.shape_cast %51 : vector<1x256x128xbf16> to vector<256x128xbf16>
    %cst_53 = arith.constant dense<0.000000e+00> : vector<4x128xf32>
    %53 = tpu.matmul %50, %52, %cst_53 {dimension_numbers = #tpu.dot_dimension_numbers<[1], [0], [0], [1], [0, 0, 1, 1], [], []>} : vector<4x256xbf16>, vector<256x128xbf16>, vector<4x128xf32> -> vector<4x128xf32>
    %54 = arith.addf %48, %53 : vector<4x128xf32>
    %c0_54 = arith.constant 0 : index
    %c9 = arith.constant 9 : index
    %c0_55 = arith.constant 0 : index
    %55 = vector.load %arg1[%c0_54, %c9, %c0_55] : memref<1x19x256xbf16, #tpu.memory_space<vmem>>, vector<1x4x256xbf16>
    %56 = vector.shape_cast %55 : vector<1x4x256xbf16> to vector<4x256xbf16>
    %c9_56 = arith.constant 9 : index
    %c0_57 = arith.constant 0 : index
    %c0_58 = arith.constant 0 : index
    %57 = vector.load %arg2[%c9_56, %c0_57, %c0_58] : memref<16x256x128xbf16, #tpu.memory_space<vmem>>, vector<1x256x128xbf16>
    %58 = vector.shape_cast %57 : vector<1x256x128xbf16> to vector<256x128xbf16>
    %cst_59 = arith.constant dense<0.000000e+00> : vector<4x128xf32>
    %59 = tpu.matmul %56, %58, %cst_59 {dimension_numbers = #tpu.dot_dimension_numbers<[1], [0], [0], [1], [0, 0, 1, 1], [], []>} : vector<4x256xbf16>, vector<256x128xbf16>, vector<4x128xf32> -> vector<4x128xf32>
    %60 = arith.addf %54, %59 : vector<4x128xf32>
    %c0_60 = arith.constant 0 : index
    %c10 = arith.constant 10 : index
    %c0_61 = arith.constant 0 : index
    %61 = vector.load %arg1[%c0_60, %c10, %c0_61] : memref<1x19x256xbf16, #tpu.memory_space<vmem>>, vector<1x4x256xbf16>
    %62 = vector.shape_cast %61 : vector<1x4x256xbf16> to vector<4x256xbf16>
    %c10_62 = arith.constant 10 : index
    %c0_63 = arith.constant 0 : index
    %c0_64 = arith.constant 0 : index
    %63 = vector.load %arg2[%c10_62, %c0_63, %c0_64] : memref<16x256x128xbf16, #tpu.memory_space<vmem>>, vector<1x256x128xbf16>
    %64 = vector.shape_cast %63 : vector<1x256x128xbf16> to vector<256x128xbf16>
    %cst_65 = arith.constant dense<0.000000e+00> : vector<4x128xf32>
    %65 = tpu.matmul %62, %64, %cst_65 {dimension_numbers = #tpu.dot_dimension_numbers<[1], [0], [0], [1], [0, 0, 1, 1], [], []>} : vector<4x256xbf16>, vector<256x128xbf16>, vector<4x128xf32> -> vector<4x128xf32>
    %66 = arith.addf %60, %65 : vector<4x128xf32>
    %c0_66 = arith.constant 0 : index
    %c11 = arith.constant 11 : index
    %c0_67 = arith.constant 0 : index
    %67 = vector.load %arg1[%c0_66, %c11, %c0_67] : memref<1x19x256xbf16, #tpu.memory_space<vmem>>, vector<1x4x256xbf16>
    %68 = vector.shape_cast %67 : vector<1x4x256xbf16> to vector<4x256xbf16>
    %c11_68 = arith.constant 11 : index
    %c0_69 = arith.constant 0 : index
    %c0_70 = arith.constant 0 : index
    %69 = vector.load %arg2[%c11_68, %c0_69, %c0_70] : memref<16x256x128xbf16, #tpu.memory_space<vmem>>, vector<1x256x128xbf16>
    %70 = vector.shape_cast %69 : vector<1x256x128xbf16> to vector<256x128xbf16>
    %cst_71 = arith.constant dense<0.000000e+00> : vector<4x128xf32>
    %71 = tpu.matmul %68, %70, %cst_71 {dimension_numbers = #tpu.dot_dimension_numbers<[1], [0], [0], [1], [0, 0, 1, 1], [], []>} : vector<4x256xbf16>, vector<256x128xbf16>, vector<4x128xf32> -> vector<4x128xf32>
    %72 = arith.addf %66, %71 : vector<4x128xf32>
    %c0_72 = arith.constant 0 : index
    %c12 = arith.constant 12 : index
    %c0_73 = arith.constant 0 : index
    %73 = vector.load %arg1[%c0_72, %c12, %c0_73] : memref<1x19x256xbf16, #tpu.memory_space<vmem>>, vector<1x4x256xbf16>
    %74 = vector.shape_cast %73 : vector<1x4x256xbf16> to vector<4x256xbf16>
    %c12_74 = arith.constant 12 : index
    %c0_75 = arith.constant 0 : index
    %c0_76 = arith.constant 0 : index
    %75 = vector.load %arg2[%c12_74, %c0_75, %c0_76] : memref<16x256x128xbf16, #tpu.memory_space<vmem>>, vector<1x256x128xbf16>
    %76 = vector.shape_cast %75 : vector<1x256x128xbf16> to vector<256x128xbf16>
    %cst_77 = arith.constant dense<0.000000e+00> : vector<4x128xf32>
    %77 = tpu.matmul %74, %76, %cst_77 {dimension_numbers = #tpu.dot_dimension_numbers<[1], [0], [0], [1], [0, 0, 1, 1], [], []>} : vector<4x256xbf16>, vector<256x128xbf16>, vector<4x128xf32> -> vector<4x128xf32>
    %78 = arith.addf %72, %77 : vector<4x128xf32>
    %c0_78 = arith.constant 0 : index
    %c13 = arith.constant 13 : index
    %c0_79 = arith.constant 0 : index
    %79 = vector.load %arg1[%c0_78, %c13, %c0_79] : memref<1x19x256xbf16, #tpu.memory_space<vmem>>, vector<1x4x256xbf16>
    %80 = vector.shape_cast %79 : vector<1x4x256xbf16> to vector<4x256xbf16>
    %c13_80 = arith.constant 13 : index
    %c0_81 = arith.constant 0 : index
    %c0_82 = arith.constant 0 : index
    %81 = vector.load %arg2[%c13_80, %c0_81, %c0_82] : memref<16x256x128xbf16, #tpu.memory_space<vmem>>, vector<1x256x128xbf16>
    %82 = vector.shape_cast %81 : vector<1x256x128xbf16> to vector<256x128xbf16>
    %cst_83 = arith.constant dense<0.000000e+00> : vector<4x128xf32>
    %83 = tpu.matmul %80, %82, %cst_83 {dimension_numbers = #tpu.dot_dimension_numbers<[1], [0], [0], [1], [0, 0, 1, 1], [], []>} : vector<4x256xbf16>, vector<256x128xbf16>, vector<4x128xf32> -> vector<4x128xf32>
    %84 = arith.addf %78, %83 : vector<4x128xf32>
    %c0_84 = arith.constant 0 : index
    %c14 = arith.constant 14 : index
    %c0_85 = arith.constant 0 : index
    %85 = vector.load %arg1[%c0_84, %c14, %c0_85] : memref<1x19x256xbf16, #tpu.memory_space<vmem>>, vector<1x4x256xbf16>
    %86 = vector.shape_cast %85 : vector<1x4x256xbf16> to vector<4x256xbf16>
    %c14_86 = arith.constant 14 : index
    %c0_87 = arith.constant 0 : index
    %c0_88 = arith.constant 0 : index
    %87 = vector.load %arg2[%c14_86, %c0_87, %c0_88] : memref<16x256x128xbf16, #tpu.memory_space<vmem>>, vector<1x256x128xbf16>
    %88 = vector.shape_cast %87 : vector<1x256x128xbf16> to vector<256x128xbf16>
    %cst_89 = arith.constant dense<0.000000e+00> : vector<4x128xf32>
    %89 = tpu.matmul %86, %88, %cst_89 {dimension_numbers = #tpu.dot_dimension_numbers<[1], [0], [0], [1], [0, 0, 1, 1], [], []>} : vector<4x256xbf16>, vector<256x128xbf16>, vector<4x128xf32> -> vector<4x128xf32>
    %90 = arith.addf %84, %89 : vector<4x128xf32>
    %c0_90 = arith.constant 0 : index
    %c15 = arith.constant 15 : index
    %c0_91 = arith.constant 0 : index
    %91 = vector.load %arg1[%c0_90, %c15, %c0_91] : memref<1x19x256xbf16, #tpu.memory_space<vmem>>, vector<1x4x256xbf16>
    %92 = vector.shape_cast %91 : vector<1x4x256xbf16> to vector<4x256xbf16>
    %c15_92 = arith.constant 15 : index
    %c0_93 = arith.constant 0 : index
    %c0_94 = arith.constant 0 : index
    %93 = vector.load %arg2[%c15_92, %c0_93, %c0_94] : memref<16x256x128xbf16, #tpu.memory_space<vmem>>, vector<1x256x128xbf16>
    %94 = vector.shape_cast %93 : vector<1x256x128xbf16> to vector<256x128xbf16>
    %cst_95 = arith.constant dense<0.000000e+00> : vector<4x128xf32>
    %95 = tpu.matmul %92, %94, %cst_95 {dimension_numbers = #tpu.dot_dimension_numbers<[1], [0], [0], [1], [0, 0, 1, 1], [], []>} : vector<4x256xbf16>, vector<256x128xbf16>, vector<4x128xf32> -> vector<4x128xf32>
    %96 = arith.addf %90, %95 : vector<4x128xf32>
    %c0_96 = arith.constant 0 : index
    %c0_97 = arith.constant 0 : index
    %97 = vector.load %arg3[%c0_96, %c0_97] : memref<1x128xf32, #tpu.memory_space<vmem>>, vector<1x128xf32>
    %98 = vector.broadcast %97 : vector<1x128xf32> to vector<4x128xf32>
    %99 = arith.addf %96, %98 : vector<4x128xf32>
    %c0_98 = arith.constant 0 : index
    %c0_99 = arith.constant 0 : index
    %c0_100 = arith.constant 0 : index
    %100 = vector.load %arg4[%c0_98, %c0_99, %c0_100] : memref<1x4x128xf32, #tpu.memory_space<vmem>>, vector<1x4x128xf32>
    %101 = vector.shape_cast %100 : vector<1x4x128xf32> to vector<4x128xf32>
    %102 = vector.shape_cast %99 : vector<4x128xf32> to vector<1x4x128xf32>
    tpu.vector_store %arg4[%c0_98, %c0_99, %c0_100], %102 {strides = array<i32>} : memref<1x4x128xf32, #tpu.memory_space<vmem>>, vector<1x4x128xf32>,
    return
  }
  func.func @transform_0(%arg0: i32) -> (i32, i32, i32) {
    %c0_i32 = arith.constant 0 : i32
    %c0_i32_0 = arith.constant 0 : i32
    %c0_i32_1 = arith.constant 0 : i32
    return %arg0, %c0_i32, %c0_i32_0 : i32, i32, i32
  }
  func.func @transform_1(%arg0: i32) -> (i32, i32, i32) {
    %c0_i32 = arith.constant 0 : i32
    %c0_i32_0 = arith.constant 0 : i32
    %c0_i32_1 = arith.constant 0 : i32
    %c0_i32_2 = arith.constant 0 : i32
    return %c0_i32, %c0_i32_0, %c0_i32_1 : i32, i32, i32
  }
  func.func @transform_2(%arg0: i32) -> (i32, i32) {
    %c0_i32 = arith.constant 0 : i32
    %c0_i32_0 = arith.constant 0 : i32
    %c0_i32_1 = arith.constant 0 : i32
    return %c0_i32, %c0_i32_0 : i32, i32
  }
  func.func @transform_3(%arg0: i32) -> (i32, i32, i32) {
    %c0_i32 = arith.constant 0 : i32
    %c0_i32_0 = arith.constant 0 : i32
    %c0_i32_1 = arith.constant 0 : i32
    return %arg0, %c0_i32, %c0_i32_0 : i32, i32, i32
  }
}

</mosaic_0001>

<llo_original>
// kernel: patch_discriminator.4
$region0: #{patch_discriminator.4}
  #allocation0 [shape = 'u32[]', space=smem, size = 0x4, offset = 0x4, fixed_abs, tag = 'smem constant byte address 0x4 - core index']
  #allocation1 [shape = 'u32[144,128]{1,0:T(1,128)}', space=vmem, size = 0x12000, scoped, tag = 'internal scratch']
  %s0 = inlined_call_operand.vmem [shape: bf16[512,48], index: 0, kind: input, shape index: {}]
  %s1 = inlined_call_operand.vmem [shape: bf16[48,64], index: 1, kind: input, shape index: {}]
  %s2 = inlined_call_operand.vmem [shape: f32[1,64], index: 2, kind: input, shape index: {}]
  %s3 = inlined_call_operand.vmem [shape: bf16[512,64], index: 3, kind: output, shape index: {}]
  %s4 = sld [smem:[#allocation0]]
  $region45: #{patch_discriminator.4} parent=0
    _
  %s6 = ssub.s32 1, %s4
  %s7 = scalar_select 0, %s6, %s4
  loop: start=0, step=1, limit=4
  $region2: #{patch_discriminator.4} parent=0 // loop_pre_header
    _
  $region3: #{patch_discriminator.4} parent=0 // loop_header
    %s9 = sphi 0, %s13
    %p10 = scmp.ge.s32.totalorder %s9, 4
    %s19 = sphi 0, %s21
    %s22 = sphi 0, %s19
    %s23 = sphi 0, %s22
    %s39 = sphi 0, %s23
    %s43 = sphi 0, %s43
    %s45 = sphi 0, %s43
    %s46 = sphi 0, %s45
    %s60 = sphi 0, %s46
    %s64 = sphi 0, %s64
    %s66 = sphi 0, %s64
    %s67 = sphi 0, %s66
    %s81 = sphi 0, %s67
    %s87 = sphi 0, %s89
    %s90 = sphi 0, %s87
    %s91 = sphi 0, %s90
    %s107 = sphi 0, %s91
  $region4: #{patch_discriminator.4} parent=0 // loop_header_branch
    %12 = sbr.rel (%p10) target = $region8
  $region5: #{patch_discriminator.4} parent=0 // loop_body
    %s14 = ssub.s32 %s9, 1
    %s15 = ssub.s32 %s9, 2
    %s16 = sadd.s32 %s9, 1
    %s17 = ssub.s32 %s9, %s16
    %p18 = scmp.eq.s32.totalorder %s17, 0
    %s20 = sadd.s32 %s19, 1
    %s21 = scalar_select %p18, %s19, %s20
    %p24 = pneg %p18
    %p25 = scmp.eq.s32.totalorder %s9, 1
    %p26 = por %p24, %p25
    %p27 = scmp.ne.s32.totalorder %s19, %s22
    %p28 = scmp.eq.s32.totalorder %s9, 0
    %p29 = por %p27, %p28
    %p30 = scmp.ne.s32.totalorder %s19, %s22
    %p31 = scmp.eq.s32.totalorder %s14, 1
    %p32 = por %p30, %p31
    %p33 = scmp.ne.s32.totalorder %s22, %s23
    %p34 = scmp.eq.s32.totalorder %s14, 0
    %p35 = por %p33, %p34
    %p36 = scmp.ne.s32.totalorder %s22, %s23
    %p37 = scmp.eq.s32.totalorder %s15, 1
    %p38 = por %p36, %p37
    %p40 = scmp.ne.s32.totalorder %s23, %s39
    %p41 = scmp.eq.s32.totalorder %s15, 0
    %p42 = por %p40, %p41
    %s44 = sadd.s32 %s43, 1
    %p47 = scmp.eq.s32.totalorder %s9, 1
    %p48 = scmp.ne.s32.totalorder %s43, %s45
    %p49 = scmp.eq.s32.totalorder %s9, 0
    %p50 = por %p48, %p49
    %p51 = scmp.ne.s32.totalorder %s43, %s45
    %p52 = scmp.eq.s32.totalorder %s14, 1
    %p53 = por %p51, %p52
    %p54 = scmp.ne.s32.totalorder %s45, %s46
    %p55 = scmp.eq.s32.totalorder %s14, 0
    %p56 = por %p54, %p55
    %p57 = scmp.ne.s32.totalorder %s45, %s46
    %p58 = scmp.eq.s32.totalorder %s15, 1
    %p59 = por %p57, %p58
    %p61 = scmp.ne.s32.totalorder %s46, %s60
    %p62 = scmp.eq.s32.totalorder %s15, 0
    %p63 = por %p61, %p62
    %s65 = sadd.s32 %s64, 1
    %p68 = scmp.eq.s32.totalorder %s9, 1
    %p69 = scmp.ne.s32.totalorder %s64, %s66
    %p70 = scmp.eq.s32.totalorder %s9, 0
    %p71 = por %p69, %p70
    %p72 = scmp.ne.s32.totalorder %s64, %s66
    %p73 = scmp.eq.s32.totalorder %s14, 1
    %p74 = por %p72, %p73
    %p75 = scmp.ne.s32.totalorder %s66, %s67
    %p76 = scmp.eq.s32.totalorder %s14, 0
    %p77 = por %p75, %p76
    %p78 = scmp.ne.s32.totalorder %s66, %s67
    %p79 = scmp.eq.s32.totalorder %s15, 1
    %p80 = por %p78, %p79
    %p82 = scmp.ne.s32.totalorder %s67, %s81
    %p83 = scmp.eq.s32.totalorder %s15, 0
    %p84 = por %p82, %p83
    %s85 = ssub.s32 %s9, %s16
    %p86 = scmp.eq.s32.totalorder %s85, 0
    %s88 = sadd.s32 %s87, 1
    %s89 = scalar_select %p86, %s87, %s88
    %p92 = pneg %p86
    %p93 = scmp.eq.s32.totalorder %s9, 1
    %p94 = por %p92, %p93
    %p95 = scmp.ne.s32.totalorder %s87, %s90
    %p96 = scmp.eq.s32.totalorder %s9, 0
    %p97 = por %p95, %p96
    %p98 = scmp.ne.s32.totalorder %s87, %s90
    %p99 = scmp.eq.s32.totalorder %s14, 1
    %p100 = por %p98, %p99
    %p101 = scmp.ne.s32.totalorder %s90, %s91
    %p102 = scmp.eq.s32.totalorder %s14, 0
    %p103 = por %p101, %p102
    %p104 = scmp.ne.s32.totalorder %s90, %s91
    %p105 = scmp.eq.s32.totalorder %s15, 1
    %p106 = por %p104, %p105
    %p108 = scmp.ne.s32.totalorder %s91, %s107
    %p109 = scmp.eq.s32.totalorder %s15, 0
    %p110 = por %p108, %p109
    %p111 = scmp.le.s32.totalorder 1, %s9
    %p112 = scmp.lt.s32.totalorder %s9, 3
    %p113 = pnand %p111, %p112
    %p114 = pneg %p113
    // Predicated region
    $region9: #{patch_discriminator.4} parent=5 // pred_check
      _
    $region10: #{patch_discriminator.4} parent=5 // pred_check_branch
      %116 = sbr.rel (%p113) target = $region12
    $region11: #{patch_discriminator.4} parent=5 // pred_region
      %s117 = ssub.s32 %s9, 1
      // Predicated region
      $region13: #{patch_discriminator.4} parent=11 // pred_check
        %p118 = pneg %p56
      $region14: #{patch_discriminator.4} parent=11 // pred_check_branch
        %120 = sbr.rel (%p118) target = $region16
      $region15: #{patch_discriminator.4} parent=11 // pred_region
        _
      $region16: #{patch_discriminator.4} parent=11 // pred_fallthru
        _
      // Predicated region
      $region17: #{patch_discriminator.4} parent=11 // pred_check
        %p121 = pneg %p77
      $region18: #{patch_discriminator.4} parent=11 // pred_check_branch
        %123 = sbr.rel (%p121) target = $region20
      $region19: #{patch_discriminator.4} parent=11 // pred_region
        _
      $region20: #{patch_discriminator.4} parent=11 // pred_fallthru
        _
    $region12: #{patch_discriminator.4} parent=5 // pred_fallthru
      _
    %p124 = scmp.lt.s32.totalorder %s9, 2
    // Predicated region
    $region21: #{patch_discriminator.4} parent=5 // pred_check
      %p125 = pneg %p124
    $region22: #{patch_discriminator.4} parent=5 // pred_check_branch
      %127 = sbr.rel (%p125) target = $region24
    $region23: #{patch_discriminator.4} parent=5 // pred_region
      // Predicated region
      $region25: #{patch_discriminator.4} parent=23 // pred_check
        %p128 = pneg %p29
      $region26: #{patch_discriminator.4} parent=23 // pred_check_branch
        %130 = sbr.rel (%p128) target = $region28
      $region27: #{patch_discriminator.4} parent=23 // pred_region
        %s131 = smul.u32 32, %s9
        %p132 = scmp.lt.s32.totalorder %s131, 63
        %s133 = scalar_select %p132, %s131, 63
        %s134 = smul.addr %s133, 4
        %s135 = scalar_lea.vmem %s0, %s134
        %s136 = smul.u32 32, %s9
      $region28: #{patch_discriminator.4} parent=23 // pred_fallthru
        _
    $region24: #{patch_discriminator.4} parent=5 // pred_fallthru
      _
    %p137 = scmp.le.s32.totalorder 1, %s9
    %p138 = scmp.lt.s32.totalorder %s9, 3
    %p139 = pnand %p137, %p138
    %p140 = pneg %p139
    // Predicated region
    $region29: #{patch_discriminator.4} parent=5 // pred_check
      _
    $region30: #{patch_discriminator.4} parent=5 // pred_check_branch
      %142 = sbr.rel (%p139) target = $region32
    $region31: #{patch_discriminator.4} parent=5 // pred_region
      %s143 = ssub.s32 %s9, 1
      %s144 = smul.u32 32, %s14
      %p145 = scmp.lt.s32.totalorder %s144, 63
      %s146 = scalar_select %p145, %s144, 63
      %s147 = smul.addr %s146, 4
      %s148 = scalar_lea.vmem %s0, %s147
      %p149 = pneg %p35
      %p150 = pneg %p32
      %p151 = pneg %p56
      %p152 = pneg %p53
      %p153 = pneg %p77
      %p154 = pneg %p74
      %p155 = pneg %p103
      %p156 = pneg %p100
      %s157 = smul.u32 32, %s14
      %p158 = scmp.lt.s32.totalorder %s157, 63
      %s159 = scalar_select %p158, %s157, 63
      %s160 = smul.addr %s159, 4
      %s161 = scalar_lea.vmem %s3, %s160
      %s162 = smul.u32 32, %s14
      %p163 = scmp.lt.s32.totalorder %s162, 63
      %s164 = scalar_select %p163, %s162, 63
      %s165 = smul.addr %s164, 4
      %s166 = scalar_lea.vmem %s0, %s165
      %s167 = smul.u32 32, %s14
      %s168 = smul.u32 32, %s14
      %p169 = scmp.lt.s32.totalorder %s168, 63
      %s170 = scalar_select %p169, %s168, 63
      %s171 = smul.addr %s170, 4
      %s172 = scalar_lea.vmem %s3, %s171
      %s173 = smul.u32 32, %s14
      %v175 = vld [vmem:[%s166] sm:$0xf]
      %v176 = vld [vmem:[%s166 + $0x4] sm:$0xf]
      %v177 = vld [vmem:[%s166 + $0x8] sm:$0xf]
      %v178 = vld [vmem:[%s166 + $0xc] sm:$0xf]
      %v179 = vld [vmem:[%s166 + $0x10] sm:$0xf]
      %v180 = vld [vmem:[%s166 + $0x14] sm:$0xf]
      %v181 = vld [vmem:[%s166 + $0x18] sm:$0xf]
      %v182 = vld [vmem:[%s166 + $0x1c] sm:$0xf]
      %v183 = vld [vmem:[%s166 + $0x20] sm:$0xf]
      %v184 = vld [vmem:[%s166 + $0x24] sm:$0xf]
      %v185 = vld [vmem:[%s166 + $0x28] sm:$0xf]
      %v186 = vld [vmem:[%s166 + $0x2c] sm:$0xf]
      %v187 = vld [vmem:[%s166 + $0x30] sm:$0xf]
      %v188 = vld [vmem:[%s166 + $0x34] sm:$0xf]
      %v189 = vld [vmem:[%s166 + $0x38] sm:$0xf]
      %v190 = vld [vmem:[%s166 + $0x3c] sm:$0xf]
      %v191 = vld [vmem:[%s166 + $0x40] sm:$0xf]
      %v192 = vld [vmem:[%s166 + $0x44] sm:$0xf]
      %v193 = vld [vmem:[%s166 + $0x48] sm:$0xf]
      %v194 = vld [vmem:[%s166 + $0x4c] sm:$0xf]
      %v195 = vld [vmem:[%s166 + $0x50] sm:$0xf]
      %v196 = vld [vmem:[%s166 + $0x54] sm:$0xf]
      %v197 = vld [vmem:[%s166 + $0x58] sm:$0xf]
      %v198 = vld [vmem:[%s166 + $0x5c] sm:$0xf]
      %v199 = vld [vmem:[%s166 + $0x60] sm:$0xf]
      %v200 = vld [vmem:[%s166 + $0x64] sm:$0xf]
      %v201 = vld [vmem:[%s166 + $0x68] sm:$0xf]
      %v202 = vld [vmem:[%s166 + $0x6c] sm:$0xf]
      %v203 = vld [vmem:[%s166 + $0x70] sm:$0xf]
      %v204 = vld [vmem:[%s166 + $0x74] sm:$0xf]
      %v205 = vld [vmem:[%s166 + $0x78] sm:$0xf]
      %v206 = vld [vmem:[%s166 + $0x7c] sm:$0xf]
      %v207 = vld [vmem:[%s1] sm:$0xf]
      %v208 = vld [vmem:[%s1 + $0x4] sm:$0xf]
      %v209 = vld [vmem:[%s1 + $0x8] sm:$0xf]
      %v210 = vld [vmem:[%s1 + $0xc] sm:$0xf]
      %v211 = vld [vmem:[%s1 + $0x10] sm:$0xf]
      %v212 = vld [vmem:[%s1 + $0x14] sm:$0xf]
      %v213 = vld [vmem:[%s2] sm:$0x1]
      %v215 = vlaneseq
      %v216 = vshrl.u32 %v215, 7
      %v217 = vsub.s32 0, %v216
      %v218 = vrot.slane %v213, %v217
      %v252 = vunpack.c.l.b16 %v175
      %v253 = vunpack.c.l.b16 %v176
      %v254 = vunpack.c.l.b16 %v177
      %v255 = vunpack.c.l.b16 %v178
      %v256 = vunpack.c.l.b16 %v179
      %v257 = vunpack.c.l.b16 %v180
      %v258 = vunpack.c.l.b16 %v181
      %v259 = vunpack.c.l.b16 %v182
      %v260 = vunpack.c.l.b16 %v183
      %v261 = vunpack.c.l.b16 %v184
      %v262 = vunpack.c.l.b16 %v185
      %v263 = vunpack.c.l.b16 %v186
      %v264 = vunpack.c.l.b16 %v187
      %v265 = vunpack.c.l.b16 %v188
      %v266 = vunpack.c.l.b16 %v189
      %v267 = vunpack.c.l.b16 %v190
      %v268 = vunpack.c.l.b16 %v191
      %v269 = vunpack.c.l.b16 %v192
      %v270 = vunpack.c.l.b16 %v193
      %v271 = vunpack.c.l.b16 %v194
      %v272 = vunpack.c.l.b16 %v195
      %v273 = vunpack.c.l.b16 %v196
      %v274 = vunpack.c.l.b16 %v197
      %v275 = vunpack.c.l.b16 %v198
      %v276 = vunpack.c.l.b16 %v199
      %v277 = vunpack.c.l.b16 %v200
      %v278 = vunpack.c.l.b16 %v201
      %v279 = vunpack.c.l.b16 %v202
      %v280 = vunpack.c.l.b16 %v203
      %v281 = vunpack.c.l.b16 %v204
      %v282 = vunpack.c.l.b16 %v205
      %v283 = vunpack.c.l.b16 %v206
      %v284 = vpack.c.b16 %v253, %v252
      %v285 = vpack.c.b16 %v255, %v254
      %v286 = vpack.c.b16 %v257, %v256
      %v287 = vpack.c.b16 %v259, %v258
      %v288 = vpack.c.b16 %v261, %v260
      %v289 = vpack.c.b16 %v263, %v262
      %v290 = vpack.c.b16 %v265, %v264
      %v291 = vpack.c.b16 %v267, %v266
      %v292 = vpack.c.b16 %v269, %v268
      %v293 = vpack.c.b16 %v271, %v270
      %v294 = vpack.c.b16 %v273, %v272
      %v295 = vpack.c.b16 %v275, %v274
      %v296 = vpack.c.b16 %v277, %v276
      %v297 = vpack.c.b16 %v279, %v278
      %v298 = vpack.c.b16 %v281, %v280
      %v299 = vpack.c.b16 %v283, %v282
      %v306 = vunpack.c.l.b16 %v207
      %v307 = vunpack.c.l.b16 %v208
      %v308 = vunpack.c.l.b16 %v209
      %v309 = vunpack.c.l.b16 %v210
      %v310 = vunpack.c.l.b16 %v211
      %v311 = vunpack.c.l.b16 %v212
      %v312 = vpack.c.b16 %v307, %v306
      %v313 = vpack.c.b16 %v309, %v308
      %v314 = vpack.c.b16 %v311, %v310
      %vm318 = vcmask 392192
      %v320 = vsel %vm318, %v284, 0
      %v323 = vsel %vm318, %v285, 0
      %v326 = vsel %vm318, %v286, 0
      %v329 = vsel %vm318, %v287, 0
      %v332 = vsel %vm318, %v288, 0
      %v335 = vsel %vm318, %v289, 0
      %v338 = vsel %vm318, %v290, 0
      %v341 = vsel %vm318, %v291, 0
      %v344 = vsel %vm318, %v292, 0
      %v347 = vsel %vm318, %v293, 0
      %v350 = vsel %vm318, %v294, 0
      %v353 = vsel %vm318, %v295, 0
      %v356 = vsel %vm318, %v296, 0
      %v359 = vsel %vm318, %v297, 0
      %v362 = vsel %vm318, %v298, 0
      %v365 = vsel %vm318, %v299, 0
      %367 = vmatprep.subr.bf16.mxu0 0
      %368 = vmatpush1.bf16.msra.mxu0 %v312
      %369 = vmatprep.subr.bf16.mxu0 0
      %370 = vmatpush1.bf16.msra.mxu0 %v313
      %371 = vmatprep.subr.bf16.mxu0 0
      %372 = vmatpush1.bf16.msra.mxu0 %v314
      %373 = vmatprep.subr.bf16.mxu0 0
      %374 = vmatpush1.bf16.msra.mxu0 0
      %375 = vmatprep.subr.bf16.mxu0 0
      %376 = vmatpush1.bf16.msra.mxu0 0
      %377 = vmatprep.subr.bf16.mxu0 0
      %378 = vmatpush1.bf16.msra.mxu0 0
      %379 = vmatprep.subr.bf16.mxu0 0
      %380 = vmatpush1.bf16.msra.mxu0 0
      %381 = vmatprep.subr.bf16.mxu0 0
      %382 = vmatpush1.bf16.msra.mxu0 0
      %383 = vmatprep.subr.bf16.mxu0 0
      %384 = vmatpush1.bf16.msra.mxu0 0
      %385 = vmatprep.subr.bf16.mxu0 0
      %386 = vmatpush1.bf16.msra.mxu0 0
      %387 = vmatprep.subr.bf16.mxu0 0
      %388 = vmatpush1.bf16.msra.mxu0 0
      %389 = vmatprep.subr.bf16.mxu0 0
      %390 = vmatpush1.bf16.msra.mxu0 0
      %391 = vmatprep.subr.bf16.mxu0 0
      %392 = vmatpush1.bf16.msra.mxu0 0
      %393 = vmatprep.subr.bf16.mxu0 0
      %394 = vmatpush1.bf16.msra.mxu0 0
      %395 = vmatprep.subr.bf16.mxu0 0
      %396 = vmatpush1.bf16.msra.mxu0 0
      %397 = vmatprep.subr.bf16.mxu0 0
      %398 = vmatpush1.bf16.msra.mxu0 0
      %399 = vmatprep.mubr.bf16.mxu0 0
      %400 = vmatmul.mubr.bf16.gmra.mrb[0].mxu0 %v320
      %v401 = vpop.f32.mrb[0].mxu0
      %v402 = vadd.f32 %v218, %v401
      %v403 = vpop.f32.mrb[0].mxu0
      %v404 = vpop.f32.mrb[0].mxu0
      %v405 = vadd.f32 %v218, %v404
      %v406 = vpop.f32.mrb[0].mxu0
      %407 = vmatprep.mubr.bf16.mxu0 0
      %408 = vmatmul.mubr.bf16.gmra.mrb[0].mxu0 %v323
      %v409 = vpop.f32.mrb[0].mxu0
      %v410 = vadd.f32 %v218, %v409
      %v411 = vpop.f32.mrb[0].mxu0
      %v412 = vpop.f32.mrb[0].mxu0
      %v413 = vadd.f32 %v218, %v412
      %v414 = vpop.f32.mrb[0].mxu0
      %415 = vmatprep.mubr.bf16.mxu0 0
      %416 = vmatmul.mubr.bf16.gmra.mrb[0].mxu0 %v326
      %v417 = vpop.f32.mrb[0].mxu0
      %v418 = vadd.f32 %v218, %v417
      %v419 = vpop.f32.mrb[0].mxu0
      %v420 = vpop.f32.mrb[0].mxu0
      %v421 = vadd.f32 %v218, %v420
      %v422 = vpop.f32.mrb[0].mxu0
      %423 = vmatprep.mubr.bf16.mxu0 0
      %424 = vmatmul.mubr.bf16.gmra.mrb[0].mxu0 %v329
      %v425 = vpop.f32.mrb[0].mxu0
      %v426 = vadd.f32 %v218, %v425
      %v427 = vpop.f32.mrb[0].mxu0
      %v428 = vpop.f32.mrb[0].mxu0
      %v429 = vadd.f32 %v218, %v428
      %v430 = vpop.f32.mrb[0].mxu0
      %431 = vmatprep.mubr.bf16.mxu0 0
      %432 = vmatmul.mubr.bf16.gmra.mrb[0].mxu0 %v332
      %v433 = vpop.f32.mrb[0].mxu0
      %v434 = vadd.f32 %v218, %v433
      %v435 = vpop.f32.mrb[0].mxu0
      %v436 = vpop.f32.mrb[0].mxu0
      %v437 = vadd.f32 %v218, %v436
      %v438 = vpop.f32.mrb[0].mxu0
      %439 = vmatprep.mubr.bf16.mxu0 0
      %440 = vmatmul.mubr.bf16.gmra.mrb[0].mxu0 %v335
      %v441 = vpop.f32.mrb[0].mxu0
      %v442 = vadd.f32 %v218, %v441
      %v443 = vpop.f32.mrb[0].mxu0
      %v444 = vpop.f32.mrb[0].mxu0
      %v445 = vadd.f32 %v218, %v444
      %v446 = vpop.f32.mrb[0].mxu0
      %447 = vmatprep.mubr.bf16.mxu0 0
      %448 = vmatmul.mubr.bf16.gmra.mrb[0].mxu0 %v338
      %v449 = vpop.f32.mrb[0].mxu0
      %v450 = vadd.f32 %v218, %v449
      %v451 = vpop.f32.mrb[0].mxu0
      %v452 = vpop.f32.mrb[0].mxu0
      %v453 = vadd.f32 %v218, %v452
      %v454 = vpop.f32.mrb[0].mxu0
      %455 = vmatprep.mubr.bf16.mxu0 0
      %456 = vmatmul.mubr.bf16.gmra.mrb[0].mxu0 %v341
      %v457 = vpop.f32.mrb[0].mxu0
      %v458 = vadd.f32 %v218, %v457
      %v459 = vpop.f32.mrb[0].mxu0
      %v460 = vpop.f32.mrb[0].mxu0
      %v461 = vadd.f32 %v218, %v460
      %v462 = vpop.f32.mrb[0].mxu0
      %463 = vmatprep.mubr.bf16.mxu0 0
      %464 = vmatmul.mubr.bf16.gmra.mrb[0].mxu0 %v344
      %v465 = vpop.f32.mrb[0].mxu0
      %v466 = vadd.f32 %v218, %v465
      %v467 = vpop.f32.mrb[0].mxu0
      %v468 = vpop.f32.mrb[0].mxu0
      %v469 = vadd.f32 %v218, %v468
      %v470 = vpop.f32.mrb[0].mxu0
      %471 = vmatprep.mubr.bf16.mxu0 0
      %472 = vmatmul.mubr.bf16.gmra.mrb[0].mxu0 %v347
      %v473 = vpop.f32.mrb[0].mxu0
      %v474 = vadd.f32 %v218, %v473
      %v475 = vpop.f32.mrb[0].mxu0
      %v476 = vpop.f32.mrb[0].mxu0
      %v477 = vadd.f32 %v218, %v476
      %v478 = vpop.f32.mrb[0].mxu0
      %479 = vmatprep.mubr.bf16.mxu0 0
      %480 = vmatmul.mubr.bf16.gmra.mrb[0].mxu0 %v350
      %v481 = vpop.f32.mrb[0].mxu0
      %v482 = vadd.f32 %v218, %v481
      %v483 = vpop.f32.mrb[0].mxu0
      %v484 = vpop.f32.mrb[0].mxu0
      %v485 = vadd.f32 %v218, %v484
      %v486 = vpop.f32.mrb[0].mxu0
      %487 = vmatprep.mubr.bf16.mxu0 0
      %488 = vmatmul.mubr.bf16.gmra.mrb[0].mxu0 %v353
      %v489 = vpop.f32.mrb[0].mxu0
      %v490 = vadd.f32 %v218, %v489
      %v491 = vpop.f32.mrb[0].mxu0
      %v492 = vpop.f32.mrb[0].mxu0
      %v493 = vadd.f32 %v218, %v492
      %v494 = vpop.f32.mrb[0].mxu0
      %495 = vmatprep.mubr.bf16.mxu0 0
      %496 = vmatmul.mubr.bf16.gmra.mrb[0].mxu0 %v356
      %v497 = vpop.f32.mrb[0].mxu0
      %v498 = vadd.f32 %v218, %v497
      %v499 = vpop.f32.mrb[0].mxu0
      %v500 = vpop.f32.mrb[0].mxu0
      %v501 = vadd.f32 %v218, %v500
      %v502 = vpop.f32.mrb[0].mxu0
      %503 = vmatprep.mubr.bf16.mxu0 0
      %504 = vmatmul.mubr.bf16.gmra.mrb[0].mxu0 %v359
      %v505 = vpop.f32.mrb[0].mxu0
      %v506 = vadd.f32 %v218, %v505
      %v507 = vpop.f32.mrb[0].mxu0
      %v508 = vpop.f32.mrb[0].mxu0
      %v509 = vadd.f32 %v218, %v508
      %v510 = vpop.f32.mrb[0].mxu0
      %511 = vmatprep.mubr.bf16.mxu0 0
      %512 = vmatmul.mubr.bf16.gmra.mrb[0].mxu0 %v362
      %v513 = vpop.f32.mrb[0].mxu0
      %v514 = vadd.f32 %v218, %v513
      %v515 = vpop.f32.mrb[0].mxu0
      %v516 = vpop.f32.mrb[0].mxu0
      %v517 = vadd.f32 %v218, %v516
      %v518 = vpop.f32.mrb[0].mxu0
      %519 = vmatprep.mubr.bf16.mxu0 0
      %520 = vmatmul.mubr.bf16.gmra.mrb[0].mxu0 %v365
      %v521 = vpop.f32.mrb[0].mxu0
      %v522 = vadd.f32 %v218, %v521
      %v523 = vpop.f32.mrb[0].mxu0
      %v524 = vpop.f32.mrb[0].mxu0
      %v525 = vadd.f32 %v218, %v524
      %v526 = vpop.f32.mrb[0].mxu0
      %527 = vdwg.mxu0
      %vm528 = vcmp.ge.f32.partialorder %v402, 0.0
      %vm529 = vcmp.ge.f32.partialorder %v405, 0.0
      %vm530 = vcmp.ge.f32.partialorder %v410, 0.0
      %vm531 = vcmp.ge.f32.partialorder %v413, 0.0
      %vm532 = vcmp.ge.f32.partialorder %v418, 0.0
      %vm533 = vcmp.ge.f32.partialorder %v421, 0.0
      %vm534 = vcmp.ge.f32.partialorder %v426, 0.0
      %vm535 = vcmp.ge.f32.partialorder %v429, 0.0
      %vm536 = vcmp.ge.f32.partialorder %v434, 0.0
      %vm537 = vcmp.ge.f32.partialorder %v437, 0.0
      %vm538 = vcmp.ge.f32.partialorder %v442, 0.0
      %vm539 = vcmp.ge.f32.partialorder %v445, 0.0
      %vm540 = vcmp.ge.f32.partialorder %v450, 0.0
      %vm541 = vcmp.ge.f32.partialorder %v453, 0.0
      %vm542 = vcmp.ge.f32.partialorder %v458, 0.0
      %vm543 = vcmp.ge.f32.partialorder %v461, 0.0
      %vm544 = vcmp.ge.f32.partialorder %v466, 0.0
      %vm545 = vcmp.ge.f32.partialorder %v469, 0.0
      %vm546 = vcmp.ge.f32.partialorder %v474, 0.0
      %vm547 = vcmp.ge.f32.partialorder %v477, 0.0
      %vm548 = vcmp.ge.f32.partialorder %v482, 0.0
      %vm549 = vcmp.ge.f32.partialorder %v485, 0.0
      %vm550 = vcmp.ge.f32.partialorder %v490, 0.0
      %vm551 = vcmp.ge.f32.partialorder %v493, 0.0
      %vm552 = vcmp.ge.f32.partialorder %v498, 0.0
      %vm553 = vcmp.ge.f32.partialorder %v501, 0.0
      %vm554 = vcmp.ge.f32.partialorder %v506, 0.0
      %vm555 = vcmp.ge.f32.partialorder %v509, 0.0
      %vm556 = vcmp.ge.f32.partialorder %v514, 0.0
      %vm557 = vcmp.ge.f32.partialorder %v517, 0.0
      %vm558 = vcmp.ge.f32.partialorder %v522, 0.0
      %vm559 = vcmp.ge.f32.partialorder %v525, 0.0
      %v560 = vmul.f32 %v402, 0.2
      %v561 = vmul.f32 %v405, 0.2
      %v562 = vmul.f32 %v410, 0.2
      %v563 = vmul.f32 %v413, 0.2
      %v564 = vmul.f32 %v418, 0.2
      %v565 = vmul.f32 %v421, 0.2
      %v566 = vmul.f32 %v426, 0.2
      %v567 = vmul.f32 %v429, 0.2
      %v568 = vmul.f32 %v434, 0.2
      %v569 = vmul.f32 %v437, 0.2
      %v570 = vmul.f32 %v442, 0.2
      %v571 = vmul.f32 %v445, 0.2
      %v572 = vmul.f32 %v450, 0.2
      %v573 = vmul.f32 %v453, 0.2
      %v574 = vmul.f32 %v458, 0.2
      %v575 = vmul.f32 %v461, 0.2
      %v576 = vmul.f32 %v466, 0.2
      %v577 = vmul.f32 %v469, 0.2
      %v578 = vmul.f32 %v474, 0.2
      %v579 = vmul.f32 %v477, 0.2
      %v580 = vmul.f32 %v482, 0.2
      %v581 = vmul.f32 %v485, 0.2
      %v582 = vmul.f32 %v490, 0.2
      %v583 = vmul.f32 %v493, 0.2
      %v584 = vmul.f32 %v498, 0.2
      %v585 = vmul.f32 %v501, 0.2
      %v586 = vmul.f32 %v506, 0.2
      %v587 = vmul.f32 %v509, 0.2
      %v588 = vmul.f32 %v514, 0.2
      %v589 = vmul.f32 %v517, 0.2
      %v590 = vmul.f32 %v522, 0.2
      %v591 = vmul.f32 %v525, 0.2
      %v592 = vsel %vm528, %v402, %v560
      %v593 = vsel %vm529, %v405, %v561
      %v594 = vsel %vm530, %v410, %v562
      %v595 = vsel %vm531, %v413, %v563
      %v596 = vsel %vm532, %v418, %v564
      %v597 = vsel %vm533, %v421, %v565
      %v598 = vsel %vm534, %v426, %v566
      %v599 = vsel %vm535, %v429, %v567
      %v600 = vsel %vm536, %v434, %v568
      %v601 = vsel %vm537, %v437, %v569
      %v602 = vsel %vm538, %v442, %v570
      %v603 = vsel %vm539, %v445, %v571
      %v604 = vsel %vm540, %v450, %v572
      %v605 = vsel %vm541, %v453, %v573
      %v606 = vsel %vm542, %v458, %v574
      %v607 = vsel %vm543, %v461, %v575
      %v608 = vsel %vm544, %v466, %v576
      %v609 = vsel %vm545, %v469, %v577
      %v610 = vsel %vm546, %v474, %v578
      %v611 = vsel %vm547, %v477, %v579
      %v612 = vsel %vm548, %v482, %v580
      %v613 = vsel %vm549, %v485, %v581
      %v614 = vsel %vm550, %v490, %v582
      %v615 = vsel %vm551, %v493, %v583
      %v616 = vsel %vm552, %v498, %v584
      %v617 = vsel %vm553, %v501, %v585
      %v618 = vsel %vm554, %v506, %v586
      %v619 = vsel %vm555, %v509, %v587
      %v620 = vsel %vm556, %v514, %v588
      %v621 = vsel %vm557, %v517, %v589
      %v622 = vsel %vm558, %v522, %v590
      %v623 = vsel %vm559, %v525, %v591
      %v624 = vpack.c.bf16 %v593, %v592
      %v625 = vpack.c.bf16 %v595, %v594
      %v626 = vpack.c.bf16 %v597, %v596
      %v627 = vpack.c.bf16 %v599, %v598
      %v628 = vpack.c.bf16 %v601, %v600
      %v629 = vpack.c.bf16 %v603, %v602
      %v630 = vpack.c.bf16 %v605, %v604
      %v631 = vpack.c.bf16 %v607, %v606
      %v632 = vpack.c.bf16 %v609, %v608
      %v633 = vpack.c.bf16 %v611, %v610
      %v634 = vpack.c.bf16 %v613, %v612
      %v635 = vpack.c.bf16 %v615, %v614
      %v636 = vpack.c.bf16 %v617, %v616
      %v637 = vpack.c.bf16 %v619, %v618
      %v638 = vpack.c.bf16 %v621, %v620
      %v639 = vpack.c.bf16 %v623, %v622
      %v656 = vunpack.c.l.b16 %v624
      %v657 = vunpack.c.h.b16 %v624
      %v658 = vunpack.c.l.b16 %v625
      %v659 = vunpack.c.h.b16 %v625
      %v660 = vunpack.c.l.b16 %v626
      %v661 = vunpack.c.h.b16 %v626
      %v662 = vunpack.c.l.b16 %v627
      %v663 = vunpack.c.h.b16 %v627
      %v664 = vunpack.c.l.b16 %v628
      %v665 = vunpack.c.h.b16 %v628
      %v666 = vunpack.c.l.b16 %v629
      %v667 = vunpack.c.h.b16 %v629
      %v668 = vunpack.c.l.b16 %v630
      %v669 = vunpack.c.h.b16 %v630
      %v670 = vunpack.c.l.b16 %v631
      %v671 = vunpack.c.h.b16 %v631
      %v672 = vunpack.c.l.b16 %v632
      %v673 = vunpack.c.h.b16 %v632
      %v674 = vunpack.c.l.b16 %v633
      %v675 = vunpack.c.h.b16 %v633
      %v676 = vunpack.c.l.b16 %v634
      %v677 = vunpack.c.h.b16 %v634
      %v678 = vunpack.c.l.b16 %v635
      %v679 = vunpack.c.h.b16 %v635
      %v680 = vunpack.c.l.b16 %v636
      %v681 = vunpack.c.h.b16 %v636
      %v682 = vunpack.c.l.b16 %v637
      %v683 = vunpack.c.h.b16 %v637
      %v684 = vunpack.c.l.b16 %v638
      %v685 = vunpack.c.h.b16 %v638
      %v686 = vunpack.c.l.b16 %v639
      %v687 = vunpack.c.h.b16 %v639
      %v688 = vpack.c.b16 %v656, %v656
      %v689 = vpack.c.b16 %v657, %v657
      %v690 = vpack.c.b16 %v658, %v658
      %v691 = vpack.c.b16 %v659, %v659
      %v692 = vpack.c.b16 %v660, %v660
      %v693 = vpack.c.b16 %v661, %v661
      %v694 = vpack.c.b16 %v662, %v662
      %v695 = vpack.c.b16 %v663, %v663
      %v696 = vpack.c.b16 %v664, %v664
      %v697 = vpack.c.b16 %v665, %v665
      %v698 = vpack.c.b16 %v666, %v666
      %v699 = vpack.c.b16 %v667, %v667
      %v700 = vpack.c.b16 %v668, %v668
      %v701 = vpack.c.b16 %v669, %v669
      %v702 = vpack.c.b16 %v670, %v670
      %v703 = vpack.c.b16 %v671, %v671
      %v704 = vpack.c.b16 %v672, %v672
      %v705 = vpack.c.b16 %v673, %v673
      %v706 = vpack.c.b16 %v674, %v674
      %v707 = vpack.c.b16 %v675, %v675
      %v708 = vpack.c.b16 %v676, %v676
      %v709 = vpack.c.b16 %v677, %v677
      %v710 = vpack.c.b16 %v678, %v678
      %v711 = vpack.c.b16 %v679, %v679
      %v712 = vpack.c.b16 %v680, %v680
      %v713 = vpack.c.b16 %v681, %v681
      %v714 = vpack.c.b16 %v682, %v682
      %v715 = vpack.c.b16 %v683, %v683
      %v716 = vpack.c.b16 %v684, %v684
      %v717 = vpack.c.b16 %v685, %v685
      %v718 = vpack.c.b16 %v686, %v686
      %v719 = vpack.c.b16 %v687, %v687
      %vm752 = vcmask 519168
      %753 = vst.msk [vmem:[%s172] sm:$0xf] %vm752, %v688
      %754 = vst.msk [vmem:[%s172 + $0x4] sm:$0xf] %vm752, %v689
      %755 = vst.msk [vmem:[%s172 + $0x8] sm:$0xf] %vm752, %v690
      %756 = vst.msk [vmem:[%s172 + $0xc] sm:$0xf] %vm752, %v691
      %757 = vst.msk [vmem:[%s172 + $0x10] sm:$0xf] %vm752, %v692
      %758 = vst.msk [vmem:[%s172 + $0x14] sm:$0xf] %vm752, %v693
      %759 = vst.msk [vmem:[%s172 + $0x18] sm:$0xf] %vm752, %v694
      %760 = vst.msk [vmem:[%s172 + $0x1c] sm:$0xf] %vm752, %v695
      %761 = vst.msk [vmem:[%s172 + $0x20] sm:$0xf] %vm752, %v696
      %762 = vst.msk [vmem:[%s172 + $0x24] sm:$0xf] %vm752, %v697
      %763 = vst.msk [vmem:[%s172 + $0x28] sm:$0xf] %vm752, %v698
      %764 = vst.msk [vmem:[%s172 + $0x2c] sm:$0xf] %vm752, %v699
      %765 = vst.msk [vmem:[%s172 + $0x30] sm:$0xf] %vm752, %v700
      %766 = vst.msk [vmem:[%s172 + $0x34] sm:$0xf] %vm752, %v701
      %767 = vst.msk [vmem:[%s172 + $0x38] sm:$0xf] %vm752, %v702
      %768 = vst.msk [vmem:[%s172 + $0x3c] sm:$0xf] %vm752, %v703
      %769 = vst.msk [vmem:[%s172 + $0x40] sm:$0xf] %vm752, %v704
      %770 = vst.msk [vmem:[%s172 + $0x44] sm:$0xf] %vm752, %v705
      %771 = vst.msk [vmem:[%s172 + $0x48] sm:$0xf] %vm752, %v706
      %772 = vst.msk [vmem:[%s172 + $0x4c] sm:$0xf] %vm752, %v707
      %773 = vst.msk [vmem:[%s172 + $0x50] sm:$0xf] %vm752, %v708
      %774 = vst.msk [vmem:[%s172 + $0x54] sm:$0xf] %vm752, %v709
      %775 = vst.msk [vmem:[%s172 + $0x58] sm:$0xf] %vm752, %v710
      %776 = vst.msk [vmem:[%s172 + $0x5c] sm:$0xf] %vm752, %v711
      %777 = vst.msk [vmem:[%s172 + $0x60] sm:$0xf] %vm752, %v712
      %778 = vst.msk [vmem:[%s172 + $0x64] sm:$0xf] %vm752, %v713
      %779 = vst.msk [vmem:[%s172 + $0x68] sm:$0xf] %vm752, %v714
      %780 = vst.msk [vmem:[%s172 + $0x6c] sm:$0xf] %vm752, %v715
      %781 = vst.msk [vmem:[%s172 + $0x70] sm:$0xf] %vm752, %v716
      %782 = vst.msk [vmem:[%s172 + $0x74] sm:$0xf] %vm752, %v717
      %783 = vst.msk [vmem:[%s172 + $0x78] sm:$0xf] %vm752, %v718
      %784 = vst.msk [vmem:[%s172 + $0x7c] sm:$0xf] %vm752, %v719
      %s785 = smul.u32 32, %s14
      %p786 = scmp.lt.s32.totalorder %s785, 63
      %s787 = scalar_select %p786, %s785, 63
      %s788 = smul.addr %s787, 4
      %s789 = scalar_lea.vmem %s3, %s788
      // Predicated region
      $region33: #{patch_discriminator.4} parent=31 // pred_check
        %p790 = pneg %p100
      $region34: #{patch_discriminator.4} parent=31 // pred_check_branch
        %792 = sbr.rel (%p790) target = $region36
      $region35: #{patch_discriminator.4} parent=31 // pred_region
        %s793 = smul.u32 32, %s14
      $region36: #{patch_discriminator.4} parent=31 // pred_fallthru
        _
    $region32: #{patch_discriminator.4} parent=5 // pred_fallthru
      _
    %p794 = scmp.le.s32.totalorder 2, %s9
    // Predicated region
    $region37: #{patch_discriminator.4} parent=5 // pred_check
      %p795 = pneg %p794
    $region38: #{patch_discriminator.4} parent=5 // pred_check_branch
      %797 = sbr.rel (%p795) target = $region40
    $region39: #{patch_discriminator.4} parent=5 // pred_region
      %s798 = ssub.s32 %s9, 2
      // Predicated region
      $region41: #{patch_discriminator.4} parent=39 // pred_check
        %p799 = pneg %p106
      $region42: #{patch_discriminator.4} parent=39 // pred_check_branch
        %801 = sbr.rel (%p799) target = $region44
      $region43: #{patch_discriminator.4} parent=39 // pred_region
        %s802 = smul.u32 32, %s15
        %p803 = scmp.lt.s32.totalorder %s802, 63
        %s804 = scalar_select %p803, %s802, 63
        %s805 = smul.addr %s804, 4
        %s806 = scalar_lea.vmem %s3, %s805
      $region44: #{patch_discriminator.4} parent=39 // pred_fallthru
        _
    $region40: #{patch_discriminator.4} parent=5 // pred_fallthru
      _
  $region6: #{patch_discriminator.4} parent=0 // loop_footer
    %s13 = sadd.s32 1, %s9
  $region7: #{patch_discriminator.4} parent=0 // loop_footer_branch
    %8 = sbr.rel target = $region3
  $region8: #{patch_discriminator.4} parent=0 // loop_exit
    _

// kernel: patch_discriminator.5
$region0: #{patch_discriminator.5}
  #allocation0 [shape = 'u32[]', space=smem, size = 0x4, offset = 0x4, fixed_abs, tag = 'smem constant byte address 0x4 - core index']
  #allocation1 [shape = 'u32[144,128]{1,0:T(1,128)}', space=vmem, size = 0x12000, scoped, tag = 'internal scratch']
  %s0 = inlined_call_operand.vmem [shape: bf16[2,82,256], index: 0, kind: input, shape index: {}]
  %s1 = inlined_call_operand.vmem [shape: bf16[4,256,128], index: 1, kind: input, shape index: {}]
  %s2 = inlined_call_operand.vmem [shape: f32[1,128], index: 2, kind: input, shape index: {}]
  %s3 = inlined_call_operand.vmem [shape: bf16[2,72,128], index: 3, kind: output, shape index: {}]
  %s4 = sld [smem:[#allocation0]]
  $region45: #{patch_discriminator.5} parent=0
    _
  %s6 = ssub.s32 1, %s4
  %s7 = scalar_select 0, %s6, %s4
  loop: start=0, step=1, limit=4
  $region2: #{patch_discriminator.5} parent=0 // loop_pre_header
    _
  $region3: #{patch_discriminator.5} parent=0 // loop_header
    %s9 = sphi 0, %s13
    %p10 = scmp.ge.s32.totalorder %s9, 4
    %s19 = sphi 0, %s21
    %s22 = sphi 0, %s19
    %s23 = sphi 0, %s22
    %s39 = sphi 0, %s23
    %s43 = sphi 0, %s43
    %s45 = sphi 0, %s43
    %s46 = sphi 0, %s45
    %s60 = sphi 0, %s46
    %s64 = sphi 0, %s64
    %s66 = sphi 0, %s64
    %s67 = sphi 0, %s66
    %s81 = sphi 0, %s67
    %s87 = sphi 0, %s89
    %s90 = sphi 0, %s87
    %s91 = sphi 0, %s90
    %s107 = sphi 0, %s91
  $region4: #{patch_discriminator.5} parent=0 // loop_header_branch
    %12 = sbr.rel (%p10) target = $region8
  $region5: #{patch_discriminator.5} parent=0 // loop_body
    %s14 = ssub.s32 %s9, 1
    %s15 = ssub.s32 %s9, 2
    %s16 = sadd.s32 %s9, 1
    %s17 = ssub.s32 %s9, %s16
    %p18 = scmp.eq.s32.totalorder %s17, 0
    %s20 = sadd.s32 %s19, 1
    %s21 = scalar_select %p18, %s19, %s20
    %p24 = pneg %p18
    %p25 = scmp.eq.s32.totalorder %s9, 1
    %p26 = por %p24, %p25
    %p27 = scmp.ne.s32.totalorder %s19, %s22
    %p28 = scmp.eq.s32.totalorder %s9, 0
    %p29 = por %p27, %p28
    %p30 = scmp.ne.s32.totalorder %s19, %s22
    %p31 = scmp.eq.s32.totalorder %s14, 1
    %p32 = por %p30, %p31
    %p33 = scmp.ne.s32.totalorder %s22, %s23
    %p34 = scmp.eq.s32.totalorder %s14, 0
    %p35 = por %p33, %p34
    %p36 = scmp.ne.s32.totalorder %s22, %s23
    %p37 = scmp.eq.s32.totalorder %s15, 1
    %p38 = por %p36, %p37
    %p40 = scmp.ne.s32.totalorder %s23, %s39
    %p41 = scmp.eq.s32.totalorder %s15, 0
    %p42 = por %p40, %p41
    %s44 = sadd.s32 %s43, 1
    %p47 = scmp.eq.s32.totalorder %s9, 1
    %p48 = scmp.ne.s32.totalorder %s43, %s45
    %p49 = scmp.eq.s32.totalorder %s9, 0
    %p50 = por %p48, %p49
    %p51 = scmp.ne.s32.totalorder %s43, %s45
    %p52 = scmp.eq.s32.totalorder %s14, 1
    %p53 = por %p51, %p52
    %p54 = scmp.ne.s32.totalorder %s45, %s46
    %p55 = scmp.eq.s32.totalorder %s14, 0
    %p56 = por %p54, %p55
    %p57 = scmp.ne.s32.totalorder %s45, %s46
    %p58 = scmp.eq.s32.totalorder %s15, 1
    %p59 = por %p57, %p58
    %p61 = scmp.ne.s32.totalorder %s46, %s60
    %p62 = scmp.eq.s32.totalorder %s15, 0
    %p63 = por %p61, %p62
    %s65 = sadd.s32 %s64, 1
    %p68 = scmp.eq.s32.totalorder %s9, 1
    %p69 = scmp.ne.s32.totalorder %s64, %s66
    %p70 = scmp.eq.s32.totalorder %s9, 0
    %p71 = por %p69, %p70
    %p72 = scmp.ne.s32.totalorder %s64, %s66
    %p73 = scmp.eq.s32.totalorder %s14, 1
    %p74 = por %p72, %p73
    %p75 = scmp.ne.s32.totalorder %s66, %s67
    %p76 = scmp.eq.s32.totalorder %s14, 0
    %p77 = por %p75, %p76
    %p78 = scmp.ne.s32.totalorder %s66, %s67
    %p79 = scmp.eq.s32.totalorder %s15, 1
    %p80 = por %p78, %p79
    %p82 = scmp.ne.s32.totalorder %s67, %s81
    %p83 = scmp.eq.s32.totalorder %s15, 0
    %p84 = por %p82, %p83
    %s85 = ssub.s32 %s9, %s16
    %p86 = scmp.eq.s32.totalorder %s85, 0
    %s88 = sadd.s32 %s87, 1
    %s89 = scalar_select %p86, %s87, %s88
    %p92 = pneg %p86
    %p93 = scmp.eq.s32.totalorder %s9, 1
    %p94 = por %p92, %p93
    %p95 = scmp.ne.s32.totalorder %s87, %s90
    %p96 = scmp.eq.s32.totalorder %s9, 0
    %p97 = por %p95, %p96
    %p98 = scmp.ne.s32.totalorder %s87, %s90
    %p99 = scmp.eq.s32.totalorder %s14, 1
    %p100 = por %p98, %p99
    %p101 = scmp.ne.s32.totalorder %s90, %s91
    %p102 = scmp.eq.s32.totalorder %s14, 0
    %p103 = por %p101, %p102
    %p104 = scmp.ne.s32.totalorder %s90, %s91
    %p105 = scmp.eq.s32.totalorder %s15, 1
    %p106 = por %p104, %p105
    %p108 = scmp.ne.s32.totalorder %s91, %s107
    %p109 = scmp.eq.s32.totalorder %s15, 0
    %p110 = por %p108, %p109
    %p111 = scmp.le.s32.totalorder 1, %s9
    %p112 = scmp.lt.s32.totalorder %s9, 3
    %p113 = pnand %p111, %p112
    %p114 = pneg %p113
    // Predicated region
    $region9: #{patch_discriminator.5} parent=5 // pred_check
      _
    $region10: #{patch_discriminator.5} parent=5 // pred_check_branch
      %116 = sbr.rel (%p113) target = $region12
    $region11: #{patch_discriminator.5} parent=5 // pred_region
      %s117 = ssub.s32 %s9, 1
      // Predicated region
      $region13: #{patch_discriminator.5} parent=11 // pred_check
        %p118 = pneg %p56
      $region14: #{patch_discriminator.5} parent=11 // pred_check_branch
        %120 = sbr.rel (%p118) target = $region16
      $region15: #{patch_discriminator.5} parent=11 // pred_region
        _
      $region16: #{patch_discriminator.5} parent=11 // pred_fallthru
        _
      // Predicated region
      $region17: #{patch_discriminator.5} parent=11 // pred_check
        %p121 = pneg %p77
      $region18: #{patch_discriminator.5} parent=11 // pred_check_branch
        %123 = sbr.rel (%p121) target = $region20
      $region19: #{patch_discriminator.5} parent=11 // pred_region
        _
      $region20: #{patch_discriminator.5} parent=11 // pred_fallthru
        _
    $region12: #{patch_discriminator.5} parent=5 // pred_fallthru
      _
    %p124 = scmp.lt.s32.totalorder %s9, 2
    // Predicated region
    $region21: #{patch_discriminator.5} parent=5 // pred_check
      %p125 = pneg %p124
    $region22: #{patch_discriminator.5} parent=5 // pred_check_branch
      %127 = sbr.rel (%p125) target = $region24
    $region23: #{patch_discriminator.5} parent=5 // pred_region
      // Predicated region
      $region25: #{patch_discriminator.5} parent=23 // pred_check
        %p128 = pneg %p29
      $region26: #{patch_discriminator.5} parent=23 // pred_check_branch
        %130 = sbr.rel (%p128) target = $region28
      $region27: #{patch_discriminator.5} parent=23 // pred_region
        %p131 = scmp.lt.s32.totalorder %s9, 1
        %s132 = scalar_select %p131, %s9, 1
        %s133 = smul.addr %s132, 22
        %s134 = smul.addr %s133, 4
        %s135 = scalar_lea.vmem %s0, %s134
      $region28: #{patch_discriminator.5} parent=23 // pred_fallthru
        _
    $region24: #{patch_discriminator.5} parent=5 // pred_fallthru
      _
    %p136 = scmp.le.s32.totalorder 1, %s9
    %p137 = scmp.lt.s32.totalorder %s9, 3
    %p138 = pnand %p136, %p137
    %p139 = pneg %p138
    // Predicated region
    $region29: #{patch_discriminator.5} parent=5 // pred_check
      _
    $region30: #{patch_discriminator.5} parent=5 // pred_check_branch
      %141 = sbr.rel (%p138) target = $region32
    $region31: #{patch_discriminator.5} parent=5 // pred_region
      %s142 = ssub.s32 %s9, 1
      %p143 = scmp.lt.s32.totalorder %s14, 1
      %s144 = scalar_select %p143, %s14, 1
      %s145 = smul.addr %s144, 22
      %s146 = smul.addr %s145, 4
      %s147 = scalar_lea.vmem %s0, %s146
      %p148 = pneg %p35
      %p149 = pneg %p32
      %p150 = pneg %p56
      %p151 = pneg %p53
      %p152 = pneg %p77
      %p153 = pneg %p74
      %p154 = pneg %p103
      %p155 = pneg %p100
      %p156 = scmp.lt.s32.totalorder %s14, 1
      %s157 = scalar_select %p156, %s14, 1
      %s158 = smul.addr %s157, 9
      %s159 = smul.addr %s158, 4
      %s160 = scalar_lea.vmem %s3, %s159
      %p161 = scmp.lt.s32.totalorder %s14, 1
      %s162 = scalar_select %p161, %s14, 1
      %s163 = smul.addr %s162, 22
      %s164 = smul.addr %s163, 4
      %s165 = scalar_lea.vmem %s0, %s164
      %p166 = scmp.lt.s32.totalorder %s14, 1
      %s167 = scalar_select %p166, %s14, 1
      %s168 = smul.addr %s167, 9
      %s169 = smul.addr %s168, 4
      %s170 = scalar_lea.vmem %s3, %s169
      %v172 = vld [vmem:[%s165] sm:$0xff]
      %v173 = vld [vmem:[%s165 + $0x8] sm:$0xff]
      %v174 = vld [vmem:[%s165 + $0x10] sm:$0xff]
      %v175 = vld [vmem:[%s165 + $0x18] sm:$0xff]
      %v176 = vld [vmem:[%s165 + $0x20] sm:$0xff]
      %v177 = vld [vmem:[%s165 + $0x28] sm:$0xff]
      %v178 = vld [vmem:[%s165 + $0x30] sm:$0xff]
      %v179 = vld [vmem:[%s165 + $0x38] sm:$0xff]
      %v180 = vld [vmem:[%s165 + $0x40] sm:$0xff]
      %v181 = vld [vmem:[%s1] sm:$0xf]
      %v182 = vld [vmem:[%s1 + $0x4] sm:$0xf]
      %v183 = vld [vmem:[%s1 + $0x8] sm:$0xf]
      %v184 = vld [vmem:[%s1 + $0xc] sm:$0xf]
      %v185 = vld [vmem:[%s1 + $0x10] sm:$0xf]
      %v186 = vld [vmem:[%s1 + $0x14] sm:$0xf]
      %v187 = vld [vmem:[%s1 + $0x18] sm:$0xf]
      %v188 = vld [vmem:[%s1 + $0x1c] sm:$0xf]
      %v189 = vld [vmem:[%s1 + $0x20] sm:$0xf]
      %v190 = vld [vmem:[%s1 + $0x24] sm:$0xf]
      %v191 = vld [vmem:[%s1 + $0x28] sm:$0xf]
      %v192 = vld [vmem:[%s1 + $0x2c] sm:$0xf]
      %v193 = vld [vmem:[%s1 + $0x30] sm:$0xf]
      %v194 = vld [vmem:[%s1 + $0x34] sm:$0xf]
      %v195 = vld [vmem:[%s1 + $0x38] sm:$0xf]
      %v196 = vld [vmem:[%s1 + $0x3c] sm:$0xf]
      %v197 = vld [vmem:[%s1 + $0x40] sm:$0xf]
      %v198 = vld [vmem:[%s1 + $0x44] sm:$0xf]
      %v199 = vld [vmem:[%s1 + $0x48] sm:$0xf]
      %v200 = vld [vmem:[%s1 + $0x4c] sm:$0xf]
      %v201 = vld [vmem:[%s1 + $0x50] sm:$0xf]
      %v202 = vld [vmem:[%s1 + $0x54] sm:$0xf]
      %v203 = vld [vmem:[%s1 + $0x58] sm:$0xf]
      %v204 = vld [vmem:[%s1 + $0x5c] sm:$0xf]
      %v205 = vld [vmem:[%s1 + $0x60] sm:$0xf]
      %v206 = vld [vmem:[%s1 + $0x64] sm:$0xf]
      %v207 = vld [vmem:[%s1 + $0x68] sm:$0xf]
      %v208 = vld [vmem:[%s1 + $0x6c] sm:$0xf]
      %v209 = vld [vmem:[%s1 + $0x70] sm:$0xf]
      %v210 = vld [vmem:[%s1 + $0x74] sm:$0xf]
      %v211 = vld [vmem:[%s1 + $0x78] sm:$0xf]
      %v212 = vld [vmem:[%s1 + $0x7c] sm:$0xf]
      %v213 = vld [vmem:[%s165 + $0x48] sm:$0x11]
      %s214 = scalar_lea.vmem %s1, 128
      %v215 = vld [vmem:[%s214] sm:$0xf]
      %v216 = vld [vmem:[%s214 + $0x4] sm:$0xf]
      %v217 = vld [vmem:[%s214 + $0x8] sm:$0xf]
      %v218 = vld [vmem:[%s214 + $0xc] sm:$0xf]
      %v219 = vld [vmem:[%s214 + $0x10] sm:$0xf]
      %v220 = vld [vmem:[%s214 + $0x14] sm:$0xf]
      %v221 = vld [vmem:[%s214 + $0x18] sm:$0xf]
      %v222 = vld [vmem:[%s214 + $0x1c] sm:$0xf]
      %v223 = vld [vmem:[%s214 + $0x20] sm:$0xf]
      %v224 = vld [vmem:[%s214 + $0x24] sm:$0xf]
      %v225 = vld [vmem:[%s214 + $0x28] sm:$0xf]
      %v226 = vld [vmem:[%s214 + $0x2c] sm:$0xf]
      %v227 = vld [vmem:[%s214 + $0x30] sm:$0xf]
      %v228 = vld [vmem:[%s214 + $0x34] sm:$0xf]
      %v229 = vld [vmem:[%s214 + $0x38] sm:$0xf]
      %v230 = vld [vmem:[%s214 + $0x3c] sm:$0xf]
      %v231 = vld [vmem:[%s214 + $0x40] sm:$0xf]
      %v232 = vld [vmem:[%s214 + $0x44] sm:$0xf]
      %v233 = vld [vmem:[%s214 + $0x48] sm:$0xf]
      %v234 = vld [vmem:[%s214 + $0x4c] sm:$0xf]
      %v235 = vld [vmem:[%s214 + $0x50] sm:$0xf]
      %v236 = vld [vmem:[%s214 + $0x54] sm:$0xf]
      %v237 = vld [vmem:[%s214 + $0x58] sm:$0xf]
      %v238 = vld [vmem:[%s214 + $0x5c] sm:$0xf]
      %v239 = vld [vmem:[%s214 + $0x60] sm:$0xf]
      %v240 = vld [vmem:[%s214 + $0x64] sm:$0xf]
      %v241 = vld [vmem:[%s214 + $0x68] sm:$0xf]
      %v242 = vld [vmem:[%s214 + $0x6c] sm:$0xf]
      %v243 = vld [vmem:[%s214 + $0x70] sm:$0xf]
      %v244 = vld [vmem:[%s214 + $0x74] sm:$0xf]
      %v245 = vld [vmem:[%s214 + $0x78] sm:$0xf]
      %v246 = vld [vmem:[%s214 + $0x7c] sm:$0xf]
      %v257 = vunpack.c.l.b16 %v172
      %v258 = vunpack.c.h.b16 %v172
      %v259 = vunpack.c.l.b16 %v173
      %v260 = vunpack.c.h.b16 %v173
      %v261 = vunpack.c.l.b16 %v174
      %v262 = vunpack.c.h.b16 %v174
      %v263 = vunpack.c.l.b16 %v175
      %v264 = vunpack.c.h.b16 %v175
      %v265 = vunpack.c.l.b16 %v176
      %v266 = vunpack.c.h.b16 %v176
      %v267 = vunpack.c.l.b16 %v177
      %v268 = vunpack.c.h.b16 %v177
      %v269 = vunpack.c.l.b16 %v178
      %v270 = vunpack.c.h.b16 %v178
      %v271 = vunpack.c.l.b16 %v179
      %v272 = vunpack.c.h.b16 %v179
      %v273 = vunpack.c.l.b16 %v180
      %v274 = vunpack.c.h.b16 %v180
      %v275 = vunpack.c.l.b16 %v213
      %v276 = vunpack.c.h.b16 %v213
      %v277 = vpack.c.b16 %v259, %v257
      %v278 = vpack.c.b16 %v260, %v258
      %v279 = vpack.c.b16 %v263, %v261
      %v280 = vpack.c.b16 %v264, %v262
      %v281 = vpack.c.b16 %v267, %v265
      %v282 = vpack.c.b16 %v268, %v266
      %v283 = vpack.c.b16 %v271, %v269
      %v284 = vpack.c.b16 %v272, %v270
      %v285 = vpack.c.b16 %v275, %v273
      %v286 = vpack.c.b16 %v276, %v274
      %vm287 = vsmask.f32 7424
      %v289 = vshrl.u32 %v277, 16
      %v291 = vshll.u32 %v277, 16
      %v293 = vrot.slane %v291, 1
      %v294 = vor.u32 %v289, %v293
      %v296 = vshll.u32 %v279, 16
      %v298 = vrot.slane %v296, 1
      %v299 = vsel %vm287, %v294, %v298
      %v301 = vshrl.u32 %v278, 16
      %v303 = vshll.u32 %v278, 16
      %v305 = vrot.slane %v303, 1
      %v306 = vor.u32 %v301, %v305
      %v308 = vshll.u32 %v280, 16
      %v310 = vrot.slane %v308, 1
      %v311 = vsel %vm287, %v306, %v310
      %v312 = vshrl.u32 %v279, 16
      %v314 = vor.u32 %v312, %v298
      %v316 = vshll.u32 %v281, 16
      %v318 = vrot.slane %v316, 1
      %v319 = vsel %vm287, %v314, %v318
      %v320 = vshrl.u32 %v280, 16
      %v322 = vor.u32 %v320, %v310
      %v324 = vshll.u32 %v282, 16
      %v326 = vrot.slane %v324, 1
      %v327 = vsel %vm287, %v322, %v326
      %v328 = vshrl.u32 %v281, 16
      %v330 = vor.u32 %v328, %v318
      %v332 = vshll.u32 %v283, 16
      %v334 = vrot.slane %v332, 1
      %v335 = vsel %vm287, %v330, %v334
      %v336 = vshrl.u32 %v282, 16
      %v338 = vor.u32 %v336, %v326
      %v340 = vshll.u32 %v284, 16
      %v342 = vrot.slane %v340, 1
      %v343 = vsel %vm287, %v338, %v342
      %v344 = vshrl.u32 %v283, 16
      %v346 = vor.u32 %v344, %v334
      %v348 = vshll.u32 %v285, 16
      %v350 = vrot.slane %v348, 1
      %v351 = vsel %vm287, %v346, %v350
      %v352 = vshrl.u32 %v284, 16
      %v354 = vor.u32 %v352, %v342
      %v356 = vshll.u32 %v286, 16
      %v358 = vrot.slane %v356, 1
      %v359 = vsel %vm287, %v354, %v358
      %v360 = vshrl.u32 %v285, 16
      %v362 = vor.u32 %v360, %v350
      %v363 = vshrl.u32 %v286, 16
      %v365 = vor.u32 %v363, %v358
      %v408 = vunpack.c.l.b16 %v215
      %v409 = vunpack.c.l.b16 %v216
      %v410 = vunpack.c.l.b16 %v217
      %v411 = vunpack.c.l.b16 %v218
      %v412 = vunpack.c.l.b16 %v219
      %v413 = vunpack.c.l.b16 %v220
      %v414 = vunpack.c.l.b16 %v221
      %v415 = vunpack.c.l.b16 %v222
      %v416 = vunpack.c.l.b16 %v223
      %v417 = vunpack.c.l.b16 %v224
      %v418 = vunpack.c.l.b16 %v225
      %v419 = vunpack.c.l.b16 %v226
      %v420 = vunpack.c.l.b16 %v227
      %v421 = vunpack.c.l.b16 %v228
      %v422 = vunpack.c.l.b16 %v229
      %v423 = vunpack.c.l.b16 %v230
      %v424 = vunpack.c.l.b16 %v231
      %v425 = vunpack.c.l.b16 %v232
      %v426 = vunpack.c.l.b16 %v233
      %v427 = vunpack.c.l.b16 %v234
      %v428 = vunpack.c.l.b16 %v235
      %v429 = vunpack.c.l.b16 %v236
      %v430 = vunpack.c.l.b16 %v237
      %v431 = vunpack.c.l.b16 %v238
      %v432 = vunpack.c.l.b16 %v239
      %v433 = vunpack.c.l.b16 %v240
      %v434 = vunpack.c.l.b16 %v241
      %v435 = vunpack.c.l.b16 %v242
      %v436 = vunpack.c.l.b16 %v243
      %v437 = vunpack.c.l.b16 %v244
      %v438 = vunpack.c.l.b16 %v245
      %v439 = vunpack.c.l.b16 %v246
      %v440 = vpack.c.b16 %v409, %v408
      %v441 = vpack.c.b16 %v411, %v410
      %v442 = vpack.c.b16 %v413, %v412
      %v443 = vpack.c.b16 %v415, %v414
      %v444 = vpack.c.b16 %v417, %v416
      %v445 = vpack.c.b16 %v419, %v418
      %v446 = vpack.c.b16 %v421, %v420
      %v447 = vpack.c.b16 %v423, %v422
      %v448 = vpack.c.b16 %v425, %v424
      %v449 = vpack.c.b16 %v427, %v426
      %v450 = vpack.c.b16 %v429, %v428
      %v451 = vpack.c.b16 %v431, %v430
      %v452 = vpack.c.b16 %v433, %v432
      %v453 = vpack.c.b16 %v435, %v434
      %v454 = vpack.c.b16 %v437, %v436
      %v455 = vpack.c.b16 %v439, %v438
      %472 = vmatprep.subr.bf16.mxu0 0
      %473 = vmatpush1.bf16.msra.mxu0 %v440
      %474 = vmatprep.subr.bf16.mxu0 0
      %475 = vmatpush1.bf16.msra.mxu0 %v441
      %476 = vmatprep.subr.bf16.mxu0 0
      %477 = vmatpush1.bf16.msra.mxu0 %v442
      %478 = vmatprep.subr.bf16.mxu0 0
      %479 = vmatpush1.bf16.msra.mxu0 %v443
      %480 = vmatprep.subr.bf16.mxu0 0
      %481 = vmatpush1.bf16.msra.mxu0 %v444
      %482 = vmatprep.subr.bf16.mxu0 0
      %483 = vmatpush1.bf16.msra.mxu0 %v445
      %484 = vmatprep.subr.bf16.mxu0 0
      %485 = vmatpush1.bf16.msra.mxu0 %v446
      %486 = vmatprep.subr.bf16.mxu0 0
      %487 = vmatpush1.bf16.msra.mxu0 %v447
      %488 = vmatprep.subr.bf16.mxu0 0
      %489 = vmatpush1.bf16.msra.mxu0 %v448
      %490 = vmatprep.subr.bf16.mxu0 0
      %491 = vmatpush1.bf16.msra.mxu0 %v449
      %492 = vmatprep.subr.bf16.mxu0 0
      %493 = vmatpush1.bf16.msra.mxu0 %v450
      %494 = vmatprep.subr.bf16.mxu0 0
      %495 = vmatpush1.bf16.msra.mxu0 %v451
      %496 = vmatprep.subr.bf16.mxu0 0
      %497 = vmatpush1.bf16.msra.mxu0 %v452
      %498 = vmatprep.subr.bf16.mxu0 0
      %499 = vmatpush1.bf16.msra.mxu0 %v453
      %500 = vmatprep.subr.bf16.mxu0 0
      %501 = vmatpush1.bf16.msra.mxu0 %v454
      %502 = vmatprep.subr.bf16.mxu0 0
      %503 = vmatpush1.bf16.msra.mxu0 %v455
      %504 = vmatprep.mubr.bf16.mxu0 %v311
      %505 = vmatmul.mubr.bf16.gmra.mrb[0].mxu0 %v299
      %v506 = vpop.f32.mrb[0].mxu0
      %v507 = vadd.f32 0.0, %v506
      %v508 = vpop.f32.mrb[0].mxu0
      %v509 = vpop.f32.mrb[0].mxu0
      %v510 = vadd.f32 0.0, %v509
      %v511 = vpop.f32.mrb[0].mxu0
      %512 = vmatprep.mubr.bf16.mxu0 %v327
      %513 = vmatmul.mubr.bf16.gmra.mrb[0].mxu0 %v319
      %v514 = vpop.f32.mrb[0].mxu0
      %v515 = vadd.f32 0.0, %v514
      %v516 = vpop.f32.mrb[0].mxu0
      %v517 = vpop.f32.mrb[0].mxu0
      %v518 = vadd.f32 0.0, %v517
      %v519 = vpop.f32.mrb[0].mxu0
      %520 = vmatprep.mubr.bf16.mxu0 %v343
      %521 = vmatmul.mubr.bf16.gmra.mrb[0].mxu0 %v335
      %v522 = vpop.f32.mrb[0].mxu0
      %v523 = vadd.f32 0.0, %v522
      %v524 = vpop.f32.mrb[0].mxu0
      %v525 = vpop.f32.mrb[0].mxu0
      %v526 = vadd.f32 0.0, %v525
      %v527 = vpop.f32.mrb[0].mxu0
      %528 = vmatprep.mubr.bf16.mxu0 %v359
      %529 = vmatmul.mubr.bf16.gmra.mrb[0].mxu0 %v351
      %v530 = vpop.f32.mrb[0].mxu0
      %v531 = vadd.f32 0.0, %v530
      %v532 = vpop.f32.mrb[0].mxu0
      %v533 = vpop.f32.mrb[0].mxu0
      %v534 = vadd.f32 0.0, %v533
      %v535 = vpop.f32.mrb[0].mxu0
      %536 = vmatprep.mubr.bf16.mxu0 %v365
      %537 = vmatmul.mubr.bf16.gmra.mrb[0].mxu0 %v362
      %v538 = vpop.f32.mrb[0].mxu0
      %v539 = vadd.f32 0.0, %v538
      %v540 = vpop.f32.mrb[0].mxu0
      %v541 = vpop.f32.mrb[0].mxu0
      %v542 = vpop.f32.mrb[0].mxu0
      %543 = vdwg.mxu0
      %v544 = vpack.c.b16 %v273, %v273
      %v545 = vpack.c.b16 %v274, %v274
      %v588 = vunpack.c.l.b16 %v181
      %v589 = vunpack.c.l.b16 %v182
      %v590 = vunpack.c.l.b16 %v183
      %v591 = vunpack.c.l.b16 %v184
      %v592 = vunpack.c.l.b16 %v185
      %v593 = vunpack.c.l.b16 %v186
      %v594 = vunpack.c.l.b16 %v187
      %v595 = vunpack.c.l.b16 %v188
      %v596 = vunpack.c.l.b16 %v189
      %v597 = vunpack.c.l.b16 %v190
      %v598 = vunpack.c.l.b16 %v191
      %v599 = vunpack.c.l.b16 %v192
      %v600 = vunpack.c.l.b16 %v193
      %v601 = vunpack.c.l.b16 %v194
      %v602 = vunpack.c.l.b16 %v195
      %v603 = vunpack.c.l.b16 %v196
      %v604 = vunpack.c.l.b16 %v197
      %v605 = vunpack.c.l.b16 %v198
      %v606 = vunpack.c.l.b16 %v199
      %v607 = vunpack.c.l.b16 %v200
      %v608 = vunpack.c.l.b16 %v201
      %v609 = vunpack.c.l.b16 %v202
      %v610 = vunpack.c.l.b16 %v203
      %v611 = vunpack.c.l.b16 %v204
      %v612 = vunpack.c.l.b16 %v205
      %v613 = vunpack.c.l.b16 %v206
      %v614 = vunpack.c.l.b16 %v207
      %v615 = vunpack.c.l.b16 %v208
      %v616 = vunpack.c.l.b16 %v209
      %v617 = vunpack.c.l.b16 %v210
      %v618 = vunpack.c.l.b16 %v211
      %v619 = vunpack.c.l.b16 %v212
      %v620 = vpack.c.b16 %v589, %v588
      %v621 = vpack.c.b16 %v591, %v590
      %v622 = vpack.c.b16 %v593, %v592
      %v623 = vpack.c.b16 %v595, %v594
      %v624 = vpack.c.b16 %v597, %v596
      %v625 = vpack.c.b16 %v599, %v598
      %v626 = vpack.c.b16 %v601, %v600
      %v627 = vpack.c.b16 %v603, %v602
      %v628 = vpack.c.b16 %v605, %v604
      %v629 = vpack.c.b16 %v607, %v606
      %v630 = vpack.c.b16 %v609, %v608
      %v631 = vpack.c.b16 %v611, %v610
      %v632 = vpack.c.b16 %v613, %v612
      %v633 = vpack.c.b16 %v615, %v614
      %v634 = vpack.c.b16 %v617, %v616
      %v635 = vpack.c.b16 %v619, %v618
      %652 = vmatprep.subr.bf16.mxu0 0
      %653 = vmatpush1.bf16.msra.mxu0 %v620
      %654 = vmatprep.subr.bf16.mxu0 0
      %655 = vmatpush1.bf16.msra.mxu0 %v621
      %656 = vmatprep.subr.bf16.mxu0 0
      %657 = vmatpush1.bf16.msra.mxu0 %v622
      %658 = vmatprep.subr.bf16.mxu0 0
      %659 = vmatpush1.bf16.msra.mxu0 %v623
      %660 = vmatprep.subr.bf16.mxu0 0
      %661 = vmatpush1.bf16.msra.mxu0 %v624
      %662 = vmatprep.subr.bf16.mxu0 0
      %663 = vmatpush1.bf16.msra.mxu0 %v625
      %664 = vmatprep.subr.bf16.mxu0 0
      %665 = vmatpush1.bf16.msra.mxu0 %v626
      %666 = vmatprep.subr.bf16.mxu0 0
      %667 = vmatpush1.bf16.msra.mxu0 %v627
      %668 = vmatprep.subr.bf16.mxu0 0
      %669 = vmatpush1.bf16.msra.mxu0 %v628
      %670 = vmatprep.subr.bf16.mxu0 0
      %671 = vmatpush1.bf16.msra.mxu0 %v629
      %672 = vmatprep.subr.bf16.mxu0 0
      %673 = vmatpush1.bf16.msra.mxu0 %v630
      %674 = vmatprep.subr.bf16.mxu0 0
      %675 = vmatpush1.bf16.msra.mxu0 %v631
      %676 = vmatprep.subr.bf16.mxu0 0
      %677 = vmatpush1.bf16.msra.mxu0 %v632
      %678 = vmatprep.subr.bf16.mxu0 0
      %679 = vmatpush1.bf16.msra.mxu0 %v633
      %680 = vmatprep.subr.bf16.mxu0 0
      %681 = vmatpush1.bf16.msra.mxu0 %v634
      %682 = vmatprep.subr.bf16.mxu0 0
      %683 = vmatpush1.bf16.msra.mxu0 %v635
      %684 = vmatprep.mubr.bf16.mxu0 %v278
      %685 = vmatmul.mubr.bf16.gmra.mrb[0].mxu0 %v277
      %v686 = vpop.f32.mrb[0].mxu0
      %v687 = vadd.f32 %v507, %v686
      %v688 = vpop.f32.mrb[0].mxu0
      %v689 = vpop.f32.mrb[0].mxu0
      %v690 = vadd.f32 %v510, %v689
      %v691 = vpop.f32.mrb[0].mxu0
      %692 = vmatprep.mubr.bf16.mxu0 %v280
      %693 = vmatmul.mubr.bf16.gmra.mrb[0].mxu0 %v279
      %v694 = vpop.f32.mrb[0].mxu0
      %v695 = vadd.f32 %v515, %v694
      %v696 = vpop.f32.mrb[0].mxu0
      %v697 = vpop.f32.mrb[0].mxu0
      %v698 = vadd.f32 %v518, %v697
      %v699 = vpop.f32.mrb[0].mxu0
      %700 = vmatprep.mubr.bf16.mxu0 %v282
      %701 = vmatmul.mubr.bf16.gmra.mrb[0].mxu0 %v281
      %v702 = vpop.f32.mrb[0].mxu0
      %v703 = vadd.f32 %v523, %v702
      %v704 = vpop.f32.mrb[0].mxu0
      %v705 = vpop.f32.mrb[0].mxu0
      %v706 = vadd.f32 %v526, %v705
      %v707 = vpop.f32.mrb[0].mxu0
      %708 = vmatprep.mubr.bf16.mxu0 %v284
      %709 = vmatmul.mubr.bf16.gmra.mrb[0].mxu0 %v283
      %v710 = vpop.f32.mrb[0].mxu0
      %v711 = vadd.f32 %v531, %v710
      %v712 = vpop.f32.mrb[0].mxu0
      %v713 = vpop.f32.mrb[0].mxu0
      %v714 = vadd.f32 %v534, %v713
      %v715 = vpop.f32.mrb[0].mxu0
      %716 = vmatprep.mubr.bf16.mxu0 %v545
      %717 = vmatmul.mubr.bf16.gmra.mrb[0].mxu0 %v544
      %v718 = vpop.f32.mrb[0].mxu0
      %v719 = vadd.f32 %v539, %v718
      %v720 = vpop.f32.mrb[0].mxu0
      %v721 = vpop.f32.mrb[0].mxu0
      %v722 = vpop.f32.mrb[0].mxu0
      %723 = vdwg.mxu0
      %v724 = vld [vmem:[%s165 + $0x8] sm:$0xff]
      %v725 = vld [vmem:[%s165 + $0x10] sm:$0xff]
      %v726 = vld [vmem:[%s165 + $0x18] sm:$0xff]
      %v727 = vld [vmem:[%s165 + $0x20] sm:$0xff]
      %v728 = vld [vmem:[%s165 + $0x28] sm:$0xff]
      %v729 = vld [vmem:[%s165 + $0x30] sm:$0xff]
      %v730 = vld [vmem:[%s165 + $0x38] sm:$0xff]
      %v731 = vld [vmem:[%s165 + $0x40] sm:$0xff]
      %v732 = vld [vmem:[%s165 + $0x48] sm:$0xff]
      %v733 = vld [vmem:[%s165 + $0x50] sm:$0x11]
      %s734 = scalar_lea.vmem %s1, 256
      %v735 = vld [vmem:[%s734] sm:$0xf]
      %v736 = vld [vmem:[%s734 + $0x4] sm:$0xf]
      %v737 = vld [vmem:[%s734 + $0x8] sm:$0xf]
      %v738 = vld [vmem:[%s734 + $0xc] sm:$0xf]
      %v739 = vld [vmem:[%s734 + $0x10] sm:$0xf]
      %v740 = vld [vmem:[%s734 + $0x14] sm:$0xf]
      %v741 = vld [vmem:[%s734 + $0x18] sm:$0xf]
      %v742 = vld [vmem:[%s734 + $0x1c] sm:$0xf]
      %v743 = vld [vmem:[%s734 + $0x20] sm:$0xf]
      %v744 = vld [vmem:[%s734 + $0x24] sm:$0xf]
      %v745 = vld [vmem:[%s734 + $0x28] sm:$0xf]
      %v746 = vld [vmem:[%s734 + $0x2c] sm:$0xf]
      %v747 = vld [vmem:[%s734 + $0x30] sm:$0xf]
      %v748 = vld [vmem:[%s734 + $0x34] sm:$0xf]
      %v749 = vld [vmem:[%s734 + $0x38] sm:$0xf]
      %v750 = vld [vmem:[%s734 + $0x3c] sm:$0xf]
      %v751 = vld [vmem:[%s734 + $0x40] sm:$0xf]
      %v752 = vld [vmem:[%s734 + $0x44] sm:$0xf]
      %v753 = vld [vmem:[%s734 + $0x48] sm:$0xf]
      %v754 = vld [vmem:[%s734 + $0x4c] sm:$0xf]
      %v755 = vld [vmem:[%s734 + $0x50] sm:$0xf]
      %v756 = vld [vmem:[%s734 + $0x54] sm:$0xf]
      %v757 = vld [vmem:[%s734 + $0x58] sm:$0xf]
      %v758 = vld [vmem:[%s734 + $0x5c] sm:$0xf]
      %v759 = vld [vmem:[%s734 + $0x60] sm:$0xf]
      %v760 = vld [vmem:[%s734 + $0x64] sm:$0xf]
      %v761 = vld [vmem:[%s734 + $0x68] sm:$0xf]
      %v762 = vld [vmem:[%s734 + $0x6c] sm:$0xf]
      %v763 = vld [vmem:[%s734 + $0x70] sm:$0xf]
      %v764 = vld [vmem:[%s734 + $0x74] sm:$0xf]
      %v765 = vld [vmem:[%s734 + $0x78] sm:$0xf]
      %v766 = vld [vmem:[%s734 + $0x7c] sm:$0xf]
      %v777 = vunpack.c.l.b16 %v724
      %v778 = vunpack.c.h.b16 %v724
      %v779 = vunpack.c.l.b16 %v725
      %v780 = vunpack.c.h.b16 %v725
      %v781 = vunpack.c.l.b16 %v726
      %v782 = vunpack.c.h.b16 %v726
      %v783 = vunpack.c.l.b16 %v727
      %v784 = vunpack.c.h.b16 %v727
      %v785 = vunpack.c.l.b16 %v728
      %v786 = vunpack.c.h.b16 %v728
      %v787 = vunpack.c.l.b16 %v729
      %v788 = vunpack.c.h.b16 %v729
      %v789 = vunpack.c.l.b16 %v730
      %v790 = vunpack.c.h.b16 %v730
      %v791 = vunpack.c.l.b16 %v731
      %v792 = vunpack.c.h.b16 %v731
      %v793 = vunpack.c.l.b16 %v732
      %v794 = vunpack.c.h.b16 %v732
      %v795 = vunpack.c.l.b16 %v733
      %v796 = vunpack.c.h.b16 %v733
      %v797 = vpack.c.b16 %v779, %v777
      %v798 = vpack.c.b16 %v780, %v778
      %v799 = vpack.c.b16 %v783, %v781
      %v800 = vpack.c.b16 %v784, %v782
      %v801 = vpack.c.b16 %v787, %v785
      %v802 = vpack.c.b16 %v788, %v786
      %v803 = vpack.c.b16 %v791, %v789
      %v804 = vpack.c.b16 %v792, %v790
      %v805 = vpack.c.b16 %v795, %v793
      %v806 = vpack.c.b16 %v796, %v794
      %v808 = vshrl.u32 %v797, 16
      %v810 = vshll.u32 %v797, 16
      %v812 = vrot.slane %v810, 1
      %v813 = vor.u32 %v808, %v812
      %v815 = vshll.u32 %v799, 16
      %v817 = vrot.slane %v815, 1
      %v818 = vsel %vm287, %v813, %v817
      %v820 = vshrl.u32 %v798, 16
      %v822 = vshll.u32 %v798, 16
      %v824 = vrot.slane %v822, 1
      %v825 = vor.u32 %v820, %v824
      %v827 = vshll.u32 %v800, 16
      %v829 = vrot.slane %v827, 1
      %v830 = vsel %vm287, %v825, %v829
      %v831 = vshrl.u32 %v799, 16
      %v833 = vor.u32 %v831, %v817
      %v835 = vshll.u32 %v801, 16
      %v837 = vrot.slane %v835, 1
      %v838 = vsel %vm287, %v833, %v837
      %v839 = vshrl.u32 %v800, 16
      %v841 = vor.u32 %v839, %v829
      %v843 = vshll.u32 %v802, 16
      %v845 = vrot.slane %v843, 1
      %v846 = vsel %vm287, %v841, %v845
      %v847 = vshrl.u32 %v801, 16
      %v849 = vor.u32 %v847, %v837
      %v851 = vshll.u32 %v803, 16
      %v853 = vrot.slane %v851, 1
      %v854 = vsel %vm287, %v849, %v853
      %v855 = vshrl.u32 %v802, 16
      %v857 = vor.u32 %v855, %v845
      %v859 = vshll.u32 %v804, 16
      %v861 = vrot.slane %v859, 1
      %v862 = vsel %vm287, %v857, %v861
      %v863 = vshrl.u32 %v803, 16
      %v865 = vor.u32 %v863, %v853
      %v867 = vshll.u32 %v805, 16
      %v869 = vrot.slane %v867, 1
      %v870 = vsel %vm287, %v865, %v869
      %v871 = vshrl.u32 %v804, 16
      %v873 = vor.u32 %v871, %v861
      %v875 = vshll.u32 %v806, 16
      %v877 = vrot.slane %v875, 1
      %v878 = vsel %vm287, %v873, %v877
      %v879 = vshrl.u32 %v805, 16
      %v881 = vor.u32 %v879, %v869
      %v882 = vshrl.u32 %v806, 16
      %v884 = vor.u32 %v882, %v877
      %v927 = vunpack.c.l.b16 %v735
      %v928 = vunpack.c.l.b16 %v736
      %v929 = vunpack.c.l.b16 %v737
      %v930 = vunpack.c.l.b16 %v738
      %v931 = vunpack.c.l.b16 %v739
      %v932 = vunpack.c.l.b16 %v740
      %v933 = vunpack.c.l.b16 %v741
      %v934 = vunpack.c.l.b16 %v742
      %v935 = vunpack.c.l.b16 %v743
      %v936 = vunpack.c.l.b16 %v744
      %v937 = vunpack.c.l.b16 %v745
      %v938 = vunpack.c.l.b16 %v746
      %v939 = vunpack.c.l.b16 %v747
      %v940 = vunpack.c.l.b16 %v748
      %v941 = vunpack.c.l.b16 %v749
      %v942 = vunpack.c.l.b16 %v750
      %v943 = vunpack.c.l.b16 %v751
      %v944 = vunpack.c.l.b16 %v752
      %v945 = vunpack.c.l.b16 %v753
      %v946 = vunpack.c.l.b16 %v754
      %v947 = vunpack.c.l.b16 %v755
      %v948 = vunpack.c.l.b16 %v756
      %v949 = vunpack.c.l.b16 %v757
      %v950 = vunpack.c.l.b16 %v758
      %v951 = vunpack.c.l.b16 %v759
      %v952 = vunpack.c.l.b16 %v760
      %v953 = vunpack.c.l.b16 %v761
      %v954 = vunpack.c.l.b16 %v762
      %v955 = vunpack.c.l.b16 %v763
      %v956 = vunpack.c.l.b16 %v764
      %v957 = vunpack.c.l.b16 %v765
      %v958 = vunpack.c.l.b16 %v766
      %v959 = vpack.c.b16 %v928, %v927
      %v960 = vpack.c.b16 %v930, %v929
      %v961 = vpack.c.b16 %v932, %v931
      %v962 = vpack.c.b16 %v934, %v933
      %v963 = vpack.c.b16 %v936, %v935
      %v964 = vpack.c.b16 %v938, %v937
      %v965 = vpack.c.b16 %v940, %v939
      %v966 = vpack.c.b16 %v942, %v941
      %v967 = vpack.c.b16 %v944, %v943
      %v968 = vpack.c.b16 %v946, %v945
      %v969 = vpack.c.b16 %v948, %v947
      %v970 = vpack.c.b16 %v950, %v949
      %v971 = vpack.c.b16 %v952, %v951
      %v972 = vpack.c.b16 %v954, %v953
      %v973 = vpack.c.b16 %v956, %v955
      %v974 = vpack.c.b16 %v958, %v957
      %991 = vmatprep.subr.bf16.mxu0 0
      %992 = vmatpush1.bf16.msra.mxu0 %v959
      %993 = vmatprep.subr.bf16.mxu0 0
      %994 = vmatpush1.bf16.msra.mxu0 %v960
      %995 = vmatprep.subr.bf16.mxu0 0
      %996 = vmatpush1.bf16.msra.mxu0 %v961
      %997 = vmatprep.subr.bf16.mxu0 0
      %998 = vmatpush1.bf16.msra.mxu0 %v962
      %999 = vmatprep.subr.bf16.mxu0 0
      %1000 = vmatpush1.bf16.msra.mxu0 %v963
      %1001 = vmatprep.subr.bf16.mxu0 0
      %1002 = vmatpush1.bf16.msra.mxu0 %v964
      %1003 = vmatprep.subr.bf16.mxu0 0
      %1004 = vmatpush1.bf16.msra.mxu0 %v965
      %1005 = vmatprep.subr.bf16.mxu0 0
      %1006 = vmatpush1.bf16.msra.mxu0 %v966
      %1007 = vmatprep.subr.bf16.mxu0 0
      %1008 = vmatpush1.bf16.msra.mxu0 %v967
      %1009 = vmatprep.subr.bf16.mxu0 0
      %1010 = vmatpush1.bf16.msra.mxu0 %v968
      %1011 = vmatprep.subr.bf16.mxu0 0
      %1012 = vmatpush1.bf16.msra.mxu0 %v969
      %1013 = vmatprep.subr.bf16.mxu0 0
      %1014 = vmatpush1.bf16.msra.mxu0 %v970
      %1015 = vmatprep.subr.bf16.mxu0 0
      %1016 = vmatpush1.bf16.msra.mxu0 %v971
      %1017 = vmatprep.subr.bf16.mxu0 0
      %1018 = vmatpush1.bf16.msra.mxu0 %v972
      %1019 = vmatprep.subr.bf16.mxu0 0
      %1020 = vmatpush1.bf16.msra.mxu0 %v973
      %1021 = vmatprep.subr.bf16.mxu0 0
      %1022 = vmatpush1.bf16.msra.mxu0 %v974
      %1023 = vmatprep.mubr.bf16.mxu0 %v830
      %1024 = vmatmul.mubr.bf16.gmra.mrb[0].mxu0 %v818
      %v1025 = vpop.f32.mrb[0].mxu0
      %v1026 = vadd.f32 0.0, %v1025
      %v1027 = vpop.f32.mrb[0].mxu0
      %v1028 = vpop.f32.mrb[0].mxu0
      %v1029 = vadd.f32 0.0, %v1028
      %v1030 = vpop.f32.mrb[0].mxu0
      %1031 = vmatprep.mubr.bf16.mxu0 %v846
      %1032 = vmatmul.mubr.bf16.gmra.mrb[0].mxu0 %v838
      %v1033 = vpop.f32.mrb[0].mxu0
      %v1034 = vadd.f32 0.0, %v1033
      %v1035 = vpop.f32.mrb[0].mxu0
      %v1036 = vpop.f32.mrb[0].mxu0
      %v1037 = vadd.f32 0.0, %v1036
      %v1038 = vpop.f32.mrb[0].mxu0
      %1039 = vmatprep.mubr.bf16.mxu0 %v862
      %1040 = vmatmul.mubr.bf16.gmra.mrb[0].mxu0 %v854
      %v1041 = vpop.f32.mrb[0].mxu0
      %v1042 = vadd.f32 0.0, %v1041
      %v1043 = vpop.f32.mrb[0].mxu0
      %v1044 = vpop.f32.mrb[0].mxu0
      %v1045 = vadd.f32 0.0, %v1044
      %v1046 = vpop.f32.mrb[0].mxu0
      %1047 = vmatprep.mubr.bf16.mxu0 %v878
      %1048 = vmatmul.mubr.bf16.gmra.mrb[0].mxu0 %v870
      %v1049 = vpop.f32.mrb[0].mxu0
      %v1050 = vadd.f32 0.0, %v1049
      %v1051 = vpop.f32.mrb[0].mxu0
      %v1052 = vpop.f32.mrb[0].mxu0
      %v1053 = vadd.f32 0.0, %v1052
      %v1054 = vpop.f32.mrb[0].mxu0
      %1055 = vmatprep.mubr.bf16.mxu0 %v884
      %1056 = vmatmul.mubr.bf16.gmra.mrb[0].mxu0 %v881
      %v1057 = vpop.f32.mrb[0].mxu0
      %v1058 = vadd.f32 0.0, %v1057
      %v1059 = vpop.f32.mrb[0].mxu0
      %v1060 = vpop.f32.mrb[0].mxu0
      %v1061 = vpop.f32.mrb[0].mxu0
      %1062 = vdwg.mxu0
      %v1063 = vadd.f32 %v687, %v1026
      %v1064 = vadd.f32 %v690, %v1029
      %v1065 = vadd.f32 %v695, %v1034
      %v1066 = vadd.f32 %v698, %v1037
      %v1067 = vadd.f32 %v703, %v1042
      %v1068 = vadd.f32 %v706, %v1045
      %v1069 = vadd.f32 %v711, %v1050
      %v1070 = vadd.f32 %v714, %v1053
      %v1071 = vadd.f32 %v719, %v1058
      %v1072 = vld [vmem:[%s165 + $0x8] sm:$0xee]
      %s1073 = scalar_lea.vmem %s1, 384
      %v1074 = vld [vmem:[%s1073] sm:$0xf]
      %v1075 = vld [vmem:[%s1073 + $0x4] sm:$0xf]
      %v1076 = vld [vmem:[%s1073 + $0x8] sm:$0xf]
      %v1077 = vld [vmem:[%s1073 + $0xc] sm:$0xf]
      %v1078 = vld [vmem:[%s1073 + $0x10] sm:$0xf]
      %v1079 = vld [vmem:[%s1073 + $0x14] sm:$0xf]
      %v1080 = vld [vmem:[%s1073 + $0x18] sm:$0xf]
      %v1081 = vld [vmem:[%s1073 + $0x1c] sm:$0xf]
      %v1082 = vld [vmem:[%s1073 + $0x20] sm:$0xf]
      %v1083 = vld [vmem:[%s1073 + $0x24] sm:$0xf]
      %v1084 = vld [vmem:[%s1073 + $0x28] sm:$0xf]
      %v1085 = vld [vmem:[%s1073 + $0x2c] sm:$0xf]
      %v1086 = vld [vmem:[%s1073 + $0x30] sm:$0xf]
      %v1087 = vld [vmem:[%s1073 + $0x34] sm:$0xf]
      %v1088 = vld [vmem:[%s1073 + $0x38] sm:$0xf]
      %v1089 = vld [vmem:[%s1073 + $0x3c] sm:$0xf]
      %v1090 = vld [vmem:[%s1073 + $0x40] sm:$0xf]
      %v1091 = vld [vmem:[%s1073 + $0x44] sm:$0xf]
      %v1092 = vld [vmem:[%s1073 + $0x48] sm:$0xf]
      %v1093 = vld [vmem:[%s1073 + $0x4c] sm:$0xf]
      %v1094 = vld [vmem:[%s1073 + $0x50] sm:$0xf]
      %v1095 = vld [vmem:[%s1073 + $0x54] sm:$0xf]
      %v1096 = vld [vmem:[%s1073 + $0x58] sm:$0xf]
      %v1097 = vld [vmem:[%s1073 + $0x5c] sm:$0xf]
      %v1098 = vld [vmem:[%s1073 + $0x60] sm:$0xf]
      %v1099 = vld [vmem:[%s1073 + $0x64] sm:$0xf]
      %v1100 = vld [vmem:[%s1073 + $0x68] sm:$0xf]
      %v1101 = vld [vmem:[%s1073 + $0x6c] sm:$0xf]
      %v1102 = vld [vmem:[%s1073 + $0x70] sm:$0xf]
      %v1103 = vld [vmem:[%s1073 + $0x74] sm:$0xf]
      %v1104 = vld [vmem:[%s1073 + $0x78] sm:$0xf]
      %v1105 = vld [vmem:[%s1073 + $0x7c] sm:$0xf]
      %v1107 = vunpack.c.l.b16 %v1072
      %v1108 = vunpack.c.h.b16 %v1072
      %v1109 = vpack.c.b16 %v779, %v1107
      %v1110 = vpack.c.b16 %v780, %v1108
      %vm1111 = vcmask 1046528
      %v1112 = vrot.slane %v1109, 1
      %v1113 = vrot.slane %v799, 1
      %v1114 = vsel %vm1111, %v1112, %v1113
      %v1115 = vrot.slane %v1110, 1
      %v1116 = vrot.slane %v800, 1
      %v1117 = vsel %vm1111, %v1115, %v1116
      %v1118 = vrot.slane %v801, 1
      %v1119 = vsel %vm1111, %v1113, %v1118
      %v1120 = vrot.slane %v802, 1
      %v1121 = vsel %vm1111, %v1116, %v1120
      %v1122 = vrot.slane %v803, 1
      %v1123 = vsel %vm1111, %v1118, %v1122
      %v1124 = vrot.slane %v804, 1
      %v1125 = vsel %vm1111, %v1120, %v1124
      %v1126 = vrot.slane %v805, 1
      %v1127 = vsel %vm1111, %v1122, %v1126
      %v1128 = vrot.slane %v806, 1
      %v1129 = vsel %vm1111, %v1124, %v1128
      %v1172 = vunpack.c.l.b16 %v1074
      %v1173 = vunpack.c.l.b16 %v1075
      %v1174 = vunpack.c.l.b16 %v1076
      %v1175 = vunpack.c.l.b16 %v1077
      %v1176 = vunpack.c.l.b16 %v1078
      %v1177 = vunpack.c.l.b16 %v1079
      %v1178 = vunpack.c.l.b16 %v1080
      %v1179 = vunpack.c.l.b16 %v1081
      %v1180 = vunpack.c.l.b16 %v1082
      %v1181 = vunpack.c.l.b16 %v1083
      %v1182 = vunpack.c.l.b16 %v1084
      %v1183 = vunpack.c.l.b16 %v1085
      %v1184 = vunpack.c.l.b16 %v1086
      %v1185 = vunpack.c.l.b16 %v1087
      %v1186 = vunpack.c.l.b16 %v1088
      %v1187 = vunpack.c.l.b16 %v1089
      %v1188 = vunpack.c.l.b16 %v1090
      %v1189 = vunpack.c.l.b16 %v1091
      %v1190 = vunpack.c.l.b16 %v1092
      %v1191 = vunpack.c.l.b16 %v1093
      %v1192 = vunpack.c.l.b16 %v1094
      %v1193 = vunpack.c.l.b16 %v1095
      %v1194 = vunpack.c.l.b16 %v1096
      %v1195 = vunpack.c.l.b16 %v1097
      %v1196 = vunpack.c.l.b16 %v1098
      %v1197 = vunpack.c.l.b16 %v1099
      %v1198 = vunpack.c.l.b16 %v1100
      %v1199 = vunpack.c.l.b16 %v1101
      %v1200 = vunpack.c.l.b16 %v1102
      %v1201 = vunpack.c.l.b16 %v1103
      %v1202 = vunpack.c.l.b16 %v1104
      %v1203 = vunpack.c.l.b16 %v1105
      %v1204 = vpack.c.b16 %v1173, %v1172
      %v1205 = vpack.c.b16 %v1175, %v1174
      %v1206 = vpack.c.b16 %v1177, %v1176
      %v1207 = vpack.c.b16 %v1179, %v1178
      %v1208 = vpack.c.b16 %v1181, %v1180
      %v1209 = vpack.c.b16 %v1183, %v1182
      %v1210 = vpack.c.b16 %v1185, %v1184
      %v1211 = vpack.c.b16 %v1187, %v1186
      %v1212 = vpack.c.b16 %v1189, %v1188
      %v1213 = vpack.c.b16 %v1191, %v1190
      %v1214 = vpack.c.b16 %v1193, %v1192
      %v1215 = vpack.c.b16 %v1195, %v1194
      %v1216 = vpack.c.b16 %v1197, %v1196
      %v1217 = vpack.c.b16 %v1199, %v1198
      %v1218 = vpack.c.b16 %v1201, %v1200
      %v1219 = vpack.c.b16 %v1203, %v1202
      %1236 = vmatprep.subr.bf16.mxu0 0
      %1237 = vmatpush1.bf16.msra.mxu0 %v1204
      %1238 = vmatprep.subr.bf16.mxu0 0
      %1239 = vmatpush1.bf16.msra.mxu0 %v1205
      %1240 = vmatprep.subr.bf16.mxu0 0
      %1241 = vmatpush1.bf16.msra.mxu0 %v1206
      %1242 = vmatprep.subr.bf16.mxu0 0
      %1243 = vmatpush1.bf16.msra.mxu0 %v1207
      %1244 = vmatprep.subr.bf16.mxu0 0
      %1245 = vmatpush1.bf16.msra.mxu0 %v1208
      %1246 = vmatprep.subr.bf16.mxu0 0
      %1247 = vmatpush1.bf16.msra.mxu0 %v1209
      %1248 = vmatprep.subr.bf16.mxu0 0
      %1249 = vmatpush1.bf16.msra.mxu0 %v1210
      %1250 = vmatprep.subr.bf16.mxu0 0
      %1251 = vmatpush1.bf16.msra.mxu0 %v1211
      %1252 = vmatprep.subr.bf16.mxu0 0
      %1253 = vmatpush1.bf16.msra.mxu0 %v1212
      %1254 = vmatprep.subr.bf16.mxu0 0
      %1255 = vmatpush1.bf16.msra.mxu0 %v1213
      %1256 = vmatprep.subr.bf16.mxu0 0
      %1257 = vmatpush1.bf16.msra.mxu0 %v1214
      %1258 = vmatprep.subr.bf16.mxu0 0
      %1259 = vmatpush1.bf16.msra.mxu0 %v1215
      %1260 = vmatprep.subr.bf16.mxu0 0
      %1261 = vmatpush1.bf16.msra.mxu0 %v1216
      %1262 = vmatprep.subr.bf16.mxu0 0
      %1263 = vmatpush1.bf16.msra.mxu0 %v1217
      %1264 = vmatprep.subr.bf16.mxu0 0
      %1265 = vmatpush1.bf16.msra.mxu0 %v1218
      %1266 = vmatprep.subr.bf16.mxu0 0
      %1267 = vmatpush1.bf16.msra.mxu0 %v1219
      %1268 = vmatprep.mubr.bf16.mxu0 %v1117
      %1269 = vmatmul.mubr.bf16.gmra.mrb[0].mxu0 %v1114
      %v1270 = vpop.f32.mrb[0].mxu0
      %v1271 = vadd.f32 0.0, %v1270
      %v1272 = vpop.f32.mrb[0].mxu0
      %v1273 = vpop.f32.mrb[0].mxu0
      %v1274 = vadd.f32 0.0, %v1273
      %v1275 = vpop.f32.mrb[0].mxu0
      %1276 = vmatprep.mubr.bf16.mxu0 %v1121
      %1277 = vmatmul.mubr.bf16.gmra.mrb[0].mxu0 %v1119
      %v1278 = vpop.f32.mrb[0].mxu0
      %v1279 = vadd.f32 0.0, %v1278
      %v1280 = vpop.f32.mrb[0].mxu0
      %v1281 = vpop.f32.mrb[0].mxu0
      %v1282 = vadd.f32 0.0, %v1281
      %v1283 = vpop.f32.mrb[0].mxu0
      %1284 = vmatprep.mubr.bf16.mxu0 %v1125
      %1285 = vmatmul.mubr.bf16.gmra.mrb[0].mxu0 %v1123
      %v1286 = vpop.f32.mrb[0].mxu0
      %v1287 = vadd.f32 0.0, %v1286
      %v1288 = vpop.f32.mrb[0].mxu0
      %v1289 = vpop.f32.mrb[0].mxu0
      %v1290 = vadd.f32 0.0, %v1289
      %v1291 = vpop.f32.mrb[0].mxu0
      %1292 = vmatprep.mubr.bf16.mxu0 %v1129
      %1293 = vmatmul.mubr.bf16.gmra.mrb[0].mxu0 %v1127
      %v1294 = vpop.f32.mrb[0].mxu0
      %v1295 = vadd.f32 0.0, %v1294
      %v1296 = vpop.f32.mrb[0].mxu0
      %v1297 = vpop.f32.mrb[0].mxu0
      %v1298 = vadd.f32 0.0, %v1297
      %v1299 = vpop.f32.mrb[0].mxu0
      %1300 = vmatprep.mubr.bf16.mxu0 %v1128
      %1301 = vmatmul.mubr.bf16.gmra.mrb[0].mxu0 %v1126
      %v1302 = vpop.f32.mrb[0].mxu0
      %v1303 = vadd.f32 0.0, %v1302
      %v1304 = vpop.f32.mrb[0].mxu0
      %v1305 = vpop.f32.mrb[0].mxu0
      %v1306 = vpop.f32.mrb[0].mxu0
      %1307 = vdwg.mxu0
      %v1308 = vadd.f32 %v1063, %v1271
      %v1309 = vadd.f32 %v1064, %v1274
      %v1310 = vadd.f32 %v1065, %v1279
      %v1311 = vadd.f32 %v1066, %v1282
      %v1312 = vadd.f32 %v1067, %v1287
      %v1313 = vadd.f32 %v1068, %v1290
      %v1314 = vadd.f32 %v1069, %v1295
      %v1315 = vadd.f32 %v1070, %v1298
      %v1316 = vadd.f32 %v1071, %v1303
      %v1317 = vld [vmem:[%s2] sm:$0x1]
      %v1319 = vlaneseq
      %v1320 = vshrl.u32 %v1319, 7
      %v1321 = vsub.s32 0, %v1320
      %v1322 = vrot.slane %v1317, %v1321
      %v1324 = vadd.f32 %v1308, %v1322
      %v1325 = vadd.f32 %v1309, %v1322
      %v1326 = vadd.f32 %v1310, %v1322
      %v1327 = vadd.f32 %v1311, %v1322
      %v1328 = vadd.f32 %v1312, %v1322
      %v1329 = vadd.f32 %v1313, %v1322
      %v1330 = vadd.f32 %v1314, %v1322
      %v1331 = vadd.f32 %v1315, %v1322
      %v1332 = vadd.f32 %v1316, %v1322
      %vm1333 = vcmp.ge.f32.partialorder %v1324, 0.0
      %vm1334 = vcmp.ge.f32.partialorder %v1325, 0.0
      %vm1335 = vcmp.ge.f32.partialorder %v1326, 0.0
      %vm1336 = vcmp.ge.f32.partialorder %v1327, 0.0
      %vm1337 = vcmp.ge.f32.partialorder %v1328, 0.0
      %vm1338 = vcmp.ge.f32.partialorder %v1329, 0.0
      %vm1339 = vcmp.ge.f32.partialorder %v1330, 0.0
      %vm1340 = vcmp.ge.f32.partialorder %v1331, 0.0
      %vm1341 = vcmp.ge.f32.partialorder %v1332, 0.0
      %v1342 = vmul.f32 %v1324, 0.2
      %v1343 = vmul.f32 %v1325, 0.2
      %v1344 = vmul.f32 %v1326, 0.2
      %v1345 = vmul.f32 %v1327, 0.2
      %v1346 = vmul.f32 %v1328, 0.2
      %v1347 = vmul.f32 %v1329, 0.2
      %v1348 = vmul.f32 %v1330, 0.2
      %v1349 = vmul.f32 %v1331, 0.2
      %v1350 = vmul.f32 %v1332, 0.2
      %v1351 = vsel %vm1333, %v1324, %v1342
      %v1352 = vsel %vm1334, %v1325, %v1343
      %v1353 = vsel %vm1335, %v1326, %v1344
      %v1354 = vsel %vm1336, %v1327, %v1345
      %v1355 = vsel %vm1337, %v1328, %v1346
      %v1356 = vsel %vm1338, %v1329, %v1347
      %v1357 = vsel %vm1339, %v1330, %v1348
      %v1358 = vsel %vm1340, %v1331, %v1349
      %v1359 = vsel %vm1341, %v1332, %v1350
      %v1360 = vpack.c.bf16 %v1352, %v1351
      %v1361 = vpack.c.bf16 %v1354, %v1353
      %v1362 = vpack.c.bf16 %v1356, %v1355
      %v1363 = vpack.c.bf16 %v1358, %v1357
      %v1364 = vpack.c.bf16 %v1359, %v1359
      %v1370 = vunpack.c.l.b16 %v1360
      %v1371 = vunpack.c.h.b16 %v1360
      %v1372 = vunpack.c.l.b16 %v1361
      %v1373 = vunpack.c.h.b16 %v1361
      %v1374 = vunpack.c.l.b16 %v1362
      %v1375 = vunpack.c.h.b16 %v1362
      %v1376 = vunpack.c.l.b16 %v1363
      %v1377 = vunpack.c.h.b16 %v1363
      %v1378 = vunpack.c.l.b16 %v1364
      %v1379 = vpack.c.b16 %v1370, %v1370
      %v1380 = vpack.c.b16 %v1371, %v1371
      %v1381 = vpack.c.b16 %v1372, %v1372
      %v1382 = vpack.c.b16 %v1373, %v1373
      %v1383 = vpack.c.b16 %v1374, %v1374
      %v1384 = vpack.c.b16 %v1375, %v1375
      %v1385 = vpack.c.b16 %v1376, %v1376
      %v1386 = vpack.c.b16 %v1377, %v1377
      %v1387 = vpack.c.b16 %v1378, %v1378
      %1397 = vst [vmem:[%s170] sm:$0xf] %v1379
      %1398 = vst [vmem:[%s170 + $0x4] sm:$0xf] %v1380
      %1399 = vst [vmem:[%s170 + $0x8] sm:$0xf] %v1381
      %1400 = vst [vmem:[%s170 + $0xc] sm:$0xf] %v1382
      %1401 = vst [vmem:[%s170 + $0x10] sm:$0xf] %v1383
      %1402 = vst [vmem:[%s170 + $0x14] sm:$0xf] %v1384
      %1403 = vst [vmem:[%s170 + $0x18] sm:$0xf] %v1385
      %1404 = vst [vmem:[%s170 + $0x1c] sm:$0xf] %v1386
      %1405 = vst [vmem:[%s170 + $0x20] sm:$0xf] %v1387
      %p1406 = scmp.lt.s32.totalorder %s14, 1
      %s1407 = scalar_select %p1406, %s14, 1
      %s1408 = smul.addr %s1407, 9
      %s1409 = smul.addr %s1408, 4
      %s1410 = scalar_lea.vmem %s3, %s1409
      // Predicated region
      $region33: #{patch_discriminator.5} parent=31 // pred_check
        %p1411 = pneg %p100
      $region34: #{patch_discriminator.5} parent=31 // pred_check_branch
        %1413 = sbr.rel (%p1411) target = $region36
      $region35: #{patch_discriminator.5} parent=31 // pred_region
        _
      $region36: #{patch_discriminator.5} parent=31 // pred_fallthru
        _
    $region32: #{patch_discriminator.5} parent=5 // pred_fallthru
      _
    %p1414 = scmp.le.s32.totalorder 2, %s9
    // Predicated region
    $region37: #{patch_discriminator.5} parent=5 // pred_check
      %p1415 = pneg %p1414
    $region38: #{patch_discriminator.5} parent=5 // pred_check_branch
      %1417 = sbr.rel (%p1415) target = $region40
    $region39: #{patch_discriminator.5} parent=5 // pred_region
      %s1418 = ssub.s32 %s9, 2
      // Predicated region
      $region41: #{patch_discriminator.5} parent=39 // pred_check
        %p1419 = pneg %p106
      $region42: #{patch_discriminator.5} parent=39 // pred_check_branch
        %1421 = sbr.rel (%p1419) target = $region44
      $region43: #{patch_discriminator.5} parent=39 // pred_region
        %p1422 = scmp.lt.s32.totalorder %s15, 1
        %s1423 = scalar_select %p1422, %s15, 1
        %s1424 = smul.addr %s1423, 9
        %s1425 = smul.addr %s1424, 4
        %s1426 = scalar_lea.vmem %s3, %s1425
      $region44: #{patch_discriminator.5} parent=39 // pred_fallthru
        _
    $region40: #{patch_discriminator.5} parent=5 // pred_fallthru
      _
  $region6: #{patch_discriminator.5} parent=0 // loop_footer
    %s13 = sadd.s32 1, %s9
  $region7: #{patch_discriminator.5} parent=0 // loop_footer_branch
    %8 = sbr.rel target = $region3
  $region8: #{patch_discriminator.5} parent=0 // loop_exit
    _

// kernel: patch_discriminator.6
$region0: #{patch_discriminator.6}
  #allocation0 [shape = 'u32[]', space=smem, size = 0x4, offset = 0x4, fixed_abs, tag = 'smem constant byte address 0x4 - core index']
  #allocation1 [shape = 'u32[144,128]{1,0:T(1,128)}', space=vmem, size = 0x12000, scoped, tag = 'internal scratch']
  %s0 = inlined_call_operand.vmem [shape: bf16[2,26,512], index: 0, kind: input, shape index: {}]
  %s1 = inlined_call_operand.vmem [shape: bf16[4,512,256], index: 1, kind: input, shape index: {}]
  %s2 = inlined_call_operand.vmem [shape: f32[1,256], index: 2, kind: input, shape index: {}]
  %s3 = inlined_call_operand.vmem [shape: bf16[2,20,256], index: 3, kind: output, shape index: {}]
  %s4 = sld [smem:[#allocation0]]
  $region45: #{patch_discriminator.6} parent=0
    _
  %s6 = ssub.s32 1, %s4
  %s7 = scalar_select 0, %s6, %s4
  loop: start=0, step=1, limit=4
  $region2: #{patch_discriminator.6} parent=0 // loop_pre_header
    _
  $region3: #{patch_discriminator.6} parent=0 // loop_header
    %s9 = sphi 0, %s13
    %p10 = scmp.ge.s32.totalorder %s9, 4
    %s19 = sphi 0, %s21
    %s22 = sphi 0, %s19
    %s23 = sphi 0, %s22
    %s39 = sphi 0, %s23
    %s43 = sphi 0, %s43
    %s45 = sphi 0, %s43
    %s46 = sphi 0, %s45
    %s60 = sphi 0, %s46
    %s64 = sphi 0, %s64
    %s66 = sphi 0, %s64
    %s67 = sphi 0, %s66
    %s81 = sphi 0, %s67
    %s87 = sphi 0, %s89
    %s90 = sphi 0, %s87
    %s91 = sphi 0, %s90
    %s107 = sphi 0, %s91
  $region4: #{patch_discriminator.6} parent=0 // loop_header_branch
    %12 = sbr.rel (%p10) target = $region8
  $region5: #{patch_discriminator.6} parent=0 // loop_body
    %s14 = ssub.s32 %s9, 1
    %s15 = ssub.s32 %s9, 2
    %s16 = sadd.s32 %s9, 1
    %s17 = ssub.s32 %s9, %s16
    %p18 = scmp.eq.s32.totalorder %s17, 0
    %s20 = sadd.s32 %s19, 1
    %s21 = scalar_select %p18, %s19, %s20
    %p24 = pneg %p18
    %p25 = scmp.eq.s32.totalorder %s9, 1
    %p26 = por %p24, %p25
    %p27 = scmp.ne.s32.totalorder %s19, %s22
    %p28 = scmp.eq.s32.totalorder %s9, 0
    %p29 = por %p27, %p28
    %p30 = scmp.ne.s32.totalorder %s19, %s22
    %p31 = scmp.eq.s32.totalorder %s14, 1
    %p32 = por %p30, %p31
    %p33 = scmp.ne.s32.totalorder %s22, %s23
    %p34 = scmp.eq.s32.totalorder %s14, 0
    %p35 = por %p33, %p34
    %p36 = scmp.ne.s32.totalorder %s22, %s23
    %p37 = scmp.eq.s32.totalorder %s15, 1
    %p38 = por %p36, %p37
    %p40 = scmp.ne.s32.totalorder %s23, %s39
    %p41 = scmp.eq.s32.totalorder %s15, 0
    %p42 = por %p40, %p41
    %s44 = sadd.s32 %s43, 1
    %p47 = scmp.eq.s32.totalorder %s9, 1
    %p48 = scmp.ne.s32.totalorder %s43, %s45
    %p49 = scmp.eq.s32.totalorder %s9, 0
    %p50 = por %p48, %p49
    %p51 = scmp.ne.s32.totalorder %s43, %s45
    %p52 = scmp.eq.s32.totalorder %s14, 1
    %p53 = por %p51, %p52
    %p54 = scmp.ne.s32.totalorder %s45, %s46
    %p55 = scmp.eq.s32.totalorder %s14, 0
    %p56 = por %p54, %p55
    %p57 = scmp.ne.s32.totalorder %s45, %s46
    %p58 = scmp.eq.s32.totalorder %s15, 1
    %p59 = por %p57, %p58
    %p61 = scmp.ne.s32.totalorder %s46, %s60
    %p62 = scmp.eq.s32.totalorder %s15, 0
    %p63 = por %p61, %p62
    %s65 = sadd.s32 %s64, 1
    %p68 = scmp.eq.s32.totalorder %s9, 1
    %p69 = scmp.ne.s32.totalorder %s64, %s66
    %p70 = scmp.eq.s32.totalorder %s9, 0
    %p71 = por %p69, %p70
    %p72 = scmp.ne.s32.totalorder %s64, %s66
    %p73 = scmp.eq.s32.totalorder %s14, 1
    %p74 = por %p72, %p73
    %p75 = scmp.ne.s32.totalorder %s66, %s67
    %p76 = scmp.eq.s32.totalorder %s14, 0
    %p77 = por %p75, %p76
    %p78 = scmp.ne.s32.totalorder %s66, %s67
    %p79 = scmp.eq.s32.totalorder %s15, 1
    %p80 = por %p78, %p79
    %p82 = scmp.ne.s32.totalorder %s67, %s81
    %p83 = scmp.eq.s32.totalorder %s15, 0
    %p84 = por %p82, %p83
    %s85 = ssub.s32 %s9, %s16
    %p86 = scmp.eq.s32.totalorder %s85, 0
    %s88 = sadd.s32 %s87, 1
    %s89 = scalar_select %p86, %s87, %s88
    %p92 = pneg %p86
    %p93 = scmp.eq.s32.totalorder %s9, 1
    %p94 = por %p92, %p93
    %p95 = scmp.ne.s32.totalorder %s87, %s90
    %p96 = scmp.eq.s32.totalorder %s9, 0
    %p97 = por %p95, %p96
    %p98 = scmp.ne.s32.totalorder %s87, %s90
    %p99 = scmp.eq.s32.totalorder %s14, 1
    %p100 = por %p98, %p99
    %p101 = scmp.ne.s32.totalorder %s90, %s91
    %p102 = scmp.eq.s32.totalorder %s14, 0
    %p103 = por %p101, %p102
    %p104 = scmp.ne.s32.totalorder %s90, %s91
    %p105 = scmp.eq.s32.totalorder %s15, 1
    %p106 = por %p104, %p105
    %p108 = scmp.ne.s32.totalorder %s91, %s107
    %p109 = scmp.eq.s32.totalorder %s15, 0
    %p110 = por %p108, %p109
    %p111 = scmp.le.s32.totalorder 1, %s9
    %p112 = scmp.lt.s32.totalorder %s9, 3
    %p113 = pnand %p111, %p112
    %p114 = pneg %p113
    // Predicated region
    $region9: #{patch_discriminator.6} parent=5 // pred_check
      _
    $region10: #{patch_discriminator.6} parent=5 // pred_check_branch
      %116 = sbr.rel (%p113) target = $region12
    $region11: #{patch_discriminator.6} parent=5 // pred_region
      %s117 = ssub.s32 %s9, 1
      // Predicated region
      $region13: #{patch_discriminator.6} parent=11 // pred_check
        %p118 = pneg %p56
      $region14: #{patch_discriminator.6} parent=11 // pred_check_branch
        %120 = sbr.rel (%p118) target = $region16
      $region15: #{patch_discriminator.6} parent=11 // pred_region
        _
      $region16: #{patch_discriminator.6} parent=11 // pred_fallthru
        _
      // Predicated region
      $region17: #{patch_discriminator.6} parent=11 // pred_check
        %p121 = pneg %p77
      $region18: #{patch_discriminator.6} parent=11 // pred_check_branch
        %123 = sbr.rel (%p121) target = $region20
      $region19: #{patch_discriminator.6} parent=11 // pred_region
        _
      $region20: #{patch_discriminator.6} parent=11 // pred_fallthru
        _
    $region12: #{patch_discriminator.6} parent=5 // pred_fallthru
      _
    %p124 = scmp.lt.s32.totalorder %s9, 2
    // Predicated region
    $region21: #{patch_discriminator.6} parent=5 // pred_check
      %p125 = pneg %p124
    $region22: #{patch_discriminator.6} parent=5 // pred_check_branch
      %127 = sbr.rel (%p125) target = $region24
    $region23: #{patch_discriminator.6} parent=5 // pred_region
      // Predicated region
      $region25: #{patch_discriminator.6} parent=23 // pred_check
        %p128 = pneg %p29
      $region26: #{patch_discriminator.6} parent=23 // pred_check_branch
        %130 = sbr.rel (%p128) target = $region28
      $region27: #{patch_discriminator.6} parent=23 // pred_region
        %p131 = scmp.lt.s32.totalorder %s9, 1
        %s132 = scalar_select %p131, %s9, 1
        %s133 = smul.addr %s132, 16
        %s134 = smul.addr %s133, 4
        %s135 = scalar_lea.vmem %s0, %s134
      $region28: #{patch_discriminator.6} parent=23 // pred_fallthru
        _
    $region24: #{patch_discriminator.6} parent=5 // pred_fallthru
      _
    %p136 = scmp.le.s32.totalorder 1, %s9
    %p137 = scmp.lt.s32.totalorder %s9, 3
    %p138 = pnand %p136, %p137
    %p139 = pneg %p138
    // Predicated region
    $region29: #{patch_discriminator.6} parent=5 // pred_check
      _
    $region30: #{patch_discriminator.6} parent=5 // pred_check_branch
      %141 = sbr.rel (%p138) target = $region32
    $region31: #{patch_discriminator.6} parent=5 // pred_region
      %s142 = ssub.s32 %s9, 1
      %p143 = scmp.lt.s32.totalorder %s14, 1
      %s144 = scalar_select %p143, %s14, 1
      %s145 = smul.addr %s144, 16
      %s146 = smul.addr %s145, 4
      %s147 = scalar_lea.vmem %s0, %s146
      %p148 = pneg %p35
      %p149 = pneg %p32
      %p150 = pneg %p56
      %p151 = pneg %p53
      %p152 = pneg %p77
      %p153 = pneg %p74
      %p154 = pneg %p103
      %p155 = pneg %p100
      %p156 = scmp.lt.s32.totalorder %s14, 1
      %s157 = scalar_select %p156, %s14, 1
      %s158 = smul.addr %s157, 6
      %s159 = smul.addr %s158, 4
      %s160 = scalar_lea.vmem %s3, %s159
      %p161 = scmp.lt.s32.totalorder %s14, 1
      %s162 = scalar_select %p161, %s14, 1
      %s163 = smul.addr %s162, 16
      %s164 = smul.addr %s163, 4
      %s165 = scalar_lea.vmem %s0, %s164
      %p166 = scmp.lt.s32.totalorder %s14, 1
      %s167 = scalar_select %p166, %s14, 1
      %s168 = smul.addr %s167, 6
      %s169 = smul.addr %s168, 4
      %s170 = scalar_lea.vmem %s3, %s169
      %v171 = vld [vmem:[%s165] sm:$0xff]
      %v172 = vld [vmem:[%s165 + $0x8] sm:$0xff]
      %v173 = vld [vmem:[%s165 + $0x10] sm:$0xff]
      %v174 = vld [vmem:[%s165 + $0x18] sm:$0xff]
      %v175 = vld [vmem:[%s165 + $0x20] sm:$0x33]
      %v176 = vld [vmem:[%s165 + $0x28] sm:$0x33]
      %v177 = vld [vmem:[%s1] sm:$0xff]
      %v178 = vld [vmem:[%s1 + $0x8] sm:$0xff]
      %v179 = vld [vmem:[%s1 + $0x10] sm:$0xff]
      %v180 = vld [vmem:[%s1 + $0x18] sm:$0xff]
      %v181 = vld [vmem:[%s1 + $0x20] sm:$0xff]
      %v182 = vld [vmem:[%s1 + $0x28] sm:$0xff]
      %v183 = vld [vmem:[%s1 + $0x30] sm:$0xff]
      %v184 = vld [vmem:[%s1 + $0x38] sm:$0xff]
      %v185 = vld [vmem:[%s1 + $0x40] sm:$0xff]
      %v186 = vld [vmem:[%s1 + $0x48] sm:$0xff]
      %v187 = vld [vmem:[%s1 + $0x50] sm:$0xff]
      %v188 = vld [vmem:[%s1 + $0x58] sm:$0xff]
      %v189 = vld [vmem:[%s1 + $0x60] sm:$0xff]
      %v190 = vld [vmem:[%s1 + $0x68] sm:$0xff]
      %v191 = vld [vmem:[%s1 + $0x70] sm:$0xff]
      %v192 = vld [vmem:[%s1 + $0x78] sm:$0xff]
      %v193 = vld [vmem:[%s1 + $0x80] sm:$0xff]
      %v194 = vld [vmem:[%s1 + $0x88] sm:$0xff]
      %v195 = vld [vmem:[%s1 + $0x90] sm:$0xff]
      %v196 = vld [vmem:[%s1 + $0x98] sm:$0xff]
      %v197 = vld [vmem:[%s1 + $0xa0] sm:$0xff]
      %v198 = vld [vmem:[%s1 + $0xa8] sm:$0xff]
      %v199 = vld [vmem:[%s1 + $0xb0] sm:$0xff]
      %v200 = vld [vmem:[%s1 + $0xb8] sm:$0xff]
      %v201 = vld [vmem:[%s1 + $0xc0] sm:$0xff]
      %v202 = vld [vmem:[%s1 + $0xc8] sm:$0xff]
      %v203 = vld [vmem:[%s1 + $0xd0] sm:$0xff]
      %v204 = vld [vmem:[%s1 + $0xd8] sm:$0xff]
      %v205 = vld [vmem:[%s1 + $0xe0] sm:$0xff]
      %v206 = vld [vmem:[%s1 + $0xe8] sm:$0xff]
      %v207 = vld [vmem:[%s1 + $0xf0] sm:$0xff]
      %v208 = vld [vmem:[%s1 + $0xf8] sm:$0xff]
      %v209 = vld [vmem:[%s1 + $0x100] sm:$0xff]
      %v210 = vld [vmem:[%s1 + $0x108] sm:$0xff]
      %v211 = vld [vmem:[%s1 + $0x110] sm:$0xff]
      %v212 = vld [vmem:[%s1 + $0x118] sm:$0xff]
      %v213 = vld [vmem:[%s1 + $0x120] sm:$0xff]
      %v214 = vld [vmem:[%s1 + $0x128] sm:$0xff]
      %v215 = vld [vmem:[%s1 + $0x130] sm:$0xff]
      %v216 = vld [vmem:[%s1 + $0x138] sm:$0xff]
      %v217 = vld [vmem:[%s1 + $0x140] sm:$0xff]
      %v218 = vld [vmem:[%s1 + $0x148] sm:$0xff]
      %v219 = vld [vmem:[%s1 + $0x150] sm:$0xff]
      %v220 = vld [vmem:[%s1 + $0x158] sm:$0xff]
      %v221 = vld [vmem:[%s1 + $0x160] sm:$0xff]
      %v222 = vld [vmem:[%s1 + $0x168] sm:$0xff]
      %v223 = vld [vmem:[%s1 + $0x170] sm:$0xff]
      %v224 = vld [vmem:[%s1 + $0x178] sm:$0xff]
      %v225 = vld [vmem:[%s1 + $0x180] sm:$0xff]
      %v226 = vld [vmem:[%s1 + $0x188] sm:$0xff]
      %v227 = vld [vmem:[%s1 + $0x190] sm:$0xff]
      %v228 = vld [vmem:[%s1 + $0x198] sm:$0xff]
      %v229 = vld [vmem:[%s1 + $0x1a0] sm:$0xff]
      %v230 = vld [vmem:[%s1 + $0x1a8] sm:$0xff]
      %v231 = vld [vmem:[%s1 + $0x1b0] sm:$0xff]
      %v232 = vld [vmem:[%s1 + $0x1b8] sm:$0xff]
      %v233 = vld [vmem:[%s1 + $0x1c0] sm:$0xff]
      %v234 = vld [vmem:[%s1 + $0x1c8] sm:$0xff]
      %v235 = vld [vmem:[%s1 + $0x1d0] sm:$0xff]
      %v236 = vld [vmem:[%s1 + $0x1d8] sm:$0xff]
      %v237 = vld [vmem:[%s1 + $0x1e0] sm:$0xff]
      %v238 = vld [vmem:[%s1 + $0x1e8] sm:$0xff]
      %v239 = vld [vmem:[%s1 + $0x1f0] sm:$0xff]
      %v240 = vld [vmem:[%s1 + $0x1f8] sm:$0xff]
      %v241 = vld [vmem:[%s165 + $0x20] sm:$0x77]
      %v242 = vld [vmem:[%s165 + $0x28] sm:$0x77]
      %s243 = scalar_lea.vmem %s1, 512
      %v244 = vld [vmem:[%s243] sm:$0xff]
      %v245 = vld [vmem:[%s243 + $0x8] sm:$0xff]
      %v246 = vld [vmem:[%s243 + $0x10] sm:$0xff]
      %v247 = vld [vmem:[%s243 + $0x18] sm:$0xff]
      %v248 = vld [vmem:[%s243 + $0x20] sm:$0xff]
      %v249 = vld [vmem:[%s243 + $0x28] sm:$0xff]
      %v250 = vld [vmem:[%s243 + $0x30] sm:$0xff]
      %v251 = vld [vmem:[%s243 + $0x38] sm:$0xff]
      %v252 = vld [vmem:[%s243 + $0x40] sm:$0xff]
      %v253 = vld [vmem:[%s243 + $0x48] sm:$0xff]
      %v254 = vld [vmem:[%s243 + $0x50] sm:$0xff]
      %v255 = vld [vmem:[%s243 + $0x58] sm:$0xff]
      %v256 = vld [vmem:[%s243 + $0x60] sm:$0xff]
      %v257 = vld [vmem:[%s243 + $0x68] sm:$0xff]
      %v258 = vld [vmem:[%s243 + $0x70] sm:$0xff]
      %v259 = vld [vmem:[%s243 + $0x78] sm:$0xff]
      %v260 = vld [vmem:[%s243 + $0x80] sm:$0xff]
      %v261 = vld [vmem:[%s243 + $0x88] sm:$0xff]
      %v262 = vld [vmem:[%s243 + $0x90] sm:$0xff]
      %v263 = vld [vmem:[%s243 + $0x98] sm:$0xff]
      %v264 = vld [vmem:[%s243 + $0xa0] sm:$0xff]
      %v265 = vld [vmem:[%s243 + $0xa8] sm:$0xff]
      %v266 = vld [vmem:[%s243 + $0xb0] sm:$0xff]
      %v267 = vld [vmem:[%s243 + $0xb8] sm:$0xff]
      %v268 = vld [vmem:[%s243 + $0xc0] sm:$0xff]
      %v269 = vld [vmem:[%s243 + $0xc8] sm:$0xff]
      %v270 = vld [vmem:[%s243 + $0xd0] sm:$0xff]
      %v271 = vld [vmem:[%s243 + $0xd8] sm:$0xff]
      %v272 = vld [vmem:[%s243 + $0xe0] sm:$0xff]
      %v273 = vld [vmem:[%s243 + $0xe8] sm:$0xff]
      %v274 = vld [vmem:[%s243 + $0xf0] sm:$0xff]
      %v275 = vld [vmem:[%s243 + $0xf8] sm:$0xff]
      %v276 = vld [vmem:[%s243 + $0x100] sm:$0xff]
      %v277 = vld [vmem:[%s243 + $0x108] sm:$0xff]
      %v278 = vld [vmem:[%s243 + $0x110] sm:$0xff]
      %v279 = vld [vmem:[%s243 + $0x118] sm:$0xff]
      %v280 = vld [vmem:[%s243 + $0x120] sm:$0xff]
      %v281 = vld [vmem:[%s243 + $0x128] sm:$0xff]
      %v282 = vld [vmem:[%s243 + $0x130] sm:$0xff]
      %v283 = vld [vmem:[%s243 + $0x138] sm:$0xff]
      %v284 = vld [vmem:[%s243 + $0x140] sm:$0xff]
      %v285 = vld [vmem:[%s243 + $0x148] sm:$0xff]
      %v286 = vld [vmem:[%s243 + $0x150] sm:$0xff]
      %v287 = vld [vmem:[%s243 + $0x158] sm:$0xff]
      %v288 = vld [vmem:[%s243 + $0x160] sm:$0xff]
      %v289 = vld [vmem:[%s243 + $0x168] sm:$0xff]
      %v290 = vld [vmem:[%s243 + $0x170] sm:$0xff]
      %v291 = vld [vmem:[%s243 + $0x178] sm:$0xff]
      %v292 = vld [vmem:[%s243 + $0x180] sm:$0xff]
      %v293 = vld [vmem:[%s243 + $0x188] sm:$0xff]
      %v294 = vld [vmem:[%s243 + $0x190] sm:$0xff]
      %v295 = vld [vmem:[%s243 + $0x198] sm:$0xff]
      %v296 = vld [vmem:[%s243 + $0x1a0] sm:$0xff]
      %v297 = vld [vmem:[%s243 + $0x1a8] sm:$0xff]
      %v298 = vld [vmem:[%s243 + $0x1b0] sm:$0xff]
      %v299 = vld [vmem:[%s243 + $0x1b8] sm:$0xff]
      %v300 = vld [vmem:[%s243 + $0x1c0] sm:$0xff]
      %v301 = vld [vmem:[%s243 + $0x1c8] sm:$0xff]
      %v302 = vld [vmem:[%s243 + $0x1d0] sm:$0xff]
      %v303 = vld [vmem:[%s243 + $0x1d8] sm:$0xff]
      %v304 = vld [vmem:[%s243 + $0x1e0] sm:$0xff]
      %v305 = vld [vmem:[%s243 + $0x1e8] sm:$0xff]
      %v306 = vld [vmem:[%s243 + $0x1f0] sm:$0xff]
      %v307 = vld [vmem:[%s243 + $0x1f8] sm:$0xff]
      %v314 = vunpack.c.l.b16 %v171
      %v315 = vunpack.c.h.b16 %v171
      %v316 = vunpack.c.l.b16 %v172
      %v317 = vunpack.c.h.b16 %v172
      %v318 = vunpack.c.l.b16 %v173
      %v319 = vunpack.c.h.b16 %v173
      %v320 = vunpack.c.l.b16 %v174
      %v321 = vunpack.c.h.b16 %v174
      %v322 = vunpack.c.l.b16 %v241
      %v323 = vunpack.c.h.b16 %v241
      %v324 = vunpack.c.l.b16 %v242
      %v325 = vunpack.c.h.b16 %v242
      %v326 = vpack.c.b16 %v318, %v314
      %v327 = vpack.c.b16 %v319, %v315
      %v328 = vpack.c.b16 %v320, %v316
      %v329 = vpack.c.b16 %v321, %v317
      %v330 = vpack.c.b16 %v322, %v322
      %v331 = vpack.c.b16 %v323, %v323
      %v332 = vpack.c.b16 %v324, %v324
      %v333 = vpack.c.b16 %v325, %v325
      %vm334 = vsmask.f32 7424
      %v336 = vshrl.u32 %v326, 16
      %v338 = vshll.u32 %v326, 16
      %v340 = vrot.slane %v338, 1
      %v341 = vor.u32 %v336, %v340
      %v343 = vshll.u32 %v330, 16
      %v345 = vrot.slane %v343, 1
      %v346 = vsel %vm334, %v341, %v345
      %v348 = vshrl.u32 %v327, 16
      %v350 = vshll.u32 %v327, 16
      %v352 = vrot.slane %v350, 1
      %v353 = vor.u32 %v348, %v352
      %v355 = vshll.u32 %v331, 16
      %v357 = vrot.slane %v355, 1
      %v358 = vsel %vm334, %v353, %v357
      %v360 = vshrl.u32 %v328, 16
      %v362 = vshll.u32 %v328, 16
      %v364 = vrot.slane %v362, 1
      %v365 = vor.u32 %v360, %v364
      %v367 = vshll.u32 %v332, 16
      %v369 = vrot.slane %v367, 1
      %v370 = vsel %vm334, %v365, %v369
      %v372 = vshrl.u32 %v329, 16
      %v374 = vshll.u32 %v329, 16
      %v376 = vrot.slane %v374, 1
      %v377 = vor.u32 %v372, %v376
      %v379 = vshll.u32 %v333, 16
      %v381 = vrot.slane %v379, 1
      %v382 = vsel %vm334, %v377, %v381
      %v383 = vshrl.u32 %v330, 16
      %v385 = vor.u32 %v383, %v345
      %v386 = vshrl.u32 %v331, 16
      %v388 = vor.u32 %v386, %v357
      %v389 = vshrl.u32 %v332, 16
      %v391 = vor.u32 %v389, %v369
      %v392 = vshrl.u32 %v333, 16
      %v394 = vor.u32 %v392, %v381
      %v467 = vunpack.c.l.b16 %v244
      %v468 = vunpack.c.h.b16 %v244
      %v469 = vunpack.c.l.b16 %v245
      %v470 = vunpack.c.h.b16 %v245
      %v471 = vunpack.c.l.b16 %v246
      %v472 = vunpack.c.h.b16 %v246
      %v473 = vunpack.c.l.b16 %v247
      %v474 = vunpack.c.h.b16 %v247
      %v475 = vunpack.c.l.b16 %v248
      %v476 = vunpack.c.h.b16 %v248
      %v477 = vunpack.c.l.b16 %v249
      %v478 = vunpack.c.h.b16 %v249
      %v479 = vunpack.c.l.b16 %v250
      %v480 = vunpack.c.h.b16 %v250
      %v481 = vunpack.c.l.b16 %v251
      %v482 = vunpack.c.h.b16 %v251
      %v483 = vunpack.c.l.b16 %v252
      %v484 = vunpack.c.h.b16 %v252
      %v485 = vunpack.c.l.b16 %v253
      %v486 = vunpack.c.h.b16 %v253
      %v487 = vunpack.c.l.b16 %v254
      %v488 = vunpack.c.h.b16 %v254
      %v489 = vunpack.c.l.b16 %v255
      %v490 = vunpack.c.h.b16 %v255
      %v491 = vunpack.c.l.b16 %v256
      %v492 = vunpack.c.h.b16 %v256
      %v493 = vunpack.c.l.b16 %v257
      %v494 = vunpack.c.h.b16 %v257
      %v495 = vunpack.c.l.b16 %v258
      %v496 = vunpack.c.h.b16 %v258
      %v497 = vunpack.c.l.b16 %v259
      %v498 = vunpack.c.h.b16 %v259
      %v499 = vunpack.c.l.b16 %v260
      %v500 = vunpack.c.h.b16 %v260
      %v501 = vunpack.c.l.b16 %v261
      %v502 = vunpack.c.h.b16 %v261
      %v503 = vunpack.c.l.b16 %v262
      %v504 = vunpack.c.h.b16 %v262
      %v505 = vunpack.c.l.b16 %v263
      %v506 = vunpack.c.h.b16 %v263
      %v507 = vunpack.c.l.b16 %v264
      %v508 = vunpack.c.h.b16 %v264
      %v509 = vunpack.c.l.b16 %v265
      %v510 = vunpack.c.h.b16 %v265
      %v511 = vunpack.c.l.b16 %v266
      %v512 = vunpack.c.h.b16 %v266
      %v513 = vunpack.c.l.b16 %v267
      %v514 = vunpack.c.h.b16 %v267
      %v515 = vunpack.c.l.b16 %v268
      %v516 = vunpack.c.h.b16 %v268
      %v517 = vunpack.c.l.b16 %v269
      %v518 = vunpack.c.h.b16 %v269
      %v519 = vunpack.c.l.b16 %v270
      %v520 = vunpack.c.h.b16 %v270
      %v521 = vunpack.c.l.b16 %v271
      %v522 = vunpack.c.h.b16 %v271
      %v523 = vunpack.c.l.b16 %v272
      %v524 = vunpack.c.h.b16 %v272
      %v525 = vunpack.c.l.b16 %v273
      %v526 = vunpack.c.h.b16 %v273
      %v527 = vunpack.c.l.b16 %v274
      %v528 = vunpack.c.h.b16 %v274
      %v529 = vunpack.c.l.b16 %v275
      %v530 = vunpack.c.h.b16 %v275
      %v531 = vunpack.c.l.b16 %v276
      %v532 = vunpack.c.h.b16 %v276
      %v533 = vunpack.c.l.b16 %v277
      %v534 = vunpack.c.h.b16 %v277
      %v535 = vunpack.c.l.b16 %v278
      %v536 = vunpack.c.h.b16 %v278
      %v537 = vunpack.c.l.b16 %v279
      %v538 = vunpack.c.h.b16 %v279
      %v539 = vunpack.c.l.b16 %v280
      %v540 = vunpack.c.h.b16 %v280
      %v541 = vunpack.c.l.b16 %v281
      %v542 = vunpack.c.h.b16 %v281
      %v543 = vunpack.c.l.b16 %v282
      %v544 = vunpack.c.h.b16 %v282
      %v545 = vunpack.c.l.b16 %v283
      %v546 = vunpack.c.h.b16 %v283
      %v547 = vunpack.c.l.b16 %v284
      %v548 = vunpack.c.h.b16 %v284
      %v549 = vunpack.c.l.b16 %v285
      %v550 = vunpack.c.h.b16 %v285
      %v551 = vunpack.c.l.b16 %v286
      %v552 = vunpack.c.h.b16 %v286
      %v553 = vunpack.c.l.b16 %v287
      %v554 = vunpack.c.h.b16 %v287
      %v555 = vunpack.c.l.b16 %v288
      %v556 = vunpack.c.h.b16 %v288
      %v557 = vunpack.c.l.b16 %v289
      %v558 = vunpack.c.h.b16 %v289
      %v559 = vunpack.c.l.b16 %v290
      %v560 = vunpack.c.h.b16 %v290
      %v561 = vunpack.c.l.b16 %v291
      %v562 = vunpack.c.h.b16 %v291
      %v563 = vunpack.c.l.b16 %v292
      %v564 = vunpack.c.h.b16 %v292
      %v565 = vunpack.c.l.b16 %v293
      %v566 = vunpack.c.h.b16 %v293
      %v567 = vunpack.c.l.b16 %v294
      %v568 = vunpack.c.h.b16 %v294
      %v569 = vunpack.c.l.b16 %v295
      %v570 = vunpack.c.h.b16 %v295
      %v571 = vunpack.c.l.b16 %v296
      %v572 = vunpack.c.h.b16 %v296
      %v573 = vunpack.c.l.b16 %v297
      %v574 = vunpack.c.h.b16 %v297
      %v575 = vunpack.c.l.b16 %v298
      %v576 = vunpack.c.h.b16 %v298
      %v577 = vunpack.c.l.b16 %v299
      %v578 = vunpack.c.h.b16 %v299
      %v579 = vunpack.c.l.b16 %v300
      %v580 = vunpack.c.h.b16 %v300
      %v581 = vunpack.c.l.b16 %v301
      %v582 = vunpack.c.h.b16 %v301
      %v583 = vunpack.c.l.b16 %v302
      %v584 = vunpack.c.h.b16 %v302
      %v585 = vunpack.c.l.b16 %v303
      %v586 = vunpack.c.h.b16 %v303
      %v587 = vunpack.c.l.b16 %v304
      %v588 = vunpack.c.h.b16 %v304
      %v589 = vunpack.c.l.b16 %v305
      %v590 = vunpack.c.h.b16 %v305
      %v591 = vunpack.c.l.b16 %v306
      %v592 = vunpack.c.h.b16 %v306
      %v593 = vunpack.c.l.b16 %v307
      %v594 = vunpack.c.h.b16 %v307
      %v595 = vpack.c.b16 %v469, %v467
      %v596 = vpack.c.b16 %v470, %v468
      %v597 = vpack.c.b16 %v473, %v471
      %v598 = vpack.c.b16 %v474, %v472
      %v599 = vpack.c.b16 %v477, %v475
      %v600 = vpack.c.b16 %v478, %v476
      %v601 = vpack.c.b16 %v481, %v479
      %v602 = vpack.c.b16 %v482, %v480
      %v603 = vpack.c.b16 %v485, %v483
      %v604 = vpack.c.b16 %v486, %v484
      %v605 = vpack.c.b16 %v489, %v487
      %v606 = vpack.c.b16 %v490, %v488
      %v607 = vpack.c.b16 %v493, %v491
      %v608 = vpack.c.b16 %v494, %v492
      %v609 = vpack.c.b16 %v497, %v495
      %v610 = vpack.c.b16 %v498, %v496
      %v611 = vpack.c.b16 %v501, %v499
      %v612 = vpack.c.b16 %v502, %v500
      %v613 = vpack.c.b16 %v505, %v503
      %v614 = vpack.c.b16 %v506, %v504
      %v615 = vpack.c.b16 %v509, %v507
      %v616 = vpack.c.b16 %v510, %v508
      %v617 = vpack.c.b16 %v513, %v511
      %v618 = vpack.c.b16 %v514, %v512
      %v619 = vpack.c.b16 %v517, %v515
      %v620 = vpack.c.b16 %v518, %v516
      %v621 = vpack.c.b16 %v521, %v519
      %v622 = vpack.c.b16 %v522, %v520
      %v623 = vpack.c.b16 %v525, %v523
      %v624 = vpack.c.b16 %v526, %v524
      %v625 = vpack.c.b16 %v529, %v527
      %v626 = vpack.c.b16 %v530, %v528
      %v627 = vpack.c.b16 %v533, %v531
      %v628 = vpack.c.b16 %v534, %v532
      %v629 = vpack.c.b16 %v537, %v535
      %v630 = vpack.c.b16 %v538, %v536
      %v631 = vpack.c.b16 %v541, %v539
      %v632 = vpack.c.b16 %v542, %v540
      %v633 = vpack.c.b16 %v545, %v543
      %v634 = vpack.c.b16 %v546, %v544
      %v635 = vpack.c.b16 %v549, %v547
      %v636 = vpack.c.b16 %v550, %v548
      %v637 = vpack.c.b16 %v553, %v551
      %v638 = vpack.c.b16 %v554, %v552
      %v639 = vpack.c.b16 %v557, %v555
      %v640 = vpack.c.b16 %v558, %v556
      %v641 = vpack.c.b16 %v561, %v559
      %v642 = vpack.c.b16 %v562, %v560
      %v643 = vpack.c.b16 %v565, %v563
      %v644 = vpack.c.b16 %v566, %v564
      %v645 = vpack.c.b16 %v569, %v567
      %v646 = vpack.c.b16 %v570, %v568
      %v647 = vpack.c.b16 %v573, %v571
      %v648 = vpack.c.b16 %v574, %v572
      %v649 = vpack.c.b16 %v577, %v575
      %v650 = vpack.c.b16 %v578, %v576
      %v651 = vpack.c.b16 %v581, %v579
      %v652 = vpack.c.b16 %v582, %v580
      %v653 = vpack.c.b16 %v585, %v583
      %v654 = vpack.c.b16 %v586, %v584
      %v655 = vpack.c.b16 %v589, %v587
      %v656 = vpack.c.b16 %v590, %v588
      %v657 = vpack.c.b16 %v593, %v591
      %v658 = vpack.c.b16 %v594, %v592
      %723 = vmatprep.subr.bf16.mxu0 %v596
      %724 = vmatpush1.bf16.msra.mxu0 %v595
      %725 = vmatprep.subr.bf16.mxu0 %v598
      %726 = vmatpush1.bf16.msra.mxu0 %v597
      %727 = vmatprep.subr.bf16.mxu0 %v600
      %728 = vmatpush1.bf16.msra.mxu0 %v599
      %729 = vmatprep.subr.bf16.mxu0 %v602
      %730 = vmatpush1.bf16.msra.mxu0 %v601
      %731 = vmatprep.subr.bf16.mxu0 %v604
      %732 = vmatpush1.bf16.msra.mxu0 %v603
      %733 = vmatprep.subr.bf16.mxu0 %v606
      %734 = vmatpush1.bf16.msra.mxu0 %v605
      %735 = vmatprep.subr.bf16.mxu0 %v608
      %736 = vmatpush1.bf16.msra.mxu0 %v607
      %737 = vmatprep.subr.bf16.mxu0 %v610
      %738 = vmatpush1.bf16.msra.mxu0 %v609
      %739 = vmatprep.subr.bf16.mxu0 %v612
      %740 = vmatpush1.bf16.msra.mxu0 %v611
      %741 = vmatprep.subr.bf16.mxu0 %v614
      %742 = vmatpush1.bf16.msra.mxu0 %v613
      %743 = vmatprep.subr.bf16.mxu0 %v616
      %744 = vmatpush1.bf16.msra.mxu0 %v615
      %745 = vmatprep.subr.bf16.mxu0 %v618
      %746 = vmatpush1.bf16.msra.mxu0 %v617
      %747 = vmatprep.subr.bf16.mxu0 %v620
      %748 = vmatpush1.bf16.msra.mxu0 %v619
      %749 = vmatprep.subr.bf16.mxu0 %v622
      %750 = vmatpush1.bf16.msra.mxu0 %v621
      %751 = vmatprep.subr.bf16.mxu0 %v624
      %752 = vmatpush1.bf16.msra.mxu0 %v623
      %753 = vmatprep.subr.bf16.mxu0 %v626
      %754 = vmatpush1.bf16.msra.mxu0 %v625
      %755 = vmatprep.mubr.bf16.mxu0 %v358
      %756 = vmatmul.mubr.bf16.gmra.mrb[0].mxu0 %v346
      %v757 = vpop.f32.mrb[0].mxu0
      %v758 = vadd.f32 0.0, %v757
      %v759 = vpop.f32.mrb[0].mxu0
      %v760 = vadd.f32 0.0, %v759
      %v761 = vpop.f32.mrb[0].mxu0
      %v762 = vadd.f32 0.0, %v761
      %v763 = vpop.f32.mrb[0].mxu0
      %v764 = vadd.f32 0.0, %v763
      %765 = vmatprep.mubr.bf16.mxu0 %v388
      %766 = vmatmul.mubr.bf16.gmra.mrb[0].mxu0 %v385
      %v767 = vpop.f32.mrb[0].mxu0
      %v768 = vadd.f32 0.0, %v767
      %v769 = vpop.f32.mrb[0].mxu0
      %v770 = vadd.f32 0.0, %v769
      %v771 = vpop.f32.mrb[0].mxu0
      %v772 = vpop.f32.mrb[0].mxu0
      %773 = vdwg.mxu0
      %774 = vmatprep.subr.bf16.mxu0 %v628
      %775 = vmatpush1.bf16.msra.mxu0 %v627
      %776 = vmatprep.subr.bf16.mxu0 %v630
      %777 = vmatpush1.bf16.msra.mxu0 %v629
      %778 = vmatprep.subr.bf16.mxu0 %v632
      %779 = vmatpush1.bf16.msra.mxu0 %v631
      %780 = vmatprep.subr.bf16.mxu0 %v634
      %781 = vmatpush1.bf16.msra.mxu0 %v633
      %782 = vmatprep.subr.bf16.mxu0 %v636
      %783 = vmatpush1.bf16.msra.mxu0 %v635
      %784 = vmatprep.subr.bf16.mxu0 %v638
      %785 = vmatpush1.bf16.msra.mxu0 %v637
      %786 = vmatprep.subr.bf16.mxu0 %v640
      %787 = vmatpush1.bf16.msra.mxu0 %v639
      %788 = vmatprep.subr.bf16.mxu0 %v642
      %789 = vmatpush1.bf16.msra.mxu0 %v641
      %790 = vmatprep.subr.bf16.mxu0 %v644
      %791 = vmatpush1.bf16.msra.mxu0 %v643
      %792 = vmatprep.subr.bf16.mxu0 %v646
      %793 = vmatpush1.bf16.msra.mxu0 %v645
      %794 = vmatprep.subr.bf16.mxu0 %v648
      %795 = vmatpush1.bf16.msra.mxu0 %v647
      %796 = vmatprep.subr.bf16.mxu0 %v650
      %797 = vmatpush1.bf16.msra.mxu0 %v649
      %798 = vmatprep.subr.bf16.mxu0 %v652
      %799 = vmatpush1.bf16.msra.mxu0 %v651
      %800 = vmatprep.subr.bf16.mxu0 %v654
      %801 = vmatpush1.bf16.msra.mxu0 %v653
      %802 = vmatprep.subr.bf16.mxu0 %v656
      %803 = vmatpush1.bf16.msra.mxu0 %v655
      %804 = vmatprep.subr.bf16.mxu0 %v658
      %805 = vmatpush1.bf16.msra.mxu0 %v657
      %806 = vmatprep.mubr.bf16.mxu0 %v382
      %807 = vmatmul.mubr.bf16.gmra.mrb[0].mxu0 %v370
      %v808 = vpop.f32.mrb[0].mxu0
      %v809 = vadd.f32 %v758, %v808
      %v810 = vpop.f32.mrb[0].mxu0
      %v811 = vadd.f32 %v760, %v810
      %v812 = vpop.f32.mrb[0].mxu0
      %v813 = vadd.f32 %v762, %v812
      %v814 = vpop.f32.mrb[0].mxu0
      %v815 = vadd.f32 %v764, %v814
      %816 = vmatprep.mubr.bf16.mxu0 %v394
      %817 = vmatmul.mubr.bf16.gmra.mrb[0].mxu0 %v391
      %v818 = vpop.f32.mrb[0].mxu0
      %v819 = vadd.f32 %v768, %v818
      %v820 = vpop.f32.mrb[0].mxu0
      %v821 = vadd.f32 %v770, %v820
      %v822 = vpop.f32.mrb[0].mxu0
      %v823 = vpop.f32.mrb[0].mxu0
      %824 = vdwg.mxu0
      %v827 = vunpack.c.l.b16 %v175
      %v828 = vunpack.c.h.b16 %v175
      %v829 = vunpack.c.l.b16 %v176
      %v830 = vunpack.c.h.b16 %v176
      %v831 = vpack.c.b16 %v827, %v827
      %v832 = vpack.c.b16 %v828, %v828
      %v833 = vpack.c.b16 %v829, %v829
      %v834 = vpack.c.b16 %v830, %v830
      %v907 = vunpack.c.l.b16 %v177
      %v908 = vunpack.c.h.b16 %v177
      %v909 = vunpack.c.l.b16 %v178
      %v910 = vunpack.c.h.b16 %v178
      %v911 = vunpack.c.l.b16 %v179
      %v912 = vunpack.c.h.b16 %v179
      %v913 = vunpack.c.l.b16 %v180
      %v914 = vunpack.c.h.b16 %v180
      %v915 = vunpack.c.l.b16 %v181
      %v916 = vunpack.c.h.b16 %v181
      %v917 = vunpack.c.l.b16 %v182
      %v918 = vunpack.c.h.b16 %v182
      %v919 = vunpack.c.l.b16 %v183
      %v920 = vunpack.c.h.b16 %v183
      %v921 = vunpack.c.l.b16 %v184
      %v922 = vunpack.c.h.b16 %v184
      %v923 = vunpack.c.l.b16 %v185
      %v924 = vunpack.c.h.b16 %v185
      %v925 = vunpack.c.l.b16 %v186
      %v926 = vunpack.c.h.b16 %v186
      %v927 = vunpack.c.l.b16 %v187
      %v928 = vunpack.c.h.b16 %v187
      %v929 = vunpack.c.l.b16 %v188
      %v930 = vunpack.c.h.b16 %v188
      %v931 = vunpack.c.l.b16 %v189
      %v932 = vunpack.c.h.b16 %v189
      %v933 = vunpack.c.l.b16 %v190
      %v934 = vunpack.c.h.b16 %v190
      %v935 = vunpack.c.l.b16 %v191
      %v936 = vunpack.c.h.b16 %v191
      %v937 = vunpack.c.l.b16 %v192
      %v938 = vunpack.c.h.b16 %v192
      %v939 = vunpack.c.l.b16 %v193
      %v940 = vunpack.c.h.b16 %v193
      %v941 = vunpack.c.l.b16 %v194
      %v942 = vunpack.c.h.b16 %v194
      %v943 = vunpack.c.l.b16 %v195
      %v944 = vunpack.c.h.b16 %v195
      %v945 = vunpack.c.l.b16 %v196
      %v946 = vunpack.c.h.b16 %v196
      %v947 = vunpack.c.l.b16 %v197
      %v948 = vunpack.c.h.b16 %v197
      %v949 = vunpack.c.l.b16 %v198
      %v950 = vunpack.c.h.b16 %v198
      %v951 = vunpack.c.l.b16 %v199
      %v952 = vunpack.c.h.b16 %v199
      %v953 = vunpack.c.l.b16 %v200
      %v954 = vunpack.c.h.b16 %v200
      %v955 = vunpack.c.l.b16 %v201
      %v956 = vunpack.c.h.b16 %v201
      %v957 = vunpack.c.l.b16 %v202
      %v958 = vunpack.c.h.b16 %v202
      %v959 = vunpack.c.l.b16 %v203
      %v960 = vunpack.c.h.b16 %v203
      %v961 = vunpack.c.l.b16 %v204
      %v962 = vunpack.c.h.b16 %v204
      %v963 = vunpack.c.l.b16 %v205
      %v964 = vunpack.c.h.b16 %v205
      %v965 = vunpack.c.l.b16 %v206
      %v966 = vunpack.c.h.b16 %v206
      %v967 = vunpack.c.l.b16 %v207
      %v968 = vunpack.c.h.b16 %v207
      %v969 = vunpack.c.l.b16 %v208
      %v970 = vunpack.c.h.b16 %v208
      %v971 = vunpack.c.l.b16 %v209
      %v972 = vunpack.c.h.b16 %v209
      %v973 = vunpack.c.l.b16 %v210
      %v974 = vunpack.c.h.b16 %v210
      %v975 = vunpack.c.l.b16 %v211
      %v976 = vunpack.c.h.b16 %v211
      %v977 = vunpack.c.l.b16 %v212
      %v978 = vunpack.c.h.b16 %v212
      %v979 = vunpack.c.l.b16 %v213
      %v980 = vunpack.c.h.b16 %v213
      %v981 = vunpack.c.l.b16 %v214
      %v982 = vunpack.c.h.b16 %v214
      %v983 = vunpack.c.l.b16 %v215
      %v984 = vunpack.c.h.b16 %v215
      %v985 = vunpack.c.l.b16 %v216
      %v986 = vunpack.c.h.b16 %v216
      %v987 = vunpack.c.l.b16 %v217
      %v988 = vunpack.c.h.b16 %v217
      %v989 = vunpack.c.l.b16 %v218
      %v990 = vunpack.c.h.b16 %v218
      %v991 = vunpack.c.l.b16 %v219
      %v992 = vunpack.c.h.b16 %v219
      %v993 = vunpack.c.l.b16 %v220
      %v994 = vunpack.c.h.b16 %v220
      %v995 = vunpack.c.l.b16 %v221
      %v996 = vunpack.c.h.b16 %v221
      %v997 = vunpack.c.l.b16 %v222
      %v998 = vunpack.c.h.b16 %v222
      %v999 = vunpack.c.l.b16 %v223
      %v1000 = vunpack.c.h.b16 %v223
      %v1001 = vunpack.c.l.b16 %v224
      %v1002 = vunpack.c.h.b16 %v224
      %v1003 = vunpack.c.l.b16 %v225
      %v1004 = vunpack.c.h.b16 %v225
      %v1005 = vunpack.c.l.b16 %v226
      %v1006 = vunpack.c.h.b16 %v226
      %v1007 = vunpack.c.l.b16 %v227
      %v1008 = vunpack.c.h.b16 %v227
      %v1009 = vunpack.c.l.b16 %v228
      %v1010 = vunpack.c.h.b16 %v228
      %v1011 = vunpack.c.l.b16 %v229
      %v1012 = vunpack.c.h.b16 %v229
      %v1013 = vunpack.c.l.b16 %v230
      %v1014 = vunpack.c.h.b16 %v230
      %v1015 = vunpack.c.l.b16 %v231
      %v1016 = vunpack.c.h.b16 %v231
      %v1017 = vunpack.c.l.b16 %v232
      %v1018 = vunpack.c.h.b16 %v232
      %v1019 = vunpack.c.l.b16 %v233
      %v1020 = vunpack.c.h.b16 %v233
      %v1021 = vunpack.c.l.b16 %v234
      %v1022 = vunpack.c.h.b16 %v234
      %v1023 = vunpack.c.l.b16 %v235
      %v1024 = vunpack.c.h.b16 %v235
      %v1025 = vunpack.c.l.b16 %v236
      %v1026 = vunpack.c.h.b16 %v236
      %v1027 = vunpack.c.l.b16 %v237
      %v1028 = vunpack.c.h.b16 %v237
      %v1029 = vunpack.c.l.b16 %v238
      %v1030 = vunpack.c.h.b16 %v238
      %v1031 = vunpack.c.l.b16 %v239
      %v1032 = vunpack.c.h.b16 %v239
      %v1033 = vunpack.c.l.b16 %v240
      %v1034 = vunpack.c.h.b16 %v240
      %v1035 = vpack.c.b16 %v909, %v907
      %v1036 = vpack.c.b16 %v910, %v908
      %v1037 = vpack.c.b16 %v913, %v911
      %v1038 = vpack.c.b16 %v914, %v912
      %v1039 = vpack.c.b16 %v917, %v915
      %v1040 = vpack.c.b16 %v918, %v916
      %v1041 = vpack.c.b16 %v921, %v919
      %v1042 = vpack.c.b16 %v922, %v920
      %v1043 = vpack.c.b16 %v925, %v923
      %v1044 = vpack.c.b16 %v926, %v924
      %v1045 = vpack.c.b16 %v929, %v927
      %v1046 = vpack.c.b16 %v930, %v928
      %v1047 = vpack.c.b16 %v933, %v931
      %v1048 = vpack.c.b16 %v934, %v932
      %v1049 = vpack.c.b16 %v937, %v935
      %v1050 = vpack.c.b16 %v938, %v936
      %v1051 = vpack.c.b16 %v941, %v939
      %v1052 = vpack.c.b16 %v942, %v940
      %v1053 = vpack.c.b16 %v945, %v943
      %v1054 = vpack.c.b16 %v946, %v944
      %v1055 = vpack.c.b16 %v949, %v947
      %v1056 = vpack.c.b16 %v950, %v948
      %v1057 = vpack.c.b16 %v953, %v951
      %v1058 = vpack.c.b16 %v954, %v952
      %v1059 = vpack.c.b16 %v957, %v955
      %v1060 = vpack.c.b16 %v958, %v956
      %v1061 = vpack.c.b16 %v961, %v959
      %v1062 = vpack.c.b16 %v962, %v960
      %v1063 = vpack.c.b16 %v965, %v963
      %v1064 = vpack.c.b16 %v966, %v964
      %v1065 = vpack.c.b16 %v969, %v967
      %v1066 = vpack.c.b16 %v970, %v968
      %v1067 = vpack.c.b16 %v973, %v971
      %v1068 = vpack.c.b16 %v974, %v972
      %v1069 = vpack.c.b16 %v977, %v975
      %v1070 = vpack.c.b16 %v978, %v976
      %v1071 = vpack.c.b16 %v981, %v979
      %v1072 = vpack.c.b16 %v982, %v980
      %v1073 = vpack.c.b16 %v985, %v983
      %v1074 = vpack.c.b16 %v986, %v984
      %v1075 = vpack.c.b16 %v989, %v987
      %v1076 = vpack.c.b16 %v990, %v988
      %v1077 = vpack.c.b16 %v993, %v991
      %v1078 = vpack.c.b16 %v994, %v992
      %v1079 = vpack.c.b16 %v997, %v995
      %v1080 = vpack.c.b16 %v998, %v996
      %v1081 = vpack.c.b16 %v1001, %v999
      %v1082 = vpack.c.b16 %v1002, %v1000
      %v1083 = vpack.c.b16 %v1005, %v1003
      %v1084 = vpack.c.b16 %v1006, %v1004
      %v1085 = vpack.c.b16 %v1009, %v1007
      %v1086 = vpack.c.b16 %v1010, %v1008
      %v1087 = vpack.c.b16 %v1013, %v1011
      %v1088 = vpack.c.b16 %v1014, %v1012
      %v1089 = vpack.c.b16 %v1017, %v1015
      %v1090 = vpack.c.b16 %v1018, %v1016
      %v1091 = vpack.c.b16 %v1021, %v1019
      %v1092 = vpack.c.b16 %v1022, %v1020
      %v1093 = vpack.c.b16 %v1025, %v1023
      %v1094 = vpack.c.b16 %v1026, %v1024
      %v1095 = vpack.c.b16 %v1029, %v1027
      %v1096 = vpack.c.b16 %v1030, %v1028
      %v1097 = vpack.c.b16 %v1033, %v1031
      %v1098 = vpack.c.b16 %v1034, %v1032
      %1163 = vmatprep.subr.bf16.mxu0 %v1036
      %1164 = vmatpush1.bf16.msra.mxu0 %v1035
      %1165 = vmatprep.subr.bf16.mxu0 %v1038
      %1166 = vmatpush1.bf16.msra.mxu0 %v1037
      %1167 = vmatprep.subr.bf16.mxu0 %v1040
      %1168 = vmatpush1.bf16.msra.mxu0 %v1039
      %1169 = vmatprep.subr.bf16.mxu0 %v1042
      %1170 = vmatpush1.bf16.msra.mxu0 %v1041
      %1171 = vmatprep.subr.bf16.mxu0 %v1044
      %1172 = vmatpush1.bf16.msra.mxu0 %v1043
      %1173 = vmatprep.subr.bf16.mxu0 %v1046
      %1174 = vmatpush1.bf16.msra.mxu0 %v1045
      %1175 = vmatprep.subr.bf16.mxu0 %v1048
      %1176 = vmatpush1.bf16.msra.mxu0 %v1047
      %1177 = vmatprep.subr.bf16.mxu0 %v1050
      %1178 = vmatpush1.bf16.msra.mxu0 %v1049
      %1179 = vmatprep.subr.bf16.mxu0 %v1052
      %1180 = vmatpush1.bf16.msra.mxu0 %v1051
      %1181 = vmatprep.subr.bf16.mxu0 %v1054
      %1182 = vmatpush1.bf16.msra.mxu0 %v1053
      %1183 = vmatprep.subr.bf16.mxu0 %v1056
      %1184 = vmatpush1.bf16.msra.mxu0 %v1055
      %1185 = vmatprep.subr.bf16.mxu0 %v1058
      %1186 = vmatpush1.bf16.msra.mxu0 %v1057
      %1187 = vmatprep.subr.bf16.mxu0 %v1060
      %1188 = vmatpush1.bf16.msra.mxu0 %v1059
      %1189 = vmatprep.subr.bf16.mxu0 %v1062
      %1190 = vmatpush1.bf16.msra.mxu0 %v1061
      %1191 = vmatprep.subr.bf16.mxu0 %v1064
      %1192 = vmatpush1.bf16.msra.mxu0 %v1063
      %1193 = vmatprep.subr.bf16.mxu0 %v1066
      %1194 = vmatpush1.bf16.msra.mxu0 %v1065
      %1195 = vmatprep.mubr.bf16.mxu0 %v327
      %1196 = vmatmul.mubr.bf16.gmra.mrb[0].mxu0 %v326
      %v1197 = vpop.f32.mrb[0].mxu0
      %v1198 = vadd.f32 %v809, %v1197
      %v1199 = vpop.f32.mrb[0].mxu0
      %v1200 = vadd.f32 %v811, %v1199
      %v1201 = vpop.f32.mrb[0].mxu0
      %v1202 = vadd.f32 %v813, %v1201
      %v1203 = vpop.f32.mrb[0].mxu0
      %v1204 = vadd.f32 %v815, %v1203
      %1205 = vmatprep.mubr.bf16.mxu0 %v832
      %1206 = vmatmul.mubr.bf16.gmra.mrb[0].mxu0 %v831
      %v1207 = vpop.f32.mrb[0].mxu0
      %v1208 = vadd.f32 %v819, %v1207
      %v1209 = vpop.f32.mrb[0].mxu0
      %v1210 = vadd.f32 %v821, %v1209
      %v1211 = vpop.f32.mrb[0].mxu0
      %v1212 = vpop.f32.mrb[0].mxu0
      %1213 = vdwg.mxu0
      %1214 = vmatprep.subr.bf16.mxu0 %v1068
      %1215 = vmatpush1.bf16.msra.mxu0 %v1067
      %1216 = vmatprep.subr.bf16.mxu0 %v1070
      %1217 = vmatpush1.bf16.msra.mxu0 %v1069
      %1218 = vmatprep.subr.bf16.mxu0 %v1072
      %1219 = vmatpush1.bf16.msra.mxu0 %v1071
      %1220 = vmatprep.subr.bf16.mxu0 %v1074
      %1221 = vmatpush1.bf16.msra.mxu0 %v1073
      %1222 = vmatprep.subr.bf16.mxu0 %v1076
      %1223 = vmatpush1.bf16.msra.mxu0 %v1075
      %1224 = vmatprep.subr.bf16.mxu0 %v1078
      %1225 = vmatpush1.bf16.msra.mxu0 %v1077
      %1226 = vmatprep.subr.bf16.mxu0 %v1080
      %1227 = vmatpush1.bf16.msra.mxu0 %v1079
      %1228 = vmatprep.subr.bf16.mxu0 %v1082
      %1229 = vmatpush1.bf16.msra.mxu0 %v1081
      %1230 = vmatprep.subr.bf16.mxu0 %v1084
      %1231 = vmatpush1.bf16.msra.mxu0 %v1083
      %1232 = vmatprep.subr.bf16.mxu0 %v1086
      %1233 = vmatpush1.bf16.msra.mxu0 %v1085
      %1234 = vmatprep.subr.bf16.mxu0 %v1088
      %1235 = vmatpush1.bf16.msra.mxu0 %v1087
      %1236 = vmatprep.subr.bf16.mxu0 %v1090
      %1237 = vmatpush1.bf16.msra.mxu0 %v1089
      %1238 = vmatprep.subr.bf16.mxu0 %v1092
      %1239 = vmatpush1.bf16.msra.mxu0 %v1091
      %1240 = vmatprep.subr.bf16.mxu0 %v1094
      %1241 = vmatpush1.bf16.msra.mxu0 %v1093
      %1242 = vmatprep.subr.bf16.mxu0 %v1096
      %1243 = vmatpush1.bf16.msra.mxu0 %v1095
      %1244 = vmatprep.subr.bf16.mxu0 %v1098
      %1245 = vmatpush1.bf16.msra.mxu0 %v1097
      %1246 = vmatprep.mubr.bf16.mxu0 %v329
      %1247 = vmatmul.mubr.bf16.gmra.mrb[0].mxu0 %v328
      %v1248 = vpop.f32.mrb[0].mxu0
      %v1249 = vadd.f32 %v1198, %v1248
      %v1250 = vpop.f32.mrb[0].mxu0
      %v1251 = vadd.f32 %v1200, %v1250
      %v1252 = vpop.f32.mrb[0].mxu0
      %v1253 = vadd.f32 %v1202, %v1252
      %v1254 = vpop.f32.mrb[0].mxu0
      %v1255 = vadd.f32 %v1204, %v1254
      %1256 = vmatprep.mubr.bf16.mxu0 %v834
      %1257 = vmatmul.mubr.bf16.gmra.mrb[0].mxu0 %v833
      %v1258 = vpop.f32.mrb[0].mxu0
      %v1259 = vadd.f32 %v1208, %v1258
      %v1260 = vpop.f32.mrb[0].mxu0
      %v1261 = vadd.f32 %v1210, %v1260
      %v1262 = vpop.f32.mrb[0].mxu0
      %v1263 = vpop.f32.mrb[0].mxu0
      %1264 = vdwg.mxu0
      %v1265 = vld [vmem:[%s165] sm:$0xcc]
      %v1266 = vld [vmem:[%s165 + $0x8] sm:$0xcc]
      %v1267 = vld [vmem:[%s165 + $0x10] sm:$0xff]
      %v1268 = vld [vmem:[%s165 + $0x18] sm:$0xff]
      %v1269 = vld [vmem:[%s165 + $0x20] sm:$0xff]
      %v1270 = vld [vmem:[%s165 + $0x28] sm:$0xff]
      %v1271 = vld [vmem:[%s165 + $0x30] sm:$0x11]
      %v1272 = vld [vmem:[%s165 + $0x38] sm:$0x11]
      %s1273 = scalar_lea.vmem %s1, 1024
      %v1274 = vld [vmem:[%s1273] sm:$0xff]
      %v1275 = vld [vmem:[%s1273 + $0x8] sm:$0xff]
      %v1276 = vld [vmem:[%s1273 + $0x10] sm:$0xff]
      %v1277 = vld [vmem:[%s1273 + $0x18] sm:$0xff]
      %v1278 = vld [vmem:[%s1273 + $0x20] sm:$0xff]
      %v1279 = vld [vmem:[%s1273 + $0x28] sm:$0xff]
      %v1280 = vld [vmem:[%s1273 + $0x30] sm:$0xff]
      %v1281 = vld [vmem:[%s1273 + $0x38] sm:$0xff]
      %v1282 = vld [vmem:[%s1273 + $0x40] sm:$0xff]
      %v1283 = vld [vmem:[%s1273 + $0x48] sm:$0xff]
      %v1284 = vld [vmem:[%s1273 + $0x50] sm:$0xff]
      %v1285 = vld [vmem:[%s1273 + $0x58] sm:$0xff]
      %v1286 = vld [vmem:[%s1273 + $0x60] sm:$0xff]
      %v1287 = vld [vmem:[%s1273 + $0x68] sm:$0xff]
      %v1288 = vld [vmem:[%s1273 + $0x70] sm:$0xff]
      %v1289 = vld [vmem:[%s1273 + $0x78] sm:$0xff]
      %v1290 = vld [vmem:[%s1273 + $0x80] sm:$0xff]
      %v1291 = vld [vmem:[%s1273 + $0x88] sm:$0xff]
      %v1292 = vld [vmem:[%s1273 + $0x90] sm:$0xff]
      %v1293 = vld [vmem:[%s1273 + $0x98] sm:$0xff]
      %v1294 = vld [vmem:[%s1273 + $0xa0] sm:$0xff]
      %v1295 = vld [vmem:[%s1273 + $0xa8] sm:$0xff]
      %v1296 = vld [vmem:[%s1273 + $0xb0] sm:$0xff]
      %v1297 = vld [vmem:[%s1273 + $0xb8] sm:$0xff]
      %v1298 = vld [vmem:[%s1273 + $0xc0] sm:$0xff]
      %v1299 = vld [vmem:[%s1273 + $0xc8] sm:$0xff]
      %v1300 = vld [vmem:[%s1273 + $0xd0] sm:$0xff]
      %v1301 = vld [vmem:[%s1273 + $0xd8] sm:$0xff]
      %v1302 = vld [vmem:[%s1273 + $0xe0] sm:$0xff]
      %v1303 = vld [vmem:[%s1273 + $0xe8] sm:$0xff]
      %v1304 = vld [vmem:[%s1273 + $0xf0] sm:$0xff]
      %v1305 = vld [vmem:[%s1273 + $0xf8] sm:$0xff]
      %v1306 = vld [vmem:[%s1273 + $0x100] sm:$0xff]
      %v1307 = vld [vmem:[%s1273 + $0x108] sm:$0xff]
      %v1308 = vld [vmem:[%s1273 + $0x110] sm:$0xff]
      %v1309 = vld [vmem:[%s1273 + $0x118] sm:$0xff]
      %v1310 = vld [vmem:[%s1273 + $0x120] sm:$0xff]
      %v1311 = vld [vmem:[%s1273 + $0x128] sm:$0xff]
      %v1312 = vld [vmem:[%s1273 + $0x130] sm:$0xff]
      %v1313 = vld [vmem:[%s1273 + $0x138] sm:$0xff]
      %v1314 = vld [vmem:[%s1273 + $0x140] sm:$0xff]
      %v1315 = vld [vmem:[%s1273 + $0x148] sm:$0xff]
      %v1316 = vld [vmem:[%s1273 + $0x150] sm:$0xff]
      %v1317 = vld [vmem:[%s1273 + $0x158] sm:$0xff]
      %v1318 = vld [vmem:[%s1273 + $0x160] sm:$0xff]
      %v1319 = vld [vmem:[%s1273 + $0x168] sm:$0xff]
      %v1320 = vld [vmem:[%s1273 + $0x170] sm:$0xff]
      %v1321 = vld [vmem:[%s1273 + $0x178] sm:$0xff]
      %v1322 = vld [vmem:[%s1273 + $0x180] sm:$0xff]
      %v1323 = vld [vmem:[%s1273 + $0x188] sm:$0xff]
      %v1324 = vld [vmem:[%s1273 + $0x190] sm:$0xff]
      %v1325 = vld [vmem:[%s1273 + $0x198] sm:$0xff]
      %v1326 = vld [vmem:[%s1273 + $0x1a0] sm:$0xff]
      %v1327 = vld [vmem:[%s1273 + $0x1a8] sm:$0xff]
      %v1328 = vld [vmem:[%s1273 + $0x1b0] sm:$0xff]
      %v1329 = vld [vmem:[%s1273 + $0x1b8] sm:$0xff]
      %v1330 = vld [vmem:[%s1273 + $0x1c0] sm:$0xff]
      %v1331 = vld [vmem:[%s1273 + $0x1c8] sm:$0xff]
      %v1332 = vld [vmem:[%s1273 + $0x1d0] sm:$0xff]
      %v1333 = vld [vmem:[%s1273 + $0x1d8] sm:$0xff]
      %v1334 = vld [vmem:[%s1273 + $0x1e0] sm:$0xff]
      %v1335 = vld [vmem:[%s1273 + $0x1e8] sm:$0xff]
      %v1336 = vld [vmem:[%s1273 + $0x1f0] sm:$0xff]
      %v1337 = vld [vmem:[%s1273 + $0x1f8] sm:$0xff]
      %v1346 = vunpack.c.l.b16 %v1265
      %v1347 = vunpack.c.h.b16 %v1265
      %v1348 = vunpack.c.l.b16 %v1266
      %v1349 = vunpack.c.h.b16 %v1266
      %v1350 = vunpack.c.l.b16 %v1267
      %v1351 = vunpack.c.h.b16 %v1267
      %v1352 = vunpack.c.l.b16 %v1268
      %v1353 = vunpack.c.h.b16 %v1268
      %v1354 = vunpack.c.l.b16 %v1269
      %v1355 = vunpack.c.h.b16 %v1269
      %v1356 = vunpack.c.l.b16 %v1270
      %v1357 = vunpack.c.h.b16 %v1270
      %v1358 = vunpack.c.l.b16 %v1271
      %v1359 = vunpack.c.h.b16 %v1271
      %v1360 = vunpack.c.l.b16 %v1272
      %v1361 = vunpack.c.h.b16 %v1272
      %v1362 = vpack.c.b16 %v1350, %v1346
      %v1363 = vpack.c.b16 %v1351, %v1347
      %v1364 = vpack.c.b16 %v1352, %v1348
      %v1365 = vpack.c.b16 %v1353, %v1349
      %v1366 = vpack.c.b16 %v1358, %v1354
      %v1367 = vpack.c.b16 %v1359, %v1355
      %v1368 = vpack.c.b16 %v1360, %v1356
      %v1369 = vpack.c.b16 %v1361, %v1357
      %vm1370 = vsmask.f32 5376
      %v1372 = vshrl.u32 %v1362, 16
      %v1374 = vrot.slane %v1372, 2
      %v1375 = vshll.u32 %v1362, 16
      %v1377 = vrot.slane %v1375, 3
      %v1378 = vor.u32 %v1374, %v1377
      %v1380 = vshrl.u32 %v1366, 16
      %v1382 = vrot.slane %v1380, 2
      %v1383 = vshll.u32 %v1366, 16
      %v1385 = vrot.slane %v1383, 3
      %v1386 = vor.u32 %v1382, %v1385
      %v1387 = vsel %vm1370, %v1378, %v1386
      %v1389 = vshrl.u32 %v1363, 16
      %v1391 = vrot.slane %v1389, 2
      %v1392 = vshll.u32 %v1363, 16
      %v1394 = vrot.slane %v1392, 3
      %v1395 = vor.u32 %v1391, %v1394
      %v1397 = vshrl.u32 %v1367, 16
      %v1399 = vrot.slane %v1397, 2
      %v1400 = vshll.u32 %v1367, 16
      %v1402 = vrot.slane %v1400, 3
      %v1403 = vor.u32 %v1399, %v1402
      %v1404 = vsel %vm1370, %v1395, %v1403
      %v1406 = vshrl.u32 %v1364, 16
      %v1408 = vrot.slane %v1406, 2
      %v1409 = vshll.u32 %v1364, 16
      %v1411 = vrot.slane %v1409, 3
      %v1412 = vor.u32 %v1408, %v1411
      %v1414 = vshrl.u32 %v1368, 16
      %v1416 = vrot.slane %v1414, 2
      %v1417 = vshll.u32 %v1368, 16
      %v1419 = vrot.slane %v1417, 3
      %v1420 = vor.u32 %v1416, %v1419
      %v1421 = vsel %vm1370, %v1412, %v1420
      %v1423 = vshrl.u32 %v1365, 16
      %v1425 = vrot.slane %v1423, 2
      %v1426 = vshll.u32 %v1365, 16
      %v1428 = vrot.slane %v1426, 3
      %v1429 = vor.u32 %v1425, %v1428
      %v1431 = vshrl.u32 %v1369, 16
      %v1433 = vrot.slane %v1431, 2
      %v1434 = vshll.u32 %v1369, 16
      %v1436 = vrot.slane %v1434, 3
      %v1437 = vor.u32 %v1433, %v1436
      %v1438 = vsel %vm1370, %v1429, %v1437
      %v1511 = vunpack.c.l.b16 %v1274
      %v1512 = vunpack.c.h.b16 %v1274
      %v1513 = vunpack.c.l.b16 %v1275
      %v1514 = vunpack.c.h.b16 %v1275
      %v1515 = vunpack.c.l.b16 %v1276
      %v1516 = vunpack.c.h.b16 %v1276
      %v1517 = vunpack.c.l.b16 %v1277
      %v1518 = vunpack.c.h.b16 %v1277
      %v1519 = vunpack.c.l.b16 %v1278
      %v1520 = vunpack.c.h.b16 %v1278
      %v1521 = vunpack.c.l.b16 %v1279
      %v1522 = vunpack.c.h.b16 %v1279
      %v1523 = vunpack.c.l.b16 %v1280
      %v1524 = vunpack.c.h.b16 %v1280
      %v1525 = vunpack.c.l.b16 %v1281
      %v1526 = vunpack.c.h.b16 %v1281
      %v1527 = vunpack.c.l.b16 %v1282
      %v1528 = vunpack.c.h.b16 %v1282
      %v1529 = vunpack.c.l.b16 %v1283
      %v1530 = vunpack.c.h.b16 %v1283
      %v1531 = vunpack.c.l.b16 %v1284
      %v1532 = vunpack.c.h.b16 %v1284
      %v1533 = vunpack.c.l.b16 %v1285
      %v1534 = vunpack.c.h.b16 %v1285
      %v1535 = vunpack.c.l.b16 %v1286
      %v1536 = vunpack.c.h.b16 %v1286
      %v1537 = vunpack.c.l.b16 %v1287
      %v1538 = vunpack.c.h.b16 %v1287
      %v1539 = vunpack.c.l.b16 %v1288
      %v1540 = vunpack.c.h.b16 %v1288
      %v1541 = vunpack.c.l.b16 %v1289
      %v1542 = vunpack.c.h.b16 %v1289
      %v1543 = vunpack.c.l.b16 %v1290
      %v1544 = vunpack.c.h.b16 %v1290
      %v1545 = vunpack.c.l.b16 %v1291
      %v1546 = vunpack.c.h.b16 %v1291
      %v1547 = vunpack.c.l.b16 %v1292
      %v1548 = vunpack.c.h.b16 %v1292
      %v1549 = vunpack.c.l.b16 %v1293
      %v1550 = vunpack.c.h.b16 %v1293
      %v1551 = vunpack.c.l.b16 %v1294
      %v1552 = vunpack.c.h.b16 %v1294
      %v1553 = vunpack.c.l.b16 %v1295
      %v1554 = vunpack.c.h.b16 %v1295
      %v1555 = vunpack.c.l.b16 %v1296
      %v1556 = vunpack.c.h.b16 %v1296
      %v1557 = vunpack.c.l.b16 %v1297
      %v1558 = vunpack.c.h.b16 %v1297
      %v1559 = vunpack.c.l.b16 %v1298
      %v1560 = vunpack.c.h.b16 %v1298
      %v1561 = vunpack.c.l.b16 %v1299
      %v1562 = vunpack.c.h.b16 %v1299
      %v1563 = vunpack.c.l.b16 %v1300
      %v1564 = vunpack.c.h.b16 %v1300
      %v1565 = vunpack.c.l.b16 %v1301
      %v1566 = vunpack.c.h.b16 %v1301
      %v1567 = vunpack.c.l.b16 %v1302
      %v1568 = vunpack.c.h.b16 %v1302
      %v1569 = vunpack.c.l.b16 %v1303
      %v1570 = vunpack.c.h.b16 %v1303
      %v1571 = vunpack.c.l.b16 %v1304
      %v1572 = vunpack.c.h.b16 %v1304
      %v1573 = vunpack.c.l.b16 %v1305
      %v1574 = vunpack.c.h.b16 %v1305
      %v1575 = vunpack.c.l.b16 %v1306
      %v1576 = vunpack.c.h.b16 %v1306
      %v1577 = vunpack.c.l.b16 %v1307
      %v1578 = vunpack.c.h.b16 %v1307
      %v1579 = vunpack.c.l.b16 %v1308
      %v1580 = vunpack.c.h.b16 %v1308
      %v1581 = vunpack.c.l.b16 %v1309
      %v1582 = vunpack.c.h.b16 %v1309
      %v1583 = vunpack.c.l.b16 %v1310
      %v1584 = vunpack.c.h.b16 %v1310
      %v1585 = vunpack.c.l.b16 %v1311
      %v1586 = vunpack.c.h.b16 %v1311
      %v1587 = vunpack.c.l.b16 %v1312
      %v1588 = vunpack.c.h.b16 %v1312
      %v1589 = vunpack.c.l.b16 %v1313
      %v1590 = vunpack.c.h.b16 %v1313
      %v1591 = vunpack.c.l.b16 %v1314
      %v1592 = vunpack.c.h.b16 %v1314
      %v1593 = vunpack.c.l.b16 %v1315
      %v1594 = vunpack.c.h.b16 %v1315
      %v1595 = vunpack.c.l.b16 %v1316
      %v1596 = vunpack.c.h.b16 %v1316
      %v1597 = vunpack.c.l.b16 %v1317
      %v1598 = vunpack.c.h.b16 %v1317
      %v1599 = vunpack.c.l.b16 %v1318
      %v1600 = vunpack.c.h.b16 %v1318
      %v1601 = vunpack.c.l.b16 %v1319
      %v1602 = vunpack.c.h.b16 %v1319
      %v1603 = vunpack.c.l.b16 %v1320
      %v1604 = vunpack.c.h.b16 %v1320
      %v1605 = vunpack.c.l.b16 %v1321
      %v1606 = vunpack.c.h.b16 %v1321
      %v1607 = vunpack.c.l.b16 %v1322
      %v1608 = vunpack.c.h.b16 %v1322
      %v1609 = vunpack.c.l.b16 %v1323
      %v1610 = vunpack.c.h.b16 %v1323
      %v1611 = vunpack.c.l.b16 %v1324
      %v1612 = vunpack.c.h.b16 %v1324
      %v1613 = vunpack.c.l.b16 %v1325
      %v1614 = vunpack.c.h.b16 %v1325
      %v1615 = vunpack.c.l.b16 %v1326
      %v1616 = vunpack.c.h.b16 %v1326
      %v1617 = vunpack.c.l.b16 %v1327
      %v1618 = vunpack.c.h.b16 %v1327
      %v1619 = vunpack.c.l.b16 %v1328
      %v1620 = vunpack.c.h.b16 %v1328
      %v1621 = vunpack.c.l.b16 %v1329
      %v1622 = vunpack.c.h.b16 %v1329
      %v1623 = vunpack.c.l.b16 %v1330
      %v1624 = vunpack.c.h.b16 %v1330
      %v1625 = vunpack.c.l.b16 %v1331
      %v1626 = vunpack.c.h.b16 %v1331
      %v1627 = vunpack.c.l.b16 %v1332
      %v1628 = vunpack.c.h.b16 %v1332
      %v1629 = vunpack.c.l.b16 %v1333
      %v1630 = vunpack.c.h.b16 %v1333
      %v1631 = vunpack.c.l.b16 %v1334
      %v1632 = vunpack.c.h.b16 %v1334
      %v1633 = vunpack.c.l.b16 %v1335
      %v1634 = vunpack.c.h.b16 %v1335
      %v1635 = vunpack.c.l.b16 %v1336
      %v1636 = vunpack.c.h.b16 %v1336
      %v1637 = vunpack.c.l.b16 %v1337
      %v1638 = vunpack.c.h.b16 %v1337
      %v1639 = vpack.c.b16 %v1513, %v1511
      %v1640 = vpack.c.b16 %v1514, %v1512
      %v1641 = vpack.c.b16 %v1517, %v1515
      %v1642 = vpack.c.b16 %v1518, %v1516
      %v1643 = vpack.c.b16 %v1521, %v1519
      %v1644 = vpack.c.b16 %v1522, %v1520
      %v1645 = vpack.c.b16 %v1525, %v1523
      %v1646 = vpack.c.b16 %v1526, %v1524
      %v1647 = vpack.c.b16 %v1529, %v1527
      %v1648 = vpack.c.b16 %v1530, %v1528
      %v1649 = vpack.c.b16 %v1533, %v1531
      %v1650 = vpack.c.b16 %v1534, %v1532
      %v1651 = vpack.c.b16 %v1537, %v1535
      %v1652 = vpack.c.b16 %v1538, %v1536
      %v1653 = vpack.c.b16 %v1541, %v1539
      %v1654 = vpack.c.b16 %v1542, %v1540
      %v1655 = vpack.c.b16 %v1545, %v1543
      %v1656 = vpack.c.b16 %v1546, %v1544
      %v1657 = vpack.c.b16 %v1549, %v1547
      %v1658 = vpack.c.b16 %v1550, %v1548
      %v1659 = vpack.c.b16 %v1553, %v1551
      %v1660 = vpack.c.b16 %v1554, %v1552
      %v1661 = vpack.c.b16 %v1557, %v1555
      %v1662 = vpack.c.b16 %v1558, %v1556
      %v1663 = vpack.c.b16 %v1561, %v1559
      %v1664 = vpack.c.b16 %v1562, %v1560
      %v1665 = vpack.c.b16 %v1565, %v1563
      %v1666 = vpack.c.b16 %v1566, %v1564
      %v1667 = vpack.c.b16 %v1569, %v1567
      %v1668 = vpack.c.b16 %v1570, %v1568
      %v1669 = vpack.c.b16 %v1573, %v1571
      %v1670 = vpack.c.b16 %v1574, %v1572
      %v1671 = vpack.c.b16 %v1577, %v1575
      %v1672 = vpack.c.b16 %v1578, %v1576
      %v1673 = vpack.c.b16 %v1581, %v1579
      %v1674 = vpack.c.b16 %v1582, %v1580
      %v1675 = vpack.c.b16 %v1585, %v1583
      %v1676 = vpack.c.b16 %v1586, %v1584
      %v1677 = vpack.c.b16 %v1589, %v1587
      %v1678 = vpack.c.b16 %v1590, %v1588
      %v1679 = vpack.c.b16 %v1593, %v1591
      %v1680 = vpack.c.b16 %v1594, %v1592
      %v1681 = vpack.c.b16 %v1597, %v1595
      %v1682 = vpack.c.b16 %v1598, %v1596
      %v1683 = vpack.c.b16 %v1601, %v1599
      %v1684 = vpack.c.b16 %v1602, %v1600
      %v1685 = vpack.c.b16 %v1605, %v1603
      %v1686 = vpack.c.b16 %v1606, %v1604
      %v1687 = vpack.c.b16 %v1609, %v1607
      %v1688 = vpack.c.b16 %v1610, %v1608
      %v1689 = vpack.c.b16 %v1613, %v1611
      %v1690 = vpack.c.b16 %v1614, %v1612
      %v1691 = vpack.c.b16 %v1617, %v1615
      %v1692 = vpack.c.b16 %v1618, %v1616
      %v1693 = vpack.c.b16 %v1621, %v1619
      %v1694 = vpack.c.b16 %v1622, %v1620
      %v1695 = vpack.c.b16 %v1625, %v1623
      %v1696 = vpack.c.b16 %v1626, %v1624
      %v1697 = vpack.c.b16 %v1629, %v1627
      %v1698 = vpack.c.b16 %v1630, %v1628
      %v1699 = vpack.c.b16 %v1633, %v1631
      %v1700 = vpack.c.b16 %v1634, %v1632
      %v1701 = vpack.c.b16 %v1637, %v1635
      %v1702 = vpack.c.b16 %v1638, %v1636
      %1767 = vmatprep.subr.bf16.mxu0 %v1640
      %1768 = vmatpush1.bf16.msra.mxu0 %v1639
      %1769 = vmatprep.subr.bf16.mxu0 %v1642
      %1770 = vmatpush1.bf16.msra.mxu0 %v1641
      %1771 = vmatprep.subr.bf16.mxu0 %v1644
      %1772 = vmatpush1.bf16.msra.mxu0 %v1643
      %1773 = vmatprep.subr.bf16.mxu0 %v1646
      %1774 = vmatpush1.bf16.msra.mxu0 %v1645
      %1775 = vmatprep.subr.bf16.mxu0 %v1648
      %1776 = vmatpush1.bf16.msra.mxu0 %v1647
      %1777 = vmatprep.subr.bf16.mxu0 %v1650
      %1778 = vmatpush1.bf16.msra.mxu0 %v1649
      %1779 = vmatprep.subr.bf16.mxu0 %v1652
      %1780 = vmatpush1.bf16.msra.mxu0 %v1651
      %1781 = vmatprep.subr.bf16.mxu0 %v1654
      %1782 = vmatpush1.bf16.msra.mxu0 %v1653
      %1783 = vmatprep.subr.bf16.mxu0 %v1656
      %1784 = vmatpush1.bf16.msra.mxu0 %v1655
      %1785 = vmatprep.subr.bf16.mxu0 %v1658
      %1786 = vmatpush1.bf16.msra.mxu0 %v1657
      %1787 = vmatprep.subr.bf16.mxu0 %v1660
      %1788 = vmatpush1.bf16.msra.mxu0 %v1659
      %1789 = vmatprep.subr.bf16.mxu0 %v1662
      %1790 = vmatpush1.bf16.msra.mxu0 %v1661
      %1791 = vmatprep.subr.bf16.mxu0 %v1664
      %1792 = vmatpush1.bf16.msra.mxu0 %v1663
      %1793 = vmatprep.subr.bf16.mxu0 %v1666
      %1794 = vmatpush1.bf16.msra.mxu0 %v1665
      %1795 = vmatprep.subr.bf16.mxu0 %v1668
      %1796 = vmatpush1.bf16.msra.mxu0 %v1667
      %1797 = vmatprep.subr.bf16.mxu0 %v1670
      %1798 = vmatpush1.bf16.msra.mxu0 %v1669
      %1799 = vmatprep.mubr.bf16.mxu0 %v1404
      %1800 = vmatmul.mubr.bf16.gmra.mrb[0].mxu0 %v1387
      %v1801 = vpop.f32.mrb[0].mxu0
      %v1802 = vadd.f32 0.0, %v1801
      %v1803 = vpop.f32.mrb[0].mxu0
      %v1804 = vadd.f32 0.0, %v1803
      %v1805 = vpop.f32.mrb[0].mxu0
      %v1806 = vadd.f32 0.0, %v1805
      %v1807 = vpop.f32.mrb[0].mxu0
      %v1808 = vadd.f32 0.0, %v1807
      %1809 = vmatprep.mubr.bf16.mxu0 %v1403
      %1810 = vmatmul.mubr.bf16.gmra.mrb[0].mxu0 %v1386
      %v1811 = vpop.f32.mrb[0].mxu0
      %v1812 = vadd.f32 0.0, %v1811
      %v1813 = vpop.f32.mrb[0].mxu0
      %v1814 = vadd.f32 0.0, %v1813
      %v1815 = vpop.f32.mrb[0].mxu0
      %v1816 = vpop.f32.mrb[0].mxu0
      %1817 = vdwg.mxu0
      %1818 = vmatprep.subr.bf16.mxu0 %v1672
      %1819 = vmatpush1.bf16.msra.mxu0 %v1671
      %1820 = vmatprep.subr.bf16.mxu0 %v1674
      %1821 = vmatpush1.bf16.msra.mxu0 %v1673
      %1822 = vmatprep.subr.bf16.mxu0 %v1676
      %1823 = vmatpush1.bf16.msra.mxu0 %v1675
      %1824 = vmatprep.subr.bf16.mxu0 %v1678
      %1825 = vmatpush1.bf16.msra.mxu0 %v1677
      %1826 = vmatprep.subr.bf16.mxu0 %v1680
      %1827 = vmatpush1.bf16.msra.mxu0 %v1679
      %1828 = vmatprep.subr.bf16.mxu0 %v1682
      %1829 = vmatpush1.bf16.msra.mxu0 %v1681
      %1830 = vmatprep.subr.bf16.mxu0 %v1684
      %1831 = vmatpush1.bf16.msra.mxu0 %v1683
      %1832 = vmatprep.subr.bf16.mxu0 %v1686
      %1833 = vmatpush1.bf16.msra.mxu0 %v1685
      %1834 = vmatprep.subr.bf16.mxu0 %v1688
      %1835 = vmatpush1.bf16.msra.mxu0 %v1687
      %1836 = vmatprep.subr.bf16.mxu0 %v1690
      %1837 = vmatpush1.bf16.msra.mxu0 %v1689
      %1838 = vmatprep.subr.bf16.mxu0 %v1692
      %1839 = vmatpush1.bf16.msra.mxu0 %v1691
      %1840 = vmatprep.subr.bf16.mxu0 %v1694
      %1841 = vmatpush1.bf16.msra.mxu0 %v1693
      %1842 = vmatprep.subr.bf16.mxu0 %v1696
      %1843 = vmatpush1.bf16.msra.mxu0 %v1695
      %1844 = vmatprep.subr.bf16.mxu0 %v1698
      %1845 = vmatpush1.bf16.msra.mxu0 %v1697
      %1846 = vmatprep.subr.bf16.mxu0 %v1700
      %1847 = vmatpush1.bf16.msra.mxu0 %v1699
      %1848 = vmatprep.subr.bf16.mxu0 %v1702
      %1849 = vmatpush1.bf16.msra.mxu0 %v1701
      %1850 = vmatprep.mubr.bf16.mxu0 %v1438
      %1851 = vmatmul.mubr.bf16.gmra.mrb[0].mxu0 %v1421
      %v1852 = vpop.f32.mrb[0].mxu0
      %v1853 = vadd.f32 %v1802, %v1852
      %v1854 = vpop.f32.mrb[0].mxu0
      %v1855 = vadd.f32 %v1804, %v1854
      %v1856 = vpop.f32.mrb[0].mxu0
      %v1857 = vadd.f32 %v1806, %v1856
      %v1858 = vpop.f32.mrb[0].mxu0
      %v1859 = vadd.f32 %v1808, %v1858
      %1860 = vmatprep.mubr.bf16.mxu0 %v1437
      %1861 = vmatmul.mubr.bf16.gmra.mrb[0].mxu0 %v1420
      %v1862 = vpop.f32.mrb[0].mxu0
      %v1863 = vadd.f32 %v1812, %v1862
      %v1864 = vpop.f32.mrb[0].mxu0
      %v1865 = vadd.f32 %v1814, %v1864
      %v1866 = vpop.f32.mrb[0].mxu0
      %v1867 = vpop.f32.mrb[0].mxu0
      %1868 = vdwg.mxu0
      %v1869 = vadd.f32 %v1249, %v1853
      %v1870 = vadd.f32 %v1251, %v1855
      %v1871 = vadd.f32 %v1253, %v1857
      %v1872 = vadd.f32 %v1255, %v1859
      %v1873 = vadd.f32 %v1259, %v1863
      %v1874 = vadd.f32 %v1261, %v1865
      %v1875 = vld [vmem:[%s165] sm:$0x88]
      %v1876 = vld [vmem:[%s165 + $0x8] sm:$0x88]
      %s1877 = scalar_lea.vmem %s1, 1536
      %v1878 = vld [vmem:[%s1877] sm:$0xff]
      %v1879 = vld [vmem:[%s1877 + $0x8] sm:$0xff]
      %v1880 = vld [vmem:[%s1877 + $0x10] sm:$0xff]
      %v1881 = vld [vmem:[%s1877 + $0x18] sm:$0xff]
      %v1882 = vld [vmem:[%s1877 + $0x20] sm:$0xff]
      %v1883 = vld [vmem:[%s1877 + $0x28] sm:$0xff]
      %v1884 = vld [vmem:[%s1877 + $0x30] sm:$0xff]
      %v1885 = vld [vmem:[%s1877 + $0x38] sm:$0xff]
      %v1886 = vld [vmem:[%s1877 + $0x40] sm:$0xff]
      %v1887 = vld [vmem:[%s1877 + $0x48] sm:$0xff]
      %v1888 = vld [vmem:[%s1877 + $0x50] sm:$0xff]
      %v1889 = vld [vmem:[%s1877 + $0x58] sm:$0xff]
      %v1890 = vld [vmem:[%s1877 + $0x60] sm:$0xff]
      %v1891 = vld [vmem:[%s1877 + $0x68] sm:$0xff]
      %v1892 = vld [vmem:[%s1877 + $0x70] sm:$0xff]
      %v1893 = vld [vmem:[%s1877 + $0x78] sm:$0xff]
      %v1894 = vld [vmem:[%s1877 + $0x80] sm:$0xff]
      %v1895 = vld [vmem:[%s1877 + $0x88] sm:$0xff]
      %v1896 = vld [vmem:[%s1877 + $0x90] sm:$0xff]
      %v1897 = vld [vmem:[%s1877 + $0x98] sm:$0xff]
      %v1898 = vld [vmem:[%s1877 + $0xa0] sm:$0xff]
      %v1899 = vld [vmem:[%s1877 + $0xa8] sm:$0xff]
      %v1900 = vld [vmem:[%s1877 + $0xb0] sm:$0xff]
      %v1901 = vld [vmem:[%s1877 + $0xb8] sm:$0xff]
      %v1902 = vld [vmem:[%s1877 + $0xc0] sm:$0xff]
      %v1903 = vld [vmem:[%s1877 + $0xc8] sm:$0xff]
      %v1904 = vld [vmem:[%s1877 + $0xd0] sm:$0xff]
      %v1905 = vld [vmem:[%s1877 + $0xd8] sm:$0xff]
      %v1906 = vld [vmem:[%s1877 + $0xe0] sm:$0xff]
      %v1907 = vld [vmem:[%s1877 + $0xe8] sm:$0xff]
      %v1908 = vld [vmem:[%s1877 + $0xf0] sm:$0xff]
      %v1909 = vld [vmem:[%s1877 + $0xf8] sm:$0xff]
      %v1910 = vld [vmem:[%s1877 + $0x100] sm:$0xff]
      %v1911 = vld [vmem:[%s1877 + $0x108] sm:$0xff]
      %v1912 = vld [vmem:[%s1877 + $0x110] sm:$0xff]
      %v1913 = vld [vmem:[%s1877 + $0x118] sm:$0xff]
      %v1914 = vld [vmem:[%s1877 + $0x120] sm:$0xff]
      %v1915 = vld [vmem:[%s1877 + $0x128] sm:$0xff]
      %v1916 = vld [vmem:[%s1877 + $0x130] sm:$0xff]
      %v1917 = vld [vmem:[%s1877 + $0x138] sm:$0xff]
      %v1918 = vld [vmem:[%s1877 + $0x140] sm:$0xff]
      %v1919 = vld [vmem:[%s1877 + $0x148] sm:$0xff]
      %v1920 = vld [vmem:[%s1877 + $0x150] sm:$0xff]
      %v1921 = vld [vmem:[%s1877 + $0x158] sm:$0xff]
      %v1922 = vld [vmem:[%s1877 + $0x160] sm:$0xff]
      %v1923 = vld [vmem:[%s1877 + $0x168] sm:$0xff]
      %v1924 = vld [vmem:[%s1877 + $0x170] sm:$0xff]
      %v1925 = vld [vmem:[%s1877 + $0x178] sm:$0xff]
      %v1926 = vld [vmem:[%s1877 + $0x180] sm:$0xff]
      %v1927 = vld [vmem:[%s1877 + $0x188] sm:$0xff]
      %v1928 = vld [vmem:[%s1877 + $0x190] sm:$0xff]
      %v1929 = vld [vmem:[%s1877 + $0x198] sm:$0xff]
      %v1930 = vld [vmem:[%s1877 + $0x1a0] sm:$0xff]
      %v1931 = vld [vmem:[%s1877 + $0x1a8] sm:$0xff]
      %v1932 = vld [vmem:[%s1877 + $0x1b0] sm:$0xff]
      %v1933 = vld [vmem:[%s1877 + $0x1b8] sm:$0xff]
      %v1934 = vld [vmem:[%s1877 + $0x1c0] sm:$0xff]
      %v1935 = vld [vmem:[%s1877 + $0x1c8] sm:$0xff]
      %v1936 = vld [vmem:[%s1877 + $0x1d0] sm:$0xff]
      %v1937 = vld [vmem:[%s1877 + $0x1d8] sm:$0xff]
      %v1938 = vld [vmem:[%s1877 + $0x1e0] sm:$0xff]
      %v1939 = vld [vmem:[%s1877 + $0x1e8] sm:$0xff]
      %v1940 = vld [vmem:[%s1877 + $0x1f0] sm:$0xff]
      %v1941 = vld [vmem:[%s1877 + $0x1f8] sm:$0xff]
      %v1944 = vunpack.c.l.b16 %v1875
      %v1945 = vunpack.c.h.b16 %v1875
      %v1946 = vunpack.c.l.b16 %v1876
      %v1947 = vunpack.c.h.b16 %v1876
      %v1948 = vpack.c.b16 %v1350, %v1944
      %v1949 = vpack.c.b16 %v1351, %v1945
      %v1950 = vpack.c.b16 %v1352, %v1946
      %v1951 = vpack.c.b16 %v1353, %v1947
      %vm1952 = vcmask 1044480
      %v1953 = vrot.slane %v1948, 3
      %v1954 = vrot.slane %v1366, 3
      %v1955 = vsel %vm1952, %v1953, %v1954
      %v1956 = vrot.slane %v1949, 3
      %v1957 = vrot.slane %v1367, 3
      %v1958 = vsel %vm1952, %v1956, %v1957
      %v1959 = vrot.slane %v1950, 3
      %v1960 = vrot.slane %v1368, 3
      %v1961 = vsel %vm1952, %v1959, %v1960
      %v1962 = vrot.slane %v1951, 3
      %v1963 = vrot.slane %v1369, 3
      %v1964 = vsel %vm1952, %v1962, %v1963
      %v2037 = vunpack.c.l.b16 %v1878
      %v2038 = vunpack.c.h.b16 %v1878
      %v2039 = vunpack.c.l.b16 %v1879
      %v2040 = vunpack.c.h.b16 %v1879
      %v2041 = vunpack.c.l.b16 %v1880
      %v2042 = vunpack.c.h.b16 %v1880
      %v2043 = vunpack.c.l.b16 %v1881
      %v2044 = vunpack.c.h.b16 %v1881
      %v2045 = vunpack.c.l.b16 %v1882
      %v2046 = vunpack.c.h.b16 %v1882
      %v2047 = vunpack.c.l.b16 %v1883
      %v2048 = vunpack.c.h.b16 %v1883
      %v2049 = vunpack.c.l.b16 %v1884
      %v2050 = vunpack.c.h.b16 %v1884
      %v2051 = vunpack.c.l.b16 %v1885
      %v2052 = vunpack.c.h.b16 %v1885
      %v2053 = vunpack.c.l.b16 %v1886
      %v2054 = vunpack.c.h.b16 %v1886
      %v2055 = vunpack.c.l.b16 %v1887
      %v2056 = vunpack.c.h.b16 %v1887
      %v2057 = vunpack.c.l.b16 %v1888
      %v2058 = vunpack.c.h.b16 %v1888
      %v2059 = vunpack.c.l.b16 %v1889
      %v2060 = vunpack.c.h.b16 %v1889
      %v2061 = vunpack.c.l.b16 %v1890
      %v2062 = vunpack.c.h.b16 %v1890
      %v2063 = vunpack.c.l.b16 %v1891
      %v2064 = vunpack.c.h.b16 %v1891
      %v2065 = vunpack.c.l.b16 %v1892
      %v2066 = vunpack.c.h.b16 %v1892
      %v2067 = vunpack.c.l.b16 %v1893
      %v2068 = vunpack.c.h.b16 %v1893
      %v2069 = vunpack.c.l.b16 %v1894
      %v2070 = vunpack.c.h.b16 %v1894
      %v2071 = vunpack.c.l.b16 %v1895
      %v2072 = vunpack.c.h.b16 %v1895
      %v2073 = vunpack.c.l.b16 %v1896
      %v2074 = vunpack.c.h.b16 %v1896
      %v2075 = vunpack.c.l.b16 %v1897
      %v2076 = vunpack.c.h.b16 %v1897
      %v2077 = vunpack.c.l.b16 %v1898
      %v2078 = vunpack.c.h.b16 %v1898
      %v2079 = vunpack.c.l.b16 %v1899
      %v2080 = vunpack.c.h.b16 %v1899
      %v2081 = vunpack.c.l.b16 %v1900
      %v2082 = vunpack.c.h.b16 %v1900
      %v2083 = vunpack.c.l.b16 %v1901
      %v2084 = vunpack.c.h.b16 %v1901
      %v2085 = vunpack.c.l.b16 %v1902
      %v2086 = vunpack.c.h.b16 %v1902
      %v2087 = vunpack.c.l.b16 %v1903
      %v2088 = vunpack.c.h.b16 %v1903
      %v2089 = vunpack.c.l.b16 %v1904
      %v2090 = vunpack.c.h.b16 %v1904
      %v2091 = vunpack.c.l.b16 %v1905
      %v2092 = vunpack.c.h.b16 %v1905
      %v2093 = vunpack.c.l.b16 %v1906
      %v2094 = vunpack.c.h.b16 %v1906
      %v2095 = vunpack.c.l.b16 %v1907
      %v2096 = vunpack.c.h.b16 %v1907
      %v2097 = vunpack.c.l.b16 %v1908
      %v2098 = vunpack.c.h.b16 %v1908
      %v2099 = vunpack.c.l.b16 %v1909
      %v2100 = vunpack.c.h.b16 %v1909
      %v2101 = vunpack.c.l.b16 %v1910
      %v2102 = vunpack.c.h.b16 %v1910
      %v2103 = vunpack.c.l.b16 %v1911
      %v2104 = vunpack.c.h.b16 %v1911
      %v2105 = vunpack.c.l.b16 %v1912
      %v2106 = vunpack.c.h.b16 %v1912
      %v2107 = vunpack.c.l.b16 %v1913
      %v2108 = vunpack.c.h.b16 %v1913
      %v2109 = vunpack.c.l.b16 %v1914
      %v2110 = vunpack.c.h.b16 %v1914
      %v2111 = vunpack.c.l.b16 %v1915
      %v2112 = vunpack.c.h.b16 %v1915
      %v2113 = vunpack.c.l.b16 %v1916
      %v2114 = vunpack.c.h.b16 %v1916
      %v2115 = vunpack.c.l.b16 %v1917
      %v2116 = vunpack.c.h.b16 %v1917
      %v2117 = vunpack.c.l.b16 %v1918
      %v2118 = vunpack.c.h.b16 %v1918
      %v2119 = vunpack.c.l.b16 %v1919
      %v2120 = vunpack.c.h.b16 %v1919
      %v2121 = vunpack.c.l.b16 %v1920
      %v2122 = vunpack.c.h.b16 %v1920
      %v2123 = vunpack.c.l.b16 %v1921
      %v2124 = vunpack.c.h.b16 %v1921
      %v2125 = vunpack.c.l.b16 %v1922
      %v2126 = vunpack.c.h.b16 %v1922
      %v2127 = vunpack.c.l.b16 %v1923
      %v2128 = vunpack.c.h.b16 %v1923
      %v2129 = vunpack.c.l.b16 %v1924
      %v2130 = vunpack.c.h.b16 %v1924
      %v2131 = vunpack.c.l.b16 %v1925
      %v2132 = vunpack.c.h.b16 %v1925
      %v2133 = vunpack.c.l.b16 %v1926
      %v2134 = vunpack.c.h.b16 %v1926
      %v2135 = vunpack.c.l.b16 %v1927
      %v2136 = vunpack.c.h.b16 %v1927
      %v2137 = vunpack.c.l.b16 %v1928
      %v2138 = vunpack.c.h.b16 %v1928
      %v2139 = vunpack.c.l.b16 %v1929
      %v2140 = vunpack.c.h.b16 %v1929
      %v2141 = vunpack.c.l.b16 %v1930
      %v2142 = vunpack.c.h.b16 %v1930
      %v2143 = vunpack.c.l.b16 %v1931
      %v2144 = vunpack.c.h.b16 %v1931
      %v2145 = vunpack.c.l.b16 %v1932
      %v2146 = vunpack.c.h.b16 %v1932
      %v2147 = vunpack.c.l.b16 %v1933
      %v2148 = vunpack.c.h.b16 %v1933
      %v2149 = vunpack.c.l.b16 %v1934
      %v2150 = vunpack.c.h.b16 %v1934
      %v2151 = vunpack.c.l.b16 %v1935
      %v2152 = vunpack.c.h.b16 %v1935
      %v2153 = vunpack.c.l.b16 %v1936
      %v2154 = vunpack.c.h.b16 %v1936
      %v2155 = vunpack.c.l.b16 %v1937
      %v2156 = vunpack.c.h.b16 %v1937
      %v2157 = vunpack.c.l.b16 %v1938
      %v2158 = vunpack.c.h.b16 %v1938
      %v2159 = vunpack.c.l.b16 %v1939
      %v2160 = vunpack.c.h.b16 %v1939
      %v2161 = vunpack.c.l.b16 %v1940
      %v2162 = vunpack.c.h.b16 %v1940
      %v2163 = vunpack.c.l.b16 %v1941
      %v2164 = vunpack.c.h.b16 %v1941
      %v2165 = vpack.c.b16 %v2039, %v2037
      %v2166 = vpack.c.b16 %v2040, %v2038
      %v2167 = vpack.c.b16 %v2043, %v2041
      %v2168 = vpack.c.b16 %v2044, %v2042
      %v2169 = vpack.c.b16 %v2047, %v2045
      %v2170 = vpack.c.b16 %v2048, %v2046
      %v2171 = vpack.c.b16 %v2051, %v2049
      %v2172 = vpack.c.b16 %v2052, %v2050
      %v2173 = vpack.c.b16 %v2055, %v2053
      %v2174 = vpack.c.b16 %v2056, %v2054
      %v2175 = vpack.c.b16 %v2059, %v2057
      %v2176 = vpack.c.b16 %v2060, %v2058
      %v2177 = vpack.c.b16 %v2063, %v2061
      %v2178 = vpack.c.b16 %v2064, %v2062
      %v2179 = vpack.c.b16 %v2067, %v2065
      %v2180 = vpack.c.b16 %v2068, %v2066
      %v2181 = vpack.c.b16 %v2071, %v2069
      %v2182 = vpack.c.b16 %v2072, %v2070
      %v2183 = vpack.c.b16 %v2075, %v2073
      %v2184 = vpack.c.b16 %v2076, %v2074
      %v2185 = vpack.c.b16 %v2079, %v2077
      %v2186 = vpack.c.b16 %v2080, %v2078
      %v2187 = vpack.c.b16 %v2083, %v2081
      %v2188 = vpack.c.b16 %v2084, %v2082
      %v2189 = vpack.c.b16 %v2087, %v2085
      %v2190 = vpack.c.b16 %v2088, %v2086
      %v2191 = vpack.c.b16 %v2091, %v2089
      %v2192 = vpack.c.b16 %v2092, %v2090
      %v2193 = vpack.c.b16 %v2095, %v2093
      %v2194 = vpack.c.b16 %v2096, %v2094
      %v2195 = vpack.c.b16 %v2099, %v2097
      %v2196 = vpack.c.b16 %v2100, %v2098
      %v2197 = vpack.c.b16 %v2103, %v2101
      %v2198 = vpack.c.b16 %v2104, %v2102
      %v2199 = vpack.c.b16 %v2107, %v2105
      %v2200 = vpack.c.b16 %v2108, %v2106
      %v2201 = vpack.c.b16 %v2111, %v2109
      %v2202 = vpack.c.b16 %v2112, %v2110
      %v2203 = vpack.c.b16 %v2115, %v2113
      %v2204 = vpack.c.b16 %v2116, %v2114
      %v2205 = vpack.c.b16 %v2119, %v2117
      %v2206 = vpack.c.b16 %v2120, %v2118
      %v2207 = vpack.c.b16 %v2123, %v2121
      %v2208 = vpack.c.b16 %v2124, %v2122
      %v2209 = vpack.c.b16 %v2127, %v2125
      %v2210 = vpack.c.b16 %v2128, %v2126
      %v2211 = vpack.c.b16 %v2131, %v2129
      %v2212 = vpack.c.b16 %v2132, %v2130
      %v2213 = vpack.c.b16 %v2135, %v2133
      %v2214 = vpack.c.b16 %v2136, %v2134
      %v2215 = vpack.c.b16 %v2139, %v2137
      %v2216 = vpack.c.b16 %v2140, %v2138
      %v2217 = vpack.c.b16 %v2143, %v2141
      %v2218 = vpack.c.b16 %v2144, %v2142
      %v2219 = vpack.c.b16 %v2147, %v2145
      %v2220 = vpack.c.b16 %v2148, %v2146
      %v2221 = vpack.c.b16 %v2151, %v2149
      %v2222 = vpack.c.b16 %v2152, %v2150
      %v2223 = vpack.c.b16 %v2155, %v2153
      %v2224 = vpack.c.b16 %v2156, %v2154
      %v2225 = vpack.c.b16 %v2159, %v2157
      %v2226 = vpack.c.b16 %v2160, %v2158
      %v2227 = vpack.c.b16 %v2163, %v2161
      %v2228 = vpack.c.b16 %v2164, %v2162
      %2293 = vmatprep.subr.bf16.mxu0 %v2166
      %2294 = vmatpush1.bf16.msra.mxu0 %v2165
      %2295 = vmatprep.subr.bf16.mxu0 %v2168
      %2296 = vmatpush1.bf16.msra.mxu0 %v2167
      %2297 = vmatprep.subr.bf16.mxu0 %v2170
      %2298 = vmatpush1.bf16.msra.mxu0 %v2169
      %2299 = vmatprep.subr.bf16.mxu0 %v2172
      %2300 = vmatpush1.bf16.msra.mxu0 %v2171
      %2301 = vmatprep.subr.bf16.mxu0 %v2174
      %2302 = vmatpush1.bf16.msra.mxu0 %v2173
      %2303 = vmatprep.subr.bf16.mxu0 %v2176
      %2304 = vmatpush1.bf16.msra.mxu0 %v2175
      %2305 = vmatprep.subr.bf16.mxu0 %v2178
      %2306 = vmatpush1.bf16.msra.mxu0 %v2177
      %2307 = vmatprep.subr.bf16.mxu0 %v2180
      %2308 = vmatpush1.bf16.msra.mxu0 %v2179
      %2309 = vmatprep.subr.bf16.mxu0 %v2182
      %2310 = vmatpush1.bf16.msra.mxu0 %v2181
      %2311 = vmatprep.subr.bf16.mxu0 %v2184
      %2312 = vmatpush1.bf16.msra.mxu0 %v2183
      %2313 = vmatprep.subr.bf16.mxu0 %v2186
      %2314 = vmatpush1.bf16.msra.mxu0 %v2185
      %2315 = vmatprep.subr.bf16.mxu0 %v2188
      %2316 = vmatpush1.bf16.msra.mxu0 %v2187
      %2317 = vmatprep.subr.bf16.mxu0 %v2190
      %2318 = vmatpush1.bf16.msra.mxu0 %v2189
      %2319 = vmatprep.subr.bf16.mxu0 %v2192
      %2320 = vmatpush1.bf16.msra.mxu0 %v2191
      %2321 = vmatprep.subr.bf16.mxu0 %v2194
      %2322 = vmatpush1.bf16.msra.mxu0 %v2193
      %2323 = vmatprep.subr.bf16.mxu0 %v2196
      %2324 = vmatpush1.bf16.msra.mxu0 %v2195
      %2325 = vmatprep.mubr.bf16.mxu0 %v1958
      %2326 = vmatmul.mubr.bf16.gmra.mrb[0].mxu0 %v1955
      %v2327 = vpop.f32.mrb[0].mxu0
      %v2328 = vadd.f32 0.0, %v2327
      %v2329 = vpop.f32.mrb[0].mxu0
      %v2330 = vadd.f32 0.0, %v2329
      %v2331 = vpop.f32.mrb[0].mxu0
      %v2332 = vadd.f32 0.0, %v2331
      %v2333 = vpop.f32.mrb[0].mxu0
      %v2334 = vadd.f32 0.0, %v2333
      %2335 = vmatprep.mubr.bf16.mxu0 %v1957
      %2336 = vmatmul.mubr.bf16.gmra.mrb[0].mxu0 %v1954
      %v2337 = vpop.f32.mrb[0].mxu0
      %v2338 = vadd.f32 0.0, %v2337
      %v2339 = vpop.f32.mrb[0].mxu0
      %v2340 = vadd.f32 0.0, %v2339
      %v2341 = vpop.f32.mrb[0].mxu0
      %v2342 = vpop.f32.mrb[0].mxu0
      %2343 = vdwg.mxu0
      %2344 = vmatprep.subr.bf16.mxu0 %v2198
      %2345 = vmatpush1.bf16.msra.mxu0 %v2197
      %2346 = vmatprep.subr.bf16.mxu0 %v2200
      %2347 = vmatpush1.bf16.msra.mxu0 %v2199
      %2348 = vmatprep.subr.bf16.mxu0 %v2202
      %2349 = vmatpush1.bf16.msra.mxu0 %v2201
      %2350 = vmatprep.subr.bf16.mxu0 %v2204
      %2351 = vmatpush1.bf16.msra.mxu0 %v2203
      %2352 = vmatprep.subr.bf16.mxu0 %v2206
      %2353 = vmatpush1.bf16.msra.mxu0 %v2205
      %2354 = vmatprep.subr.bf16.mxu0 %v2208
      %2355 = vmatpush1.bf16.msra.mxu0 %v2207
      %2356 = vmatprep.subr.bf16.mxu0 %v2210
      %2357 = vmatpush1.bf16.msra.mxu0 %v2209
      %2358 = vmatprep.subr.bf16.mxu0 %v2212
      %2359 = vmatpush1.bf16.msra.mxu0 %v2211
      %2360 = vmatprep.subr.bf16.mxu0 %v2214
      %2361 = vmatpush1.bf16.msra.mxu0 %v2213
      %2362 = vmatprep.subr.bf16.mxu0 %v2216
      %2363 = vmatpush1.bf16.msra.mxu0 %v2215
      %2364 = vmatprep.subr.bf16.mxu0 %v2218
      %2365 = vmatpush1.bf16.msra.mxu0 %v2217
      %2366 = vmatprep.subr.bf16.mxu0 %v2220
      %2367 = vmatpush1.bf16.msra.mxu0 %v2219
      %2368 = vmatprep.subr.bf16.mxu0 %v2222
      %2369 = vmatpush1.bf16.msra.mxu0 %v2221
      %2370 = vmatprep.subr.bf16.mxu0 %v2224
      %2371 = vmatpush1.bf16.msra.mxu0 %v2223
      %2372 = vmatprep.subr.bf16.mxu0 %v2226
      %2373 = vmatpush1.bf16.msra.mxu0 %v2225
      %2374 = vmatprep.subr.bf16.mxu0 %v2228
      %2375 = vmatpush1.bf16.msra.mxu0 %v2227
      %2376 = vmatprep.mubr.bf16.mxu0 %v1964
      %2377 = vmatmul.mubr.bf16.gmra.mrb[0].mxu0 %v1961
      %v2378 = vpop.f32.mrb[0].mxu0
      %v2379 = vadd.f32 %v2328, %v2378
      %v2380 = vpop.f32.mrb[0].mxu0
      %v2381 = vadd.f32 %v2330, %v2380
      %v2382 = vpop.f32.mrb[0].mxu0
      %v2383 = vadd.f32 %v2332, %v2382
      %v2384 = vpop.f32.mrb[0].mxu0
      %v2385 = vadd.f32 %v2334, %v2384
      %2386 = vmatprep.mubr.bf16.mxu0 %v1963
      %2387 = vmatmul.mubr.bf16.gmra.mrb[0].mxu0 %v1960
      %v2388 = vpop.f32.mrb[0].mxu0
      %v2389 = vadd.f32 %v2338, %v2388
      %v2390 = vpop.f32.mrb[0].mxu0
      %v2391 = vadd.f32 %v2340, %v2390
      %v2392 = vpop.f32.mrb[0].mxu0
      %v2393 = vpop.f32.mrb[0].mxu0
      %2394 = vdwg.mxu0
      %v2395 = vadd.f32 %v1869, %v2379
      %v2396 = vadd.f32 %v1870, %v2381
      %v2397 = vadd.f32 %v1871, %v2383
      %v2398 = vadd.f32 %v1872, %v2385
      %v2399 = vadd.f32 %v1873, %v2389
      %v2400 = vadd.f32 %v1874, %v2391
      %v2401 = vld [vmem:[%s2] sm:$0x3]
      %v2403 = vlaneseq
      %v2404 = vshrl.u32 %v2403, 7
      %v2405 = vsub.s32 0, %v2404
      %v2406 = vrot.slane %v2401, %v2405
      %v2407 = vlaneseq
      %v2408 = vshrl.u32 %v2407, 7
      %v2409 = vsub.s32 1, %v2408
      %v2410 = vrot.slane %v2401, %v2409
      %v2413 = vadd.f32 %v2395, %v2406
      %v2414 = vadd.f32 %v2396, %v2410
      %v2415 = vadd.f32 %v2397, %v2406
      %v2416 = vadd.f32 %v2398, %v2410
      %v2417 = vadd.f32 %v2399, %v2406
      %v2418 = vadd.f32 %v2400, %v2410
      %vm2419 = vcmp.ge.f32.partialorder %v2413, 0.0
      %vm2420 = vcmp.ge.f32.partialorder %v2414, 0.0
      %vm2421 = vcmp.ge.f32.partialorder %v2415, 0.0
      %vm2422 = vcmp.ge.f32.partialorder %v2416, 0.0
      %vm2423 = vcmp.ge.f32.partialorder %v2417, 0.0
      %vm2424 = vcmp.ge.f32.partialorder %v2418, 0.0
      %v2425 = vmul.f32 %v2413, 0.2
      %v2426 = vmul.f32 %v2414, 0.2
      %v2427 = vmul.f32 %v2415, 0.2
      %v2428 = vmul.f32 %v2416, 0.2
      %v2429 = vmul.f32 %v2417, 0.2
      %v2430 = vmul.f32 %v2418, 0.2
      %v2431 = vsel %vm2419, %v2413, %v2425
      %v2432 = vsel %vm2420, %v2414, %v2426
      %v2433 = vsel %vm2421, %v2415, %v2427
      %v2434 = vsel %vm2422, %v2416, %v2428
      %v2435 = vsel %vm2423, %v2417, %v2429
      %v2436 = vsel %vm2424, %v2418, %v2430
      %v2437 = vpack.c.bf16 %v2433, %v2431
      %v2438 = vpack.c.bf16 %v2434, %v2432
      %v2439 = vpack.c.bf16 %v2435, %v2435
      %v2440 = vpack.c.bf16 %v2436, %v2436
      %v2445 = vunpack.c.l.b16 %v2437
      %v2446 = vunpack.c.l.b16 %v2438
      %v2447 = vunpack.c.h.b16 %v2437
      %v2448 = vunpack.c.h.b16 %v2438
      %v2449 = vunpack.c.l.b16 %v2439
      %v2450 = vunpack.c.l.b16 %v2440
      %v2451 = vpack.c.b16 %v2446, %v2445
      %v2452 = vpack.c.b16 %v2448, %v2447
      %v2453 = vpack.c.b16 %v2450, %v2449
      %2457 = vst [vmem:[%s170] sm:$0xff] %v2451
      %2458 = vst [vmem:[%s170 + $0x8] sm:$0xff] %v2452
      %2459 = vst [vmem:[%s170 + $0x10] sm:$0x33] %v2453
      %p2460 = scmp.lt.s32.totalorder %s14, 1
      %s2461 = scalar_select %p2460, %s14, 1
      %s2462 = smul.addr %s2461, 6
      %s2463 = smul.addr %s2462, 4
      %s2464 = scalar_lea.vmem %s3, %s2463
      // Predicated region
      $region33: #{patch_discriminator.6} parent=31 // pred_check
        %p2465 = pneg %p100
      $region34: #{patch_discriminator.6} parent=31 // pred_check_branch
        %2467 = sbr.rel (%p2465) target = $region36
      $region35: #{patch_discriminator.6} parent=31 // pred_region
        _
      $region36: #{patch_discriminator.6} parent=31 // pred_fallthru
        _
    $region32: #{patch_discriminator.6} parent=5 // pred_fallthru
      _
    %p2468 = scmp.le.s32.totalorder 2, %s9
    // Predicated region
    $region37: #{patch_discriminator.6} parent=5 // pred_check
      %p2469 = pneg %p2468
    $region38: #{patch_discriminator.6} parent=5 // pred_check_branch
      %2471 = sbr.rel (%p2469) target = $region40
    $region39: #{patch_discriminator.6} parent=5 // pred_region
      %s2472 = ssub.s32 %s9, 2
      // Predicated region
      $region41: #{patch_discriminator.6} parent=39 // pred_check
        %p2473 = pneg %p106
      $region42: #{patch_discriminator.6} parent=39 // pred_check_branch
        %2475 = sbr.rel (%p2473) target = $region44
      $region43: #{patch_discriminator.6} parent=39 // pred_region
        %p2476 = scmp.lt.s32.totalorder %s15, 1
        %s2477 = scalar_select %p2476, %s15, 1
        %s2478 = smul.addr %s2477, 6
        %s2479 = smul.addr %s2478, 4
        %s2480 = scalar_lea.vmem %s3, %s2479
      $region44: #{patch_discriminator.6} parent=39 // pred_fallthru
        _
    $region40: #{patch_discriminator.6} parent=5 // pred_fallthru
      _
  $region6: #{patch_discriminator.6} parent=0 // loop_footer
    %s13 = sadd.s32 1, %s9
  $region7: #{patch_discriminator.6} parent=0 // loop_footer_branch
    %8 = sbr.rel target = $region3
  $region8: #{patch_discriminator.6} parent=0 // loop_exit
    _

// kernel: patch_discriminator.7
$region0: #{patch_discriminator.7}
  #allocation0 [shape = 'u32[]', space=smem, size = 0x4, offset = 0x4, fixed_abs, tag = 'smem constant byte address 0x4 - core index']
  #allocation1 [shape = 'u32[144,128]{1,0:T(1,128)}', space=vmem, size = 0x12000, scoped, tag = 'internal scratch']
  %s0 = inlined_call_operand.vmem [shape: bf16[2,19,256], index: 0, kind: input, shape index: {}]
  %s1 = inlined_call_operand.vmem [shape: bf16[16,256,128], index: 1, kind: input, shape index: {}]
  %s2 = inlined_call_operand.vmem [shape: f32[1,128], index: 2, kind: input, shape index: {}]
  %s3 = inlined_call_operand.vmem [shape: f32[2,4,128], index: 3, kind: output, shape index: {}]
  %s4 = sld [smem:[#allocation0]]
  $region45: #{patch_discriminator.7} parent=0
    _
  %s6 = ssub.s32 1, %s4
  %s7 = scalar_select 0, %s6, %s4
  loop: start=0, step=1, limit=4
  $region2: #{patch_discriminator.7} parent=0 // loop_pre_header
    _
  $region3: #{patch_discriminator.7} parent=0 // loop_header
    %s9 = sphi 0, %s13
    %p10 = scmp.ge.s32.totalorder %s9, 4
    %s19 = sphi 0, %s21
    %s22 = sphi 0, %s19
    %s23 = sphi 0, %s22
    %s39 = sphi 0, %s23
    %s43 = sphi 0, %s43
    %s45 = sphi 0, %s43
    %s46 = sphi 0, %s45
    %s60 = sphi 0, %s46
    %s64 = sphi 0, %s64
    %s66 = sphi 0, %s64
    %s67 = sphi 0, %s66
    %s81 = sphi 0, %s67
    %s87 = sphi 0, %s89
    %s90 = sphi 0, %s87
    %s91 = sphi 0, %s90
    %s107 = sphi 0, %s91
  $region4: #{patch_discriminator.7} parent=0 // loop_header_branch
    %12 = sbr.rel (%p10) target = $region8
  $region5: #{patch_discriminator.7} parent=0 // loop_body
    %s14 = ssub.s32 %s9, 1
    %s15 = ssub.s32 %s9, 2
    %s16 = sadd.s32 %s9, 1
    %s17 = ssub.s32 %s9, %s16
    %p18 = scmp.eq.s32.totalorder %s17, 0
    %s20 = sadd.s32 %s19, 1
    %s21 = scalar_select %p18, %s19, %s20
    %p24 = pneg %p18
    %p25 = scmp.eq.s32.totalorder %s9, 1
    %p26 = por %p24, %p25
    %p27 = scmp.ne.s32.totalorder %s19, %s22
    %p28 = scmp.eq.s32.totalorder %s9, 0
    %p29 = por %p27, %p28
    %p30 = scmp.ne.s32.totalorder %s19, %s22
    %p31 = scmp.eq.s32.totalorder %s14, 1
    %p32 = por %p30, %p31
    %p33 = scmp.ne.s32.totalorder %s22, %s23
    %p34 = scmp.eq.s32.totalorder %s14, 0
    %p35 = por %p33, %p34
    %p36 = scmp.ne.s32.totalorder %s22, %s23
    %p37 = scmp.eq.s32.totalorder %s15, 1
    %p38 = por %p36, %p37
    %p40 = scmp.ne.s32.totalorder %s23, %s39
    %p41 = scmp.eq.s32.totalorder %s15, 0
    %p42 = por %p40, %p41
    %s44 = sadd.s32 %s43, 1
    %p47 = scmp.eq.s32.totalorder %s9, 1
    %p48 = scmp.ne.s32.totalorder %s43, %s45
    %p49 = scmp.eq.s32.totalorder %s9, 0
    %p50 = por %p48, %p49
    %p51 = scmp.ne.s32.totalorder %s43, %s45
    %p52 = scmp.eq.s32.totalorder %s14, 1
    %p53 = por %p51, %p52
    %p54 = scmp.ne.s32.totalorder %s45, %s46
    %p55 = scmp.eq.s32.totalorder %s14, 0
    %p56 = por %p54, %p55
    %p57 = scmp.ne.s32.totalorder %s45, %s46
    %p58 = scmp.eq.s32.totalorder %s15, 1
    %p59 = por %p57, %p58
    %p61 = scmp.ne.s32.totalorder %s46, %s60
    %p62 = scmp.eq.s32.totalorder %s15, 0
    %p63 = por %p61, %p62
    %s65 = sadd.s32 %s64, 1
    %p68 = scmp.eq.s32.totalorder %s9, 1
    %p69 = scmp.ne.s32.totalorder %s64, %s66
    %p70 = scmp.eq.s32.totalorder %s9, 0
    %p71 = por %p69, %p70
    %p72 = scmp.ne.s32.totalorder %s64, %s66
    %p73 = scmp.eq.s32.totalorder %s14, 1
    %p74 = por %p72, %p73
    %p75 = scmp.ne.s32.totalorder %s66, %s67
    %p76 = scmp.eq.s32.totalorder %s14, 0
    %p77 = por %p75, %p76
    %p78 = scmp.ne.s32.totalorder %s66, %s67
    %p79 = scmp.eq.s32.totalorder %s15, 1
    %p80 = por %p78, %p79
    %p82 = scmp.ne.s32.totalorder %s67, %s81
    %p83 = scmp.eq.s32.totalorder %s15, 0
    %p84 = por %p82, %p83
    %s85 = ssub.s32 %s9, %s16
    %p86 = scmp.eq.s32.totalorder %s85, 0
    %s88 = sadd.s32 %s87, 1
    %s89 = scalar_select %p86, %s87, %s88
    %p92 = pneg %p86
    %p93 = scmp.eq.s32.totalorder %s9, 1
    %p94 = por %p92, %p93
    %p95 = scmp.ne.s32.totalorder %s87, %s90
    %p96 = scmp.eq.s32.totalorder %s9, 0
    %p97 = por %p95, %p96
    %p98 = scmp.ne.s32.totalorder %s87, %s90
    %p99 = scmp.eq.s32.totalorder %s14, 1
    %p100 = por %p98, %p99
    %p101 = scmp.ne.s32.totalorder %s90, %s91
    %p102 = scmp.eq.s32.totalorder %s14, 0
    %p103 = por %p101, %p102
    %p104 = scmp.ne.s32.totalorder %s90, %s91
    %p105 = scmp.eq.s32.totalorder %s15, 1
    %p106 = por %p104, %p105
    %p108 = scmp.ne.s32.totalorder %s91, %s107
    %p109 = scmp.eq.s32.totalorder %s15, 0
    %p110 = por %p108, %p109
    %p111 = scmp.le.s32.totalorder 1, %s9
    %p112 = scmp.lt.s32.totalorder %s9, 3
    %p113 = pnand %p111, %p112
    %p114 = pneg %p113
    // Predicated region
    $region9: #{patch_discriminator.7} parent=5 // pred_check
      _
    $region10: #{patch_discriminator.7} parent=5 // pred_check_branch
      %116 = sbr.rel (%p113) target = $region12
    $region11: #{patch_discriminator.7} parent=5 // pred_region
      %s117 = ssub.s32 %s9, 1
      // Predicated region
      $region13: #{patch_discriminator.7} parent=11 // pred_check
        %p118 = pneg %p56
      $region14: #{patch_discriminator.7} parent=11 // pred_check_branch
        %120 = sbr.rel (%p118) target = $region16
      $region15: #{patch_discriminator.7} parent=11 // pred_region
        _
      $region16: #{patch_discriminator.7} parent=11 // pred_fallthru
        _
      // Predicated region
      $region17: #{patch_discriminator.7} parent=11 // pred_check
        %p121 = pneg %p77
      $region18: #{patch_discriminator.7} parent=11 // pred_check_branch
        %123 = sbr.rel (%p121) target = $region20
      $region19: #{patch_discriminator.7} parent=11 // pred_region
        _
      $region20: #{patch_discriminator.7} parent=11 // pred_fallthru
        _
    $region12: #{patch_discriminator.7} parent=5 // pred_fallthru
      _
    %p124 = scmp.lt.s32.totalorder %s9, 2
    // Predicated region
    $region21: #{patch_discriminator.7} parent=5 // pred_check
      %p125 = pneg %p124
    $region22: #{patch_discriminator.7} parent=5 // pred_check_branch
      %127 = sbr.rel (%p125) target = $region24
    $region23: #{patch_discriminator.7} parent=5 // pred_region
      // Predicated region
      $region25: #{patch_discriminator.7} parent=23 // pred_check
        %p128 = pneg %p29
      $region26: #{patch_discriminator.7} parent=23 // pred_check_branch
        %130 = sbr.rel (%p128) target = $region28
      $region27: #{patch_discriminator.7} parent=23 // pred_region
        %p131 = scmp.lt.s32.totalorder %s9, 1
        %s132 = scalar_select %p131, %s9, 1
        %s133 = smul.addr %s132, 6
        %s134 = smul.addr %s133, 4
        %s135 = scalar_lea.vmem %s0, %s134
      $region28: #{patch_discriminator.7} parent=23 // pred_fallthru
        _
    $region24: #{patch_discriminator.7} parent=5 // pred_fallthru
      _
    %p136 = scmp.le.s32.totalorder 1, %s9
    %p137 = scmp.lt.s32.totalorder %s9, 3
    %p138 = pnand %p136, %p137
    %p139 = pneg %p138
    // Predicated region
    $region29: #{patch_discriminator.7} parent=5 // pred_check
      _
    $region30: #{patch_discriminator.7} parent=5 // pred_check_branch
      %141 = sbr.rel (%p138) target = $region32
    $region31: #{patch_discriminator.7} parent=5 // pred_region
      %s142 = ssub.s32 %s9, 1
      %p143 = scmp.lt.s32.totalorder %s14, 1
      %s144 = scalar_select %p143, %s14, 1
      %s145 = smul.addr %s144, 6
      %s146 = smul.addr %s145, 4
      %s147 = scalar_lea.vmem %s0, %s146
      %p148 = pneg %p35
      %p149 = pneg %p32
      %p150 = pneg %p56
      %p151 = pneg %p53
      %p152 = pneg %p77
      %p153 = pneg %p74
      %p154 = pneg %p103
      %p155 = pneg %p100
      %p156 = scmp.lt.s32.totalorder %s14, 1
      %s157 = scalar_select %p156, %s14, 1
      %s158 = smul.addr %s157, 4
      %s159 = scalar_lea.vmem %s3, %s158
      %p160 = scmp.lt.s32.totalorder %s14, 1
      %s161 = scalar_select %p160, %s14, 1
      %s162 = smul.addr %s161, 6
      %s163 = smul.addr %s162, 4
      %s164 = scalar_lea.vmem %s0, %s163
      %p165 = scmp.lt.s32.totalorder %s14, 1
      %s166 = scalar_select %p165, %s14, 1
      %s167 = smul.addr %s166, 4
      %s168 = scalar_lea.vmem %s3, %s167
      %v170 = vld [vmem:[%s164] sm:$0x33]
      %v171 = vld [vmem:[%s1] sm:$0xf]
      %v172 = vld [vmem:[%s1 + $0x4] sm:$0xf]
      %v173 = vld [vmem:[%s1 + $0x8] sm:$0xf]
      %v174 = vld [vmem:[%s1 + $0xc] sm:$0xf]
      %v175 = vld [vmem:[%s1 + $0x10] sm:$0xf]
      %v176 = vld [vmem:[%s1 + $0x14] sm:$0xf]
      %v177 = vld [vmem:[%s1 + $0x18] sm:$0xf]
      %v178 = vld [vmem:[%s1 + $0x1c] sm:$0xf]
      %v179 = vld [vmem:[%s1 + $0x20] sm:$0xf]
      %v180 = vld [vmem:[%s1 + $0x24] sm:$0xf]
      %v181 = vld [vmem:[%s1 + $0x28] sm:$0xf]
      %v182 = vld [vmem:[%s1 + $0x2c] sm:$0xf]
      %v183 = vld [vmem:[%s1 + $0x30] sm:$0xf]
      %v184 = vld [vmem:[%s1 + $0x34] sm:$0xf]
      %v185 = vld [vmem:[%s1 + $0x38] sm:$0xf]
      %v186 = vld [vmem:[%s1 + $0x3c] sm:$0xf]
      %v187 = vld [vmem:[%s1 + $0x40] sm:$0xf]
      %v188 = vld [vmem:[%s1 + $0x44] sm:$0xf]
      %v189 = vld [vmem:[%s1 + $0x48] sm:$0xf]
      %v190 = vld [vmem:[%s1 + $0x4c] sm:$0xf]
      %v191 = vld [vmem:[%s1 + $0x50] sm:$0xf]
      %v192 = vld [vmem:[%s1 + $0x54] sm:$0xf]
      %v193 = vld [vmem:[%s1 + $0x58] sm:$0xf]
      %v194 = vld [vmem:[%s1 + $0x5c] sm:$0xf]
      %v195 = vld [vmem:[%s1 + $0x60] sm:$0xf]
      %v196 = vld [vmem:[%s1 + $0x64] sm:$0xf]
      %v197 = vld [vmem:[%s1 + $0x68] sm:$0xf]
      %v198 = vld [vmem:[%s1 + $0x6c] sm:$0xf]
      %v199 = vld [vmem:[%s1 + $0x70] sm:$0xf]
      %v200 = vld [vmem:[%s1 + $0x74] sm:$0xf]
      %v201 = vld [vmem:[%s1 + $0x78] sm:$0xf]
      %v202 = vld [vmem:[%s1 + $0x7c] sm:$0xf]
      %v203 = vld [vmem:[%s164] sm:$0x77]
      %s204 = scalar_lea.vmem %s1, 128
      %v205 = vld [vmem:[%s204] sm:$0xf]
      %v206 = vld [vmem:[%s204 + $0x4] sm:$0xf]
      %v207 = vld [vmem:[%s204 + $0x8] sm:$0xf]
      %v208 = vld [vmem:[%s204 + $0xc] sm:$0xf]
      %v209 = vld [vmem:[%s204 + $0x10] sm:$0xf]
      %v210 = vld [vmem:[%s204 + $0x14] sm:$0xf]
      %v211 = vld [vmem:[%s204 + $0x18] sm:$0xf]
      %v212 = vld [vmem:[%s204 + $0x1c] sm:$0xf]
      %v213 = vld [vmem:[%s204 + $0x20] sm:$0xf]
      %v214 = vld [vmem:[%s204 + $0x24] sm:$0xf]
      %v215 = vld [vmem:[%s204 + $0x28] sm:$0xf]
      %v216 = vld [vmem:[%s204 + $0x2c] sm:$0xf]
      %v217 = vld [vmem:[%s204 + $0x30] sm:$0xf]
      %v218 = vld [vmem:[%s204 + $0x34] sm:$0xf]
      %v219 = vld [vmem:[%s204 + $0x38] sm:$0xf]
      %v220 = vld [vmem:[%s204 + $0x3c] sm:$0xf]
      %v221 = vld [vmem:[%s204 + $0x40] sm:$0xf]
      %v222 = vld [vmem:[%s204 + $0x44] sm:$0xf]
      %v223 = vld [vmem:[%s204 + $0x48] sm:$0xf]
      %v224 = vld [vmem:[%s204 + $0x4c] sm:$0xf]
      %v225 = vld [vmem:[%s204 + $0x50] sm:$0xf]
      %v226 = vld [vmem:[%s204 + $0x54] sm:$0xf]
      %v227 = vld [vmem:[%s204 + $0x58] sm:$0xf]
      %v228 = vld [vmem:[%s204 + $0x5c] sm:$0xf]
      %v229 = vld [vmem:[%s204 + $0x60] sm:$0xf]
      %v230 = vld [vmem:[%s204 + $0x64] sm:$0xf]
      %v231 = vld [vmem:[%s204 + $0x68] sm:$0xf]
      %v232 = vld [vmem:[%s204 + $0x6c] sm:$0xf]
      %v233 = vld [vmem:[%s204 + $0x70] sm:$0xf]
      %v234 = vld [vmem:[%s204 + $0x74] sm:$0xf]
      %v235 = vld [vmem:[%s204 + $0x78] sm:$0xf]
      %v236 = vld [vmem:[%s204 + $0x7c] sm:$0xf]
      %v238 = vunpack.c.l.b16 %v203
      %v239 = vunpack.c.h.b16 %v203
      %v240 = vpack.c.b16 %v238, %v238
      %v241 = vpack.c.b16 %v239, %v239
      %v243 = vshrl.u32 %v240, 16
      %v245 = vshll.u32 %v240, 16
      %v247 = vrot.slane %v245, 1
      %v248 = vor.u32 %v243, %v247
      %v250 = vshrl.u32 %v241, 16
      %v252 = vshll.u32 %v241, 16
      %v254 = vrot.slane %v252, 1
      %v255 = vor.u32 %v250, %v254
      %v290 = vunpack.c.l.b16 %v205
      %v291 = vunpack.c.l.b16 %v206
      %v292 = vunpack.c.l.b16 %v207
      %v293 = vunpack.c.l.b16 %v208
      %v294 = vunpack.c.l.b16 %v209
      %v295 = vunpack.c.l.b16 %v210
      %v296 = vunpack.c.l.b16 %v211
      %v297 = vunpack.c.l.b16 %v212
      %v298 = vunpack.c.l.b16 %v213
      %v299 = vunpack.c.l.b16 %v214
      %v300 = vunpack.c.l.b16 %v215
      %v301 = vunpack.c.l.b16 %v216
      %v302 = vunpack.c.l.b16 %v217
      %v303 = vunpack.c.l.b16 %v218
      %v304 = vunpack.c.l.b16 %v219
      %v305 = vunpack.c.l.b16 %v220
      %v306 = vunpack.c.l.b16 %v221
      %v307 = vunpack.c.l.b16 %v222
      %v308 = vunpack.c.l.b16 %v223
      %v309 = vunpack.c.l.b16 %v224
      %v310 = vunpack.c.l.b16 %v225
      %v311 = vunpack.c.l.b16 %v226
      %v312 = vunpack.c.l.b16 %v227
      %v313 = vunpack.c.l.b16 %v228
      %v314 = vunpack.c.l.b16 %v229
      %v315 = vunpack.c.l.b16 %v230
      %v316 = vunpack.c.l.b16 %v231
      %v317 = vunpack.c.l.b16 %v232
      %v318 = vunpack.c.l.b16 %v233
      %v319 = vunpack.c.l.b16 %v234
      %v320 = vunpack.c.l.b16 %v235
      %v321 = vunpack.c.l.b16 %v236
      %v322 = vpack.c.b16 %v291, %v290
      %v323 = vpack.c.b16 %v293, %v292
      %v324 = vpack.c.b16 %v295, %v294
      %v325 = vpack.c.b16 %v297, %v296
      %v326 = vpack.c.b16 %v299, %v298
      %v327 = vpack.c.b16 %v301, %v300
      %v328 = vpack.c.b16 %v303, %v302
      %v329 = vpack.c.b16 %v305, %v304
      %v330 = vpack.c.b16 %v307, %v306
      %v331 = vpack.c.b16 %v309, %v308
      %v332 = vpack.c.b16 %v311, %v310
      %v333 = vpack.c.b16 %v313, %v312
      %v334 = vpack.c.b16 %v315, %v314
      %v335 = vpack.c.b16 %v317, %v316
      %v336 = vpack.c.b16 %v319, %v318
      %v337 = vpack.c.b16 %v321, %v320
      %354 = vmatprep.subr.bf16.mxu0 0
      %355 = vmatpush1.bf16.msra.mxu0 %v322
      %356 = vmatprep.subr.bf16.mxu0 0
      %357 = vmatpush1.bf16.msra.mxu0 %v323
      %358 = vmatprep.subr.bf16.mxu0 0
      %359 = vmatpush1.bf16.msra.mxu0 %v324
      %360 = vmatprep.subr.bf16.mxu0 0
      %361 = vmatpush1.bf16.msra.mxu0 %v325
      %362 = vmatprep.subr.bf16.mxu0 0
      %363 = vmatpush1.bf16.msra.mxu0 %v326
      %364 = vmatprep.subr.bf16.mxu0 0
      %365 = vmatpush1.bf16.msra.mxu0 %v327
      %366 = vmatprep.subr.bf16.mxu0 0
      %367 = vmatpush1.bf16.msra.mxu0 %v328
      %368 = vmatprep.subr.bf16.mxu0 0
      %369 = vmatpush1.bf16.msra.mxu0 %v329
      %370 = vmatprep.subr.bf16.mxu0 0
      %371 = vmatpush1.bf16.msra.mxu0 %v330
      %372 = vmatprep.subr.bf16.mxu0 0
      %373 = vmatpush1.bf16.msra.mxu0 %v331
      %374 = vmatprep.subr.bf16.mxu0 0
      %375 = vmatpush1.bf16.msra.mxu0 %v332
      %376 = vmatprep.subr.bf16.mxu0 0
      %377 = vmatpush1.bf16.msra.mxu0 %v333
      %378 = vmatprep.subr.bf16.mxu0 0
      %379 = vmatpush1.bf16.msra.mxu0 %v334
      %380 = vmatprep.subr.bf16.mxu0 0
      %381 = vmatpush1.bf16.msra.mxu0 %v335
      %382 = vmatprep.subr.bf16.mxu0 0
      %383 = vmatpush1.bf16.msra.mxu0 %v336
      %384 = vmatprep.subr.bf16.mxu0 0
      %385 = vmatpush1.bf16.msra.mxu0 %v337
      %386 = vmatprep.mubr.bf16.mxu0 %v255
      %387 = vmatmul.mubr.bf16.gmra.mrb[0].mxu0 %v248
      %v388 = vpop.f32.mrb[0].mxu0
      %v389 = vadd.f32 0.0, %v388
      %v390 = vpop.f32.mrb[0].mxu0
      %v391 = vpop.f32.mrb[0].mxu0
      %v392 = vpop.f32.mrb[0].mxu0
      %393 = vdwg.mxu0
      %v395 = vunpack.c.l.b16 %v170
      %v396 = vunpack.c.h.b16 %v170
      %v397 = vpack.c.b16 %v395, %v395
      %v398 = vpack.c.b16 %v396, %v396
      %v433 = vunpack.c.l.b16 %v171
      %v434 = vunpack.c.l.b16 %v172
      %v435 = vunpack.c.l.b16 %v173
      %v436 = vunpack.c.l.b16 %v174
      %v437 = vunpack.c.l.b16 %v175
      %v438 = vunpack.c.l.b16 %v176
      %v439 = vunpack.c.l.b16 %v177
      %v440 = vunpack.c.l.b16 %v178
      %v441 = vunpack.c.l.b16 %v179
      %v442 = vunpack.c.l.b16 %v180
      %v443 = vunpack.c.l.b16 %v181
      %v444 = vunpack.c.l.b16 %v182
      %v445 = vunpack.c.l.b16 %v183
      %v446 = vunpack.c.l.b16 %v184
      %v447 = vunpack.c.l.b16 %v185
      %v448 = vunpack.c.l.b16 %v186
      %v449 = vunpack.c.l.b16 %v187
      %v450 = vunpack.c.l.b16 %v188
      %v451 = vunpack.c.l.b16 %v189
      %v452 = vunpack.c.l.b16 %v190
      %v453 = vunpack.c.l.b16 %v191
      %v454 = vunpack.c.l.b16 %v192
      %v455 = vunpack.c.l.b16 %v193
      %v456 = vunpack.c.l.b16 %v194
      %v457 = vunpack.c.l.b16 %v195
      %v458 = vunpack.c.l.b16 %v196
      %v459 = vunpack.c.l.b16 %v197
      %v460 = vunpack.c.l.b16 %v198
      %v461 = vunpack.c.l.b16 %v199
      %v462 = vunpack.c.l.b16 %v200
      %v463 = vunpack.c.l.b16 %v201
      %v464 = vunpack.c.l.b16 %v202
      %v465 = vpack.c.b16 %v434, %v433
      %v466 = vpack.c.b16 %v436, %v435
      %v467 = vpack.c.b16 %v438, %v437
      %v468 = vpack.c.b16 %v440, %v439
      %v469 = vpack.c.b16 %v442, %v441
      %v470 = vpack.c.b16 %v444, %v443
      %v471 = vpack.c.b16 %v446, %v445
      %v472 = vpack.c.b16 %v448, %v447
      %v473 = vpack.c.b16 %v450, %v449
      %v474 = vpack.c.b16 %v452, %v451
      %v475 = vpack.c.b16 %v454, %v453
      %v476 = vpack.c.b16 %v456, %v455
      %v477 = vpack.c.b16 %v458, %v457
      %v478 = vpack.c.b16 %v460, %v459
      %v479 = vpack.c.b16 %v462, %v461
      %v480 = vpack.c.b16 %v464, %v463
      %497 = vmatprep.subr.bf16.mxu0 0
      %498 = vmatpush1.bf16.msra.mxu0 %v465
      %499 = vmatprep.subr.bf16.mxu0 0
      %500 = vmatpush1.bf16.msra.mxu0 %v466
      %501 = vmatprep.subr.bf16.mxu0 0
      %502 = vmatpush1.bf16.msra.mxu0 %v467
      %503 = vmatprep.subr.bf16.mxu0 0
      %504 = vmatpush1.bf16.msra.mxu0 %v468
      %505 = vmatprep.subr.bf16.mxu0 0
      %506 = vmatpush1.bf16.msra.mxu0 %v469
      %507 = vmatprep.subr.bf16.mxu0 0
      %508 = vmatpush1.bf16.msra.mxu0 %v470
      %509 = vmatprep.subr.bf16.mxu0 0
      %510 = vmatpush1.bf16.msra.mxu0 %v471
      %511 = vmatprep.subr.bf16.mxu0 0
      %512 = vmatpush1.bf16.msra.mxu0 %v472
      %513 = vmatprep.subr.bf16.mxu0 0
      %514 = vmatpush1.bf16.msra.mxu0 %v473
      %515 = vmatprep.subr.bf16.mxu0 0
      %516 = vmatpush1.bf16.msra.mxu0 %v474
      %517 = vmatprep.subr.bf16.mxu0 0
      %518 = vmatpush1.bf16.msra.mxu0 %v475
      %519 = vmatprep.subr.bf16.mxu0 0
      %520 = vmatpush1.bf16.msra.mxu0 %v476
      %521 = vmatprep.subr.bf16.mxu0 0
      %522 = vmatpush1.bf16.msra.mxu0 %v477
      %523 = vmatprep.subr.bf16.mxu0 0
      %524 = vmatpush1.bf16.msra.mxu0 %v478
      %525 = vmatprep.subr.bf16.mxu0 0
      %526 = vmatpush1.bf16.msra.mxu0 %v479
      %527 = vmatprep.subr.bf16.mxu0 0
      %528 = vmatpush1.bf16.msra.mxu0 %v480
      %529 = vmatprep.mubr.bf16.mxu0 %v398
      %530 = vmatmul.mubr.bf16.gmra.mrb[0].mxu0 %v397
      %v531 = vpop.f32.mrb[0].mxu0
      %v532 = vadd.f32 %v389, %v531
      %v533 = vpop.f32.mrb[0].mxu0
      %v534 = vpop.f32.mrb[0].mxu0
      %v535 = vpop.f32.mrb[0].mxu0
      %536 = vdwg.mxu0
      %v537 = vld [vmem:[%s164] sm:$0x66]
      %s538 = scalar_lea.vmem %s1, 256
      %v539 = vld [vmem:[%s538] sm:$0xf]
      %v540 = vld [vmem:[%s538 + $0x4] sm:$0xf]
      %v541 = vld [vmem:[%s538 + $0x8] sm:$0xf]
      %v542 = vld [vmem:[%s538 + $0xc] sm:$0xf]
      %v543 = vld [vmem:[%s538 + $0x10] sm:$0xf]
      %v544 = vld [vmem:[%s538 + $0x14] sm:$0xf]
      %v545 = vld [vmem:[%s538 + $0x18] sm:$0xf]
      %v546 = vld [vmem:[%s538 + $0x1c] sm:$0xf]
      %v547 = vld [vmem:[%s538 + $0x20] sm:$0xf]
      %v548 = vld [vmem:[%s538 + $0x24] sm:$0xf]
      %v549 = vld [vmem:[%s538 + $0x28] sm:$0xf]
      %v550 = vld [vmem:[%s538 + $0x2c] sm:$0xf]
      %v551 = vld [vmem:[%s538 + $0x30] sm:$0xf]
      %v552 = vld [vmem:[%s538 + $0x34] sm:$0xf]
      %v553 = vld [vmem:[%s538 + $0x38] sm:$0xf]
      %v554 = vld [vmem:[%s538 + $0x3c] sm:$0xf]
      %v555 = vld [vmem:[%s538 + $0x40] sm:$0xf]
      %v556 = vld [vmem:[%s538 + $0x44] sm:$0xf]
      %v557 = vld [vmem:[%s538 + $0x48] sm:$0xf]
      %v558 = vld [vmem:[%s538 + $0x4c] sm:$0xf]
      %v559 = vld [vmem:[%s538 + $0x50] sm:$0xf]
      %v560 = vld [vmem:[%s538 + $0x54] sm:$0xf]
      %v561 = vld [vmem:[%s538 + $0x58] sm:$0xf]
      %v562 = vld [vmem:[%s538 + $0x5c] sm:$0xf]
      %v563 = vld [vmem:[%s538 + $0x60] sm:$0xf]
      %v564 = vld [vmem:[%s538 + $0x64] sm:$0xf]
      %v565 = vld [vmem:[%s538 + $0x68] sm:$0xf]
      %v566 = vld [vmem:[%s538 + $0x6c] sm:$0xf]
      %v567 = vld [vmem:[%s538 + $0x70] sm:$0xf]
      %v568 = vld [vmem:[%s538 + $0x74] sm:$0xf]
      %v569 = vld [vmem:[%s538 + $0x78] sm:$0xf]
      %v570 = vld [vmem:[%s538 + $0x7c] sm:$0xf]
      %v572 = vunpack.c.l.b16 %v537
      %v573 = vunpack.c.h.b16 %v537
      %v574 = vpack.c.b16 %v572, %v572
      %v575 = vpack.c.b16 %v573, %v573
      %v576 = vrot.slane %v574, 1
      %v577 = vrot.slane %v575, 1
      %v612 = vunpack.c.l.b16 %v539
      %v613 = vunpack.c.l.b16 %v540
      %v614 = vunpack.c.l.b16 %v541
      %v615 = vunpack.c.l.b16 %v542
      %v616 = vunpack.c.l.b16 %v543
      %v617 = vunpack.c.l.b16 %v544
      %v618 = vunpack.c.l.b16 %v545
      %v619 = vunpack.c.l.b16 %v546
      %v620 = vunpack.c.l.b16 %v547
      %v621 = vunpack.c.l.b16 %v548
      %v622 = vunpack.c.l.b16 %v549
      %v623 = vunpack.c.l.b16 %v550
      %v624 = vunpack.c.l.b16 %v551
      %v625 = vunpack.c.l.b16 %v552
      %v626 = vunpack.c.l.b16 %v553
      %v627 = vunpack.c.l.b16 %v554
      %v628 = vunpack.c.l.b16 %v555
      %v629 = vunpack.c.l.b16 %v556
      %v630 = vunpack.c.l.b16 %v557
      %v631 = vunpack.c.l.b16 %v558
      %v632 = vunpack.c.l.b16 %v559
      %v633 = vunpack.c.l.b16 %v560
      %v634 = vunpack.c.l.b16 %v561
      %v635 = vunpack.c.l.b16 %v562
      %v636 = vunpack.c.l.b16 %v563
      %v637 = vunpack.c.l.b16 %v564
      %v638 = vunpack.c.l.b16 %v565
      %v639 = vunpack.c.l.b16 %v566
      %v640 = vunpack.c.l.b16 %v567
      %v641 = vunpack.c.l.b16 %v568
      %v642 = vunpack.c.l.b16 %v569
      %v643 = vunpack.c.l.b16 %v570
      %v644 = vpack.c.b16 %v613, %v612
      %v645 = vpack.c.b16 %v615, %v614
      %v646 = vpack.c.b16 %v617, %v616
      %v647 = vpack.c.b16 %v619, %v618
      %v648 = vpack.c.b16 %v621, %v620
      %v649 = vpack.c.b16 %v623, %v622
      %v650 = vpack.c.b16 %v625, %v624
      %v651 = vpack.c.b16 %v627, %v626
      %v652 = vpack.c.b16 %v629, %v628
      %v653 = vpack.c.b16 %v631, %v630
      %v654 = vpack.c.b16 %v633, %v632
      %v655 = vpack.c.b16 %v635, %v634
      %v656 = vpack.c.b16 %v637, %v636
      %v657 = vpack.c.b16 %v639, %v638
      %v658 = vpack.c.b16 %v641, %v640
      %v659 = vpack.c.b16 %v643, %v642
      %676 = vmatprep.subr.bf16.mxu0 0
      %677 = vmatpush1.bf16.msra.mxu0 %v644
      %678 = vmatprep.subr.bf16.mxu0 0
      %679 = vmatpush1.bf16.msra.mxu0 %v645
      %680 = vmatprep.subr.bf16.mxu0 0
      %681 = vmatpush1.bf16.msra.mxu0 %v646
      %682 = vmatprep.subr.bf16.mxu0 0
      %683 = vmatpush1.bf16.msra.mxu0 %v647
      %684 = vmatprep.subr.bf16.mxu0 0
      %685 = vmatpush1.bf16.msra.mxu0 %v648
      %686 = vmatprep.subr.bf16.mxu0 0
      %687 = vmatpush1.bf16.msra.mxu0 %v649
      %688 = vmatprep.subr.bf16.mxu0 0
      %689 = vmatpush1.bf16.msra.mxu0 %v650
      %690 = vmatprep.subr.bf16.mxu0 0
      %691 = vmatpush1.bf16.msra.mxu0 %v651
      %692 = vmatprep.subr.bf16.mxu0 0
      %693 = vmatpush1.bf16.msra.mxu0 %v652
      %694 = vmatprep.subr.bf16.mxu0 0
      %695 = vmatpush1.bf16.msra.mxu0 %v653
      %696 = vmatprep.subr.bf16.mxu0 0
      %697 = vmatpush1.bf16.msra.mxu0 %v654
      %698 = vmatprep.subr.bf16.mxu0 0
      %699 = vmatpush1.bf16.msra.mxu0 %v655
      %700 = vmatprep.subr.bf16.mxu0 0
      %701 = vmatpush1.bf16.msra.mxu0 %v656
      %702 = vmatprep.subr.bf16.mxu0 0
      %703 = vmatpush1.bf16.msra.mxu0 %v657
      %704 = vmatprep.subr.bf16.mxu0 0
      %705 = vmatpush1.bf16.msra.mxu0 %v658
      %706 = vmatprep.subr.bf16.mxu0 0
      %707 = vmatpush1.bf16.msra.mxu0 %v659
      %708 = vmatprep.mubr.bf16.mxu0 %v577
      %709 = vmatmul.mubr.bf16.gmra.mrb[0].mxu0 %v576
      %v710 = vpop.f32.mrb[0].mxu0
      %v711 = vadd.f32 0.0, %v710
      %v712 = vpop.f32.mrb[0].mxu0
      %v713 = vpop.f32.mrb[0].mxu0
      %v714 = vpop.f32.mrb[0].mxu0
      %715 = vdwg.mxu0
      %v716 = vadd.f32 %v532, %v711
      %v717 = vld [vmem:[%s164] sm:$0xee]
      %s718 = scalar_lea.vmem %s1, 384
      %v719 = vld [vmem:[%s718] sm:$0xf]
      %v720 = vld [vmem:[%s718 + $0x4] sm:$0xf]
      %v721 = vld [vmem:[%s718 + $0x8] sm:$0xf]
      %v722 = vld [vmem:[%s718 + $0xc] sm:$0xf]
      %v723 = vld [vmem:[%s718 + $0x10] sm:$0xf]
      %v724 = vld [vmem:[%s718 + $0x14] sm:$0xf]
      %v725 = vld [vmem:[%s718 + $0x18] sm:$0xf]
      %v726 = vld [vmem:[%s718 + $0x1c] sm:$0xf]
      %v727 = vld [vmem:[%s718 + $0x20] sm:$0xf]
      %v728 = vld [vmem:[%s718 + $0x24] sm:$0xf]
      %v729 = vld [vmem:[%s718 + $0x28] sm:$0xf]
      %v730 = vld [vmem:[%s718 + $0x2c] sm:$0xf]
      %v731 = vld [vmem:[%s718 + $0x30] sm:$0xf]
      %v732 = vld [vmem:[%s718 + $0x34] sm:$0xf]
      %v733 = vld [vmem:[%s718 + $0x38] sm:$0xf]
      %v734 = vld [vmem:[%s718 + $0x3c] sm:$0xf]
      %v735 = vld [vmem:[%s718 + $0x40] sm:$0xf]
      %v736 = vld [vmem:[%s718 + $0x44] sm:$0xf]
      %v737 = vld [vmem:[%s718 + $0x48] sm:$0xf]
      %v738 = vld [vmem:[%s718 + $0x4c] sm:$0xf]
      %v739 = vld [vmem:[%s718 + $0x50] sm:$0xf]
      %v740 = vld [vmem:[%s718 + $0x54] sm:$0xf]
      %v741 = vld [vmem:[%s718 + $0x58] sm:$0xf]
      %v742 = vld [vmem:[%s718 + $0x5c] sm:$0xf]
      %v743 = vld [vmem:[%s718 + $0x60] sm:$0xf]
      %v744 = vld [vmem:[%s718 + $0x64] sm:$0xf]
      %v745 = vld [vmem:[%s718 + $0x68] sm:$0xf]
      %v746 = vld [vmem:[%s718 + $0x6c] sm:$0xf]
      %v747 = vld [vmem:[%s718 + $0x70] sm:$0xf]
      %v748 = vld [vmem:[%s718 + $0x74] sm:$0xf]
      %v749 = vld [vmem:[%s718 + $0x78] sm:$0xf]
      %v750 = vld [vmem:[%s718 + $0x7c] sm:$0xf]
      %v752 = vunpack.c.l.b16 %v717
      %v753 = vunpack.c.h.b16 %v717
      %v754 = vpack.c.b16 %v752, %v752
      %v755 = vpack.c.b16 %v753, %v753
      %v757 = vshrl.u32 %v754, 16
      %v759 = vrot.slane %v757, 1
      %v760 = vshll.u32 %v754, 16
      %v762 = vrot.slane %v760, 2
      %v763 = vor.u32 %v759, %v762
      %v765 = vshrl.u32 %v755, 16
      %v767 = vrot.slane %v765, 1
      %v768 = vshll.u32 %v755, 16
      %v770 = vrot.slane %v768, 2
      %v771 = vor.u32 %v767, %v770
      %v806 = vunpack.c.l.b16 %v719
      %v807 = vunpack.c.l.b16 %v720
      %v808 = vunpack.c.l.b16 %v721
      %v809 = vunpack.c.l.b16 %v722
      %v810 = vunpack.c.l.b16 %v723
      %v811 = vunpack.c.l.b16 %v724
      %v812 = vunpack.c.l.b16 %v725
      %v813 = vunpack.c.l.b16 %v726
      %v814 = vunpack.c.l.b16 %v727
      %v815 = vunpack.c.l.b16 %v728
      %v816 = vunpack.c.l.b16 %v729
      %v817 = vunpack.c.l.b16 %v730
      %v818 = vunpack.c.l.b16 %v731
      %v819 = vunpack.c.l.b16 %v732
      %v820 = vunpack.c.l.b16 %v733
      %v821 = vunpack.c.l.b16 %v734
      %v822 = vunpack.c.l.b16 %v735
      %v823 = vunpack.c.l.b16 %v736
      %v824 = vunpack.c.l.b16 %v737
      %v825 = vunpack.c.l.b16 %v738
      %v826 = vunpack.c.l.b16 %v739
      %v827 = vunpack.c.l.b16 %v740
      %v828 = vunpack.c.l.b16 %v741
      %v829 = vunpack.c.l.b16 %v742
      %v830 = vunpack.c.l.b16 %v743
      %v831 = vunpack.c.l.b16 %v744
      %v832 = vunpack.c.l.b16 %v745
      %v833 = vunpack.c.l.b16 %v746
      %v834 = vunpack.c.l.b16 %v747
      %v835 = vunpack.c.l.b16 %v748
      %v836 = vunpack.c.l.b16 %v749
      %v837 = vunpack.c.l.b16 %v750
      %v838 = vpack.c.b16 %v807, %v806
      %v839 = vpack.c.b16 %v809, %v808
      %v840 = vpack.c.b16 %v811, %v810
      %v841 = vpack.c.b16 %v813, %v812
      %v842 = vpack.c.b16 %v815, %v814
      %v843 = vpack.c.b16 %v817, %v816
      %v844 = vpack.c.b16 %v819, %v818
      %v845 = vpack.c.b16 %v821, %v820
      %v846 = vpack.c.b16 %v823, %v822
      %v847 = vpack.c.b16 %v825, %v824
      %v848 = vpack.c.b16 %v827, %v826
      %v849 = vpack.c.b16 %v829, %v828
      %v850 = vpack.c.b16 %v831, %v830
      %v851 = vpack.c.b16 %v833, %v832
      %v852 = vpack.c.b16 %v835, %v834
      %v853 = vpack.c.b16 %v837, %v836
      %870 = vmatprep.subr.bf16.mxu0 0
      %871 = vmatpush1.bf16.msra.mxu0 %v838
      %872 = vmatprep.subr.bf16.mxu0 0
      %873 = vmatpush1.bf16.msra.mxu0 %v839
      %874 = vmatprep.subr.bf16.mxu0 0
      %875 = vmatpush1.bf16.msra.mxu0 %v840
      %876 = vmatprep.subr.bf16.mxu0 0
      %877 = vmatpush1.bf16.msra.mxu0 %v841
      %878 = vmatprep.subr.bf16.mxu0 0
      %879 = vmatpush1.bf16.msra.mxu0 %v842
      %880 = vmatprep.subr.bf16.mxu0 0
      %881 = vmatpush1.bf16.msra.mxu0 %v843
      %882 = vmatprep.subr.bf16.mxu0 0
      %883 = vmatpush1.bf16.msra.mxu0 %v844
      %884 = vmatprep.subr.bf16.mxu0 0
      %885 = vmatpush1.bf16.msra.mxu0 %v845
      %886 = vmatprep.subr.bf16.mxu0 0
      %887 = vmatpush1.bf16.msra.mxu0 %v846
      %888 = vmatprep.subr.bf16.mxu0 0
      %889 = vmatpush1.bf16.msra.mxu0 %v847
      %890 = vmatprep.subr.bf16.mxu0 0
      %891 = vmatpush1.bf16.msra.mxu0 %v848
      %892 = vmatprep.subr.bf16.mxu0 0
      %893 = vmatpush1.bf16.msra.mxu0 %v849
      %894 = vmatprep.subr.bf16.mxu0 0
      %895 = vmatpush1.bf16.msra.mxu0 %v850
      %896 = vmatprep.subr.bf16.mxu0 0
      %897 = vmatpush1.bf16.msra.mxu0 %v851
      %898 = vmatprep.subr.bf16.mxu0 0
      %899 = vmatpush1.bf16.msra.mxu0 %v852
      %900 = vmatprep.subr.bf16.mxu0 0
      %901 = vmatpush1.bf16.msra.mxu0 %v853
      %902 = vmatprep.mubr.bf16.mxu0 %v771
      %903 = vmatmul.mubr.bf16.gmra.mrb[0].mxu0 %v763
      %v904 = vpop.f32.mrb[0].mxu0
      %v905 = vadd.f32 0.0, %v904
      %v906 = vpop.f32.mrb[0].mxu0
      %v907 = vpop.f32.mrb[0].mxu0
      %v908 = vpop.f32.mrb[0].mxu0
      %909 = vdwg.mxu0
      %v910 = vadd.f32 %v716, %v905
      %v911 = vld [vmem:[%s164] sm:$0xcc]
      %s912 = scalar_lea.vmem %s1, 512
      %v913 = vld [vmem:[%s912] sm:$0xf]
      %v914 = vld [vmem:[%s912 + $0x4] sm:$0xf]
      %v915 = vld [vmem:[%s912 + $0x8] sm:$0xf]
      %v916 = vld [vmem:[%s912 + $0xc] sm:$0xf]
      %v917 = vld [vmem:[%s912 + $0x10] sm:$0xf]
      %v918 = vld [vmem:[%s912 + $0x14] sm:$0xf]
      %v919 = vld [vmem:[%s912 + $0x18] sm:$0xf]
      %v920 = vld [vmem:[%s912 + $0x1c] sm:$0xf]
      %v921 = vld [vmem:[%s912 + $0x20] sm:$0xf]
      %v922 = vld [vmem:[%s912 + $0x24] sm:$0xf]
      %v923 = vld [vmem:[%s912 + $0x28] sm:$0xf]
      %v924 = vld [vmem:[%s912 + $0x2c] sm:$0xf]
      %v925 = vld [vmem:[%s912 + $0x30] sm:$0xf]
      %v926 = vld [vmem:[%s912 + $0x34] sm:$0xf]
      %v927 = vld [vmem:[%s912 + $0x38] sm:$0xf]
      %v928 = vld [vmem:[%s912 + $0x3c] sm:$0xf]
      %v929 = vld [vmem:[%s912 + $0x40] sm:$0xf]
      %v930 = vld [vmem:[%s912 + $0x44] sm:$0xf]
      %v931 = vld [vmem:[%s912 + $0x48] sm:$0xf]
      %v932 = vld [vmem:[%s912 + $0x4c] sm:$0xf]
      %v933 = vld [vmem:[%s912 + $0x50] sm:$0xf]
      %v934 = vld [vmem:[%s912 + $0x54] sm:$0xf]
      %v935 = vld [vmem:[%s912 + $0x58] sm:$0xf]
      %v936 = vld [vmem:[%s912 + $0x5c] sm:$0xf]
      %v937 = vld [vmem:[%s912 + $0x60] sm:$0xf]
      %v938 = vld [vmem:[%s912 + $0x64] sm:$0xf]
      %v939 = vld [vmem:[%s912 + $0x68] sm:$0xf]
      %v940 = vld [vmem:[%s912 + $0x6c] sm:$0xf]
      %v941 = vld [vmem:[%s912 + $0x70] sm:$0xf]
      %v942 = vld [vmem:[%s912 + $0x74] sm:$0xf]
      %v943 = vld [vmem:[%s912 + $0x78] sm:$0xf]
      %v944 = vld [vmem:[%s912 + $0x7c] sm:$0xf]
      %v946 = vunpack.c.l.b16 %v911
      %v947 = vunpack.c.h.b16 %v911
      %v948 = vpack.c.b16 %v946, %v946
      %v949 = vpack.c.b16 %v947, %v947
      %v950 = vrot.slane %v948, 2
      %v951 = vrot.slane %v949, 2
      %v986 = vunpack.c.l.b16 %v913
      %v987 = vunpack.c.l.b16 %v914
      %v988 = vunpack.c.l.b16 %v915
      %v989 = vunpack.c.l.b16 %v916
      %v990 = vunpack.c.l.b16 %v917
      %v991 = vunpack.c.l.b16 %v918
      %v992 = vunpack.c.l.b16 %v919
      %v993 = vunpack.c.l.b16 %v920
      %v994 = vunpack.c.l.b16 %v921
      %v995 = vunpack.c.l.b16 %v922
      %v996 = vunpack.c.l.b16 %v923
      %v997 = vunpack.c.l.b16 %v924
      %v998 = vunpack.c.l.b16 %v925
      %v999 = vunpack.c.l.b16 %v926
      %v1000 = vunpack.c.l.b16 %v927
      %v1001 = vunpack.c.l.b16 %v928
      %v1002 = vunpack.c.l.b16 %v929
      %v1003 = vunpack.c.l.b16 %v930
      %v1004 = vunpack.c.l.b16 %v931
      %v1005 = vunpack.c.l.b16 %v932
      %v1006 = vunpack.c.l.b16 %v933
      %v1007 = vunpack.c.l.b16 %v934
      %v1008 = vunpack.c.l.b16 %v935
      %v1009 = vunpack.c.l.b16 %v936
      %v1010 = vunpack.c.l.b16 %v937
      %v1011 = vunpack.c.l.b16 %v938
      %v1012 = vunpack.c.l.b16 %v939
      %v1013 = vunpack.c.l.b16 %v940
      %v1014 = vunpack.c.l.b16 %v941
      %v1015 = vunpack.c.l.b16 %v942
      %v1016 = vunpack.c.l.b16 %v943
      %v1017 = vunpack.c.l.b16 %v944
      %v1018 = vpack.c.b16 %v987, %v986
      %v1019 = vpack.c.b16 %v989, %v988
      %v1020 = vpack.c.b16 %v991, %v990
      %v1021 = vpack.c.b16 %v993, %v992
      %v1022 = vpack.c.b16 %v995, %v994
      %v1023 = vpack.c.b16 %v997, %v996
      %v1024 = vpack.c.b16 %v999, %v998
      %v1025 = vpack.c.b16 %v1001, %v1000
      %v1026 = vpack.c.b16 %v1003, %v1002
      %v1027 = vpack.c.b16 %v1005, %v1004
      %v1028 = vpack.c.b16 %v1007, %v1006
      %v1029 = vpack.c.b16 %v1009, %v1008
      %v1030 = vpack.c.b16 %v1011, %v1010
      %v1031 = vpack.c.b16 %v1013, %v1012
      %v1032 = vpack.c.b16 %v1015, %v1014
      %v1033 = vpack.c.b16 %v1017, %v1016
      %1050 = vmatprep.subr.bf16.mxu0 0
      %1051 = vmatpush1.bf16.msra.mxu0 %v1018
      %1052 = vmatprep.subr.bf16.mxu0 0
      %1053 = vmatpush1.bf16.msra.mxu0 %v1019
      %1054 = vmatprep.subr.bf16.mxu0 0
      %1055 = vmatpush1.bf16.msra.mxu0 %v1020
      %1056 = vmatprep.subr.bf16.mxu0 0
      %1057 = vmatpush1.bf16.msra.mxu0 %v1021
      %1058 = vmatprep.subr.bf16.mxu0 0
      %1059 = vmatpush1.bf16.msra.mxu0 %v1022
      %1060 = vmatprep.subr.bf16.mxu0 0
      %1061 = vmatpush1.bf16.msra.mxu0 %v1023
      %1062 = vmatprep.subr.bf16.mxu0 0
      %1063 = vmatpush1.bf16.msra.mxu0 %v1024
      %1064 = vmatprep.subr.bf16.mxu0 0
      %1065 = vmatpush1.bf16.msra.mxu0 %v1025
      %1066 = vmatprep.subr.bf16.mxu0 0
      %1067 = vmatpush1.bf16.msra.mxu0 %v1026
      %1068 = vmatprep.subr.bf16.mxu0 0
      %1069 = vmatpush1.bf16.msra.mxu0 %v1027
      %1070 = vmatprep.subr.bf16.mxu0 0
      %1071 = vmatpush1.bf16.msra.mxu0 %v1028
      %1072 = vmatprep.subr.bf16.mxu0 0
      %1073 = vmatpush1.bf16.msra.mxu0 %v1029
      %1074 = vmatprep.subr.bf16.mxu0 0
      %1075 = vmatpush1.bf16.msra.mxu0 %v1030
      %1076 = vmatprep.subr.bf16.mxu0 0
      %1077 = vmatpush1.bf16.msra.mxu0 %v1031
      %1078 = vmatprep.subr.bf16.mxu0 0
      %1079 = vmatpush1.bf16.msra.mxu0 %v1032
      %1080 = vmatprep.subr.bf16.mxu0 0
      %1081 = vmatpush1.bf16.msra.mxu0 %v1033
      %1082 = vmatprep.mubr.bf16.mxu0 %v951
      %1083 = vmatmul.mubr.bf16.gmra.mrb[0].mxu0 %v950
      %v1084 = vpop.f32.mrb[0].mxu0
      %v1085 = vadd.f32 0.0, %v1084
      %v1086 = vpop.f32.mrb[0].mxu0
      %v1087 = vpop.f32.mrb[0].mxu0
      %v1088 = vpop.f32.mrb[0].mxu0
      %1089 = vdwg.mxu0
      %v1090 = vadd.f32 %v910, %v1085
      %v1091 = vld [vmem:[%s164] sm:$0xcc]
      %v1092 = vld [vmem:[%s164 + $0x8] sm:$0x11]
      %s1093 = scalar_lea.vmem %s1, 640
      %v1094 = vld [vmem:[%s1093] sm:$0xf]
      %v1095 = vld [vmem:[%s1093 + $0x4] sm:$0xf]
      %v1096 = vld [vmem:[%s1093 + $0x8] sm:$0xf]
      %v1097 = vld [vmem:[%s1093 + $0xc] sm:$0xf]
      %v1098 = vld [vmem:[%s1093 + $0x10] sm:$0xf]
      %v1099 = vld [vmem:[%s1093 + $0x14] sm:$0xf]
      %v1100 = vld [vmem:[%s1093 + $0x18] sm:$0xf]
      %v1101 = vld [vmem:[%s1093 + $0x1c] sm:$0xf]
      %v1102 = vld [vmem:[%s1093 + $0x20] sm:$0xf]
      %v1103 = vld [vmem:[%s1093 + $0x24] sm:$0xf]
      %v1104 = vld [vmem:[%s1093 + $0x28] sm:$0xf]
      %v1105 = vld [vmem:[%s1093 + $0x2c] sm:$0xf]
      %v1106 = vld [vmem:[%s1093 + $0x30] sm:$0xf]
      %v1107 = vld [vmem:[%s1093 + $0x34] sm:$0xf]
      %v1108 = vld [vmem:[%s1093 + $0x38] sm:$0xf]
      %v1109 = vld [vmem:[%s1093 + $0x3c] sm:$0xf]
      %v1110 = vld [vmem:[%s1093 + $0x40] sm:$0xf]
      %v1111 = vld [vmem:[%s1093 + $0x44] sm:$0xf]
      %v1112 = vld [vmem:[%s1093 + $0x48] sm:$0xf]
      %v1113 = vld [vmem:[%s1093 + $0x4c] sm:$0xf]
      %v1114 = vld [vmem:[%s1093 + $0x50] sm:$0xf]
      %v1115 = vld [vmem:[%s1093 + $0x54] sm:$0xf]
      %v1116 = vld [vmem:[%s1093 + $0x58] sm:$0xf]
      %v1117 = vld [vmem:[%s1093 + $0x5c] sm:$0xf]
      %v1118 = vld [vmem:[%s1093 + $0x60] sm:$0xf]
      %v1119 = vld [vmem:[%s1093 + $0x64] sm:$0xf]
      %v1120 = vld [vmem:[%s1093 + $0x68] sm:$0xf]
      %v1121 = vld [vmem:[%s1093 + $0x6c] sm:$0xf]
      %v1122 = vld [vmem:[%s1093 + $0x70] sm:$0xf]
      %v1123 = vld [vmem:[%s1093 + $0x74] sm:$0xf]
      %v1124 = vld [vmem:[%s1093 + $0x78] sm:$0xf]
      %v1125 = vld [vmem:[%s1093 + $0x7c] sm:$0xf]
      %v1128 = vunpack.c.l.b16 %v1091
      %v1129 = vunpack.c.h.b16 %v1091
      %v1130 = vunpack.c.l.b16 %v1092
      %v1131 = vunpack.c.h.b16 %v1092
      %v1132 = vpack.c.b16 %v1130, %v1128
      %v1133 = vpack.c.b16 %v1131, %v1129
      %v1135 = vshrl.u32 %v1132, 16
      %v1137 = vrot.slane %v1135, 2
      %v1138 = vshll.u32 %v1132, 16
      %v1140 = vrot.slane %v1138, 3
      %v1141 = vor.u32 %v1137, %v1140
      %v1143 = vshrl.u32 %v1133, 16
      %v1145 = vrot.slane %v1143, 2
      %v1146 = vshll.u32 %v1133, 16
      %v1148 = vrot.slane %v1146, 3
      %v1149 = vor.u32 %v1145, %v1148
      %v1184 = vunpack.c.l.b16 %v1094
      %v1185 = vunpack.c.l.b16 %v1095
      %v1186 = vunpack.c.l.b16 %v1096
      %v1187 = vunpack.c.l.b16 %v1097
      %v1188 = vunpack.c.l.b16 %v1098
      %v1189 = vunpack.c.l.b16 %v1099
      %v1190 = vunpack.c.l.b16 %v1100
      %v1191 = vunpack.c.l.b16 %v1101
      %v1192 = vunpack.c.l.b16 %v1102
      %v1193 = vunpack.c.l.b16 %v1103
      %v1194 = vunpack.c.l.b16 %v1104
      %v1195 = vunpack.c.l.b16 %v1105
      %v1196 = vunpack.c.l.b16 %v1106
      %v1197 = vunpack.c.l.b16 %v1107
      %v1198 = vunpack.c.l.b16 %v1108
      %v1199 = vunpack.c.l.b16 %v1109
      %v1200 = vunpack.c.l.b16 %v1110
      %v1201 = vunpack.c.l.b16 %v1111
      %v1202 = vunpack.c.l.b16 %v1112
      %v1203 = vunpack.c.l.b16 %v1113
      %v1204 = vunpack.c.l.b16 %v1114
      %v1205 = vunpack.c.l.b16 %v1115
      %v1206 = vunpack.c.l.b16 %v1116
      %v1207 = vunpack.c.l.b16 %v1117
      %v1208 = vunpack.c.l.b16 %v1118
      %v1209 = vunpack.c.l.b16 %v1119
      %v1210 = vunpack.c.l.b16 %v1120
      %v1211 = vunpack.c.l.b16 %v1121
      %v1212 = vunpack.c.l.b16 %v1122
      %v1213 = vunpack.c.l.b16 %v1123
      %v1214 = vunpack.c.l.b16 %v1124
      %v1215 = vunpack.c.l.b16 %v1125
      %v1216 = vpack.c.b16 %v1185, %v1184
      %v1217 = vpack.c.b16 %v1187, %v1186
      %v1218 = vpack.c.b16 %v1189, %v1188
      %v1219 = vpack.c.b16 %v1191, %v1190
      %v1220 = vpack.c.b16 %v1193, %v1192
      %v1221 = vpack.c.b16 %v1195, %v1194
      %v1222 = vpack.c.b16 %v1197, %v1196
      %v1223 = vpack.c.b16 %v1199, %v1198
      %v1224 = vpack.c.b16 %v1201, %v1200
      %v1225 = vpack.c.b16 %v1203, %v1202
      %v1226 = vpack.c.b16 %v1205, %v1204
      %v1227 = vpack.c.b16 %v1207, %v1206
      %v1228 = vpack.c.b16 %v1209, %v1208
      %v1229 = vpack.c.b16 %v1211, %v1210
      %v1230 = vpack.c.b16 %v1213, %v1212
      %v1231 = vpack.c.b16 %v1215, %v1214
      %1248 = vmatprep.subr.bf16.mxu0 0
      %1249 = vmatpush1.bf16.msra.mxu0 %v1216
      %1250 = vmatprep.subr.bf16.mxu0 0
      %1251 = vmatpush1.bf16.msra.mxu0 %v1217
      %1252 = vmatprep.subr.bf16.mxu0 0
      %1253 = vmatpush1.bf16.msra.mxu0 %v1218
      %1254 = vmatprep.subr.bf16.mxu0 0
      %1255 = vmatpush1.bf16.msra.mxu0 %v1219
      %1256 = vmatprep.subr.bf16.mxu0 0
      %1257 = vmatpush1.bf16.msra.mxu0 %v1220
      %1258 = vmatprep.subr.bf16.mxu0 0
      %1259 = vmatpush1.bf16.msra.mxu0 %v1221
      %1260 = vmatprep.subr.bf16.mxu0 0
      %1261 = vmatpush1.bf16.msra.mxu0 %v1222
      %1262 = vmatprep.subr.bf16.mxu0 0
      %1263 = vmatpush1.bf16.msra.mxu0 %v1223
      %1264 = vmatprep.subr.bf16.mxu0 0
      %1265 = vmatpush1.bf16.msra.mxu0 %v1224
      %1266 = vmatprep.subr.bf16.mxu0 0
      %1267 = vmatpush1.bf16.msra.mxu0 %v1225
      %1268 = vmatprep.subr.bf16.mxu0 0
      %1269 = vmatpush1.bf16.msra.mxu0 %v1226
      %1270 = vmatprep.subr.bf16.mxu0 0
      %1271 = vmatpush1.bf16.msra.mxu0 %v1227
      %1272 = vmatprep.subr.bf16.mxu0 0
      %1273 = vmatpush1.bf16.msra.mxu0 %v1228
      %1274 = vmatprep.subr.bf16.mxu0 0
      %1275 = vmatpush1.bf16.msra.mxu0 %v1229
      %1276 = vmatprep.subr.bf16.mxu0 0
      %1277 = vmatpush1.bf16.msra.mxu0 %v1230
      %1278 = vmatprep.subr.bf16.mxu0 0
      %1279 = vmatpush1.bf16.msra.mxu0 %v1231
      %1280 = vmatprep.mubr.bf16.mxu0 %v1149
      %1281 = vmatmul.mubr.bf16.gmra.mrb[0].mxu0 %v1141
      %v1282 = vpop.f32.mrb[0].mxu0
      %v1283 = vadd.f32 0.0, %v1282
      %v1284 = vpop.f32.mrb[0].mxu0
      %v1285 = vpop.f32.mrb[0].mxu0
      %v1286 = vpop.f32.mrb[0].mxu0
      %1287 = vdwg.mxu0
      %v1288 = vadd.f32 %v1090, %v1283
      %v1289 = vld [vmem:[%s164] sm:$0x88]
      %s1290 = scalar_lea.vmem %s1, 768
      %v1291 = vld [vmem:[%s1290] sm:$0xf]
      %v1292 = vld [vmem:[%s1290 + $0x4] sm:$0xf]
      %v1293 = vld [vmem:[%s1290 + $0x8] sm:$0xf]
      %v1294 = vld [vmem:[%s1290 + $0xc] sm:$0xf]
      %v1295 = vld [vmem:[%s1290 + $0x10] sm:$0xf]
      %v1296 = vld [vmem:[%s1290 + $0x14] sm:$0xf]
      %v1297 = vld [vmem:[%s1290 + $0x18] sm:$0xf]
      %v1298 = vld [vmem:[%s1290 + $0x1c] sm:$0xf]
      %v1299 = vld [vmem:[%s1290 + $0x20] sm:$0xf]
      %v1300 = vld [vmem:[%s1290 + $0x24] sm:$0xf]
      %v1301 = vld [vmem:[%s1290 + $0x28] sm:$0xf]
      %v1302 = vld [vmem:[%s1290 + $0x2c] sm:$0xf]
      %v1303 = vld [vmem:[%s1290 + $0x30] sm:$0xf]
      %v1304 = vld [vmem:[%s1290 + $0x34] sm:$0xf]
      %v1305 = vld [vmem:[%s1290 + $0x38] sm:$0xf]
      %v1306 = vld [vmem:[%s1290 + $0x3c] sm:$0xf]
      %v1307 = vld [vmem:[%s1290 + $0x40] sm:$0xf]
      %v1308 = vld [vmem:[%s1290 + $0x44] sm:$0xf]
      %v1309 = vld [vmem:[%s1290 + $0x48] sm:$0xf]
      %v1310 = vld [vmem:[%s1290 + $0x4c] sm:$0xf]
      %v1311 = vld [vmem:[%s1290 + $0x50] sm:$0xf]
      %v1312 = vld [vmem:[%s1290 + $0x54] sm:$0xf]
      %v1313 = vld [vmem:[%s1290 + $0x58] sm:$0xf]
      %v1314 = vld [vmem:[%s1290 + $0x5c] sm:$0xf]
      %v1315 = vld [vmem:[%s1290 + $0x60] sm:$0xf]
      %v1316 = vld [vmem:[%s1290 + $0x64] sm:$0xf]
      %v1317 = vld [vmem:[%s1290 + $0x68] sm:$0xf]
      %v1318 = vld [vmem:[%s1290 + $0x6c] sm:$0xf]
      %v1319 = vld [vmem:[%s1290 + $0x70] sm:$0xf]
      %v1320 = vld [vmem:[%s1290 + $0x74] sm:$0xf]
      %v1321 = vld [vmem:[%s1290 + $0x78] sm:$0xf]
      %v1322 = vld [vmem:[%s1290 + $0x7c] sm:$0xf]
      %v1324 = vunpack.c.l.b16 %v1289
      %v1325 = vunpack.c.h.b16 %v1289
      %v1326 = vpack.c.b16 %v1130, %v1324
      %v1327 = vpack.c.b16 %v1131, %v1325
      %v1328 = vrot.slane %v1326, 3
      %v1329 = vrot.slane %v1327, 3
      %v1364 = vunpack.c.l.b16 %v1291
      %v1365 = vunpack.c.l.b16 %v1292
      %v1366 = vunpack.c.l.b16 %v1293
      %v1367 = vunpack.c.l.b16 %v1294
      %v1368 = vunpack.c.l.b16 %v1295
      %v1369 = vunpack.c.l.b16 %v1296
      %v1370 = vunpack.c.l.b16 %v1297
      %v1371 = vunpack.c.l.b16 %v1298
      %v1372 = vunpack.c.l.b16 %v1299
      %v1373 = vunpack.c.l.b16 %v1300
      %v1374 = vunpack.c.l.b16 %v1301
      %v1375 = vunpack.c.l.b16 %v1302
      %v1376 = vunpack.c.l.b16 %v1303
      %v1377 = vunpack.c.l.b16 %v1304
      %v1378 = vunpack.c.l.b16 %v1305
      %v1379 = vunpack.c.l.b16 %v1306
      %v1380 = vunpack.c.l.b16 %v1307
      %v1381 = vunpack.c.l.b16 %v1308
      %v1382 = vunpack.c.l.b16 %v1309
      %v1383 = vunpack.c.l.b16 %v1310
      %v1384 = vunpack.c.l.b16 %v1311
      %v1385 = vunpack.c.l.b16 %v1312
      %v1386 = vunpack.c.l.b16 %v1313
      %v1387 = vunpack.c.l.b16 %v1314
      %v1388 = vunpack.c.l.b16 %v1315
      %v1389 = vunpack.c.l.b16 %v1316
      %v1390 = vunpack.c.l.b16 %v1317
      %v1391 = vunpack.c.l.b16 %v1318
      %v1392 = vunpack.c.l.b16 %v1319
      %v1393 = vunpack.c.l.b16 %v1320
      %v1394 = vunpack.c.l.b16 %v1321
      %v1395 = vunpack.c.l.b16 %v1322
      %v1396 = vpack.c.b16 %v1365, %v1364
      %v1397 = vpack.c.b16 %v1367, %v1366
      %v1398 = vpack.c.b16 %v1369, %v1368
      %v1399 = vpack.c.b16 %v1371, %v1370
      %v1400 = vpack.c.b16 %v1373, %v1372
      %v1401 = vpack.c.b16 %v1375, %v1374
      %v1402 = vpack.c.b16 %v1377, %v1376
      %v1403 = vpack.c.b16 %v1379, %v1378
      %v1404 = vpack.c.b16 %v1381, %v1380
      %v1405 = vpack.c.b16 %v1383, %v1382
      %v1406 = vpack.c.b16 %v1385, %v1384
      %v1407 = vpack.c.b16 %v1387, %v1386
      %v1408 = vpack.c.b16 %v1389, %v1388
      %v1409 = vpack.c.b16 %v1391, %v1390
      %v1410 = vpack.c.b16 %v1393, %v1392
      %v1411 = vpack.c.b16 %v1395, %v1394
      %1428 = vmatprep.subr.bf16.mxu0 0
      %1429 = vmatpush1.bf16.msra.mxu0 %v1396
      %1430 = vmatprep.subr.bf16.mxu0 0
      %1431 = vmatpush1.bf16.msra.mxu0 %v1397
      %1432 = vmatprep.subr.bf16.mxu0 0
      %1433 = vmatpush1.bf16.msra.mxu0 %v1398
      %1434 = vmatprep.subr.bf16.mxu0 0
      %1435 = vmatpush1.bf16.msra.mxu0 %v1399
      %1436 = vmatprep.subr.bf16.mxu0 0
      %1437 = vmatpush1.bf16.msra.mxu0 %v1400
      %1438 = vmatprep.subr.bf16.mxu0 0
      %1439 = vmatpush1.bf16.msra.mxu0 %v1401
      %1440 = vmatprep.subr.bf16.mxu0 0
      %1441 = vmatpush1.bf16.msra.mxu0 %v1402
      %1442 = vmatprep.subr.bf16.mxu0 0
      %1443 = vmatpush1.bf16.msra.mxu0 %v1403
      %1444 = vmatprep.subr.bf16.mxu0 0
      %1445 = vmatpush1.bf16.msra.mxu0 %v1404
      %1446 = vmatprep.subr.bf16.mxu0 0
      %1447 = vmatpush1.bf16.msra.mxu0 %v1405
      %1448 = vmatprep.subr.bf16.mxu0 0
      %1449 = vmatpush1.bf16.msra.mxu0 %v1406
      %1450 = vmatprep.subr.bf16.mxu0 0
      %1451 = vmatpush1.bf16.msra.mxu0 %v1407
      %1452 = vmatprep.subr.bf16.mxu0 0
      %1453 = vmatpush1.bf16.msra.mxu0 %v1408
      %1454 = vmatprep.subr.bf16.mxu0 0
      %1455 = vmatpush1.bf16.msra.mxu0 %v1409
      %1456 = vmatprep.subr.bf16.mxu0 0
      %1457 = vmatpush1.bf16.msra.mxu0 %v1410
      %1458 = vmatprep.subr.bf16.mxu0 0
      %1459 = vmatpush1.bf16.msra.mxu0 %v1411
      %1460 = vmatprep.mubr.bf16.mxu0 %v1329
      %1461 = vmatmul.mubr.bf16.gmra.mrb[0].mxu0 %v1328
      %v1462 = vpop.f32.mrb[0].mxu0
      %v1463 = vadd.f32 0.0, %v1462
      %v1464 = vpop.f32.mrb[0].mxu0
      %v1465 = vpop.f32.mrb[0].mxu0
      %v1466 = vpop.f32.mrb[0].mxu0
      %1467 = vdwg.mxu0
      %v1468 = vadd.f32 %v1288, %v1463
      %v1469 = vld [vmem:[%s164 + $0x8] sm:$0x33]
      %s1470 = scalar_lea.vmem %s1, 896
      %v1471 = vld [vmem:[%s1470] sm:$0xf]
      %v1472 = vld [vmem:[%s1470 + $0x4] sm:$0xf]
      %v1473 = vld [vmem:[%s1470 + $0x8] sm:$0xf]
      %v1474 = vld [vmem:[%s1470 + $0xc] sm:$0xf]
      %v1475 = vld [vmem:[%s1470 + $0x10] sm:$0xf]
      %v1476 = vld [vmem:[%s1470 + $0x14] sm:$0xf]
      %v1477 = vld [vmem:[%s1470 + $0x18] sm:$0xf]
      %v1478 = vld [vmem:[%s1470 + $0x1c] sm:$0xf]
      %v1479 = vld [vmem:[%s1470 + $0x20] sm:$0xf]
      %v1480 = vld [vmem:[%s1470 + $0x24] sm:$0xf]
      %v1481 = vld [vmem:[%s1470 + $0x28] sm:$0xf]
      %v1482 = vld [vmem:[%s1470 + $0x2c] sm:$0xf]
      %v1483 = vld [vmem:[%s1470 + $0x30] sm:$0xf]
      %v1484 = vld [vmem:[%s1470 + $0x34] sm:$0xf]
      %v1485 = vld [vmem:[%s1470 + $0x38] sm:$0xf]
      %v1486 = vld [vmem:[%s1470 + $0x3c] sm:$0xf]
      %v1487 = vld [vmem:[%s1470 + $0x40] sm:$0xf]
      %v1488 = vld [vmem:[%s1470 + $0x44] sm:$0xf]
      %v1489 = vld [vmem:[%s1470 + $0x48] sm:$0xf]
      %v1490 = vld [vmem:[%s1470 + $0x4c] sm:$0xf]
      %v1491 = vld [vmem:[%s1470 + $0x50] sm:$0xf]
      %v1492 = vld [vmem:[%s1470 + $0x54] sm:$0xf]
      %v1493 = vld [vmem:[%s1470 + $0x58] sm:$0xf]
      %v1494 = vld [vmem:[%s1470 + $0x5c] sm:$0xf]
      %v1495 = vld [vmem:[%s1470 + $0x60] sm:$0xf]
      %v1496 = vld [vmem:[%s1470 + $0x64] sm:$0xf]
      %v1497 = vld [vmem:[%s1470 + $0x68] sm:$0xf]
      %v1498 = vld [vmem:[%s1470 + $0x6c] sm:$0xf]
      %v1499 = vld [vmem:[%s1470 + $0x70] sm:$0xf]
      %v1500 = vld [vmem:[%s1470 + $0x74] sm:$0xf]
      %v1501 = vld [vmem:[%s1470 + $0x78] sm:$0xf]
      %v1502 = vld [vmem:[%s1470 + $0x7c] sm:$0xf]
      %v1504 = vunpack.c.l.b16 %v1469
      %v1505 = vunpack.c.h.b16 %v1469
      %v1506 = vpack.c.b16 %v1504, %v1324
      %v1507 = vpack.c.b16 %v1505, %v1325
      %v1509 = vshrl.u32 %v1506, 16
      %v1511 = vrot.slane %v1509, 3
      %v1512 = vshll.u32 %v1506, 16
      %v1514 = vrot.slane %v1512, 4
      %v1515 = vor.u32 %v1511, %v1514
      %v1517 = vshrl.u32 %v1507, 16
      %v1519 = vrot.slane %v1517, 3
      %v1520 = vshll.u32 %v1507, 16
      %v1522 = vrot.slane %v1520, 4
      %v1523 = vor.u32 %v1519, %v1522
      %v1558 = vunpack.c.l.b16 %v1471
      %v1559 = vunpack.c.l.b16 %v1472
      %v1560 = vunpack.c.l.b16 %v1473
      %v1561 = vunpack.c.l.b16 %v1474
      %v1562 = vunpack.c.l.b16 %v1475
      %v1563 = vunpack.c.l.b16 %v1476
      %v1564 = vunpack.c.l.b16 %v1477
      %v1565 = vunpack.c.l.b16 %v1478
      %v1566 = vunpack.c.l.b16 %v1479
      %v1567 = vunpack.c.l.b16 %v1480
      %v1568 = vunpack.c.l.b16 %v1481
      %v1569 = vunpack.c.l.b16 %v1482
      %v1570 = vunpack.c.l.b16 %v1483
      %v1571 = vunpack.c.l.b16 %v1484
      %v1572 = vunpack.c.l.b16 %v1485
      %v1573 = vunpack.c.l.b16 %v1486
      %v1574 = vunpack.c.l.b16 %v1487
      %v1575 = vunpack.c.l.b16 %v1488
      %v1576 = vunpack.c.l.b16 %v1489
      %v1577 = vunpack.c.l.b16 %v1490
      %v1578 = vunpack.c.l.b16 %v1491
      %v1579 = vunpack.c.l.b16 %v1492
      %v1580 = vunpack.c.l.b16 %v1493
      %v1581 = vunpack.c.l.b16 %v1494
      %v1582 = vunpack.c.l.b16 %v1495
      %v1583 = vunpack.c.l.b16 %v1496
      %v1584 = vunpack.c.l.b16 %v1497
      %v1585 = vunpack.c.l.b16 %v1498
      %v1586 = vunpack.c.l.b16 %v1499
      %v1587 = vunpack.c.l.b16 %v1500
      %v1588 = vunpack.c.l.b16 %v1501
      %v1589 = vunpack.c.l.b16 %v1502
      %v1590 = vpack.c.b16 %v1559, %v1558
      %v1591 = vpack.c.b16 %v1561, %v1560
      %v1592 = vpack.c.b16 %v1563, %v1562
      %v1593 = vpack.c.b16 %v1565, %v1564
      %v1594 = vpack.c.b16 %v1567, %v1566
      %v1595 = vpack.c.b16 %v1569, %v1568
      %v1596 = vpack.c.b16 %v1571, %v1570
      %v1597 = vpack.c.b16 %v1573, %v1572
      %v1598 = vpack.c.b16 %v1575, %v1574
      %v1599 = vpack.c.b16 %v1577, %v1576
      %v1600 = vpack.c.b16 %v1579, %v1578
      %v1601 = vpack.c.b16 %v1581, %v1580
      %v1602 = vpack.c.b16 %v1583, %v1582
      %v1603 = vpack.c.b16 %v1585, %v1584
      %v1604 = vpack.c.b16 %v1587, %v1586
      %v1605 = vpack.c.b16 %v1589, %v1588
      %1622 = vmatprep.subr.bf16.mxu0 0
      %1623 = vmatpush1.bf16.msra.mxu0 %v1590
      %1624 = vmatprep.subr.bf16.mxu0 0
      %1625 = vmatpush1.bf16.msra.mxu0 %v1591
      %1626 = vmatprep.subr.bf16.mxu0 0
      %1627 = vmatpush1.bf16.msra.mxu0 %v1592
      %1628 = vmatprep.subr.bf16.mxu0 0
      %1629 = vmatpush1.bf16.msra.mxu0 %v1593
      %1630 = vmatprep.subr.bf16.mxu0 0
      %1631 = vmatpush1.bf16.msra.mxu0 %v1594
      %1632 = vmatprep.subr.bf16.mxu0 0
      %1633 = vmatpush1.bf16.msra.mxu0 %v1595
      %1634 = vmatprep.subr.bf16.mxu0 0
      %1635 = vmatpush1.bf16.msra.mxu0 %v1596
      %1636 = vmatprep.subr.bf16.mxu0 0
      %1637 = vmatpush1.bf16.msra.mxu0 %v1597
      %1638 = vmatprep.subr.bf16.mxu0 0
      %1639 = vmatpush1.bf16.msra.mxu0 %v1598
      %1640 = vmatprep.subr.bf16.mxu0 0
      %1641 = vmatpush1.bf16.msra.mxu0 %v1599
      %1642 = vmatprep.subr.bf16.mxu0 0
      %1643 = vmatpush1.bf16.msra.mxu0 %v1600
      %1644 = vmatprep.subr.bf16.mxu0 0
      %1645 = vmatpush1.bf16.msra.mxu0 %v1601
      %1646 = vmatprep.subr.bf16.mxu0 0
      %1647 = vmatpush1.bf16.msra.mxu0 %v1602
      %1648 = vmatprep.subr.bf16.mxu0 0
      %1649 = vmatpush1.bf16.msra.mxu0 %v1603
      %1650 = vmatprep.subr.bf16.mxu0 0
      %1651 = vmatpush1.bf16.msra.mxu0 %v1604
      %1652 = vmatprep.subr.bf16.mxu0 0
      %1653 = vmatpush1.bf16.msra.mxu0 %v1605
      %1654 = vmatprep.mubr.bf16.mxu0 %v1523
      %1655 = vmatmul.mubr.bf16.gmra.mrb[0].mxu0 %v1515
      %v1656 = vpop.f32.mrb[0].mxu0
      %v1657 = vadd.f32 0.0, %v1656
      %v1658 = vpop.f32.mrb[0].mxu0
      %v1659 = vpop.f32.mrb[0].mxu0
      %v1660 = vpop.f32.mrb[0].mxu0
      %1661 = vdwg.mxu0
      %v1662 = vadd.f32 %v1468, %v1657
      %s1663 = scalar_lea.vmem %s1, 1024
      %v1664 = vld [vmem:[%s1663] sm:$0xf]
      %v1665 = vld [vmem:[%s1663 + $0x4] sm:$0xf]
      %v1666 = vld [vmem:[%s1663 + $0x8] sm:$0xf]
      %v1667 = vld [vmem:[%s1663 + $0xc] sm:$0xf]
      %v1668 = vld [vmem:[%s1663 + $0x10] sm:$0xf]
      %v1669 = vld [vmem:[%s1663 + $0x14] sm:$0xf]
      %v1670 = vld [vmem:[%s1663 + $0x18] sm:$0xf]
      %v1671 = vld [vmem:[%s1663 + $0x1c] sm:$0xf]
      %v1672 = vld [vmem:[%s1663 + $0x20] sm:$0xf]
      %v1673 = vld [vmem:[%s1663 + $0x24] sm:$0xf]
      %v1674 = vld [vmem:[%s1663 + $0x28] sm:$0xf]
      %v1675 = vld [vmem:[%s1663 + $0x2c] sm:$0xf]
      %v1676 = vld [vmem:[%s1663 + $0x30] sm:$0xf]
      %v1677 = vld [vmem:[%s1663 + $0x34] sm:$0xf]
      %v1678 = vld [vmem:[%s1663 + $0x38] sm:$0xf]
      %v1679 = vld [vmem:[%s1663 + $0x3c] sm:$0xf]
      %v1680 = vld [vmem:[%s1663 + $0x40] sm:$0xf]
      %v1681 = vld [vmem:[%s1663 + $0x44] sm:$0xf]
      %v1682 = vld [vmem:[%s1663 + $0x48] sm:$0xf]
      %v1683 = vld [vmem:[%s1663 + $0x4c] sm:$0xf]
      %v1684 = vld [vmem:[%s1663 + $0x50] sm:$0xf]
      %v1685 = vld [vmem:[%s1663 + $0x54] sm:$0xf]
      %v1686 = vld [vmem:[%s1663 + $0x58] sm:$0xf]
      %v1687 = vld [vmem:[%s1663 + $0x5c] sm:$0xf]
      %v1688 = vld [vmem:[%s1663 + $0x60] sm:$0xf]
      %v1689 = vld [vmem:[%s1663 + $0x64] sm:$0xf]
      %v1690 = vld [vmem:[%s1663 + $0x68] sm:$0xf]
      %v1691 = vld [vmem:[%s1663 + $0x6c] sm:$0xf]
      %v1692 = vld [vmem:[%s1663 + $0x70] sm:$0xf]
      %v1693 = vld [vmem:[%s1663 + $0x74] sm:$0xf]
      %v1694 = vld [vmem:[%s1663 + $0x78] sm:$0xf]
      %v1695 = vld [vmem:[%s1663 + $0x7c] sm:$0xf]
      %v1696 = vpack.c.b16 %v1504, %v1504
      %v1697 = vpack.c.b16 %v1505, %v1505
      %v1732 = vunpack.c.l.b16 %v1664
      %v1733 = vunpack.c.l.b16 %v1665
      %v1734 = vunpack.c.l.b16 %v1666
      %v1735 = vunpack.c.l.b16 %v1667
      %v1736 = vunpack.c.l.b16 %v1668
      %v1737 = vunpack.c.l.b16 %v1669
      %v1738 = vunpack.c.l.b16 %v1670
      %v1739 = vunpack.c.l.b16 %v1671
      %v1740 = vunpack.c.l.b16 %v1672
      %v1741 = vunpack.c.l.b16 %v1673
      %v1742 = vunpack.c.l.b16 %v1674
      %v1743 = vunpack.c.l.b16 %v1675
      %v1744 = vunpack.c.l.b16 %v1676
      %v1745 = vunpack.c.l.b16 %v1677
      %v1746 = vunpack.c.l.b16 %v1678
      %v1747 = vunpack.c.l.b16 %v1679
      %v1748 = vunpack.c.l.b16 %v1680
      %v1749 = vunpack.c.l.b16 %v1681
      %v1750 = vunpack.c.l.b16 %v1682
      %v1751 = vunpack.c.l.b16 %v1683
      %v1752 = vunpack.c.l.b16 %v1684
      %v1753 = vunpack.c.l.b16 %v1685
      %v1754 = vunpack.c.l.b16 %v1686
      %v1755 = vunpack.c.l.b16 %v1687
      %v1756 = vunpack.c.l.b16 %v1688
      %v1757 = vunpack.c.l.b16 %v1689
      %v1758 = vunpack.c.l.b16 %v1690
      %v1759 = vunpack.c.l.b16 %v1691
      %v1760 = vunpack.c.l.b16 %v1692
      %v1761 = vunpack.c.l.b16 %v1693
      %v1762 = vunpack.c.l.b16 %v1694
      %v1763 = vunpack.c.l.b16 %v1695
      %v1764 = vpack.c.b16 %v1733, %v1732
      %v1765 = vpack.c.b16 %v1735, %v1734
      %v1766 = vpack.c.b16 %v1737, %v1736
      %v1767 = vpack.c.b16 %v1739, %v1738
      %v1768 = vpack.c.b16 %v1741, %v1740
      %v1769 = vpack.c.b16 %v1743, %v1742
      %v1770 = vpack.c.b16 %v1745, %v1744
      %v1771 = vpack.c.b16 %v1747, %v1746
      %v1772 = vpack.c.b16 %v1749, %v1748
      %v1773 = vpack.c.b16 %v1751, %v1750
      %v1774 = vpack.c.b16 %v1753, %v1752
      %v1775 = vpack.c.b16 %v1755, %v1754
      %v1776 = vpack.c.b16 %v1757, %v1756
      %v1777 = vpack.c.b16 %v1759, %v1758
      %v1778 = vpack.c.b16 %v1761, %v1760
      %v1779 = vpack.c.b16 %v1763, %v1762
      %1796 = vmatprep.subr.bf16.mxu0 0
      %1797 = vmatpush1.bf16.msra.mxu0 %v1764
      %1798 = vmatprep.subr.bf16.mxu0 0
      %1799 = vmatpush1.bf16.msra.mxu0 %v1765
      %1800 = vmatprep.subr.bf16.mxu0 0
      %1801 = vmatpush1.bf16.msra.mxu0 %v1766
      %1802 = vmatprep.subr.bf16.mxu0 0
      %1803 = vmatpush1.bf16.msra.mxu0 %v1767
      %1804 = vmatprep.subr.bf16.mxu0 0
      %1805 = vmatpush1.bf16.msra.mxu0 %v1768
      %1806 = vmatprep.subr.bf16.mxu0 0
      %1807 = vmatpush1.bf16.msra.mxu0 %v1769
      %1808 = vmatprep.subr.bf16.mxu0 0
      %1809 = vmatpush1.bf16.msra.mxu0 %v1770
      %1810 = vmatprep.subr.bf16.mxu0 0
      %1811 = vmatpush1.bf16.msra.mxu0 %v1771
      %1812 = vmatprep.subr.bf16.mxu0 0
      %1813 = vmatpush1.bf16.msra.mxu0 %v1772
      %1814 = vmatprep.subr.bf16.mxu0 0
      %1815 = vmatpush1.bf16.msra.mxu0 %v1773
      %1816 = vmatprep.subr.bf16.mxu0 0
      %1817 = vmatpush1.bf16.msra.mxu0 %v1774
      %1818 = vmatprep.subr.bf16.mxu0 0
      %1819 = vmatpush1.bf16.msra.mxu0 %v1775
      %1820 = vmatprep.subr.bf16.mxu0 0
      %1821 = vmatpush1.bf16.msra.mxu0 %v1776
      %1822 = vmatprep.subr.bf16.mxu0 0
      %1823 = vmatpush1.bf16.msra.mxu0 %v1777
      %1824 = vmatprep.subr.bf16.mxu0 0
      %1825 = vmatpush1.bf16.msra.mxu0 %v1778
      %1826 = vmatprep.subr.bf16.mxu0 0
      %1827 = vmatpush1.bf16.msra.mxu0 %v1779
      %1828 = vmatprep.mubr.bf16.mxu0 %v1697
      %1829 = vmatmul.mubr.bf16.gmra.mrb[0].mxu0 %v1696
      %v1830 = vpop.f32.mrb[0].mxu0
      %v1831 = vadd.f32 0.0, %v1830
      %v1832 = vpop.f32.mrb[0].mxu0
      %v1833 = vpop.f32.mrb[0].mxu0
      %v1834 = vpop.f32.mrb[0].mxu0
      %1835 = vdwg.mxu0
      %v1836 = vadd.f32 %v1662, %v1831
      %v1837 = vld [vmem:[%s164 + $0x8] sm:$0x77]
      %s1838 = scalar_lea.vmem %s1, 1152
      %v1839 = vld [vmem:[%s1838] sm:$0xf]
      %v1840 = vld [vmem:[%s1838 + $0x4] sm:$0xf]
      %v1841 = vld [vmem:[%s1838 + $0x8] sm:$0xf]
      %v1842 = vld [vmem:[%s1838 + $0xc] sm:$0xf]
      %v1843 = vld [vmem:[%s1838 + $0x10] sm:$0xf]
      %v1844 = vld [vmem:[%s1838 + $0x14] sm:$0xf]
      %v1845 = vld [vmem:[%s1838 + $0x18] sm:$0xf]
      %v1846 = vld [vmem:[%s1838 + $0x1c] sm:$0xf]
      %v1847 = vld [vmem:[%s1838 + $0x20] sm:$0xf]
      %v1848 = vld [vmem:[%s1838 + $0x24] sm:$0xf]
      %v1849 = vld [vmem:[%s1838 + $0x28] sm:$0xf]
      %v1850 = vld [vmem:[%s1838 + $0x2c] sm:$0xf]
      %v1851 = vld [vmem:[%s1838 + $0x30] sm:$0xf]
      %v1852 = vld [vmem:[%s1838 + $0x34] sm:$0xf]
      %v1853 = vld [vmem:[%s1838 + $0x38] sm:$0xf]
      %v1854 = vld [vmem:[%s1838 + $0x3c] sm:$0xf]
      %v1855 = vld [vmem:[%s1838 + $0x40] sm:$0xf]
      %v1856 = vld [vmem:[%s1838 + $0x44] sm:$0xf]
      %v1857 = vld [vmem:[%s1838 + $0x48] sm:$0xf]
      %v1858 = vld [vmem:[%s1838 + $0x4c] sm:$0xf]
      %v1859 = vld [vmem:[%s1838 + $0x50] sm:$0xf]
      %v1860 = vld [vmem:[%s1838 + $0x54] sm:$0xf]
      %v1861 = vld [vmem:[%s1838 + $0x58] sm:$0xf]
      %v1862 = vld [vmem:[%s1838 + $0x5c] sm:$0xf]
      %v1863 = vld [vmem:[%s1838 + $0x60] sm:$0xf]
      %v1864 = vld [vmem:[%s1838 + $0x64] sm:$0xf]
      %v1865 = vld [vmem:[%s1838 + $0x68] sm:$0xf]
      %v1866 = vld [vmem:[%s1838 + $0x6c] sm:$0xf]
      %v1867 = vld [vmem:[%s1838 + $0x70] sm:$0xf]
      %v1868 = vld [vmem:[%s1838 + $0x74] sm:$0xf]
      %v1869 = vld [vmem:[%s1838 + $0x78] sm:$0xf]
      %v1870 = vld [vmem:[%s1838 + $0x7c] sm:$0xf]
      %v1872 = vunpack.c.l.b16 %v1837
      %v1873 = vunpack.c.h.b16 %v1837
      %v1874 = vpack.c.b16 %v1872, %v1872
      %v1875 = vpack.c.b16 %v1873, %v1873
      %v1877 = vshrl.u32 %v1874, 16
      %v1879 = vshll.u32 %v1874, 16
      %v1881 = vrot.slane %v1879, 1
      %v1882 = vor.u32 %v1877, %v1881
      %v1884 = vshrl.u32 %v1875, 16
      %v1886 = vshll.u32 %v1875, 16
      %v1888 = vrot.slane %v1886, 1
      %v1889 = vor.u32 %v1884, %v1888
      %v1924 = vunpack.c.l.b16 %v1839
      %v1925 = vunpack.c.l.b16 %v1840
      %v1926 = vunpack.c.l.b16 %v1841
      %v1927 = vunpack.c.l.b16 %v1842
      %v1928 = vunpack.c.l.b16 %v1843
      %v1929 = vunpack.c.l.b16 %v1844
      %v1930 = vunpack.c.l.b16 %v1845
      %v1931 = vunpack.c.l.b16 %v1846
      %v1932 = vunpack.c.l.b16 %v1847
      %v1933 = vunpack.c.l.b16 %v1848
      %v1934 = vunpack.c.l.b16 %v1849
      %v1935 = vunpack.c.l.b16 %v1850
      %v1936 = vunpack.c.l.b16 %v1851
      %v1937 = vunpack.c.l.b16 %v1852
      %v1938 = vunpack.c.l.b16 %v1853
      %v1939 = vunpack.c.l.b16 %v1854
      %v1940 = vunpack.c.l.b16 %v1855
      %v1941 = vunpack.c.l.b16 %v1856
      %v1942 = vunpack.c.l.b16 %v1857
      %v1943 = vunpack.c.l.b16 %v1858
      %v1944 = vunpack.c.l.b16 %v1859
      %v1945 = vunpack.c.l.b16 %v1860
      %v1946 = vunpack.c.l.b16 %v1861
      %v1947 = vunpack.c.l.b16 %v1862
      %v1948 = vunpack.c.l.b16 %v1863
      %v1949 = vunpack.c.l.b16 %v1864
      %v1950 = vunpack.c.l.b16 %v1865
      %v1951 = vunpack.c.l.b16 %v1866
      %v1952 = vunpack.c.l.b16 %v1867
      %v1953 = vunpack.c.l.b16 %v1868
      %v1954 = vunpack.c.l.b16 %v1869
      %v1955 = vunpack.c.l.b16 %v1870
      %v1956 = vpack.c.b16 %v1925, %v1924
      %v1957 = vpack.c.b16 %v1927, %v1926
      %v1958 = vpack.c.b16 %v1929, %v1928
      %v1959 = vpack.c.b16 %v1931, %v1930
      %v1960 = vpack.c.b16 %v1933, %v1932
      %v1961 = vpack.c.b16 %v1935, %v1934
      %v1962 = vpack.c.b16 %v1937, %v1936
      %v1963 = vpack.c.b16 %v1939, %v1938
      %v1964 = vpack.c.b16 %v1941, %v1940
      %v1965 = vpack.c.b16 %v1943, %v1942
      %v1966 = vpack.c.b16 %v1945, %v1944
      %v1967 = vpack.c.b16 %v1947, %v1946
      %v1968 = vpack.c.b16 %v1949, %v1948
      %v1969 = vpack.c.b16 %v1951, %v1950
      %v1970 = vpack.c.b16 %v1953, %v1952
      %v1971 = vpack.c.b16 %v1955, %v1954
      %1988 = vmatprep.subr.bf16.mxu0 0
      %1989 = vmatpush1.bf16.msra.mxu0 %v1956
      %1990 = vmatprep.subr.bf16.mxu0 0
      %1991 = vmatpush1.bf16.msra.mxu0 %v1957
      %1992 = vmatprep.subr.bf16.mxu0 0
      %1993 = vmatpush1.bf16.msra.mxu0 %v1958
      %1994 = vmatprep.subr.bf16.mxu0 0
      %1995 = vmatpush1.bf16.msra.mxu0 %v1959
      %1996 = vmatprep.subr.bf16.mxu0 0
      %1997 = vmatpush1.bf16.msra.mxu0 %v1960
      %1998 = vmatprep.subr.bf16.mxu0 0
      %1999 = vmatpush1.bf16.msra.mxu0 %v1961
      %2000 = vmatprep.subr.bf16.mxu0 0
      %2001 = vmatpush1.bf16.msra.mxu0 %v1962
      %2002 = vmatprep.subr.bf16.mxu0 0
      %2003 = vmatpush1.bf16.msra.mxu0 %v1963
      %2004 = vmatprep.subr.bf16.mxu0 0
      %2005 = vmatpush1.bf16.msra.mxu0 %v1964
      %2006 = vmatprep.subr.bf16.mxu0 0
      %2007 = vmatpush1.bf16.msra.mxu0 %v1965
      %2008 = vmatprep.subr.bf16.mxu0 0
      %2009 = vmatpush1.bf16.msra.mxu0 %v1966
      %2010 = vmatprep.subr.bf16.mxu0 0
      %2011 = vmatpush1.bf16.msra.mxu0 %v1967
      %2012 = vmatprep.subr.bf16.mxu0 0
      %2013 = vmatpush1.bf16.msra.mxu0 %v1968
      %2014 = vmatprep.subr.bf16.mxu0 0
      %2015 = vmatpush1.bf16.msra.mxu0 %v1969
      %2016 = vmatprep.subr.bf16.mxu0 0
      %2017 = vmatpush1.bf16.msra.mxu0 %v1970
      %2018 = vmatprep.subr.bf16.mxu0 0
      %2019 = vmatpush1.bf16.msra.mxu0 %v1971
      %2020 = vmatprep.mubr.bf16.mxu0 %v1889
      %2021 = vmatmul.mubr.bf16.gmra.mrb[0].mxu0 %v1882
      %v2022 = vpop.f32.mrb[0].mxu0
      %v2023 = vadd.f32 0.0, %v2022
      %v2024 = vpop.f32.mrb[0].mxu0
      %v2025 = vpop.f32.mrb[0].mxu0
      %v2026 = vpop.f32.mrb[0].mxu0
      %2027 = vdwg.mxu0
      %v2028 = vadd.f32 %v1836, %v2023
      %v2029 = vld [vmem:[%s164 + $0x8] sm:$0x66]
      %s2030 = scalar_lea.vmem %s1, 1280
      %v2031 = vld [vmem:[%s2030] sm:$0xf]
      %v2032 = vld [vmem:[%s2030 + $0x4] sm:$0xf]
      %v2033 = vld [vmem:[%s2030 + $0x8] sm:$0xf]
      %v2034 = vld [vmem:[%s2030 + $0xc] sm:$0xf]
      %v2035 = vld [vmem:[%s2030 + $0x10] sm:$0xf]
      %v2036 = vld [vmem:[%s2030 + $0x14] sm:$0xf]
      %v2037 = vld [vmem:[%s2030 + $0x18] sm:$0xf]
      %v2038 = vld [vmem:[%s2030 + $0x1c] sm:$0xf]
      %v2039 = vld [vmem:[%s2030 + $0x20] sm:$0xf]
      %v2040 = vld [vmem:[%s2030 + $0x24] sm:$0xf]
      %v2041 = vld [vmem:[%s2030 + $0x28] sm:$0xf]
      %v2042 = vld [vmem:[%s2030 + $0x2c] sm:$0xf]
      %v2043 = vld [vmem:[%s2030 + $0x30] sm:$0xf]
      %v2044 = vld [vmem:[%s2030 + $0x34] sm:$0xf]
      %v2045 = vld [vmem:[%s2030 + $0x38] sm:$0xf]
      %v2046 = vld [vmem:[%s2030 + $0x3c] sm:$0xf]
      %v2047 = vld [vmem:[%s2030 + $0x40] sm:$0xf]
      %v2048 = vld [vmem:[%s2030 + $0x44] sm:$0xf]
      %v2049 = vld [vmem:[%s2030 + $0x48] sm:$0xf]
      %v2050 = vld [vmem:[%s2030 + $0x4c] sm:$0xf]
      %v2051 = vld [vmem:[%s2030 + $0x50] sm:$0xf]
      %v2052 = vld [vmem:[%s2030 + $0x54] sm:$0xf]
      %v2053 = vld [vmem:[%s2030 + $0x58] sm:$0xf]
      %v2054 = vld [vmem:[%s2030 + $0x5c] sm:$0xf]
      %v2055 = vld [vmem:[%s2030 + $0x60] sm:$0xf]
      %v2056 = vld [vmem:[%s2030 + $0x64] sm:$0xf]
      %v2057 = vld [vmem:[%s2030 + $0x68] sm:$0xf]
      %v2058 = vld [vmem:[%s2030 + $0x6c] sm:$0xf]
      %v2059 = vld [vmem:[%s2030 + $0x70] sm:$0xf]
      %v2060 = vld [vmem:[%s2030 + $0x74] sm:$0xf]
      %v2061 = vld [vmem:[%s2030 + $0x78] sm:$0xf]
      %v2062 = vld [vmem:[%s2030 + $0x7c] sm:$0xf]
      %v2064 = vunpack.c.l.b16 %v2029
      %v2065 = vunpack.c.h.b16 %v2029
      %v2066 = vpack.c.b16 %v2064, %v2064
      %v2067 = vpack.c.b16 %v2065, %v2065
      %v2068 = vrot.slane %v2066, 1
      %v2069 = vrot.slane %v2067, 1
      %v2104 = vunpack.c.l.b16 %v2031
      %v2105 = vunpack.c.l.b16 %v2032
      %v2106 = vunpack.c.l.b16 %v2033
      %v2107 = vunpack.c.l.b16 %v2034
      %v2108 = vunpack.c.l.b16 %v2035
      %v2109 = vunpack.c.l.b16 %v2036
      %v2110 = vunpack.c.l.b16 %v2037
      %v2111 = vunpack.c.l.b16 %v2038
      %v2112 = vunpack.c.l.b16 %v2039
      %v2113 = vunpack.c.l.b16 %v2040
      %v2114 = vunpack.c.l.b16 %v2041
      %v2115 = vunpack.c.l.b16 %v2042
      %v2116 = vunpack.c.l.b16 %v2043
      %v2117 = vunpack.c.l.b16 %v2044
      %v2118 = vunpack.c.l.b16 %v2045
      %v2119 = vunpack.c.l.b16 %v2046
      %v2120 = vunpack.c.l.b16 %v2047
      %v2121 = vunpack.c.l.b16 %v2048
      %v2122 = vunpack.c.l.b16 %v2049
      %v2123 = vunpack.c.l.b16 %v2050
      %v2124 = vunpack.c.l.b16 %v2051
      %v2125 = vunpack.c.l.b16 %v2052
      %v2126 = vunpack.c.l.b16 %v2053
      %v2127 = vunpack.c.l.b16 %v2054
      %v2128 = vunpack.c.l.b16 %v2055
      %v2129 = vunpack.c.l.b16 %v2056
      %v2130 = vunpack.c.l.b16 %v2057
      %v2131 = vunpack.c.l.b16 %v2058
      %v2132 = vunpack.c.l.b16 %v2059
      %v2133 = vunpack.c.l.b16 %v2060
      %v2134 = vunpack.c.l.b16 %v2061
      %v2135 = vunpack.c.l.b16 %v2062
      %v2136 = vpack.c.b16 %v2105, %v2104
      %v2137 = vpack.c.b16 %v2107, %v2106
      %v2138 = vpack.c.b16 %v2109, %v2108
      %v2139 = vpack.c.b16 %v2111, %v2110
      %v2140 = vpack.c.b16 %v2113, %v2112
      %v2141 = vpack.c.b16 %v2115, %v2114
      %v2142 = vpack.c.b16 %v2117, %v2116
      %v2143 = vpack.c.b16 %v2119, %v2118
      %v2144 = vpack.c.b16 %v2121, %v2120
      %v2145 = vpack.c.b16 %v2123, %v2122
      %v2146 = vpack.c.b16 %v2125, %v2124
      %v2147 = vpack.c.b16 %v2127, %v2126
      %v2148 = vpack.c.b16 %v2129, %v2128
      %v2149 = vpack.c.b16 %v2131, %v2130
      %v2150 = vpack.c.b16 %v2133, %v2132
      %v2151 = vpack.c.b16 %v2135, %v2134
      %2168 = vmatprep.subr.bf16.mxu0 0
      %2169 = vmatpush1.bf16.msra.mxu0 %v2136
      %2170 = vmatprep.subr.bf16.mxu0 0
      %2171 = vmatpush1.bf16.msra.mxu0 %v2137
      %2172 = vmatprep.subr.bf16.mxu0 0
      %2173 = vmatpush1.bf16.msra.mxu0 %v2138
      %2174 = vmatprep.subr.bf16.mxu0 0
      %2175 = vmatpush1.bf16.msra.mxu0 %v2139
      %2176 = vmatprep.subr.bf16.mxu0 0
      %2177 = vmatpush1.bf16.msra.mxu0 %v2140
      %2178 = vmatprep.subr.bf16.mxu0 0
      %2179 = vmatpush1.bf16.msra.mxu0 %v2141
      %2180 = vmatprep.subr.bf16.mxu0 0
      %2181 = vmatpush1.bf16.msra.mxu0 %v2142
      %2182 = vmatprep.subr.bf16.mxu0 0
      %2183 = vmatpush1.bf16.msra.mxu0 %v2143
      %2184 = vmatprep.subr.bf16.mxu0 0
      %2185 = vmatpush1.bf16.msra.mxu0 %v2144
      %2186 = vmatprep.subr.bf16.mxu0 0
      %2187 = vmatpush1.bf16.msra.mxu0 %v2145
      %2188 = vmatprep.subr.bf16.mxu0 0
      %2189 = vmatpush1.bf16.msra.mxu0 %v2146
      %2190 = vmatprep.subr.bf16.mxu0 0
      %2191 = vmatpush1.bf16.msra.mxu0 %v2147
      %2192 = vmatprep.subr.bf16.mxu0 0
      %2193 = vmatpush1.bf16.msra.mxu0 %v2148
      %2194 = vmatprep.subr.bf16.mxu0 0
      %2195 = vmatpush1.bf16.msra.mxu0 %v2149
      %2196 = vmatprep.subr.bf16.mxu0 0
      %2197 = vmatpush1.bf16.msra.mxu0 %v2150
      %2198 = vmatprep.subr.bf16.mxu0 0
      %2199 = vmatpush1.bf16.msra.mxu0 %v2151
      %2200 = vmatprep.mubr.bf16.mxu0 %v2069
      %2201 = vmatmul.mubr.bf16.gmra.mrb[0].mxu0 %v2068
      %v2202 = vpop.f32.mrb[0].mxu0
      %v2203 = vadd.f32 0.0, %v2202
      %v2204 = vpop.f32.mrb[0].mxu0
      %v2205 = vpop.f32.mrb[0].mxu0
      %v2206 = vpop.f32.mrb[0].mxu0
      %2207 = vdwg.mxu0
      %v2208 = vadd.f32 %v2028, %v2203
      %v2209 = vld [vmem:[%s164 + $0x8] sm:$0xee]
      %s2210 = scalar_lea.vmem %s1, 1408
      %v2211 = vld [vmem:[%s2210] sm:$0xf]
      %v2212 = vld [vmem:[%s2210 + $0x4] sm:$0xf]
      %v2213 = vld [vmem:[%s2210 + $0x8] sm:$0xf]
      %v2214 = vld [vmem:[%s2210 + $0xc] sm:$0xf]
      %v2215 = vld [vmem:[%s2210 + $0x10] sm:$0xf]
      %v2216 = vld [vmem:[%s2210 + $0x14] sm:$0xf]
      %v2217 = vld [vmem:[%s2210 + $0x18] sm:$0xf]
      %v2218 = vld [vmem:[%s2210 + $0x1c] sm:$0xf]
      %v2219 = vld [vmem:[%s2210 + $0x20] sm:$0xf]
      %v2220 = vld [vmem:[%s2210 + $0x24] sm:$0xf]
      %v2221 = vld [vmem:[%s2210 + $0x28] sm:$0xf]
      %v2222 = vld [vmem:[%s2210 + $0x2c] sm:$0xf]
      %v2223 = vld [vmem:[%s2210 + $0x30] sm:$0xf]
      %v2224 = vld [vmem:[%s2210 + $0x34] sm:$0xf]
      %v2225 = vld [vmem:[%s2210 + $0x38] sm:$0xf]
      %v2226 = vld [vmem:[%s2210 + $0x3c] sm:$0xf]
      %v2227 = vld [vmem:[%s2210 + $0x40] sm:$0xf]
      %v2228 = vld [vmem:[%s2210 + $0x44] sm:$0xf]
      %v2229 = vld [vmem:[%s2210 + $0x48] sm:$0xf]
      %v2230 = vld [vmem:[%s2210 + $0x4c] sm:$0xf]
      %v2231 = vld [vmem:[%s2210 + $0x50] sm:$0xf]
      %v2232 = vld [vmem:[%s2210 + $0x54] sm:$0xf]
      %v2233 = vld [vmem:[%s2210 + $0x58] sm:$0xf]
      %v2234 = vld [vmem:[%s2210 + $0x5c] sm:$0xf]
      %v2235 = vld [vmem:[%s2210 + $0x60] sm:$0xf]
      %v2236 = vld [vmem:[%s2210 + $0x64] sm:$0xf]
      %v2237 = vld [vmem:[%s2210 + $0x68] sm:$0xf]
      %v2238 = vld [vmem:[%s2210 + $0x6c] sm:$0xf]
      %v2239 = vld [vmem:[%s2210 + $0x70] sm:$0xf]
      %v2240 = vld [vmem:[%s2210 + $0x74] sm:$0xf]
      %v2241 = vld [vmem:[%s2210 + $0x78] sm:$0xf]
      %v2242 = vld [vmem:[%s2210 + $0x7c] sm:$0xf]
      %v2244 = vunpack.c.l.b16 %v2209
      %v2245 = vunpack.c.h.b16 %v2209
      %v2246 = vpack.c.b16 %v2244, %v2244
      %v2247 = vpack.c.b16 %v2245, %v2245
      %v2249 = vshrl.u32 %v2246, 16
      %v2251 = vrot.slane %v2249, 1
      %v2252 = vshll.u32 %v2246, 16
      %v2254 = vrot.slane %v2252, 2
      %v2255 = vor.u32 %v2251, %v2254
      %v2257 = vshrl.u32 %v2247, 16
      %v2259 = vrot.slane %v2257, 1
      %v2260 = vshll.u32 %v2247, 16
      %v2262 = vrot.slane %v2260, 2
      %v2263 = vor.u32 %v2259, %v2262
      %v2298 = vunpack.c.l.b16 %v2211
      %v2299 = vunpack.c.l.b16 %v2212
      %v2300 = vunpack.c.l.b16 %v2213
      %v2301 = vunpack.c.l.b16 %v2214
      %v2302 = vunpack.c.l.b16 %v2215
      %v2303 = vunpack.c.l.b16 %v2216
      %v2304 = vunpack.c.l.b16 %v2217
      %v2305 = vunpack.c.l.b16 %v2218
      %v2306 = vunpack.c.l.b16 %v2219
      %v2307 = vunpack.c.l.b16 %v2220
      %v2308 = vunpack.c.l.b16 %v2221
      %v2309 = vunpack.c.l.b16 %v2222
      %v2310 = vunpack.c.l.b16 %v2223
      %v2311 = vunpack.c.l.b16 %v2224
      %v2312 = vunpack.c.l.b16 %v2225
      %v2313 = vunpack.c.l.b16 %v2226
      %v2314 = vunpack.c.l.b16 %v2227
      %v2315 = vunpack.c.l.b16 %v2228
      %v2316 = vunpack.c.l.b16 %v2229
      %v2317 = vunpack.c.l.b16 %v2230
      %v2318 = vunpack.c.l.b16 %v2231
      %v2319 = vunpack.c.l.b16 %v2232
      %v2320 = vunpack.c.l.b16 %v2233
      %v2321 = vunpack.c.l.b16 %v2234
      %v2322 = vunpack.c.l.b16 %v2235
      %v2323 = vunpack.c.l.b16 %v2236
      %v2324 = vunpack.c.l.b16 %v2237
      %v2325 = vunpack.c.l.b16 %v2238
      %v2326 = vunpack.c.l.b16 %v2239
      %v2327 = vunpack.c.l.b16 %v2240
      %v2328 = vunpack.c.l.b16 %v2241
      %v2329 = vunpack.c.l.b16 %v2242
      %v2330 = vpack.c.b16 %v2299, %v2298
      %v2331 = vpack.c.b16 %v2301, %v2300
      %v2332 = vpack.c.b16 %v2303, %v2302
      %v2333 = vpack.c.b16 %v2305, %v2304
      %v2334 = vpack.c.b16 %v2307, %v2306
      %v2335 = vpack.c.b16 %v2309, %v2308
      %v2336 = vpack.c.b16 %v2311, %v2310
      %v2337 = vpack.c.b16 %v2313, %v2312
      %v2338 = vpack.c.b16 %v2315, %v2314
      %v2339 = vpack.c.b16 %v2317, %v2316
      %v2340 = vpack.c.b16 %v2319, %v2318
      %v2341 = vpack.c.b16 %v2321, %v2320
      %v2342 = vpack.c.b16 %v2323, %v2322
      %v2343 = vpack.c.b16 %v2325, %v2324
      %v2344 = vpack.c.b16 %v2327, %v2326
      %v2345 = vpack.c.b16 %v2329, %v2328
      %2362 = vmatprep.subr.bf16.mxu0 0
      %2363 = vmatpush1.bf16.msra.mxu0 %v2330
      %2364 = vmatprep.subr.bf16.mxu0 0
      %2365 = vmatpush1.bf16.msra.mxu0 %v2331
      %2366 = vmatprep.subr.bf16.mxu0 0
      %2367 = vmatpush1.bf16.msra.mxu0 %v2332
      %2368 = vmatprep.subr.bf16.mxu0 0
      %2369 = vmatpush1.bf16.msra.mxu0 %v2333
      %2370 = vmatprep.subr.bf16.mxu0 0
      %2371 = vmatpush1.bf16.msra.mxu0 %v2334
      %2372 = vmatprep.subr.bf16.mxu0 0
      %2373 = vmatpush1.bf16.msra.mxu0 %v2335
      %2374 = vmatprep.subr.bf16.mxu0 0
      %2375 = vmatpush1.bf16.msra.mxu0 %v2336
      %2376 = vmatprep.subr.bf16.mxu0 0
      %2377 = vmatpush1.bf16.msra.mxu0 %v2337
      %2378 = vmatprep.subr.bf16.mxu0 0
      %2379 = vmatpush1.bf16.msra.mxu0 %v2338
      %2380 = vmatprep.subr.bf16.mxu0 0
      %2381 = vmatpush1.bf16.msra.mxu0 %v2339
      %2382 = vmatprep.subr.bf16.mxu0 0
      %2383 = vmatpush1.bf16.msra.mxu0 %v2340
      %2384 = vmatprep.subr.bf16.mxu0 0
      %2385 = vmatpush1.bf16.msra.mxu0 %v2341
      %2386 = vmatprep.subr.bf16.mxu0 0
      %2387 = vmatpush1.bf16.msra.mxu0 %v2342
      %2388 = vmatprep.subr.bf16.mxu0 0
      %2389 = vmatpush1.bf16.msra.mxu0 %v2343
      %2390 = vmatprep.subr.bf16.mxu0 0
      %2391 = vmatpush1.bf16.msra.mxu0 %v2344
      %2392 = vmatprep.subr.bf16.mxu0 0
      %2393 = vmatpush1.bf16.msra.mxu0 %v2345
      %2394 = vmatprep.mubr.bf16.mxu0 %v2263
      %2395 = vmatmul.mubr.bf16.gmra.mrb[0].mxu0 %v2255
      %v2396 = vpop.f32.mrb[0].mxu0
      %v2397 = vadd.f32 0.0, %v2396
      %v2398 = vpop.f32.mrb[0].mxu0
      %v2399 = vpop.f32.mrb[0].mxu0
      %v2400 = vpop.f32.mrb[0].mxu0
      %2401 = vdwg.mxu0
      %v2402 = vadd.f32 %v2208, %v2397
      %v2403 = vld [vmem:[%s164 + $0x8] sm:$0xcc]
      %s2404 = scalar_lea.vmem %s1, 1536
      %v2405 = vld [vmem:[%s2404] sm:$0xf]
      %v2406 = vld [vmem:[%s2404 + $0x4] sm:$0xf]
      %v2407 = vld [vmem:[%s2404 + $0x8] sm:$0xf]
      %v2408 = vld [vmem:[%s2404 + $0xc] sm:$0xf]
      %v2409 = vld [vmem:[%s2404 + $0x10] sm:$0xf]
      %v2410 = vld [vmem:[%s2404 + $0x14] sm:$0xf]
      %v2411 = vld [vmem:[%s2404 + $0x18] sm:$0xf]
      %v2412 = vld [vmem:[%s2404 + $0x1c] sm:$0xf]
      %v2413 = vld [vmem:[%s2404 + $0x20] sm:$0xf]
      %v2414 = vld [vmem:[%s2404 + $0x24] sm:$0xf]
      %v2415 = vld [vmem:[%s2404 + $0x28] sm:$0xf]
      %v2416 = vld [vmem:[%s2404 + $0x2c] sm:$0xf]
      %v2417 = vld [vmem:[%s2404 + $0x30] sm:$0xf]
      %v2418 = vld [vmem:[%s2404 + $0x34] sm:$0xf]
      %v2419 = vld [vmem:[%s2404 + $0x38] sm:$0xf]
      %v2420 = vld [vmem:[%s2404 + $0x3c] sm:$0xf]
      %v2421 = vld [vmem:[%s2404 + $0x40] sm:$0xf]
      %v2422 = vld [vmem:[%s2404 + $0x44] sm:$0xf]
      %v2423 = vld [vmem:[%s2404 + $0x48] sm:$0xf]
      %v2424 = vld [vmem:[%s2404 + $0x4c] sm:$0xf]
      %v2425 = vld [vmem:[%s2404 + $0x50] sm:$0xf]
      %v2426 = vld [vmem:[%s2404 + $0x54] sm:$0xf]
      %v2427 = vld [vmem:[%s2404 + $0x58] sm:$0xf]
      %v2428 = vld [vmem:[%s2404 + $0x5c] sm:$0xf]
      %v2429 = vld [vmem:[%s2404 + $0x60] sm:$0xf]
      %v2430 = vld [vmem:[%s2404 + $0x64] sm:$0xf]
      %v2431 = vld [vmem:[%s2404 + $0x68] sm:$0xf]
      %v2432 = vld [vmem:[%s2404 + $0x6c] sm:$0xf]
      %v2433 = vld [vmem:[%s2404 + $0x70] sm:$0xf]
      %v2434 = vld [vmem:[%s2404 + $0x74] sm:$0xf]
      %v2435 = vld [vmem:[%s2404 + $0x78] sm:$0xf]
      %v2436 = vld [vmem:[%s2404 + $0x7c] sm:$0xf]
      %v2438 = vunpack.c.l.b16 %v2403
      %v2439 = vunpack.c.h.b16 %v2403
      %v2440 = vpack.c.b16 %v2438, %v2438
      %v2441 = vpack.c.b16 %v2439, %v2439
      %v2442 = vrot.slane %v2440, 2
      %v2443 = vrot.slane %v2441, 2
      %v2478 = vunpack.c.l.b16 %v2405
      %v2479 = vunpack.c.l.b16 %v2406
      %v2480 = vunpack.c.l.b16 %v2407
      %v2481 = vunpack.c.l.b16 %v2408
      %v2482 = vunpack.c.l.b16 %v2409
      %v2483 = vunpack.c.l.b16 %v2410
      %v2484 = vunpack.c.l.b16 %v2411
      %v2485 = vunpack.c.l.b16 %v2412
      %v2486 = vunpack.c.l.b16 %v2413
      %v2487 = vunpack.c.l.b16 %v2414
      %v2488 = vunpack.c.l.b16 %v2415
      %v2489 = vunpack.c.l.b16 %v2416
      %v2490 = vunpack.c.l.b16 %v2417
      %v2491 = vunpack.c.l.b16 %v2418
      %v2492 = vunpack.c.l.b16 %v2419
      %v2493 = vunpack.c.l.b16 %v2420
      %v2494 = vunpack.c.l.b16 %v2421
      %v2495 = vunpack.c.l.b16 %v2422
      %v2496 = vunpack.c.l.b16 %v2423
      %v2497 = vunpack.c.l.b16 %v2424
      %v2498 = vunpack.c.l.b16 %v2425
      %v2499 = vunpack.c.l.b16 %v2426
      %v2500 = vunpack.c.l.b16 %v2427
      %v2501 = vunpack.c.l.b16 %v2428
      %v2502 = vunpack.c.l.b16 %v2429
      %v2503 = vunpack.c.l.b16 %v2430
      %v2504 = vunpack.c.l.b16 %v2431
      %v2505 = vunpack.c.l.b16 %v2432
      %v2506 = vunpack.c.l.b16 %v2433
      %v2507 = vunpack.c.l.b16 %v2434
      %v2508 = vunpack.c.l.b16 %v2435
      %v2509 = vunpack.c.l.b16 %v2436
      %v2510 = vpack.c.b16 %v2479, %v2478
      %v2511 = vpack.c.b16 %v2481, %v2480
      %v2512 = vpack.c.b16 %v2483, %v2482
      %v2513 = vpack.c.b16 %v2485, %v2484
      %v2514 = vpack.c.b16 %v2487, %v2486
      %v2515 = vpack.c.b16 %v2489, %v2488
      %v2516 = vpack.c.b16 %v2491, %v2490
      %v2517 = vpack.c.b16 %v2493, %v2492
      %v2518 = vpack.c.b16 %v2495, %v2494
      %v2519 = vpack.c.b16 %v2497, %v2496
      %v2520 = vpack.c.b16 %v2499, %v2498
      %v2521 = vpack.c.b16 %v2501, %v2500
      %v2522 = vpack.c.b16 %v2503, %v2502
      %v2523 = vpack.c.b16 %v2505, %v2504
      %v2524 = vpack.c.b16 %v2507, %v2506
      %v2525 = vpack.c.b16 %v2509, %v2508
      %2542 = vmatprep.subr.bf16.mxu0 0
      %2543 = vmatpush1.bf16.msra.mxu0 %v2510
      %2544 = vmatprep.subr.bf16.mxu0 0
      %2545 = vmatpush1.bf16.msra.mxu0 %v2511
      %2546 = vmatprep.subr.bf16.mxu0 0
      %2547 = vmatpush1.bf16.msra.mxu0 %v2512
      %2548 = vmatprep.subr.bf16.mxu0 0
      %2549 = vmatpush1.bf16.msra.mxu0 %v2513
      %2550 = vmatprep.subr.bf16.mxu0 0
      %2551 = vmatpush1.bf16.msra.mxu0 %v2514
      %2552 = vmatprep.subr.bf16.mxu0 0
      %2553 = vmatpush1.bf16.msra.mxu0 %v2515
      %2554 = vmatprep.subr.bf16.mxu0 0
      %2555 = vmatpush1.bf16.msra.mxu0 %v2516
      %2556 = vmatprep.subr.bf16.mxu0 0
      %2557 = vmatpush1.bf16.msra.mxu0 %v2517
      %2558 = vmatprep.subr.bf16.mxu0 0
      %2559 = vmatpush1.bf16.msra.mxu0 %v2518
      %2560 = vmatprep.subr.bf16.mxu0 0
      %2561 = vmatpush1.bf16.msra.mxu0 %v2519
      %2562 = vmatprep.subr.bf16.mxu0 0
      %2563 = vmatpush1.bf16.msra.mxu0 %v2520
      %2564 = vmatprep.subr.bf16.mxu0 0
      %2565 = vmatpush1.bf16.msra.mxu0 %v2521
      %2566 = vmatprep.subr.bf16.mxu0 0
      %2567 = vmatpush1.bf16.msra.mxu0 %v2522
      %2568 = vmatprep.subr.bf16.mxu0 0
      %2569 = vmatpush1.bf16.msra.mxu0 %v2523
      %2570 = vmatprep.subr.bf16.mxu0 0
      %2571 = vmatpush1.bf16.msra.mxu0 %v2524
      %2572 = vmatprep.subr.bf16.mxu0 0
      %2573 = vmatpush1.bf16.msra.mxu0 %v2525
      %2574 = vmatprep.mubr.bf16.mxu0 %v2443
      %2575 = vmatmul.mubr.bf16.gmra.mrb[0].mxu0 %v2442
      %v2576 = vpop.f32.mrb[0].mxu0
      %v2577 = vadd.f32 0.0, %v2576
      %v2578 = vpop.f32.mrb[0].mxu0
      %v2579 = vpop.f32.mrb[0].mxu0
      %v2580 = vpop.f32.mrb[0].mxu0
      %2581 = vdwg.mxu0
      %v2582 = vadd.f32 %v2402, %v2577
      %v2583 = vld [vmem:[%s164 + $0x8] sm:$0xcc]
      %v2584 = vld [vmem:[%s164 + $0x10] sm:$0x11]
      %s2585 = scalar_lea.vmem %s1, 1664
      %v2586 = vld [vmem:[%s2585] sm:$0xf]
      %v2587 = vld [vmem:[%s2585 + $0x4] sm:$0xf]
      %v2588 = vld [vmem:[%s2585 + $0x8] sm:$0xf]
      %v2589 = vld [vmem:[%s2585 + $0xc] sm:$0xf]
      %v2590 = vld [vmem:[%s2585 + $0x10] sm:$0xf]
      %v2591 = vld [vmem:[%s2585 + $0x14] sm:$0xf]
      %v2592 = vld [vmem:[%s2585 + $0x18] sm:$0xf]
      %v2593 = vld [vmem:[%s2585 + $0x1c] sm:$0xf]
      %v2594 = vld [vmem:[%s2585 + $0x20] sm:$0xf]
      %v2595 = vld [vmem:[%s2585 + $0x24] sm:$0xf]
      %v2596 = vld [vmem:[%s2585 + $0x28] sm:$0xf]
      %v2597 = vld [vmem:[%s2585 + $0x2c] sm:$0xf]
      %v2598 = vld [vmem:[%s2585 + $0x30] sm:$0xf]
      %v2599 = vld [vmem:[%s2585 + $0x34] sm:$0xf]
      %v2600 = vld [vmem:[%s2585 + $0x38] sm:$0xf]
      %v2601 = vld [vmem:[%s2585 + $0x3c] sm:$0xf]
      %v2602 = vld [vmem:[%s2585 + $0x40] sm:$0xf]
      %v2603 = vld [vmem:[%s2585 + $0x44] sm:$0xf]
      %v2604 = vld [vmem:[%s2585 + $0x48] sm:$0xf]
      %v2605 = vld [vmem:[%s2585 + $0x4c] sm:$0xf]
      %v2606 = vld [vmem:[%s2585 + $0x50] sm:$0xf]
      %v2607 = vld [vmem:[%s2585 + $0x54] sm:$0xf]
      %v2608 = vld [vmem:[%s2585 + $0x58] sm:$0xf]
      %v2609 = vld [vmem:[%s2585 + $0x5c] sm:$0xf]
      %v2610 = vld [vmem:[%s2585 + $0x60] sm:$0xf]
      %v2611 = vld [vmem:[%s2585 + $0x64] sm:$0xf]
      %v2612 = vld [vmem:[%s2585 + $0x68] sm:$0xf]
      %v2613 = vld [vmem:[%s2585 + $0x6c] sm:$0xf]
      %v2614 = vld [vmem:[%s2585 + $0x70] sm:$0xf]
      %v2615 = vld [vmem:[%s2585 + $0x74] sm:$0xf]
      %v2616 = vld [vmem:[%s2585 + $0x78] sm:$0xf]
      %v2617 = vld [vmem:[%s2585 + $0x7c] sm:$0xf]
      %v2620 = vunpack.c.l.b16 %v2583
      %v2621 = vunpack.c.h.b16 %v2583
      %v2622 = vunpack.c.l.b16 %v2584
      %v2623 = vunpack.c.h.b16 %v2584
      %v2624 = vpack.c.b16 %v2622, %v2620
      %v2625 = vpack.c.b16 %v2623, %v2621
      %v2627 = vshrl.u32 %v2624, 16
      %v2629 = vrot.slane %v2627, 2
      %v2630 = vshll.u32 %v2624, 16
      %v2632 = vrot.slane %v2630, 3
      %v2633 = vor.u32 %v2629, %v2632
      %v2635 = vshrl.u32 %v2625, 16
      %v2637 = vrot.slane %v2635, 2
      %v2638 = vshll.u32 %v2625, 16
      %v2640 = vrot.slane %v2638, 3
      %v2641 = vor.u32 %v2637, %v2640
      %v2676 = vunpack.c.l.b16 %v2586
      %v2677 = vunpack.c.l.b16 %v2587
      %v2678 = vunpack.c.l.b16 %v2588
      %v2679 = vunpack.c.l.b16 %v2589
      %v2680 = vunpack.c.l.b16 %v2590
      %v2681 = vunpack.c.l.b16 %v2591
      %v2682 = vunpack.c.l.b16 %v2592
      %v2683 = vunpack.c.l.b16 %v2593
      %v2684 = vunpack.c.l.b16 %v2594
      %v2685 = vunpack.c.l.b16 %v2595
      %v2686 = vunpack.c.l.b16 %v2596
      %v2687 = vunpack.c.l.b16 %v2597
      %v2688 = vunpack.c.l.b16 %v2598
      %v2689 = vunpack.c.l.b16 %v2599
      %v2690 = vunpack.c.l.b16 %v2600
      %v2691 = vunpack.c.l.b16 %v2601
      %v2692 = vunpack.c.l.b16 %v2602
      %v2693 = vunpack.c.l.b16 %v2603
      %v2694 = vunpack.c.l.b16 %v2604
      %v2695 = vunpack.c.l.b16 %v2605
      %v2696 = vunpack.c.l.b16 %v2606
      %v2697 = vunpack.c.l.b16 %v2607
      %v2698 = vunpack.c.l.b16 %v2608
      %v2699 = vunpack.c.l.b16 %v2609
      %v2700 = vunpack.c.l.b16 %v2610
      %v2701 = vunpack.c.l.b16 %v2611
      %v2702 = vunpack.c.l.b16 %v2612
      %v2703 = vunpack.c.l.b16 %v2613
      %v2704 = vunpack.c.l.b16 %v2614
      %v2705 = vunpack.c.l.b16 %v2615
      %v2706 = vunpack.c.l.b16 %v2616
      %v2707 = vunpack.c.l.b16 %v2617
      %v2708 = vpack.c.b16 %v2677, %v2676
      %v2709 = vpack.c.b16 %v2679, %v2678
      %v2710 = vpack.c.b16 %v2681, %v2680
      %v2711 = vpack.c.b16 %v2683, %v2682
      %v2712 = vpack.c.b16 %v2685, %v2684
      %v2713 = vpack.c.b16 %v2687, %v2686
      %v2714 = vpack.c.b16 %v2689, %v2688
      %v2715 = vpack.c.b16 %v2691, %v2690
      %v2716 = vpack.c.b16 %v2693, %v2692
      %v2717 = vpack.c.b16 %v2695, %v2694
      %v2718 = vpack.c.b16 %v2697, %v2696
      %v2719 = vpack.c.b16 %v2699, %v2698
      %v2720 = vpack.c.b16 %v2701, %v2700
      %v2721 = vpack.c.b16 %v2703, %v2702
      %v2722 = vpack.c.b16 %v2705, %v2704
      %v2723 = vpack.c.b16 %v2707, %v2706
      %2740 = vmatprep.subr.bf16.mxu0 0
      %2741 = vmatpush1.bf16.msra.mxu0 %v2708
      %2742 = vmatprep.subr.bf16.mxu0 0
      %2743 = vmatpush1.bf16.msra.mxu0 %v2709
      %2744 = vmatprep.subr.bf16.mxu0 0
      %2745 = vmatpush1.bf16.msra.mxu0 %v2710
      %2746 = vmatprep.subr.bf16.mxu0 0
      %2747 = vmatpush1.bf16.msra.mxu0 %v2711
      %2748 = vmatprep.subr.bf16.mxu0 0
      %2749 = vmatpush1.bf16.msra.mxu0 %v2712
      %2750 = vmatprep.subr.bf16.mxu0 0
      %2751 = vmatpush1.bf16.msra.mxu0 %v2713
      %2752 = vmatprep.subr.bf16.mxu0 0
      %2753 = vmatpush1.bf16.msra.mxu0 %v2714
      %2754 = vmatprep.subr.bf16.mxu0 0
      %2755 = vmatpush1.bf16.msra.mxu0 %v2715
      %2756 = vmatprep.subr.bf16.mxu0 0
      %2757 = vmatpush1.bf16.msra.mxu0 %v2716
      %2758 = vmatprep.subr.bf16.mxu0 0
      %2759 = vmatpush1.bf16.msra.mxu0 %v2717
      %2760 = vmatprep.subr.bf16.mxu0 0
      %2761 = vmatpush1.bf16.msra.mxu0 %v2718
      %2762 = vmatprep.subr.bf16.mxu0 0
      %2763 = vmatpush1.bf16.msra.mxu0 %v2719
      %2764 = vmatprep.subr.bf16.mxu0 0
      %2765 = vmatpush1.bf16.msra.mxu0 %v2720
      %2766 = vmatprep.subr.bf16.mxu0 0
      %2767 = vmatpush1.bf16.msra.mxu0 %v2721
      %2768 = vmatprep.subr.bf16.mxu0 0
      %2769 = vmatpush1.bf16.msra.mxu0 %v2722
      %2770 = vmatprep.subr.bf16.mxu0 0
      %2771 = vmatpush1.bf16.msra.mxu0 %v2723
      %2772 = vmatprep.mubr.bf16.mxu0 %v2641
      %2773 = vmatmul.mubr.bf16.gmra.mrb[0].mxu0 %v2633
      %v2774 = vpop.f32.mrb[0].mxu0
      %v2775 = vadd.f32 0.0, %v2774
      %v2776 = vpop.f32.mrb[0].mxu0
      %v2777 = vpop.f32.mrb[0].mxu0
      %v2778 = vpop.f32.mrb[0].mxu0
      %2779 = vdwg.mxu0
      %v2780 = vadd.f32 %v2582, %v2775
      %v2781 = vld [vmem:[%s164 + $0x8] sm:$0x88]
      %s2782 = scalar_lea.vmem %s1, 1792
      %v2783 = vld [vmem:[%s2782] sm:$0xf]
      %v2784 = vld [vmem:[%s2782 + $0x4] sm:$0xf]
      %v2785 = vld [vmem:[%s2782 + $0x8] sm:$0xf]
      %v2786 = vld [vmem:[%s2782 + $0xc] sm:$0xf]
      %v2787 = vld [vmem:[%s2782 + $0x10] sm:$0xf]
      %v2788 = vld [vmem:[%s2782 + $0x14] sm:$0xf]
      %v2789 = vld [vmem:[%s2782 + $0x18] sm:$0xf]
      %v2790 = vld [vmem:[%s2782 + $0x1c] sm:$0xf]
      %v2791 = vld [vmem:[%s2782 + $0x20] sm:$0xf]
      %v2792 = vld [vmem:[%s2782 + $0x24] sm:$0xf]
      %v2793 = vld [vmem:[%s2782 + $0x28] sm:$0xf]
      %v2794 = vld [vmem:[%s2782 + $0x2c] sm:$0xf]
      %v2795 = vld [vmem:[%s2782 + $0x30] sm:$0xf]
      %v2796 = vld [vmem:[%s2782 + $0x34] sm:$0xf]
      %v2797 = vld [vmem:[%s2782 + $0x38] sm:$0xf]
      %v2798 = vld [vmem:[%s2782 + $0x3c] sm:$0xf]
      %v2799 = vld [vmem:[%s2782 + $0x40] sm:$0xf]
      %v2800 = vld [vmem:[%s2782 + $0x44] sm:$0xf]
      %v2801 = vld [vmem:[%s2782 + $0x48] sm:$0xf]
      %v2802 = vld [vmem:[%s2782 + $0x4c] sm:$0xf]
      %v2803 = vld [vmem:[%s2782 + $0x50] sm:$0xf]
      %v2804 = vld [vmem:[%s2782 + $0x54] sm:$0xf]
      %v2805 = vld [vmem:[%s2782 + $0x58] sm:$0xf]
      %v2806 = vld [vmem:[%s2782 + $0x5c] sm:$0xf]
      %v2807 = vld [vmem:[%s2782 + $0x60] sm:$0xf]
      %v2808 = vld [vmem:[%s2782 + $0x64] sm:$0xf]
      %v2809 = vld [vmem:[%s2782 + $0x68] sm:$0xf]
      %v2810 = vld [vmem:[%s2782 + $0x6c] sm:$0xf]
      %v2811 = vld [vmem:[%s2782 + $0x70] sm:$0xf]
      %v2812 = vld [vmem:[%s2782 + $0x74] sm:$0xf]
      %v2813 = vld [vmem:[%s2782 + $0x78] sm:$0xf]
      %v2814 = vld [vmem:[%s2782 + $0x7c] sm:$0xf]
      %v2816 = vunpack.c.l.b16 %v2781
      %v2817 = vunpack.c.h.b16 %v2781
      %v2818 = vpack.c.b16 %v2622, %v2816
      %v2819 = vpack.c.b16 %v2623, %v2817
      %v2820 = vrot.slane %v2818, 3
      %v2821 = vrot.slane %v2819, 3
      %v2856 = vunpack.c.l.b16 %v2783
      %v2857 = vunpack.c.l.b16 %v2784
      %v2858 = vunpack.c.l.b16 %v2785
      %v2859 = vunpack.c.l.b16 %v2786
      %v2860 = vunpack.c.l.b16 %v2787
      %v2861 = vunpack.c.l.b16 %v2788
      %v2862 = vunpack.c.l.b16 %v2789
      %v2863 = vunpack.c.l.b16 %v2790
      %v2864 = vunpack.c.l.b16 %v2791
      %v2865 = vunpack.c.l.b16 %v2792
      %v2866 = vunpack.c.l.b16 %v2793
      %v2867 = vunpack.c.l.b16 %v2794
      %v2868 = vunpack.c.l.b16 %v2795
      %v2869 = vunpack.c.l.b16 %v2796
      %v2870 = vunpack.c.l.b16 %v2797
      %v2871 = vunpack.c.l.b16 %v2798
      %v2872 = vunpack.c.l.b16 %v2799
      %v2873 = vunpack.c.l.b16 %v2800
      %v2874 = vunpack.c.l.b16 %v2801
      %v2875 = vunpack.c.l.b16 %v2802
      %v2876 = vunpack.c.l.b16 %v2803
      %v2877 = vunpack.c.l.b16 %v2804
      %v2878 = vunpack.c.l.b16 %v2805
      %v2879 = vunpack.c.l.b16 %v2806
      %v2880 = vunpack.c.l.b16 %v2807
      %v2881 = vunpack.c.l.b16 %v2808
      %v2882 = vunpack.c.l.b16 %v2809
      %v2883 = vunpack.c.l.b16 %v2810
      %v2884 = vunpack.c.l.b16 %v2811
      %v2885 = vunpack.c.l.b16 %v2812
      %v2886 = vunpack.c.l.b16 %v2813
      %v2887 = vunpack.c.l.b16 %v2814
      %v2888 = vpack.c.b16 %v2857, %v2856
      %v2889 = vpack.c.b16 %v2859, %v2858
      %v2890 = vpack.c.b16 %v2861, %v2860
      %v2891 = vpack.c.b16 %v2863, %v2862
      %v2892 = vpack.c.b16 %v2865, %v2864
      %v2893 = vpack.c.b16 %v2867, %v2866
      %v2894 = vpack.c.b16 %v2869, %v2868
      %v2895 = vpack.c.b16 %v2871, %v2870
      %v2896 = vpack.c.b16 %v2873, %v2872
      %v2897 = vpack.c.b16 %v2875, %v2874
      %v2898 = vpack.c.b16 %v2877, %v2876
      %v2899 = vpack.c.b16 %v2879, %v2878
      %v2900 = vpack.c.b16 %v2881, %v2880
      %v2901 = vpack.c.b16 %v2883, %v2882
      %v2902 = vpack.c.b16 %v2885, %v2884
      %v2903 = vpack.c.b16 %v2887, %v2886
      %2920 = vmatprep.subr.bf16.mxu0 0
      %2921 = vmatpush1.bf16.msra.mxu0 %v2888
      %2922 = vmatprep.subr.bf16.mxu0 0
      %2923 = vmatpush1.bf16.msra.mxu0 %v2889
      %2924 = vmatprep.subr.bf16.mxu0 0
      %2925 = vmatpush1.bf16.msra.mxu0 %v2890
      %2926 = vmatprep.subr.bf16.mxu0 0
      %2927 = vmatpush1.bf16.msra.mxu0 %v2891
      %2928 = vmatprep.subr.bf16.mxu0 0
      %2929 = vmatpush1.bf16.msra.mxu0 %v2892
      %2930 = vmatprep.subr.bf16.mxu0 0
      %2931 = vmatpush1.bf16.msra.mxu0 %v2893
      %2932 = vmatprep.subr.bf16.mxu0 0
      %2933 = vmatpush1.bf16.msra.mxu0 %v2894
      %2934 = vmatprep.subr.bf16.mxu0 0
      %2935 = vmatpush1.bf16.msra.mxu0 %v2895
      %2936 = vmatprep.subr.bf16.mxu0 0
      %2937 = vmatpush1.bf16.msra.mxu0 %v2896
      %2938 = vmatprep.subr.bf16.mxu0 0
      %2939 = vmatpush1.bf16.msra.mxu0 %v2897
      %2940 = vmatprep.subr.bf16.mxu0 0
      %2941 = vmatpush1.bf16.msra.mxu0 %v2898
      %2942 = vmatprep.subr.bf16.mxu0 0
      %2943 = vmatpush1.bf16.msra.mxu0 %v2899
      %2944 = vmatprep.subr.bf16.mxu0 0
      %2945 = vmatpush1.bf16.msra.mxu0 %v2900
      %2946 = vmatprep.subr.bf16.mxu0 0
      %2947 = vmatpush1.bf16.msra.mxu0 %v2901
      %2948 = vmatprep.subr.bf16.mxu0 0
      %2949 = vmatpush1.bf16.msra.mxu0 %v2902
      %2950 = vmatprep.subr.bf16.mxu0 0
      %2951 = vmatpush1.bf16.msra.mxu0 %v2903
      %2952 = vmatprep.mubr.bf16.mxu0 %v2821
      %2953 = vmatmul.mubr.bf16.gmra.mrb[0].mxu0 %v2820
      %v2954 = vpop.f32.mrb[0].mxu0
      %v2955 = vadd.f32 0.0, %v2954
      %v2956 = vpop.f32.mrb[0].mxu0
      %v2957 = vpop.f32.mrb[0].mxu0
      %v2958 = vpop.f32.mrb[0].mxu0
      %2959 = vdwg.mxu0
      %v2960 = vadd.f32 %v2780, %v2955
      %v2961 = vld [vmem:[%s164 + $0x10] sm:$0x33]
      %s2962 = scalar_lea.vmem %s1, 1920
      %v2963 = vld [vmem:[%s2962] sm:$0xf]
      %v2964 = vld [vmem:[%s2962 + $0x4] sm:$0xf]
      %v2965 = vld [vmem:[%s2962 + $0x8] sm:$0xf]
      %v2966 = vld [vmem:[%s2962 + $0xc] sm:$0xf]
      %v2967 = vld [vmem:[%s2962 + $0x10] sm:$0xf]
      %v2968 = vld [vmem:[%s2962 + $0x14] sm:$0xf]
      %v2969 = vld [vmem:[%s2962 + $0x18] sm:$0xf]
      %v2970 = vld [vmem:[%s2962 + $0x1c] sm:$0xf]
      %v2971 = vld [vmem:[%s2962 + $0x20] sm:$0xf]
      %v2972 = vld [vmem:[%s2962 + $0x24] sm:$0xf]
      %v2973 = vld [vmem:[%s2962 + $0x28] sm:$0xf]
      %v2974 = vld [vmem:[%s2962 + $0x2c] sm:$0xf]
      %v2975 = vld [vmem:[%s2962 + $0x30] sm:$0xf]
      %v2976 = vld [vmem:[%s2962 + $0x34] sm:$0xf]
      %v2977 = vld [vmem:[%s2962 + $0x38] sm:$0xf]
      %v2978 = vld [vmem:[%s2962 + $0x3c] sm:$0xf]
      %v2979 = vld [vmem:[%s2962 + $0x40] sm:$0xf]
      %v2980 = vld [vmem:[%s2962 + $0x44] sm:$0xf]
      %v2981 = vld [vmem:[%s2962 + $0x48] sm:$0xf]
      %v2982 = vld [vmem:[%s2962 + $0x4c] sm:$0xf]
      %v2983 = vld [vmem:[%s2962 + $0x50] sm:$0xf]
      %v2984 = vld [vmem:[%s2962 + $0x54] sm:$0xf]
      %v2985 = vld [vmem:[%s2962 + $0x58] sm:$0xf]
      %v2986 = vld [vmem:[%s2962 + $0x5c] sm:$0xf]
      %v2987 = vld [vmem:[%s2962 + $0x60] sm:$0xf]
      %v2988 = vld [vmem:[%s2962 + $0x64] sm:$0xf]
      %v2989 = vld [vmem:[%s2962 + $0x68] sm:$0xf]
      %v2990 = vld [vmem:[%s2962 + $0x6c] sm:$0xf]
      %v2991 = vld [vmem:[%s2962 + $0x70] sm:$0xf]
      %v2992 = vld [vmem:[%s2962 + $0x74] sm:$0xf]
      %v2993 = vld [vmem:[%s2962 + $0x78] sm:$0xf]
      %v2994 = vld [vmem:[%s2962 + $0x7c] sm:$0xf]
      %v2996 = vunpack.c.l.b16 %v2961
      %v2997 = vunpack.c.h.b16 %v2961
      %v2998 = vpack.c.b16 %v2996, %v2816
      %v2999 = vpack.c.b16 %v2997, %v2817
      %v3001 = vshrl.u32 %v2998, 16
      %v3003 = vrot.slane %v3001, 3
      %v3004 = vshll.u32 %v2998, 16
      %v3006 = vrot.slane %v3004, 4
      %v3007 = vor.u32 %v3003, %v3006
      %v3009 = vshrl.u32 %v2999, 16
      %v3011 = vrot.slane %v3009, 3
      %v3012 = vshll.u32 %v2999, 16
      %v3014 = vrot.slane %v3012, 4
      %v3015 = vor.u32 %v3011, %v3014
      %v3050 = vunpack.c.l.b16 %v2963
      %v3051 = vunpack.c.l.b16 %v2964
      %v3052 = vunpack.c.l.b16 %v2965
      %v3053 = vunpack.c.l.b16 %v2966
      %v3054 = vunpack.c.l.b16 %v2967
      %v3055 = vunpack.c.l.b16 %v2968
      %v3056 = vunpack.c.l.b16 %v2969
      %v3057 = vunpack.c.l.b16 %v2970
      %v3058 = vunpack.c.l.b16 %v2971
      %v3059 = vunpack.c.l.b16 %v2972
      %v3060 = vunpack.c.l.b16 %v2973
      %v3061 = vunpack.c.l.b16 %v2974
      %v3062 = vunpack.c.l.b16 %v2975
      %v3063 = vunpack.c.l.b16 %v2976
      %v3064 = vunpack.c.l.b16 %v2977
      %v3065 = vunpack.c.l.b16 %v2978
      %v3066 = vunpack.c.l.b16 %v2979
      %v3067 = vunpack.c.l.b16 %v2980
      %v3068 = vunpack.c.l.b16 %v2981
      %v3069 = vunpack.c.l.b16 %v2982
      %v3070 = vunpack.c.l.b16 %v2983
      %v3071 = vunpack.c.l.b16 %v2984
      %v3072 = vunpack.c.l.b16 %v2985
      %v3073 = vunpack.c.l.b16 %v2986
      %v3074 = vunpack.c.l.b16 %v2987
      %v3075 = vunpack.c.l.b16 %v2988
      %v3076 = vunpack.c.l.b16 %v2989
      %v3077 = vunpack.c.l.b16 %v2990
      %v3078 = vunpack.c.l.b16 %v2991
      %v3079 = vunpack.c.l.b16 %v2992
      %v3080 = vunpack.c.l.b16 %v2993
      %v3081 = vunpack.c.l.b16 %v2994
      %v3082 = vpack.c.b16 %v3051, %v3050
      %v3083 = vpack.c.b16 %v3053, %v3052
      %v3084 = vpack.c.b16 %v3055, %v3054
      %v3085 = vpack.c.b16 %v3057, %v3056
      %v3086 = vpack.c.b16 %v3059, %v3058
      %v3087 = vpack.c.b16 %v3061, %v3060
      %v3088 = vpack.c.b16 %v3063, %v3062
      %v3089 = vpack.c.b16 %v3065, %v3064
      %v3090 = vpack.c.b16 %v3067, %v3066
      %v3091 = vpack.c.b16 %v3069, %v3068
      %v3092 = vpack.c.b16 %v3071, %v3070
      %v3093 = vpack.c.b16 %v3073, %v3072
      %v3094 = vpack.c.b16 %v3075, %v3074
      %v3095 = vpack.c.b16 %v3077, %v3076
      %v3096 = vpack.c.b16 %v3079, %v3078
      %v3097 = vpack.c.b16 %v3081, %v3080
      %3114 = vmatprep.subr.bf16.mxu0 0
      %3115 = vmatpush1.bf16.msra.mxu0 %v3082
      %3116 = vmatprep.subr.bf16.mxu0 0
      %3117 = vmatpush1.bf16.msra.mxu0 %v3083
      %3118 = vmatprep.subr.bf16.mxu0 0
      %3119 = vmatpush1.bf16.msra.mxu0 %v3084
      %3120 = vmatprep.subr.bf16.mxu0 0
      %3121 = vmatpush1.bf16.msra.mxu0 %v3085
      %3122 = vmatprep.subr.bf16.mxu0 0
      %3123 = vmatpush1.bf16.msra.mxu0 %v3086
      %3124 = vmatprep.subr.bf16.mxu0 0
      %3125 = vmatpush1.bf16.msra.mxu0 %v3087
      %3126 = vmatprep.subr.bf16.mxu0 0
      %3127 = vmatpush1.bf16.msra.mxu0 %v3088
      %3128 = vmatprep.subr.bf16.mxu0 0
      %3129 = vmatpush1.bf16.msra.mxu0 %v3089
      %3130 = vmatprep.subr.bf16.mxu0 0
      %3131 = vmatpush1.bf16.msra.mxu0 %v3090
      %3132 = vmatprep.subr.bf16.mxu0 0
      %3133 = vmatpush1.bf16.msra.mxu0 %v3091
      %3134 = vmatprep.subr.bf16.mxu0 0
      %3135 = vmatpush1.bf16.msra.mxu0 %v3092
      %3136 = vmatprep.subr.bf16.mxu0 0
      %3137 = vmatpush1.bf16.msra.mxu0 %v3093
      %3138 = vmatprep.subr.bf16.mxu0 0
      %3139 = vmatpush1.bf16.msra.mxu0 %v3094
      %3140 = vmatprep.subr.bf16.mxu0 0
      %3141 = vmatpush1.bf16.msra.mxu0 %v3095
      %3142 = vmatprep.subr.bf16.mxu0 0
      %3143 = vmatpush1.bf16.msra.mxu0 %v3096
      %3144 = vmatprep.subr.bf16.mxu0 0
      %3145 = vmatpush1.bf16.msra.mxu0 %v3097
      %3146 = vmatprep.mubr.bf16.mxu0 %v3015
      %3147 = vmatmul.mubr.bf16.gmra.mrb[0].mxu0 %v3007
      %v3148 = vpop.f32.mrb[0].mxu0
      %v3149 = vadd.f32 0.0, %v3148
      %v3150 = vpop.f32.mrb[0].mxu0
      %v3151 = vpop.f32.mrb[0].mxu0
      %v3152 = vpop.f32.mrb[0].mxu0
      %3153 = vdwg.mxu0
      %v3154 = vadd.f32 %v2960, %v3149
      %v3155 = vld [vmem:[%s2] sm:$0x1]
      %v3157 = vlaneseq
      %v3158 = vshrl.u32 %v3157, 7
      %v3159 = vsub.s32 0, %v3158
      %v3160 = vrot.slane %v3155, %v3159
      %v3162 = vadd.f32 %v3154, %v3160
      %3163 = vst [vmem:[%s168] sm:$0xf] %v3162
      %p3164 = scmp.lt.s32.totalorder %s14, 1
      %s3165 = scalar_select %p3164, %s14, 1
      %s3166 = smul.addr %s3165, 4
      %s3167 = scalar_lea.vmem %s3, %s3166
      // Predicated region
      $region33: #{patch_discriminator.7} parent=31 // pred_check
        %p3168 = pneg %p100
      $region34: #{patch_discriminator.7} parent=31 // pred_check_branch
        %3170 = sbr.rel (%p3168) target = $region36
      $region35: #{patch_discriminator.7} parent=31 // pred_region
        _
      $region36: #{patch_discriminator.7} parent=31 // pred_fallthru
        _
    $region32: #{patch_discriminator.7} parent=5 // pred_fallthru
      _
    %p3171 = scmp.le.s32.totalorder 2, %s9
    // Predicated region
    $region37: #{patch_discriminator.7} parent=5 // pred_check
      %p3172 = pneg %p3171
    $region38: #{patch_discriminator.7} parent=5 // pred_check_branch
      %3174 = sbr.rel (%p3172) target = $region40
    $region39: #{patch_discriminator.7} parent=5 // pred_region
      %s3175 = ssub.s32 %s9, 2
      // Predicated region
      $region41: #{patch_discriminator.7} parent=39 // pred_check
        %p3176 = pneg %p106
      $region42: #{patch_discriminator.7} parent=39 // pred_check_branch
        %3178 = sbr.rel (%p3176) target = $region44
      $region43: #{patch_discriminator.7} parent=39 // pred_region
        %p3179 = scmp.lt.s32.totalorder %s15, 1
        %s3180 = scalar_select %p3179, %s15, 1
        %s3181 = smul.addr %s3180, 4
        %s3182 = scalar_lea.vmem %s3, %s3181
      $region44: #{patch_discriminator.7} parent=39 // pred_fallthru
        _
    $region40: #{patch_discriminator.7} parent=5 // pred_fallthru
      _
  $region6: #{patch_discriminator.7} parent=0 // loop_footer
    %s13 = sadd.s32 1, %s9
  $region7: #{patch_discriminator.7} parent=0 // loop_footer_branch
    %8 = sbr.rel target = $region3
  $region8: #{patch_discriminator.7} parent=0 // loop_exit
    _

</llo_original>
